<compile_context>
chip_gen: v7x
topology: tpu7x:2x2x1
jax: 0.10.0
libtpu: 0.0.40
codegen_flags: <defaults>
</compile_context>

<pallas_src>
import jax
import jax.numpy as jnp
from jax import lax
from jax.experimental import pallas as pl
from jax.experimental.pallas import tpu as pltpu  # noqa: F401  (TPU backend)

NUM_CLASSES = 10
NUM_MEMORIES = 64
BATCH_SIZE = 2
CONV_CH = 16
FEATURE_SIZE = CONV_CH * 4 * 4 * 4  # 1024
BN_EPS = 1e-5

# Flip on for v5e (bf16-native MXU, ~3x f32-emulated throughput); accumulation
# stays f32 either way.  Default off to keep numerics identical to the reference.
USE_BF16_MXU_INPUTS = False


# ----------------------------------------------------------------------------
# Pallas kernels
# ----------------------------------------------------------------------------
def _mxu_dot(a, w):
    if USE_BF16_MXU_INPUTS:
        a = a.astype(jnp.bfloat16)
        w = w.astype(jnp.bfloat16)
    return jnp.dot(a, w, preferred_element_type=jnp.float32)


def _conv_bn_relu_kernel(a_ref, w_ref, g_ref, b_ref, o_ref):
    """Fused conv-as-matmul + train-mode BatchNorm + ReLU in one block."""
    a = a_ref[...]                      # (M, K) im2col columns (rows = B*H*W)
    w = w_ref[...]                      # (K, C)
    if a.shape[1] == 1:
        y = a * w                       # 1x1/Cin=1 conv: per-pixel scale (VPU)
    else:
        y = _mxu_dot(a, w)              # MXU matmul
    # BatchNorm over the (B*H*W) row axis, biased variance (PyTorch train mode).
    mean = jnp.mean(y, axis=0, keepdims=True)
    var = jnp.mean((y - mean) ** 2, axis=0, keepdims=True)
    yn = (y - mean) * lax.rsqrt(var + BN_EPS)
    o_ref[...] = jnp.maximum(yn * g_ref[...] + b_ref[...], 0.0)


def conv_bn_relu(cols, w2d, gamma, beta):
    """(M,K) @ (K,C) -> BN(batch stats) -> ReLU in a single pallas_call."""
    M, K = cols.shape
    C = w2d.shape[1]
    return pl.pallas_call(
        _conv_bn_relu_kernel,
        out_shape=jax.ShapeDtypeStruct((M, C), jnp.float32),
        grid=(1,),
        in_specs=[
            pl.BlockSpec((M, K), lambda i: (0, 0)),
            pl.BlockSpec((K, C), lambda i: (0, 0)),
            pl.BlockSpec((1, C), lambda i: (0, 0)),
            pl.BlockSpec((1, C), lambda i: (0, 0)),
        ],
        out_specs=pl.BlockSpec((M, C), lambda i: (0, 0)),
    )(cols, w2d, gamma.reshape(1, C), beta.reshape(1, C))


def _convT_out_kernel(a_ref, wt_ref, b_ref, o_ref):
    """Final deconv (Cout=1): output written as a lane-dense (1, M) row."""
    y = lax.dot_general(wt_ref[...], a_ref[...],
                        (((1,), (1,)), ((), ())),
                        preferred_element_type=jnp.float32)   # (1, M)
    o_ref[...] = y + b_ref[...]


def convT_out(cols, w2d, bias):
    M, K = cols.shape
    return pl.pallas_call(
        _convT_out_kernel,
        out_shape=jax.ShapeDtypeStruct((1, M), jnp.float32),
        grid=(1,),
        in_specs=[
            pl.BlockSpec((M, K), lambda i: (0, 0)),
            pl.BlockSpec((1, K), lambda i: (0, 0)),
            pl.BlockSpec((1, 1), lambda i: (0, 0)),
        ],
        out_specs=pl.BlockSpec((1, M), lambda i: (0, 0)),
    )(cols, w2d.reshape(1, K), bias.reshape(1, 1))


def _mem_attn_kernel(z_ref, mem_ref, w_ref, zhat_ref):
    z = z_ref[...]          # (B, F)
    mem = mem_ref[...]      # (M, F)
    eps = 1e-8
    z_norm = jnp.sqrt(jnp.sum(z * z, axis=1, keepdims=True))        # (B, 1)
    m_norm = jnp.sqrt(jnp.sum(mem * mem, axis=1, keepdims=True))    # (M, 1)
    dots = lax.dot_general(z, mem, (((1,), (1,)), ((), ())),
                           preferred_element_type=jnp.float32)      # (B, M)
    denom = jnp.maximum(z_norm, eps) * jnp.maximum(m_norm, eps).reshape(1, -1)
    sim = dots * pl.reciprocal(denom, approx=True)                  # cosine sim (EUP recip)
    sim_max = jnp.max(sim, axis=1, keepdims=True)
    e = jnp.exp(sim - sim_max)
    weights = e / jnp.sum(e, axis=1, keepdims=True)                 # exact: rows sum to 1
    w_ref[...] = weights
    zhat_ref[...] = jnp.dot(weights, mem, preferred_element_type=jnp.float32)


def memory_attention(z, memory):
    B, F = z.shape
    M, _ = memory.shape
    return pl.pallas_call(
        _mem_attn_kernel,
        out_shape=(
            jax.ShapeDtypeStruct((B, M), jnp.float32),
            jax.ShapeDtypeStruct((B, F), jnp.float32),
        ),
        grid=(1,),
        in_specs=[
            pl.BlockSpec((B, F), lambda i: (0, 0)),
            pl.BlockSpec((M, F), lambda i: (0, 0)),
        ],
        out_specs=(
            pl.BlockSpec((B, M), lambda i: (0, 0)),
            pl.BlockSpec((B, F), lambda i: (0, 0)),
        ),
    )(z, memory)


# ----------------------------------------------------------------------------
# JAX glue: im2col / zero-dilation for transposed conv (tiny arrays)
# ----------------------------------------------------------------------------
# TODO(synk): im2col patch extraction and transposed-conv zero-dilation stay as
# XLA glue; folding the kh*kw tap loop into the kernel (strided in-kernel VMEM
# slices + accumulation) would remove the duplicated-column HBM write but the
# strided sublane slicing is risky to lower portably.
def _im2col(x, kh, kw, stride, pad):
    """x: (B,H,W,C) -> (B*Ho*Wo, kh*kw*C), columns ordered (kh,kw,C)."""
    B, H, W, C = x.shape
    xp = jnp.pad(x, ((0, 0), (pad, pad), (pad, pad), (0, 0)))
    Hp, Wp = H + 2 * pad, W + 2 * pad
    Ho = (Hp - kh) // stride + 1
    Wo = (Wp - kw) // stride + 1
    patches = []
    for i in range(kh):
        for j in range(kw):
            patches.append(xp[:, i:i + stride * Ho:stride, j:j + stride * Wo:stride, :])
    cols = jnp.stack(patches, axis=3)          # (B, Ho, Wo, kh*kw, C)
    return cols.reshape(B * Ho * Wo, kh * kw * C), Ho, Wo


def _dilate_pad_for_transpose(x, k, stride, pad, out_pad):
    """Zero-dilate + pad so a stride-1 conv with the flipped weight equals ConvTranspose2d."""
    B, H, W, C = x.shape
    Hd = (H - 1) * stride + 1
    Wd = (W - 1) * stride + 1
    xd = jnp.zeros((B, Hd, Wd, C), x.dtype).at[:, ::stride, ::stride, :].set(x)
    p = k - 1 - pad
    return jnp.pad(xd, ((0, 0), (p, p + out_pad), (p, p + out_pad), (0, 0)))


# ----------------------------------------------------------------------------
# Layer wrappers
# ----------------------------------------------------------------------------
def conv1_bn_relu(x_nchw, w, gamma, beta):
    """Encoder conv1: Conv2d(1, 16, k=1, s=2, p=1) + BN + ReLU.
    A 1x1 conv with Cin=1 is a per-pixel scale -> VPU path of the fused kernel.
    (The conv bias cancels exactly under train-mode BN, so it is not applied.)"""
    B = x_nchw.shape[0]
    x = x_nchw[:, 0, :, :]                               # (B, 28, 28)
    xp = jnp.pad(x, ((0, 0), (1, 1), (1, 1)))            # (B, 30, 30)
    xs = xp[:, ::2, ::2]                                 # (B, 15, 15) stride-2 sample
    Ho, Wo = xs.shape[1], xs.shape[2]
    cols = xs.reshape(B * Ho * Wo, 1)
    out = conv_bn_relu(cols, w.reshape(1, -1), gamma, beta)
    return out.reshape(B, Ho, Wo, -1)


def conv_bn_relu_layer(x, w, gamma, beta, stride, pad):
    """x: NHWC, w: (kh,kw,Cin,Cout). Conv bias omitted (cancels in train-mode BN)."""
    kh, kw, Cin, Cout = w.shape
    cols, Ho, Wo = _im2col(x, kh, kw, stride, pad)
    out = conv_bn_relu(cols, w.reshape(kh * kw * Cin, Cout), gamma, beta)
    return out.reshape(x.shape[0], Ho, Wo, Cout)


def deconv_bn_relu_layer(x, w, gamma, beta, stride, pad, out_pad):
    """ConvTranspose2d (+ BN + ReLU) via zero-dilation + stride-1 conv with the
    already-flipped equivalent forward-conv weight (kh,kw,Cin,Cout)."""
    kh, kw, Cin, Cout = w.shape
    xp = _dilate_pad_for_transpose(x, kh, stride, pad, out_pad)
    cols, Ho, Wo = _im2col(xp, kh, kw, 1, 0)
    out = conv_bn_relu(cols, w.reshape(kh * kw * Cin, Cout), gamma, beta)
    return out.reshape(x.shape[0], Ho, Wo, Cout)


def deconv_out_layer(x, w, b, stride, pad, out_pad):
    """Final ConvTranspose2d (Cout=1, with bias, no BN). Returns NCHW (B,1,Ho,Wo)."""
    kh, kw, Cin, Cout = w.shape
    xp = _dilate_pad_for_transpose(x, kh, stride, pad, out_pad)
    cols, Ho, Wo = _im2col(xp, kh, kw, 1, 0)
    out = convT_out(cols, w.reshape(kh * kw * Cin, Cout), b)   # (1, B*Ho*Wo)
    return out.reshape(x.shape[0], Cout, Ho, Wo)               # NCHW directly


# ----------------------------------------------------------------------------
# Full model forward
# ----------------------------------------------------------------------------
def forward(params, x):
    # x: (B, 1, 28, 28) NCHW (PyTorch convention)
    B = x.shape[0]

    # ---- encoder ----
    h = conv1_bn_relu(x, params["c1w"], params["bn1g"], params["bn1b"])        # (B,15,15,16)
    h = conv_bn_relu_layer(h, params["c2w"], params["bn2g"], params["bn2b"],
                           stride=2, pad=1)                                    # (B,8,8,32)
    h = conv_bn_relu_layer(h, params["c3w"], params["bn3g"], params["bn3b"],
                           stride=2, pad=1)                                    # (B,4,4,64)

    # flatten in PyTorch (C,H,W) order
    z = jnp.transpose(h, (0, 3, 1, 2)).reshape(B, -1)                          # (B, 1024)

    # ---- memory read (cosine sim + softmax + mixture) ----
    mem_weight, z_hat = memory_attention(z, params["memory"])

    # ---- decoder ----
    d = jnp.transpose(z_hat.reshape(B, CONV_CH * 4, 4, 4), (0, 2, 3, 1))       # (B,4,4,64)
    d = deconv_bn_relu_layer(d, params["d1w"], params["dbn1g"], params["dbn1b"],
                             stride=2, pad=1, out_pad=1)                       # (B,8,8,32)
    d = deconv_bn_relu_layer(d, params["d2w"], params["dbn2g"], params["dbn2b"],
                             stride=2, pad=1, out_pad=1)                       # (B,15,15,16)
    rec_x = deconv_out_layer(d, params["d3w"], params["d3b"],
                             stride=2, pad=1, out_pad=0)                       # (B,1,28,28)

    logit_x = jnp.zeros((BATCH_SIZE, NUM_CLASSES), jnp.float32)
    return dict(rec_x=rec_x, logit_x=logit_x, mem_weight=mem_weight)


# ----------------------------------------------------------------------------
# Deterministic parameter init
# ----------------------------------------------------------------------------
def init_params(key):
    ks = iter(jax.random.split(key, 32))

    def w_init(shape, scale=0.1):
        return scale * jax.random.normal(next(ks), shape, jnp.float32)

    p = {}
    # encoder  (c*b biases are kept for fidelity but cancel under train-mode BN)
    p["c1w"], p["c1b"] = w_init((1, 1, 1, CONV_CH)), w_init((CONV_CH,))
    p["bn1g"], p["bn1b"] = jnp.ones((CONV_CH,), jnp.float32), jnp.zeros((CONV_CH,), jnp.float32)
    p["c2w"], p["c2b"] = w_init((3, 3, CONV_CH, CONV_CH * 2)), w_init((CONV_CH * 2,))
    p["bn2g"], p["bn2b"] = jnp.ones((CONV_CH * 2,), jnp.float32), jnp.zeros((CONV_CH * 2,), jnp.float32)
    p["c3w"], p["c3b"] = w_init((3, 3, CONV_CH * 2, CONV_CH * 4)), w_init((CONV_CH * 4,))
    p["bn3g"], p["bn3b"] = jnp.ones((CONV_CH * 4,), jnp.float32), jnp.zeros((CONV_CH * 4,), jnp.float32)
    # memory (kaiming-uniform-like: U(-sqrt(6/fan_in), sqrt(6/fan_in)))
    bound = (6.0 / FEATURE_SIZE) ** 0.5
    p["memory"] = jax.random.uniform(next(ks), (NUM_MEMORIES, FEATURE_SIZE),
                                     jnp.float32, -bound, bound)
    # decoder (weights stored as the flipped equivalent forward-conv (kh,kw,Cin,Cout))
    p["d1w"], p["d1b"] = w_init((3, 3, CONV_CH * 4, CONV_CH * 2)), w_init((CONV_CH * 2,))
    p["dbn1g"], p["dbn1b"] = jnp.ones((CONV_CH * 2,), jnp.float32), jnp.zeros((CONV_CH * 2,), jnp.float32)
    p["d2w"], p["d2b"] = w_init((2, 2, CONV_CH * 2, CONV_CH)), w_init((CONV_CH,))
    p["dbn2g"], p["dbn2b"] = jnp.ones((CONV_CH,), jnp.float32), jnp.zeros((CONV_CH,), jnp.float32)
    p["d3w"], p["d3b"] = w_init((2, 2, CONV_CH, 1)), w_init((1,))
    return p


if __name__ == "__main__":
    key = jax.random.PRNGKey(0)
    kp, kx = jax.random.split(key)
    params = init_params(kp)
    x = jax.random.normal(kx, (BATCH_SIZE, 1, 28, 28), jnp.float32)

    out = jax.jit(forward)(params, x)
    out = jax.block_until_ready(out)

    assert out["rec_x"].shape == (BATCH_SIZE, 1, 28, 28)
    assert out["logit_x"].shape == (BATCH_SIZE, NUM_CLASSES)
    assert out["mem_weight"].shape == (BATCH_SIZE, NUM_MEMORIES)
    assert bool(jnp.all(jnp.isfinite(out["rec_x"])))
    assert abs(float(jnp.sum(out["mem_weight"])) - BATCH_SIZE) < 1e-3  # softmax rows sum to 1
    print("KERNEL_OK")
</pallas_src>

<mosaic_0001>
module attributes {stable_mosaic.version = 11 : i64} {
  func.func @_conv_bn_relu_kernel(%arg0: i32, %arg1: memref<450x1xf32, #tpu.memory_space<vmem>>, %arg2: memref<1x16xf32, #tpu.memory_space<vmem>>, %arg3: memref<1x16xf32, #tpu.memory_space<vmem>>, %arg4: memref<1x16xf32, #tpu.memory_space<vmem>>, %arg5: memref<450x16xf32, #tpu.memory_space<vmem>>) attributes {dimension_semantics = [#tpu.dimension_semantics<arbitrary>], iteration_bounds = array<i64: 1>, scalar_prefetch = 0 : i64, scratch_operands = 0 : i64, tpu.core_type = #tpu.core_type<tc>, window_params = [{pipeline_mode = #tpu.pipeline_mode<synchronous>, transform_indices = @transform_0, window_bounds = array<i64: 450, 1>}, {pipeline_mode = #tpu.pipeline_mode<synchronous>, transform_indices = @transform_1, window_bounds = array<i64: 1, 16>}, {pipeline_mode = #tpu.pipeline_mode<synchronous>, transform_indices = @transform_2, window_bounds = array<i64: 1, 16>}, {pipeline_mode = #tpu.pipeline_mode<synchronous>, transform_indices = @transform_3, window_bounds = array<i64: 1, 16>}, {pipeline_mode = #tpu.pipeline_mode<synchronous>, transform_indices = @transform_4, window_bounds = array<i64: 450, 16>}]} {
    %c0 = arith.constant 0 : index
    %c0_0 = arith.constant 0 : index
    %0 = vector.load %arg1[%c0, %c0_0] : memref<450x1xf32, #tpu.memory_space<vmem>>, vector<450x1xf32>
    %c0_1 = arith.constant 0 : index
    %c0_2 = arith.constant 0 : index
    %1 = vector.load %arg2[%c0_1, %c0_2] : memref<1x16xf32, #tpu.memory_space<vmem>>, vector<1x16xf32>
    %2 = vector.broadcast %0 : vector<450x1xf32> to vector<450x16xf32>
    %3 = vector.broadcast %1 : vector<1x16xf32> to vector<450x16xf32>
    %4 = arith.mulf %2, %3 : vector<450x16xf32>
    %cst = arith.constant dense<0.000000e+00> : vector<16xf32>
    %5 = vector.multi_reduction <add>, %4, %cst [0] : vector<450x16xf32> to vector<16xf32>
    %6 = vector.shape_cast %5 : vector<16xf32> to vector<1x16xf32>
    %cst_3 = arith.constant 4.500000e+02 : f32
    %7 = vector.broadcast %cst_3 : f32 to vector<1x16xf32>
    %8 = arith.divf %6, %7 : vector<1x16xf32>
    %9 = vector.broadcast %8 : vector<1x16xf32> to vector<450x16xf32>
    %10 = arith.subf %4, %9 : vector<450x16xf32>
    %11 = arith.mulf %10, %10 : vector<450x16xf32>
    %cst_4 = arith.constant dense<0.000000e+00> : vector<16xf32>
    %12 = vector.multi_reduction <add>, %11, %cst_4 [0] : vector<450x16xf32> to vector<16xf32>
    %13 = vector.shape_cast %12 : vector<16xf32> to vector<1x16xf32>
    %cst_5 = arith.constant 4.500000e+02 : f32
    %14 = vector.broadcast %cst_5 : f32 to vector<1x16xf32>
    %15 = arith.divf %13, %14 : vector<1x16xf32>
    %16 = vector.broadcast %8 : vector<1x16xf32> to vector<450x16xf32>
    %17 = arith.subf %4, %16 : vector<450x16xf32>
    %cst_6 = arith.constant 9.99999974E-6 : f32
    %18 = vector.broadcast %cst_6 : f32 to vector<1x16xf32>
    %19 = arith.addf %15, %18 : vector<1x16xf32>
    %20 = math.rsqrt %19 : vector<1x16xf32>
    %21 = vector.broadcast %20 : vector<1x16xf32> to vector<450x16xf32>
    %22 = arith.mulf %17, %21 : vector<450x16xf32>
    %c0_7 = arith.constant 0 : index
    %c0_8 = arith.constant 0 : index
    %23 = vector.load %arg3[%c0_7, %c0_8] : memref<1x16xf32, #tpu.memory_space<vmem>>, vector<1x16xf32>
    %24 = vector.broadcast %23 : vector<1x16xf32> to vector<450x16xf32>
    %25 = arith.mulf %22, %24 : vector<450x16xf32>
    %c0_9 = arith.constant 0 : index
    %c0_10 = arith.constant 0 : index
    %26 = vector.load %arg4[%c0_9, %c0_10] : memref<1x16xf32, #tpu.memory_space<vmem>>, vector<1x16xf32>
    %27 = vector.broadcast %26 : vector<1x16xf32> to vector<450x16xf32>
    %28 = arith.addf %25, %27 : vector<450x16xf32>
    %cst_11 = arith.constant 0.000000e+00 : f32
    %29 = vector.broadcast %cst_11 : f32 to vector<450x16xf32>
    %30 = arith.maximumf %28, %29 : vector<450x16xf32>
    %c0_12 = arith.constant 0 : index
    %c0_13 = arith.constant 0 : index
    %31 = vector.load %arg5[%c0_12, %c0_13] : memref<450x16xf32, #tpu.memory_space<vmem>>, vector<450x16xf32>
    tpu.vector_store %arg5[%c0_12, %c0_13], %30 {strides = array<i32>} : memref<450x16xf32, #tpu.memory_space<vmem>>, vector<450x16xf32>,
    return
  }
  func.func @transform_0(%arg0: i32) -> (i32, i32) {
    %c0_i32 = arith.constant 0 : i32
    %c0_i32_0 = arith.constant 0 : i32
    %c0_i32_1 = arith.constant 0 : i32
    return %c0_i32, %c0_i32_0 : i32, i32
  }
  func.func @transform_1(%arg0: i32) -> (i32, i32) {
    %c0_i32 = arith.constant 0 : i32
    %c0_i32_0 = arith.constant 0 : i32
    %c0_i32_1 = arith.constant 0 : i32
    return %c0_i32, %c0_i32_0 : i32, i32
  }
  func.func @transform_2(%arg0: i32) -> (i32, i32) {
    %c0_i32 = arith.constant 0 : i32
    %c0_i32_0 = arith.constant 0 : i32
    %c0_i32_1 = arith.constant 0 : i32
    return %c0_i32, %c0_i32_0 : i32, i32
  }
  func.func @transform_3(%arg0: i32) -> (i32, i32) {
    %c0_i32 = arith.constant 0 : i32
    %c0_i32_0 = arith.constant 0 : i32
    %c0_i32_1 = arith.constant 0 : i32
    return %c0_i32, %c0_i32_0 : i32, i32
  }
  func.func @transform_4(%arg0: i32) -> (i32, i32) {
    %c0_i32 = arith.constant 0 : i32
    %c0_i32_0 = arith.constant 0 : i32
    %c0_i32_1 = arith.constant 0 : i32
    return %c0_i32, %c0_i32_0 : i32, i32
  }
}

module attributes {stable_mosaic.version = 11 : i64} {
  func.func @_conv_bn_relu_kernel(%arg0: i32, %arg1: memref<128x144xf32, #tpu.memory_space<vmem>>, %arg2: memref<144x32xf32, #tpu.memory_space<vmem>>, %arg3: memref<1x32xf32, #tpu.memory_space<vmem>>, %arg4: memref<1x32xf32, #tpu.memory_space<vmem>>, %arg5: memref<128x32xf32, #tpu.memory_space<vmem>>) attributes {dimension_semantics = [#tpu.dimension_semantics<arbitrary>], iteration_bounds = array<i64: 1>, scalar_prefetch = 0 : i64, scratch_operands = 0 : i64, tpu.core_type = #tpu.core_type<tc>, window_params = [{pipeline_mode = #tpu.pipeline_mode<synchronous>, transform_indices = @transform_0, window_bounds = array<i64: 128, 144>}, {pipeline_mode = #tpu.pipeline_mode<synchronous>, transform_indices = @transform_1, window_bounds = array<i64: 144, 32>}, {pipeline_mode = #tpu.pipeline_mode<synchronous>, transform_indices = @transform_2, window_bounds = array<i64: 1, 32>}, {pipeline_mode = #tpu.pipeline_mode<synchronous>, transform_indices = @transform_3, window_bounds = array<i64: 1, 32>}, {pipeline_mode = #tpu.pipeline_mode<synchronous>, transform_indices = @transform_4, window_bounds = array<i64: 128, 32>}]} {
    %c0 = arith.constant 0 : index
    %c0_0 = arith.constant 0 : index
    %0 = vector.load %arg1[%c0, %c0_0] : memref<128x144xf32, #tpu.memory_space<vmem>>, vector<128x144xf32>
    %c0_1 = arith.constant 0 : index
    %c0_2 = arith.constant 0 : index
    %1 = vector.load %arg2[%c0_1, %c0_2] : memref<144x32xf32, #tpu.memory_space<vmem>>, vector<144x32xf32>
    %cst = arith.constant dense<0.000000e+00> : vector<128x32xf32>
    %2 = tpu.matmul %0, %1, %cst {dimension_numbers = #tpu.dot_dimension_numbers<[1], [0], [0], [1], [0, 0, 1, 1], [], []>} : vector<128x144xf32>, vector<144x32xf32>, vector<128x32xf32> -> vector<128x32xf32>
    %cst_3 = arith.constant dense<0.000000e+00> : vector<32xf32>
    %3 = vector.multi_reduction <add>, %2, %cst_3 [0] : vector<128x32xf32> to vector<32xf32>
    %4 = vector.shape_cast %3 : vector<32xf32> to vector<1x32xf32>
    %cst_4 = arith.constant 1.280000e+02 : f32
    %5 = vector.broadcast %cst_4 : f32 to vector<1x32xf32>
    %6 = arith.divf %4, %5 : vector<1x32xf32>
    %7 = vector.broadcast %6 : vector<1x32xf32> to vector<128x32xf32>
    %8 = arith.subf %2, %7 : vector<128x32xf32>
    %9 = arith.mulf %8, %8 : vector<128x32xf32>
    %cst_5 = arith.constant dense<0.000000e+00> : vector<32xf32>
    %10 = vector.multi_reduction <add>, %9, %cst_5 [0] : vector<128x32xf32> to vector<32xf32>
    %11 = vector.shape_cast %10 : vector<32xf32> to vector<1x32xf32>
    %cst_6 = arith.constant 1.280000e+02 : f32
    %12 = vector.broadcast %cst_6 : f32 to vector<1x32xf32>
    %13 = arith.divf %11, %12 : vector<1x32xf32>
    %14 = vector.broadcast %6 : vector<1x32xf32> to vector<128x32xf32>
    %15 = arith.subf %2, %14 : vector<128x32xf32>
    %cst_7 = arith.constant 9.99999974E-6 : f32
    %16 = vector.broadcast %cst_7 : f32 to vector<1x32xf32>
    %17 = arith.addf %13, %16 : vector<1x32xf32>
    %18 = math.rsqrt %17 : vector<1x32xf32>
    %19 = vector.broadcast %18 : vector<1x32xf32> to vector<128x32xf32>
    %20 = arith.mulf %15, %19 : vector<128x32xf32>
    %c0_8 = arith.constant 0 : index
    %c0_9 = arith.constant 0 : index
    %21 = vector.load %arg3[%c0_8, %c0_9] : memref<1x32xf32, #tpu.memory_space<vmem>>, vector<1x32xf32>
    %22 = vector.broadcast %21 : vector<1x32xf32> to vector<128x32xf32>
    %23 = arith.mulf %20, %22 : vector<128x32xf32>
    %c0_10 = arith.constant 0 : index
    %c0_11 = arith.constant 0 : index
    %24 = vector.load %arg4[%c0_10, %c0_11] : memref<1x32xf32, #tpu.memory_space<vmem>>, vector<1x32xf32>
    %25 = vector.broadcast %24 : vector<1x32xf32> to vector<128x32xf32>
    %26 = arith.addf %23, %25 : vector<128x32xf32>
    %cst_12 = arith.constant 0.000000e+00 : f32
    %27 = vector.broadcast %cst_12 : f32 to vector<128x32xf32>
    %28 = arith.maximumf %26, %27 : vector<128x32xf32>
    %c0_13 = arith.constant 0 : index
    %c0_14 = arith.constant 0 : index
    %29 = vector.load %arg5[%c0_13, %c0_14] : memref<128x32xf32, #tpu.memory_space<vmem>>, vector<128x32xf32>
    tpu.vector_store %arg5[%c0_13, %c0_14], %28 {strides = array<i32>} : memref<128x32xf32, #tpu.memory_space<vmem>>, vector<128x32xf32>,
    return
  }
  func.func @transform_0(%arg0: i32) -> (i32, i32) {
    %c0_i32 = arith.constant 0 : i32
    %c0_i32_0 = arith.constant 0 : i32
    %c0_i32_1 = arith.constant 0 : i32
    return %c0_i32, %c0_i32_0 : i32, i32
  }
  func.func @transform_1(%arg0: i32) -> (i32, i32) {
    %c0_i32 = arith.constant 0 : i32
    %c0_i32_0 = arith.constant 0 : i32
    %c0_i32_1 = arith.constant 0 : i32
    return %c0_i32, %c0_i32_0 : i32, i32
  }
  func.func @transform_2(%arg0: i32) -> (i32, i32) {
    %c0_i32 = arith.constant 0 : i32
    %c0_i32_0 = arith.constant 0 : i32
    %c0_i32_1 = arith.constant 0 : i32
    return %c0_i32, %c0_i32_0 : i32, i32
  }
  func.func @transform_3(%arg0: i32) -> (i32, i32) {
    %c0_i32 = arith.constant 0 : i32
    %c0_i32_0 = arith.constant 0 : i32
    %c0_i32_1 = arith.constant 0 : i32
    return %c0_i32, %c0_i32_0 : i32, i32
  }
  func.func @transform_4(%arg0: i32) -> (i32, i32) {
    %c0_i32 = arith.constant 0 : i32
    %c0_i32_0 = arith.constant 0 : i32
    %c0_i32_1 = arith.constant 0 : i32
    return %c0_i32, %c0_i32_0 : i32, i32
  }
}

module attributes {stable_mosaic.version = 11 : i64} {
  func.func @_conv_bn_relu_kernel(%arg0: i32, %arg1: memref<32x288xf32, #tpu.memory_space<vmem>>, %arg2: memref<288x64xf32, #tpu.memory_space<vmem>>, %arg3: memref<1x64xf32, #tpu.memory_space<vmem>>, %arg4: memref<1x64xf32, #tpu.memory_space<vmem>>, %arg5: memref<32x64xf32, #tpu.memory_space<vmem>>) attributes {dimension_semantics = [#tpu.dimension_semantics<arbitrary>], iteration_bounds = array<i64: 1>, scalar_prefetch = 0 : i64, scratch_operands = 0 : i64, tpu.core_type = #tpu.core_type<tc>, window_params = [{pipeline_mode = #tpu.pipeline_mode<synchronous>, transform_indices = @transform_0, window_bounds = array<i64: 32, 288>}, {pipeline_mode = #tpu.pipeline_mode<synchronous>, transform_indices = @transform_1, window_bounds = array<i64: 288, 64>}, {pipeline_mode = #tpu.pipeline_mode<synchronous>, transform_indices = @transform_2, window_bounds = array<i64: 1, 64>}, {pipeline_mode = #tpu.pipeline_mode<synchronous>, transform_indices = @transform_3, window_bounds = array<i64: 1, 64>}, {pipeline_mode = #tpu.pipeline_mode<synchronous>, transform_indices = @transform_4, window_bounds = array<i64: 32, 64>}]} {
    %c0 = arith.constant 0 : index
    %c0_0 = arith.constant 0 : index
    %0 = vector.load %arg1[%c0, %c0_0] : memref<32x288xf32, #tpu.memory_space<vmem>>, vector<32x288xf32>
    %c0_1 = arith.constant 0 : index
    %c0_2 = arith.constant 0 : index
    %1 = vector.load %arg2[%c0_1, %c0_2] : memref<288x64xf32, #tpu.memory_space<vmem>>, vector<288x64xf32>
    %cst = arith.constant dense<0.000000e+00> : vector<32x64xf32>
    %2 = tpu.matmul %0, %1, %cst {dimension_numbers = #tpu.dot_dimension_numbers<[1], [0], [0], [1], [0, 0, 1, 1], [], []>} : vector<32x288xf32>, vector<288x64xf32>, vector<32x64xf32> -> vector<32x64xf32>
    %cst_3 = arith.constant dense<0.000000e+00> : vector<64xf32>
    %3 = vector.multi_reduction <add>, %2, %cst_3 [0] : vector<32x64xf32> to vector<64xf32>
    %4 = vector.shape_cast %3 : vector<64xf32> to vector<1x64xf32>
    %cst_4 = arith.constant 3.200000e+01 : f32
    %5 = vector.broadcast %cst_4 : f32 to vector<1x64xf32>
    %6 = arith.divf %4, %5 : vector<1x64xf32>
    %7 = vector.broadcast %6 : vector<1x64xf32> to vector<32x64xf32>
    %8 = arith.subf %2, %7 : vector<32x64xf32>
    %9 = arith.mulf %8, %8 : vector<32x64xf32>
    %cst_5 = arith.constant dense<0.000000e+00> : vector<64xf32>
    %10 = vector.multi_reduction <add>, %9, %cst_5 [0] : vector<32x64xf32> to vector<64xf32>
    %11 = vector.shape_cast %10 : vector<64xf32> to vector<1x64xf32>
    %cst_6 = arith.constant 3.200000e+01 : f32
    %12 = vector.broadcast %cst_6 : f32 to vector<1x64xf32>
    %13 = arith.divf %11, %12 : vector<1x64xf32>
    %14 = vector.broadcast %6 : vector<1x64xf32> to vector<32x64xf32>
    %15 = arith.subf %2, %14 : vector<32x64xf32>
    %cst_7 = arith.constant 9.99999974E-6 : f32
    %16 = vector.broadcast %cst_7 : f32 to vector<1x64xf32>
    %17 = arith.addf %13, %16 : vector<1x64xf32>
    %18 = math.rsqrt %17 : vector<1x64xf32>
    %19 = vector.broadcast %18 : vector<1x64xf32> to vector<32x64xf32>
    %20 = arith.mulf %15, %19 : vector<32x64xf32>
    %c0_8 = arith.constant 0 : index
    %c0_9 = arith.constant 0 : index
    %21 = vector.load %arg3[%c0_8, %c0_9] : memref<1x64xf32, #tpu.memory_space<vmem>>, vector<1x64xf32>
    %22 = vector.broadcast %21 : vector<1x64xf32> to vector<32x64xf32>
    %23 = arith.mulf %20, %22 : vector<32x64xf32>
    %c0_10 = arith.constant 0 : index
    %c0_11 = arith.constant 0 : index
    %24 = vector.load %arg4[%c0_10, %c0_11] : memref<1x64xf32, #tpu.memory_space<vmem>>, vector<1x64xf32>
    %25 = vector.broadcast %24 : vector<1x64xf32> to vector<32x64xf32>
    %26 = arith.addf %23, %25 : vector<32x64xf32>
    %cst_12 = arith.constant 0.000000e+00 : f32
    %27 = vector.broadcast %cst_12 : f32 to vector<32x64xf32>
    %28 = arith.maximumf %26, %27 : vector<32x64xf32>
    %c0_13 = arith.constant 0 : index
    %c0_14 = arith.constant 0 : index
    %29 = vector.load %arg5[%c0_13, %c0_14] : memref<32x64xf32, #tpu.memory_space<vmem>>, vector<32x64xf32>
    tpu.vector_store %arg5[%c0_13, %c0_14], %28 {strides = array<i32>} : memref<32x64xf32, #tpu.memory_space<vmem>>, vector<32x64xf32>,
    return
  }
  func.func @transform_0(%arg0: i32) -> (i32, i32) {
    %c0_i32 = arith.constant 0 : i32
    %c0_i32_0 = arith.constant 0 : i32
    %c0_i32_1 = arith.constant 0 : i32
    return %c0_i32, %c0_i32_0 : i32, i32
  }
  func.func @transform_1(%arg0: i32) -> (i32, i32) {
    %c0_i32 = arith.constant 0 : i32
    %c0_i32_0 = arith.constant 0 : i32
    %c0_i32_1 = arith.constant 0 : i32
    return %c0_i32, %c0_i32_0 : i32, i32
  }
  func.func @transform_2(%arg0: i32) -> (i32, i32) {
    %c0_i32 = arith.constant 0 : i32
    %c0_i32_0 = arith.constant 0 : i32
    %c0_i32_1 = arith.constant 0 : i32
    return %c0_i32, %c0_i32_0 : i32, i32
  }
  func.func @transform_3(%arg0: i32) -> (i32, i32) {
    %c0_i32 = arith.constant 0 : i32
    %c0_i32_0 = arith.constant 0 : i32
    %c0_i32_1 = arith.constant 0 : i32
    return %c0_i32, %c0_i32_0 : i32, i32
  }
  func.func @transform_4(%arg0: i32) -> (i32, i32) {
    %c0_i32 = arith.constant 0 : i32
    %c0_i32_0 = arith.constant 0 : i32
    %c0_i32_1 = arith.constant 0 : i32
    return %c0_i32, %c0_i32_0 : i32, i32
  }
}

module attributes {stable_mosaic.version = 11 : i64} {
  func.func @_mem_attn_kernel(%arg0: i32, %arg1: memref<2x1024xf32, #tpu.memory_space<vmem>>, %arg2: memref<64x1024xf32, #tpu.memory_space<vmem>>, %arg3: memref<2x64xf32, #tpu.memory_space<vmem>>, %arg4: memref<2x1024xf32, #tpu.memory_space<vmem>>) attributes {dimension_semantics = [#tpu.dimension_semantics<arbitrary>], iteration_bounds = array<i64: 1>, scalar_prefetch = 0 : i64, scratch_operands = 0 : i64, tpu.core_type = #tpu.core_type<tc>, window_params = [{pipeline_mode = #tpu.pipeline_mode<synchronous>, transform_indices = @transform_0, window_bounds = array<i64: 2, 1024>}, {pipeline_mode = #tpu.pipeline_mode<synchronous>, transform_indices = @transform_1, window_bounds = array<i64: 64, 1024>}, {pipeline_mode = #tpu.pipeline_mode<synchronous>, transform_indices = @transform_2, window_bounds = array<i64: 2, 64>}, {pipeline_mode = #tpu.pipeline_mode<synchronous>, transform_indices = @transform_3, window_bounds = array<i64: 2, 1024>}]} {
    %c0 = arith.constant 0 : index
    %c0_0 = arith.constant 0 : index
    %0 = vector.load %arg1[%c0, %c0_0] : memref<2x1024xf32, #tpu.memory_space<vmem>>, vector<2x1024xf32>
    %c0_1 = arith.constant 0 : index
    %c0_2 = arith.constant 0 : index
    %1 = vector.load %arg2[%c0_1, %c0_2] : memref<64x1024xf32, #tpu.memory_space<vmem>>, vector<64x1024xf32>
    %2 = arith.mulf %0, %0 : vector<2x1024xf32>
    %cst = arith.constant dense<0.000000e+00> : vector<2xf32>
    %3 = vector.multi_reduction <add>, %2, %cst [1] : vector<2x1024xf32> to vector<2xf32>
    %4 = vector.shape_cast %3 : vector<2xf32> to vector<2x1xf32>
    %5 = math.sqrt %4 : vector<2x1xf32>
    %6 = arith.mulf %1, %1 : vector<64x1024xf32>
    %cst_3 = arith.constant dense<0.000000e+00> : vector<64xf32>
    %7 = vector.multi_reduction <add>, %6, %cst_3 [1] : vector<64x1024xf32> to vector<64xf32>
    %8 = vector.shape_cast %7 : vector<64xf32> to vector<64x1xf32>
    %9 = math.sqrt %8 : vector<64x1xf32>
    %cst_4 = arith.constant dense<0.000000e+00> : vector<2x64xf32>
    %10 = tpu.matmul %0, %1, %cst_4 {dimension_numbers = #tpu.dot_dimension_numbers<[1], [1], [0], [0], [0, 0, 1, 0], [], []>} : vector<2x1024xf32>, vector<64x1024xf32>, vector<2x64xf32> -> vector<2x64xf32>
    %cst_5 = arith.constant 9.99999993E-9 : f32
    %11 = vector.broadcast %cst_5 : f32 to vector<2x1xf32>
    %12 = arith.maximumf %5, %11 : vector<2x1xf32>
    %cst_6 = arith.constant 9.99999993E-9 : f32
    %13 = vector.broadcast %cst_6 : f32 to vector<64x1xf32>
    %14 = arith.maximumf %9, %13 : vector<64x1xf32>
    %15 = vector.shape_cast %14 : vector<64x1xf32> to vector<1x64xf32>
    %16 = vector.broadcast %12 : vector<2x1xf32> to vector<2x64xf32>
    %17 = vector.broadcast %15 : vector<1x64xf32> to vector<2x64xf32>
    %18 = arith.mulf %16, %17 : vector<2x64xf32>
    %19 = tpu.reciprocal %18 {approx = true} : vector<2x64xf32> -> vector<2x64xf32>
    %20 = arith.mulf %10, %19 : vector<2x64xf32>
    %cst_7 = arith.constant dense<0xFF800000> : vector<2xf32>
    %21 = vector.multi_reduction <maximumf>, %20, %cst_7 [1] : vector<2x64xf32> to vector<2xf32>
    %22 = vector.shape_cast %21 : vector<2xf32> to vector<2x1xf32>
    %23 = vector.broadcast %22 : vector<2x1xf32> to vector<2x64xf32>
    %24 = arith.subf %20, %23 : vector<2x64xf32>
    %25 = math.exp %24 : vector<2x64xf32>
    %cst_8 = arith.constant dense<0.000000e+00> : vector<2xf32>
    %26 = vector.multi_reduction <add>, %25, %cst_8 [1] : vector<2x64xf32> to vector<2xf32>
    %27 = vector.shape_cast %26 : vector<2xf32> to vector<2x1xf32>
    %28 = vector.broadcast %27 : vector<2x1xf32> to vector<2x64xf32>
    %29 = arith.divf %25, %28 : vector<2x64xf32>
    %c0_9 = arith.constant 0 : index
    %c0_10 = arith.constant 0 : index
    %30 = vector.load %arg3[%c0_9, %c0_10] : memref<2x64xf32, #tpu.memory_space<vmem>>, vector<2x64xf32>
    tpu.vector_store %arg3[%c0_9, %c0_10], %29 {strides = array<i32>} : memref<2x64xf32, #tpu.memory_space<vmem>>, vector<2x64xf32>,
    %cst_11 = arith.constant dense<0.000000e+00> : vector<2x1024xf32>
    %31 = tpu.matmul %29, %1, %cst_11 {dimension_numbers = #tpu.dot_dimension_numbers<[1], [0], [0], [1], [0, 0, 1, 1], [], []>} : vector<2x64xf32>, vector<64x1024xf32>, vector<2x1024xf32> -> vector<2x1024xf32>
    %c0_12 = arith.constant 0 : index
    %c0_13 = arith.constant 0 : index
    %32 = vector.load %arg4[%c0_12, %c0_13] : memref<2x1024xf32, #tpu.memory_space<vmem>>, vector<2x1024xf32>
    tpu.vector_store %arg4[%c0_12, %c0_13], %31 {strides = array<i32>} : memref<2x1024xf32, #tpu.memory_space<vmem>>, vector<2x1024xf32>,
    return
  }
  func.func @transform_0(%arg0: i32) -> (i32, i32) {
    %c0_i32 = arith.constant 0 : i32
    %c0_i32_0 = arith.constant 0 : i32
    %c0_i32_1 = arith.constant 0 : i32
    return %c0_i32, %c0_i32_0 : i32, i32
  }
  func.func @transform_1(%arg0: i32) -> (i32, i32) {
    %c0_i32 = arith.constant 0 : i32
    %c0_i32_0 = arith.constant 0 : i32
    %c0_i32_1 = arith.constant 0 : i32
    return %c0_i32, %c0_i32_0 : i32, i32
  }
  func.func @transform_2(%arg0: i32) -> (i32, i32) {
    %c0_i32 = arith.constant 0 : i32
    %c0_i32_0 = arith.constant 0 : i32
    %c0_i32_1 = arith.constant 0 : i32
    return %c0_i32, %c0_i32_0 : i32, i32
  }
  func.func @transform_3(%arg0: i32) -> (i32, i32) {
    %c0_i32 = arith.constant 0 : i32
    %c0_i32_0 = arith.constant 0 : i32
    %c0_i32_1 = arith.constant 0 : i32
    return %c0_i32, %c0_i32_0 : i32, i32
  }
}

module attributes {stable_mosaic.version = 11 : i64} {
  func.func @_conv_bn_relu_kernel(%arg0: i32, %arg1: memref<128x576xf32, #tpu.memory_space<vmem>>, %arg2: memref<576x32xf32, #tpu.memory_space<vmem>>, %arg3: memref<1x32xf32, #tpu.memory_space<vmem>>, %arg4: memref<1x32xf32, #tpu.memory_space<vmem>>, %arg5: memref<128x32xf32, #tpu.memory_space<vmem>>) attributes {dimension_semantics = [#tpu.dimension_semantics<arbitrary>], iteration_bounds = array<i64: 1>, scalar_prefetch = 0 : i64, scratch_operands = 0 : i64, tpu.core_type = #tpu.core_type<tc>, window_params = [{pipeline_mode = #tpu.pipeline_mode<synchronous>, transform_indices = @transform_0, window_bounds = array<i64: 128, 576>}, {pipeline_mode = #tpu.pipeline_mode<synchronous>, transform_indices = @transform_1, window_bounds = array<i64: 576, 32>}, {pipeline_mode = #tpu.pipeline_mode<synchronous>, transform_indices = @transform_2, window_bounds = array<i64: 1, 32>}, {pipeline_mode = #tpu.pipeline_mode<synchronous>, transform_indices = @transform_3, window_bounds = array<i64: 1, 32>}, {pipeline_mode = #tpu.pipeline_mode<synchronous>, transform_indices = @transform_4, window_bounds = array<i64: 128, 32>}]} {
    %c0 = arith.constant 0 : index
    %c0_0 = arith.constant 0 : index
    %0 = vector.load %arg1[%c0, %c0_0] : memref<128x576xf32, #tpu.memory_space<vmem>>, vector<128x576xf32>
    %c0_1 = arith.constant 0 : index
    %c0_2 = arith.constant 0 : index
    %1 = vector.load %arg2[%c0_1, %c0_2] : memref<576x32xf32, #tpu.memory_space<vmem>>, vector<576x32xf32>
    %cst = arith.constant dense<0.000000e+00> : vector<128x32xf32>
    %2 = tpu.matmul %0, %1, %cst {dimension_numbers = #tpu.dot_dimension_numbers<[1], [0], [0], [1], [0, 0, 1, 1], [], []>} : vector<128x576xf32>, vector<576x32xf32>, vector<128x32xf32> -> vector<128x32xf32>
    %cst_3 = arith.constant dense<0.000000e+00> : vector<32xf32>
    %3 = vector.multi_reduction <add>, %2, %cst_3 [0] : vector<128x32xf32> to vector<32xf32>
    %4 = vector.shape_cast %3 : vector<32xf32> to vector<1x32xf32>
    %cst_4 = arith.constant 1.280000e+02 : f32
    %5 = vector.broadcast %cst_4 : f32 to vector<1x32xf32>
    %6 = arith.divf %4, %5 : vector<1x32xf32>
    %7 = vector.broadcast %6 : vector<1x32xf32> to vector<128x32xf32>
    %8 = arith.subf %2, %7 : vector<128x32xf32>
    %9 = arith.mulf %8, %8 : vector<128x32xf32>
    %cst_5 = arith.constant dense<0.000000e+00> : vector<32xf32>
    %10 = vector.multi_reduction <add>, %9, %cst_5 [0] : vector<128x32xf32> to vector<32xf32>
    %11 = vector.shape_cast %10 : vector<32xf32> to vector<1x32xf32>
    %cst_6 = arith.constant 1.280000e+02 : f32
    %12 = vector.broadcast %cst_6 : f32 to vector<1x32xf32>
    %13 = arith.divf %11, %12 : vector<1x32xf32>
    %14 = vector.broadcast %6 : vector<1x32xf32> to vector<128x32xf32>
    %15 = arith.subf %2, %14 : vector<128x32xf32>
    %cst_7 = arith.constant 9.99999974E-6 : f32
    %16 = vector.broadcast %cst_7 : f32 to vector<1x32xf32>
    %17 = arith.addf %13, %16 : vector<1x32xf32>
    %18 = math.rsqrt %17 : vector<1x32xf32>
    %19 = vector.broadcast %18 : vector<1x32xf32> to vector<128x32xf32>
    %20 = arith.mulf %15, %19 : vector<128x32xf32>
    %c0_8 = arith.constant 0 : index
    %c0_9 = arith.constant 0 : index
    %21 = vector.load %arg3[%c0_8, %c0_9] : memref<1x32xf32, #tpu.memory_space<vmem>>, vector<1x32xf32>
    %22 = vector.broadcast %21 : vector<1x32xf32> to vector<128x32xf32>
    %23 = arith.mulf %20, %22 : vector<128x32xf32>
    %c0_10 = arith.constant 0 : index
    %c0_11 = arith.constant 0 : index
    %24 = vector.load %arg4[%c0_10, %c0_11] : memref<1x32xf32, #tpu.memory_space<vmem>>, vector<1x32xf32>
    %25 = vector.broadcast %24 : vector<1x32xf32> to vector<128x32xf32>
    %26 = arith.addf %23, %25 : vector<128x32xf32>
    %cst_12 = arith.constant 0.000000e+00 : f32
    %27 = vector.broadcast %cst_12 : f32 to vector<128x32xf32>
    %28 = arith.maximumf %26, %27 : vector<128x32xf32>
    %c0_13 = arith.constant 0 : index
    %c0_14 = arith.constant 0 : index
    %29 = vector.load %arg5[%c0_13, %c0_14] : memref<128x32xf32, #tpu.memory_space<vmem>>, vector<128x32xf32>
    tpu.vector_store %arg5[%c0_13, %c0_14], %28 {strides = array<i32>} : memref<128x32xf32, #tpu.memory_space<vmem>>, vector<128x32xf32>,
    return
  }
  func.func @transform_0(%arg0: i32) -> (i32, i32) {
    %c0_i32 = arith.constant 0 : i32
    %c0_i32_0 = arith.constant 0 : i32
    %c0_i32_1 = arith.constant 0 : i32
    return %c0_i32, %c0_i32_0 : i32, i32
  }
  func.func @transform_1(%arg0: i32) -> (i32, i32) {
    %c0_i32 = arith.constant 0 : i32
    %c0_i32_0 = arith.constant 0 : i32
    %c0_i32_1 = arith.constant 0 : i32
    return %c0_i32, %c0_i32_0 : i32, i32
  }
  func.func @transform_2(%arg0: i32) -> (i32, i32) {
    %c0_i32 = arith.constant 0 : i32
    %c0_i32_0 = arith.constant 0 : i32
    %c0_i32_1 = arith.constant 0 : i32
    return %c0_i32, %c0_i32_0 : i32, i32
  }
  func.func @transform_3(%arg0: i32) -> (i32, i32) {
    %c0_i32 = arith.constant 0 : i32
    %c0_i32_0 = arith.constant 0 : i32
    %c0_i32_1 = arith.constant 0 : i32
    return %c0_i32, %c0_i32_0 : i32, i32
  }
  func.func @transform_4(%arg0: i32) -> (i32, i32) {
    %c0_i32 = arith.constant 0 : i32
    %c0_i32_0 = arith.constant 0 : i32
    %c0_i32_1 = arith.constant 0 : i32
    return %c0_i32, %c0_i32_0 : i32, i32
  }
}

module attributes {stable_mosaic.version = 11 : i64} {
  func.func @_conv_bn_relu_kernel(%arg0: i32, %arg1: memref<450x128xf32, #tpu.memory_space<vmem>>, %arg2: memref<128x16xf32, #tpu.memory_space<vmem>>, %arg3: memref<1x16xf32, #tpu.memory_space<vmem>>, %arg4: memref<1x16xf32, #tpu.memory_space<vmem>>, %arg5: memref<450x16xf32, #tpu.memory_space<vmem>>) attributes {dimension_semantics = [#tpu.dimension_semantics<arbitrary>], iteration_bounds = array<i64: 1>, scalar_prefetch = 0 : i64, scratch_operands = 0 : i64, tpu.core_type = #tpu.core_type<tc>, window_params = [{pipeline_mode = #tpu.pipeline_mode<synchronous>, transform_indices = @transform_0, window_bounds = array<i64: 450, 128>}, {pipeline_mode = #tpu.pipeline_mode<synchronous>, transform_indices = @transform_1, window_bounds = array<i64: 128, 16>}, {pipeline_mode = #tpu.pipeline_mode<synchronous>, transform_indices = @transform_2, window_bounds = array<i64: 1, 16>}, {pipeline_mode = #tpu.pipeline_mode<synchronous>, transform_indices = @transform_3, window_bounds = array<i64: 1, 16>}, {pipeline_mode = #tpu.pipeline_mode<synchronous>, transform_indices = @transform_4, window_bounds = array<i64: 450, 16>}]} {
    %c0 = arith.constant 0 : index
    %c0_0 = arith.constant 0 : index
    %0 = vector.load %arg1[%c0, %c0_0] : memref<450x128xf32, #tpu.memory_space<vmem>>, vector<450x128xf32>
    %c0_1 = arith.constant 0 : index
    %c0_2 = arith.constant 0 : index
    %1 = vector.load %arg2[%c0_1, %c0_2] : memref<128x16xf32, #tpu.memory_space<vmem>>, vector<128x16xf32>
    %cst = arith.constant dense<0.000000e+00> : vector<450x16xf32>
    %2 = tpu.matmul %0, %1, %cst {dimension_numbers = #tpu.dot_dimension_numbers<[1], [0], [0], [1], [0, 0, 1, 1], [], []>} : vector<450x128xf32>, vector<128x16xf32>, vector<450x16xf32> -> vector<450x16xf32>
    %cst_3 = arith.constant dense<0.000000e+00> : vector<16xf32>
    %3 = vector.multi_reduction <add>, %2, %cst_3 [0] : vector<450x16xf32> to vector<16xf32>
    %4 = vector.shape_cast %3 : vector<16xf32> to vector<1x16xf32>
    %cst_4 = arith.constant 4.500000e+02 : f32
    %5 = vector.broadcast %cst_4 : f32 to vector<1x16xf32>
    %6 = arith.divf %4, %5 : vector<1x16xf32>
    %7 = vector.broadcast %6 : vector<1x16xf32> to vector<450x16xf32>
    %8 = arith.subf %2, %7 : vector<450x16xf32>
    %9 = arith.mulf %8, %8 : vector<450x16xf32>
    %cst_5 = arith.constant dense<0.000000e+00> : vector<16xf32>
    %10 = vector.multi_reduction <add>, %9, %cst_5 [0] : vector<450x16xf32> to vector<16xf32>
    %11 = vector.shape_cast %10 : vector<16xf32> to vector<1x16xf32>
    %cst_6 = arith.constant 4.500000e+02 : f32
    %12 = vector.broadcast %cst_6 : f32 to vector<1x16xf32>
    %13 = arith.divf %11, %12 : vector<1x16xf32>
    %14 = vector.broadcast %6 : vector<1x16xf32> to vector<450x16xf32>
    %15 = arith.subf %2, %14 : vector<450x16xf32>
    %cst_7 = arith.constant 9.99999974E-6 : f32
    %16 = vector.broadcast %cst_7 : f32 to vector<1x16xf32>
    %17 = arith.addf %13, %16 : vector<1x16xf32>
    %18 = math.rsqrt %17 : vector<1x16xf32>
    %19 = vector.broadcast %18 : vector<1x16xf32> to vector<450x16xf32>
    %20 = arith.mulf %15, %19 : vector<450x16xf32>
    %c0_8 = arith.constant 0 : index
    %c0_9 = arith.constant 0 : index
    %21 = vector.load %arg3[%c0_8, %c0_9] : memref<1x16xf32, #tpu.memory_space<vmem>>, vector<1x16xf32>
    %22 = vector.broadcast %21 : vector<1x16xf32> to vector<450x16xf32>
    %23 = arith.mulf %20, %22 : vector<450x16xf32>
    %c0_10 = arith.constant 0 : index
    %c0_11 = arith.constant 0 : index
    %24 = vector.load %arg4[%c0_10, %c0_11] : memref<1x16xf32, #tpu.memory_space<vmem>>, vector<1x16xf32>
    %25 = vector.broadcast %24 : vector<1x16xf32> to vector<450x16xf32>
    %26 = arith.addf %23, %25 : vector<450x16xf32>
    %cst_12 = arith.constant 0.000000e+00 : f32
    %27 = vector.broadcast %cst_12 : f32 to vector<450x16xf32>
    %28 = arith.maximumf %26, %27 : vector<450x16xf32>
    %c0_13 = arith.constant 0 : index
    %c0_14 = arith.constant 0 : index
    %29 = vector.load %arg5[%c0_13, %c0_14] : memref<450x16xf32, #tpu.memory_space<vmem>>, vector<450x16xf32>
    tpu.vector_store %arg5[%c0_13, %c0_14], %28 {strides = array<i32>} : memref<450x16xf32, #tpu.memory_space<vmem>>, vector<450x16xf32>,
    return
  }
  func.func @transform_0(%arg0: i32) -> (i32, i32) {
    %c0_i32 = arith.constant 0 : i32
    %c0_i32_0 = arith.constant 0 : i32
    %c0_i32_1 = arith.constant 0 : i32
    return %c0_i32, %c0_i32_0 : i32, i32
  }
  func.func @transform_1(%arg0: i32) -> (i32, i32) {
    %c0_i32 = arith.constant 0 : i32
    %c0_i32_0 = arith.constant 0 : i32
    %c0_i32_1 = arith.constant 0 : i32
    return %c0_i32, %c0_i32_0 : i32, i32
  }
  func.func @transform_2(%arg0: i32) -> (i32, i32) {
    %c0_i32 = arith.constant 0 : i32
    %c0_i32_0 = arith.constant 0 : i32
    %c0_i32_1 = arith.constant 0 : i32
    return %c0_i32, %c0_i32_0 : i32, i32
  }
  func.func @transform_3(%arg0: i32) -> (i32, i32) {
    %c0_i32 = arith.constant 0 : i32
    %c0_i32_0 = arith.constant 0 : i32
    %c0_i32_1 = arith.constant 0 : i32
    return %c0_i32, %c0_i32_0 : i32, i32
  }
  func.func @transform_4(%arg0: i32) -> (i32, i32) {
    %c0_i32 = arith.constant 0 : i32
    %c0_i32_0 = arith.constant 0 : i32
    %c0_i32_1 = arith.constant 0 : i32
    return %c0_i32, %c0_i32_0 : i32, i32
  }
}

module attributes {stable_mosaic.version = 11 : i64} {
  func.func @_convT_out_kernel(%arg0: i32, %arg1: memref<1568x64xf32, #tpu.memory_space<vmem>>, %arg2: memref<1x64xf32, #tpu.memory_space<vmem>>, %arg3: memref<1x1xf32, #tpu.memory_space<vmem>>, %arg4: memref<1x1568xf32, #tpu.memory_space<vmem>>) attributes {dimension_semantics = [#tpu.dimension_semantics<arbitrary>], iteration_bounds = array<i64: 1>, scalar_prefetch = 0 : i64, scratch_operands = 0 : i64, tpu.core_type = #tpu.core_type<tc>, window_params = [{pipeline_mode = #tpu.pipeline_mode<synchronous>, transform_indices = @transform_0, window_bounds = array<i64: 1568, 64>}, {pipeline_mode = #tpu.pipeline_mode<synchronous>, transform_indices = @transform_1, window_bounds = array<i64: 1, 64>}, {pipeline_mode = #tpu.pipeline_mode<synchronous>, transform_indices = @transform_2, window_bounds = array<i64: 1, 1>}, {pipeline_mode = #tpu.pipeline_mode<synchronous>, transform_indices = @transform_3, window_bounds = array<i64: 1, 1568>}]} {
    %c0 = arith.constant 0 : index
    %c0_0 = arith.constant 0 : index
    %0 = vector.load %arg2[%c0, %c0_0] : memref<1x64xf32, #tpu.memory_space<vmem>>, vector<1x64xf32>
    %c0_1 = arith.constant 0 : index
    %c0_2 = arith.constant 0 : index
    %1 = vector.load %arg1[%c0_1, %c0_2] : memref<1568x64xf32, #tpu.memory_space<vmem>>, vector<1568x64xf32>
    %cst = arith.constant dense<0.000000e+00> : vector<1x1568xf32>
    %2 = tpu.matmul %0, %1, %cst {dimension_numbers = #tpu.dot_dimension_numbers<[1], [1], [0], [0], [0, 0, 1, 0], [], []>} : vector<1x64xf32>, vector<1568x64xf32>, vector<1x1568xf32> -> vector<1x1568xf32>
    %c0_3 = arith.constant 0 : index
    %c0_4 = arith.constant 0 : index
    %3 = vector.load %arg3[%c0_3, %c0_4] : memref<1x1xf32, #tpu.memory_space<vmem>>, vector<1x1xf32>
    %4 = vector.broadcast %3 : vector<1x1xf32> to vector<1x1568xf32>
    %5 = arith.addf %2, %4 : vector<1x1568xf32>
    %c0_5 = arith.constant 0 : index
    %c0_6 = arith.constant 0 : index
    %6 = vector.load %arg4[%c0_5, %c0_6] : memref<1x1568xf32, #tpu.memory_space<vmem>>, vector<1x1568xf32>
    tpu.vector_store %arg4[%c0_5, %c0_6], %5 {strides = array<i32>} : memref<1x1568xf32, #tpu.memory_space<vmem>>, vector<1x1568xf32>,
    return
  }
  func.func @transform_0(%arg0: i32) -> (i32, i32) {
    %c0_i32 = arith.constant 0 : i32
    %c0_i32_0 = arith.constant 0 : i32
    %c0_i32_1 = arith.constant 0 : i32
    return %c0_i32, %c0_i32_0 : i32, i32
  }
  func.func @transform_1(%arg0: i32) -> (i32, i32) {
    %c0_i32 = arith.constant 0 : i32
    %c0_i32_0 = arith.constant 0 : i32
    %c0_i32_1 = arith.constant 0 : i32
    return %c0_i32, %c0_i32_0 : i32, i32
  }
  func.func @transform_2(%arg0: i32) -> (i32, i32) {
    %c0_i32 = arith.constant 0 : i32
    %c0_i32_0 = arith.constant 0 : i32
    %c0_i32_1 = arith.constant 0 : i32
    return %c0_i32, %c0_i32_0 : i32, i32
  }
  func.func @transform_3(%arg0: i32) -> (i32, i32) {
    %c0_i32 = arith.constant 0 : i32
    %c0_i32_0 = arith.constant 0 : i32
    %c0_i32_1 = arith.constant 0 : i32
    return %c0_i32, %c0_i32_0 : i32, i32
  }
}

</mosaic_0001>

<llo_original>
// kernel: forward.7
$region0: #{forward.7}
  #allocation0 [shape = 'u32[]', space=smem, size = 0x4, offset = 0x4, fixed_abs, tag = 'smem constant byte address 0x4 - core index']
  #allocation1 [shape = 'u32[144,128]{1,0:T(1,128)}', space=vmem, size = 0x12000, scoped, tag = 'internal scratch']
  %s0 = inlined_call_operand.vmem [shape: f32[450,1], index: 0, kind: input, shape index: {}]
  %s1 = inlined_call_operand.hbm [shape: f32[1,16], index: 1, kind: input, shape index: {}]
  %s2 = inlined_call_operand.hbm [shape: f32[1,16], index: 2, kind: input, shape index: {}]
  %s3 = inlined_call_operand.hbm [shape: f32[1,16], index: 3, kind: input, shape index: {}]
  %s4 = inlined_call_operand.vmem [shape: f32[450,16], index: 4, kind: output, shape index: {}]
  %s5 = sld [smem:[#allocation0]]
  $region38: #{forward.7} parent=0
    _
  %s7 = ssub.s32 1, %s5
  %s8 = scalar_select 0, %s7, %s5
  $region1: #{forward.7} parent=0
    #allocation2 [shape = 'u8[512]{0}', space=vmem, size = 0x400, scoped, tag = 'input window, operand 1, single buffered']
    #allocation3 [shape = 's32[1]{0}', space=sflag, size = 0x4, scoped, tag = 'scoped memory for forward.7']
    #allocation4 [shape = 'u8[512]{0}', space=vmem, size = 0x400, scoped, tag = 'input window, operand 2, single buffered']
    #allocation5 [shape = 's32[1]{0}', space=sflag, size = 0x4, scoped, tag = 'scoped memory for forward.7']
    #allocation6 [shape = 'u8[512]{0}', space=vmem, size = 0x400, scoped, tag = 'input window, operand 3, single buffered']
    %9 = vsyncpa [#allocation3], 0
    %10 = vsyncpa [#allocation5], 0
    // Predicated region
    $region2: #{forward.7} parent=1 // pred_check
      _
    $region3: #{forward.7} parent=1 // pred_check_branch
      %12 = sbr.rel (0) target = $region5
    $region4: #{forward.7} parent=1 // pred_region
      _
    $region5: #{forward.7} parent=1 // pred_fallthru
      _
    // Predicated region
    $region6: #{forward.7} parent=1 // pred_check
      _
    $region7: #{forward.7} parent=1 // pred_check_branch
      %14 = sbr.rel (0) target = $region9
    $region8: #{forward.7} parent=1 // pred_region
      %s16 = ssub.s32 16, 16
      %17 = vsyncadd [#allocation3], %s16
      %s19 = sshll.u32 [#allocation2], 4
      %s20 = int_to_ptr.vmem [resolvable:$true] %s19
      %22 = dma.hbm_to_vmem [thread:$0]  %s1, 16, %s20, [#allocation3]
    $region9: #{forward.7} parent=1 // pred_fallthru
      _
    // Predicated region
    $region10: #{forward.7} parent=1 // pred_check
      _
    $region11: #{forward.7} parent=1 // pred_check_branch
      %24 = sbr.rel (0) target = $region13
    $region12: #{forward.7} parent=1 // pred_region
      %s26 = ssub.s32 16, 16
      %27 = vsyncadd [#allocation5], %s26
      %s29 = sshll.u32 [#allocation4], 4
      %s30 = int_to_ptr.vmem [resolvable:$true] %s29
      %32 = dma.hbm_to_vmem [thread:$0]  %s2, 16, %s30, [#allocation5]
    $region13: #{forward.7} parent=1 // pred_fallthru
      _
    // Predicated region
    $region14: #{forward.7} parent=1 // pred_check
      _
    $region15: #{forward.7} parent=1 // pred_check_branch
      %34 = sbr.rel (0) target = $region17
    $region16: #{forward.7} parent=1 // pred_region
      %s36 = ssub.s32 16, 16
      %37 = vsyncadd [#allocation5], %s36
      %s39 = sshll.u32 [#allocation6], 4
      %s40 = int_to_ptr.vmem [resolvable:$true] %s39
      %42 = dma.hbm_to_vmem [thread:$0]  %s3, 16, %s40, [#allocation5]
    $region17: #{forward.7} parent=1 // pred_fallthru
      _
    // Predicated region
    $region18: #{forward.7} parent=1 // pred_check
      _
    $region19: #{forward.7} parent=1 // pred_check_branch
      %44 = sbr.rel (0) target = $region21
    $region20: #{forward.7} parent=1 // pred_region
      %45 = dma.done [#allocation3], 16
    $region21: #{forward.7} parent=1 // pred_fallthru
      _
    // Predicated region
    $region22: #{forward.7} parent=1 // pred_check
      _
    $region23: #{forward.7} parent=1 // pred_check_branch
      %47 = sbr.rel (0) target = $region25
    $region24: #{forward.7} parent=1 // pred_region
      %48 = dma.done [#allocation5], 16
    $region25: #{forward.7} parent=1 // pred_fallthru
      _
    // Predicated region
    $region26: #{forward.7} parent=1 // pred_check
      _
    $region27: #{forward.7} parent=1 // pred_check_branch
      %50 = sbr.rel (0) target = $region29
    $region28: #{forward.7} parent=1 // pred_region
      %51 = dma.done [#allocation5], 16
    $region29: #{forward.7} parent=1 // pred_fallthru
      _
    %v52 = vld [vmem:[%s0] sm:$0xff]
    %v53 = vld [vmem:[%s0 + $0x8] sm:$0xff]
    %v54 = vld [vmem:[%s0 + $0x10] sm:$0xff]
    %v55 = vld [vmem:[%s0 + $0x18] sm:$0xff]
    %v56 = vld [vmem:[%s0 + $0x20] sm:$0xff]
    %v57 = vld [vmem:[%s0 + $0x28] sm:$0xff]
    %v58 = vld [vmem:[%s0 + $0x30] sm:$0xff]
    %v59 = vld [vmem:[%s0 + $0x38] sm:$0xff]
    %v60 = vld [vmem:[%s0 + $0x40] sm:$0xff]
    %v61 = vld [vmem:[%s0 + $0x48] sm:$0xff]
    %v62 = vld [vmem:[%s0 + $0x50] sm:$0xff]
    %v63 = vld [vmem:[%s0 + $0x58] sm:$0xff]
    %v64 = vld [vmem:[%s0 + $0x60] sm:$0xff]
    %v65 = vld [vmem:[%s0 + $0x68] sm:$0xff]
    %v66 = vld [vmem:[%s0 + $0x70] sm:$0xff]
    %v67 = vld [vmem:[%s0 + $0x78] sm:$0xff]
    %v68 = vld [vmem:[%s0 + $0x80] sm:$0xff]
    %v69 = vld [vmem:[%s0 + $0x88] sm:$0xff]
    %v70 = vld [vmem:[%s0 + $0x90] sm:$0xff]
    %v71 = vld [vmem:[%s0 + $0x98] sm:$0xff]
    %v72 = vld [vmem:[%s0 + $0xa0] sm:$0xff]
    %v73 = vld [vmem:[%s0 + $0xa8] sm:$0xff]
    %v74 = vld [vmem:[%s0 + $0xb0] sm:$0xff]
    %v75 = vld [vmem:[%s0 + $0xb8] sm:$0xff]
    %v76 = vld [vmem:[%s0 + $0xc0] sm:$0xff]
    %v77 = vld [vmem:[%s0 + $0xc8] sm:$0xff]
    %v78 = vld [vmem:[%s0 + $0xd0] sm:$0xff]
    %v79 = vld [vmem:[%s0 + $0xd8] sm:$0xff]
    %v80 = vld [vmem:[%s0 + $0xe0] sm:$0xff]
    %v81 = vld [vmem:[%s0 + $0xe8] sm:$0xff]
    %v82 = vld [vmem:[%s0 + $0xf0] sm:$0xff]
    %v83 = vld [vmem:[%s0 + $0xf8] sm:$0xff]
    %v84 = vld [vmem:[%s0 + $0x100] sm:$0xff]
    %v85 = vld [vmem:[%s0 + $0x108] sm:$0xff]
    %v86 = vld [vmem:[%s0 + $0x110] sm:$0xff]
    %v87 = vld [vmem:[%s0 + $0x118] sm:$0xff]
    %v88 = vld [vmem:[%s0 + $0x120] sm:$0xff]
    %v89 = vld [vmem:[%s0 + $0x128] sm:$0xff]
    %v90 = vld [vmem:[%s0 + $0x130] sm:$0xff]
    %v91 = vld [vmem:[%s0 + $0x138] sm:$0xff]
    %v92 = vld [vmem:[%s0 + $0x140] sm:$0xff]
    %v93 = vld [vmem:[%s0 + $0x148] sm:$0xff]
    %v94 = vld [vmem:[%s0 + $0x150] sm:$0xff]
    %v95 = vld [vmem:[%s0 + $0x158] sm:$0xff]
    %v96 = vld [vmem:[%s0 + $0x160] sm:$0xff]
    %v97 = vld [vmem:[%s0 + $0x168] sm:$0xff]
    %v98 = vld [vmem:[%s0 + $0x170] sm:$0xff]
    %v99 = vld [vmem:[%s0 + $0x178] sm:$0xff]
    %v100 = vld [vmem:[%s0 + $0x180] sm:$0xff]
    %v101 = vld [vmem:[%s0 + $0x188] sm:$0xff]
    %v102 = vld [vmem:[%s0 + $0x190] sm:$0xff]
    %v103 = vld [vmem:[%s0 + $0x198] sm:$0xff]
    %v104 = vld [vmem:[%s0 + $0x1a0] sm:$0xff]
    %v105 = vld [vmem:[%s0 + $0x1a8] sm:$0xff]
    %v106 = vld [vmem:[%s0 + $0x1b0] sm:$0xff]
    %v107 = vld [vmem:[%s0 + $0x1b8] sm:$0xff]
    %v108 = vld [vmem:[%s0 + $0x1c0] sm:$0x3]
    %v109 = vld [vmem:[#allocation2] sm:$0x1]
    %111 = vset.pattern.permute.xlu0 0
    %112 = vperm.xlu0 %111, %v52
    %v113 = vpop.permute.xlu0 %112
    %116 = vset.pattern.permute.xlu0 0
    %117 = vperm.xlu0 %116, %v53
    %v118 = vpop.permute.xlu0 %117
    %121 = vset.pattern.permute.xlu0 0
    %122 = vperm.xlu0 %121, %v54
    %v123 = vpop.permute.xlu0 %122
    %126 = vset.pattern.permute.xlu0 0
    %127 = vperm.xlu0 %126, %v55
    %v128 = vpop.permute.xlu0 %127
    %131 = vset.pattern.permute.xlu0 0
    %132 = vperm.xlu0 %131, %v56
    %v133 = vpop.permute.xlu0 %132
    %136 = vset.pattern.permute.xlu0 0
    %137 = vperm.xlu0 %136, %v57
    %v138 = vpop.permute.xlu0 %137
    %141 = vset.pattern.permute.xlu0 0
    %142 = vperm.xlu0 %141, %v58
    %v143 = vpop.permute.xlu0 %142
    %146 = vset.pattern.permute.xlu0 0
    %147 = vperm.xlu0 %146, %v59
    %v148 = vpop.permute.xlu0 %147
    %151 = vset.pattern.permute.xlu0 0
    %152 = vperm.xlu0 %151, %v60
    %v153 = vpop.permute.xlu0 %152
    %156 = vset.pattern.permute.xlu0 0
    %157 = vperm.xlu0 %156, %v61
    %v158 = vpop.permute.xlu0 %157
    %161 = vset.pattern.permute.xlu0 0
    %162 = vperm.xlu0 %161, %v62
    %v163 = vpop.permute.xlu0 %162
    %166 = vset.pattern.permute.xlu0 0
    %167 = vperm.xlu0 %166, %v63
    %v168 = vpop.permute.xlu0 %167
    %171 = vset.pattern.permute.xlu0 0
    %172 = vperm.xlu0 %171, %v64
    %v173 = vpop.permute.xlu0 %172
    %176 = vset.pattern.permute.xlu0 0
    %177 = vperm.xlu0 %176, %v65
    %v178 = vpop.permute.xlu0 %177
    %181 = vset.pattern.permute.xlu0 0
    %182 = vperm.xlu0 %181, %v66
    %v183 = vpop.permute.xlu0 %182
    %186 = vset.pattern.permute.xlu0 0
    %187 = vperm.xlu0 %186, %v67
    %v188 = vpop.permute.xlu0 %187
    %191 = vset.pattern.permute.xlu0 0
    %192 = vperm.xlu0 %191, %v68
    %v193 = vpop.permute.xlu0 %192
    %196 = vset.pattern.permute.xlu0 0
    %197 = vperm.xlu0 %196, %v69
    %v198 = vpop.permute.xlu0 %197
    %201 = vset.pattern.permute.xlu0 0
    %202 = vperm.xlu0 %201, %v70
    %v203 = vpop.permute.xlu0 %202
    %206 = vset.pattern.permute.xlu0 0
    %207 = vperm.xlu0 %206, %v71
    %v208 = vpop.permute.xlu0 %207
    %211 = vset.pattern.permute.xlu0 0
    %212 = vperm.xlu0 %211, %v72
    %v213 = vpop.permute.xlu0 %212
    %216 = vset.pattern.permute.xlu0 0
    %217 = vperm.xlu0 %216, %v73
    %v218 = vpop.permute.xlu0 %217
    %221 = vset.pattern.permute.xlu0 0
    %222 = vperm.xlu0 %221, %v74
    %v223 = vpop.permute.xlu0 %222
    %226 = vset.pattern.permute.xlu0 0
    %227 = vperm.xlu0 %226, %v75
    %v228 = vpop.permute.xlu0 %227
    %231 = vset.pattern.permute.xlu0 0
    %232 = vperm.xlu0 %231, %v76
    %v233 = vpop.permute.xlu0 %232
    %236 = vset.pattern.permute.xlu0 0
    %237 = vperm.xlu0 %236, %v77
    %v238 = vpop.permute.xlu0 %237
    %241 = vset.pattern.permute.xlu0 0
    %242 = vperm.xlu0 %241, %v78
    %v243 = vpop.permute.xlu0 %242
    %246 = vset.pattern.permute.xlu0 0
    %247 = vperm.xlu0 %246, %v79
    %v248 = vpop.permute.xlu0 %247
    %251 = vset.pattern.permute.xlu0 0
    %252 = vperm.xlu0 %251, %v80
    %v253 = vpop.permute.xlu0 %252
    %256 = vset.pattern.permute.xlu0 0
    %257 = vperm.xlu0 %256, %v81
    %v258 = vpop.permute.xlu0 %257
    %261 = vset.pattern.permute.xlu0 0
    %262 = vperm.xlu0 %261, %v82
    %v263 = vpop.permute.xlu0 %262
    %266 = vset.pattern.permute.xlu0 0
    %267 = vperm.xlu0 %266, %v83
    %v268 = vpop.permute.xlu0 %267
    %271 = vset.pattern.permute.xlu0 0
    %272 = vperm.xlu0 %271, %v84
    %v273 = vpop.permute.xlu0 %272
    %276 = vset.pattern.permute.xlu0 0
    %277 = vperm.xlu0 %276, %v85
    %v278 = vpop.permute.xlu0 %277
    %281 = vset.pattern.permute.xlu0 0
    %282 = vperm.xlu0 %281, %v86
    %v283 = vpop.permute.xlu0 %282
    %286 = vset.pattern.permute.xlu0 0
    %287 = vperm.xlu0 %286, %v87
    %v288 = vpop.permute.xlu0 %287
    %291 = vset.pattern.permute.xlu0 0
    %292 = vperm.xlu0 %291, %v88
    %v293 = vpop.permute.xlu0 %292
    %296 = vset.pattern.permute.xlu0 0
    %297 = vperm.xlu0 %296, %v89
    %v298 = vpop.permute.xlu0 %297
    %301 = vset.pattern.permute.xlu0 0
    %302 = vperm.xlu0 %301, %v90
    %v303 = vpop.permute.xlu0 %302
    %306 = vset.pattern.permute.xlu0 0
    %307 = vperm.xlu0 %306, %v91
    %v308 = vpop.permute.xlu0 %307
    %311 = vset.pattern.permute.xlu0 0
    %312 = vperm.xlu0 %311, %v92
    %v313 = vpop.permute.xlu0 %312
    %316 = vset.pattern.permute.xlu0 0
    %317 = vperm.xlu0 %316, %v93
    %v318 = vpop.permute.xlu0 %317
    %321 = vset.pattern.permute.xlu0 0
    %322 = vperm.xlu0 %321, %v94
    %v323 = vpop.permute.xlu0 %322
    %326 = vset.pattern.permute.xlu0 0
    %327 = vperm.xlu0 %326, %v95
    %v328 = vpop.permute.xlu0 %327
    %331 = vset.pattern.permute.xlu0 0
    %332 = vperm.xlu0 %331, %v96
    %v333 = vpop.permute.xlu0 %332
    %336 = vset.pattern.permute.xlu0 0
    %337 = vperm.xlu0 %336, %v97
    %v338 = vpop.permute.xlu0 %337
    %341 = vset.pattern.permute.xlu0 0
    %342 = vperm.xlu0 %341, %v98
    %v343 = vpop.permute.xlu0 %342
    %346 = vset.pattern.permute.xlu0 0
    %347 = vperm.xlu0 %346, %v99
    %v348 = vpop.permute.xlu0 %347
    %351 = vset.pattern.permute.xlu0 0
    %352 = vperm.xlu0 %351, %v100
    %v353 = vpop.permute.xlu0 %352
    %356 = vset.pattern.permute.xlu0 0
    %357 = vperm.xlu0 %356, %v101
    %v358 = vpop.permute.xlu0 %357
    %361 = vset.pattern.permute.xlu0 0
    %362 = vperm.xlu0 %361, %v102
    %v363 = vpop.permute.xlu0 %362
    %366 = vset.pattern.permute.xlu0 0
    %367 = vperm.xlu0 %366, %v103
    %v368 = vpop.permute.xlu0 %367
    %371 = vset.pattern.permute.xlu0 0
    %372 = vperm.xlu0 %371, %v104
    %v373 = vpop.permute.xlu0 %372
    %376 = vset.pattern.permute.xlu0 0
    %377 = vperm.xlu0 %376, %v105
    %v378 = vpop.permute.xlu0 %377
    %381 = vset.pattern.permute.xlu0 0
    %382 = vperm.xlu0 %381, %v106
    %v383 = vpop.permute.xlu0 %382
    %386 = vset.pattern.permute.xlu0 0
    %387 = vperm.xlu0 %386, %v107
    %v388 = vpop.permute.xlu0 %387
    %391 = vset.pattern.permute.xlu0 0
    %392 = vperm.xlu0 %391, %v108
    %v393 = vpop.permute.xlu0 %392
    %v396 = vlaneseq
    %v397 = vshrl.u32 %v396, 7
    %v398 = vsub.s32 0, %v397
    %v399 = vrot.slane %v109, %v398
    %v401 = vmul.f32 %v113, %v399
    %v402 = vmul.f32 %v118, %v399
    %v403 = vmul.f32 %v123, %v399
    %v404 = vmul.f32 %v128, %v399
    %v405 = vmul.f32 %v133, %v399
    %v406 = vmul.f32 %v138, %v399
    %v407 = vmul.f32 %v143, %v399
    %v408 = vmul.f32 %v148, %v399
    %v409 = vmul.f32 %v153, %v399
    %v410 = vmul.f32 %v158, %v399
    %v411 = vmul.f32 %v163, %v399
    %v412 = vmul.f32 %v168, %v399
    %v413 = vmul.f32 %v173, %v399
    %v414 = vmul.f32 %v178, %v399
    %v415 = vmul.f32 %v183, %v399
    %v416 = vmul.f32 %v188, %v399
    %v417 = vmul.f32 %v193, %v399
    %v418 = vmul.f32 %v198, %v399
    %v419 = vmul.f32 %v203, %v399
    %v420 = vmul.f32 %v208, %v399
    %v421 = vmul.f32 %v213, %v399
    %v422 = vmul.f32 %v218, %v399
    %v423 = vmul.f32 %v223, %v399
    %v424 = vmul.f32 %v228, %v399
    %v425 = vmul.f32 %v233, %v399
    %v426 = vmul.f32 %v238, %v399
    %v427 = vmul.f32 %v243, %v399
    %v428 = vmul.f32 %v248, %v399
    %v429 = vmul.f32 %v253, %v399
    %v430 = vmul.f32 %v258, %v399
    %v431 = vmul.f32 %v263, %v399
    %v432 = vmul.f32 %v268, %v399
    %v433 = vmul.f32 %v273, %v399
    %v434 = vmul.f32 %v278, %v399
    %v435 = vmul.f32 %v283, %v399
    %v436 = vmul.f32 %v288, %v399
    %v437 = vmul.f32 %v293, %v399
    %v438 = vmul.f32 %v298, %v399
    %v439 = vmul.f32 %v303, %v399
    %v440 = vmul.f32 %v308, %v399
    %v441 = vmul.f32 %v313, %v399
    %v442 = vmul.f32 %v318, %v399
    %v443 = vmul.f32 %v323, %v399
    %v444 = vmul.f32 %v328, %v399
    %v445 = vmul.f32 %v333, %v399
    %v446 = vmul.f32 %v338, %v399
    %v447 = vmul.f32 %v343, %v399
    %v448 = vmul.f32 %v348, %v399
    %v449 = vmul.f32 %v353, %v399
    %v450 = vmul.f32 %v358, %v399
    %v451 = vmul.f32 %v363, %v399
    %v452 = vmul.f32 %v368, %v399
    %v453 = vmul.f32 %v373, %v399
    %v454 = vmul.f32 %v378, %v399
    %v455 = vmul.f32 %v383, %v399
    %v456 = vmul.f32 %v388, %v399
    %v457 = vmul.f32 %v393, %v399
    %vm458 = vcmask 130048
    %v459 = vsel %vm458, %v401, 0.0
    %v460 = vsel %vm458, %v402, 0.0
    %v461 = vadd.f32 %v459, %v460
    %v462 = vsel %vm458, %v403, 0.0
    %v463 = vadd.f32 %v461, %v462
    %v464 = vsel %vm458, %v404, 0.0
    %v465 = vadd.f32 %v463, %v464
    %v466 = vsel %vm458, %v405, 0.0
    %v467 = vadd.f32 %v465, %v466
    %v468 = vsel %vm458, %v406, 0.0
    %v469 = vadd.f32 %v467, %v468
    %v470 = vsel %vm458, %v407, 0.0
    %v471 = vadd.f32 %v469, %v470
    %v472 = vsel %vm458, %v408, 0.0
    %v473 = vadd.f32 %v471, %v472
    %v474 = vsel %vm458, %v409, 0.0
    %v475 = vadd.f32 %v473, %v474
    %v476 = vsel %vm458, %v410, 0.0
    %v477 = vadd.f32 %v475, %v476
    %v478 = vsel %vm458, %v411, 0.0
    %v479 = vadd.f32 %v477, %v478
    %v480 = vsel %vm458, %v412, 0.0
    %v481 = vadd.f32 %v479, %v480
    %v482 = vsel %vm458, %v413, 0.0
    %v483 = vadd.f32 %v481, %v482
    %v484 = vsel %vm458, %v414, 0.0
    %v485 = vadd.f32 %v483, %v484
    %v486 = vsel %vm458, %v415, 0.0
    %v487 = vadd.f32 %v485, %v486
    %v488 = vsel %vm458, %v416, 0.0
    %v489 = vadd.f32 %v487, %v488
    %v490 = vsel %vm458, %v417, 0.0
    %v491 = vadd.f32 %v489, %v490
    %v492 = vsel %vm458, %v418, 0.0
    %v493 = vadd.f32 %v491, %v492
    %v494 = vsel %vm458, %v419, 0.0
    %v495 = vadd.f32 %v493, %v494
    %v496 = vsel %vm458, %v420, 0.0
    %v497 = vadd.f32 %v495, %v496
    %v498 = vsel %vm458, %v421, 0.0
    %v499 = vadd.f32 %v497, %v498
    %v500 = vsel %vm458, %v422, 0.0
    %v501 = vadd.f32 %v499, %v500
    %v502 = vsel %vm458, %v423, 0.0
    %v503 = vadd.f32 %v501, %v502
    %v504 = vsel %vm458, %v424, 0.0
    %v505 = vadd.f32 %v503, %v504
    %v506 = vsel %vm458, %v425, 0.0
    %v507 = vadd.f32 %v505, %v506
    %v508 = vsel %vm458, %v426, 0.0
    %v509 = vadd.f32 %v507, %v508
    %v510 = vsel %vm458, %v427, 0.0
    %v511 = vadd.f32 %v509, %v510
    %v512 = vsel %vm458, %v428, 0.0
    %v513 = vadd.f32 %v511, %v512
    %v514 = vsel %vm458, %v429, 0.0
    %v515 = vadd.f32 %v513, %v514
    %v516 = vsel %vm458, %v430, 0.0
    %v517 = vadd.f32 %v515, %v516
    %v518 = vsel %vm458, %v431, 0.0
    %v519 = vadd.f32 %v517, %v518
    %v520 = vsel %vm458, %v432, 0.0
    %v521 = vadd.f32 %v519, %v520
    %v522 = vsel %vm458, %v433, 0.0
    %v523 = vadd.f32 %v521, %v522
    %v524 = vsel %vm458, %v434, 0.0
    %v525 = vadd.f32 %v523, %v524
    %v526 = vsel %vm458, %v435, 0.0
    %v527 = vadd.f32 %v525, %v526
    %v528 = vsel %vm458, %v436, 0.0
    %v529 = vadd.f32 %v527, %v528
    %v530 = vsel %vm458, %v437, 0.0
    %v531 = vadd.f32 %v529, %v530
    %v532 = vsel %vm458, %v438, 0.0
    %v533 = vadd.f32 %v531, %v532
    %v534 = vsel %vm458, %v439, 0.0
    %v535 = vadd.f32 %v533, %v534
    %v536 = vsel %vm458, %v440, 0.0
    %v537 = vadd.f32 %v535, %v536
    %v538 = vsel %vm458, %v441, 0.0
    %v539 = vadd.f32 %v537, %v538
    %v540 = vsel %vm458, %v442, 0.0
    %v541 = vadd.f32 %v539, %v540
    %v542 = vsel %vm458, %v443, 0.0
    %v543 = vadd.f32 %v541, %v542
    %v544 = vsel %vm458, %v444, 0.0
    %v545 = vadd.f32 %v543, %v544
    %v546 = vsel %vm458, %v445, 0.0
    %v547 = vadd.f32 %v545, %v546
    %v548 = vsel %vm458, %v446, 0.0
    %v549 = vadd.f32 %v547, %v548
    %v550 = vsel %vm458, %v447, 0.0
    %v551 = vadd.f32 %v549, %v550
    %v552 = vsel %vm458, %v448, 0.0
    %v553 = vadd.f32 %v551, %v552
    %v554 = vsel %vm458, %v449, 0.0
    %v555 = vadd.f32 %v553, %v554
    %v556 = vsel %vm458, %v450, 0.0
    %v557 = vadd.f32 %v555, %v556
    %v558 = vsel %vm458, %v451, 0.0
    %v559 = vadd.f32 %v557, %v558
    %v560 = vsel %vm458, %v452, 0.0
    %v561 = vadd.f32 %v559, %v560
    %v562 = vsel %vm458, %v453, 0.0
    %v563 = vadd.f32 %v561, %v562
    %v564 = vsel %vm458, %v454, 0.0
    %v565 = vadd.f32 %v563, %v564
    %v566 = vsel %vm458, %v455, 0.0
    %v567 = vadd.f32 %v565, %v566
    %v568 = vsel %vm458, %v456, 0.0
    %v569 = vadd.f32 %v567, %v568
    %vm570 = vcmask 123904
    %v571 = vsel %vm570, %v457, 0.0
    %v572 = vadd.f32 %v569, %v571
    %v573 = vrot.slane %v572, 4
    %v574 = vadd.f32 %v572, %v573
    %v575 = vrot.slane %v574, 2
    %v576 = vadd.f32 %v574, %v575
    %v577 = vrot.slane %v576, 1
    %v578 = vadd.f32 %v576, %v577
    %v579 = vrcp.pop 450.0
    %v580 = vmul.f32 %v578, %v579
    %v581 = vsub.f32 %v401, %v580
    %v582 = vsub.f32 %v402, %v580
    %v583 = vsub.f32 %v403, %v580
    %v584 = vsub.f32 %v404, %v580
    %v585 = vsub.f32 %v405, %v580
    %v586 = vsub.f32 %v406, %v580
    %v587 = vsub.f32 %v407, %v580
    %v588 = vsub.f32 %v408, %v580
    %v589 = vsub.f32 %v409, %v580
    %v590 = vsub.f32 %v410, %v580
    %v591 = vsub.f32 %v411, %v580
    %v592 = vsub.f32 %v412, %v580
    %v593 = vsub.f32 %v413, %v580
    %v594 = vsub.f32 %v414, %v580
    %v595 = vsub.f32 %v415, %v580
    %v596 = vsub.f32 %v416, %v580
    %v597 = vsub.f32 %v417, %v580
    %v598 = vsub.f32 %v418, %v580
    %v599 = vsub.f32 %v419, %v580
    %v600 = vsub.f32 %v420, %v580
    %v601 = vsub.f32 %v421, %v580
    %v602 = vsub.f32 %v422, %v580
    %v603 = vsub.f32 %v423, %v580
    %v604 = vsub.f32 %v424, %v580
    %v605 = vsub.f32 %v425, %v580
    %v606 = vsub.f32 %v426, %v580
    %v607 = vsub.f32 %v427, %v580
    %v608 = vsub.f32 %v428, %v580
    %v609 = vsub.f32 %v429, %v580
    %v610 = vsub.f32 %v430, %v580
    %v611 = vsub.f32 %v431, %v580
    %v612 = vsub.f32 %v432, %v580
    %v613 = vsub.f32 %v433, %v580
    %v614 = vsub.f32 %v434, %v580
    %v615 = vsub.f32 %v435, %v580
    %v616 = vsub.f32 %v436, %v580
    %v617 = vsub.f32 %v437, %v580
    %v618 = vsub.f32 %v438, %v580
    %v619 = vsub.f32 %v439, %v580
    %v620 = vsub.f32 %v440, %v580
    %v621 = vsub.f32 %v441, %v580
    %v622 = vsub.f32 %v442, %v580
    %v623 = vsub.f32 %v443, %v580
    %v624 = vsub.f32 %v444, %v580
    %v625 = vsub.f32 %v445, %v580
    %v626 = vsub.f32 %v446, %v580
    %v627 = vsub.f32 %v447, %v580
    %v628 = vsub.f32 %v448, %v580
    %v629 = vsub.f32 %v449, %v580
    %v630 = vsub.f32 %v450, %v580
    %v631 = vsub.f32 %v451, %v580
    %v632 = vsub.f32 %v452, %v580
    %v633 = vsub.f32 %v453, %v580
    %v634 = vsub.f32 %v454, %v580
    %v635 = vsub.f32 %v455, %v580
    %v636 = vsub.f32 %v456, %v580
    %v637 = vsub.f32 %v457, %v580
    %v638 = vmul.f32 %v581, %v581
    %v639 = vmul.f32 %v582, %v582
    %v640 = vmul.f32 %v583, %v583
    %v641 = vmul.f32 %v584, %v584
    %v642 = vmul.f32 %v585, %v585
    %v643 = vmul.f32 %v586, %v586
    %v644 = vmul.f32 %v587, %v587
    %v645 = vmul.f32 %v588, %v588
    %v646 = vmul.f32 %v589, %v589
    %v647 = vmul.f32 %v590, %v590
    %v648 = vmul.f32 %v591, %v591
    %v649 = vmul.f32 %v592, %v592
    %v650 = vmul.f32 %v593, %v593
    %v651 = vmul.f32 %v594, %v594
    %v652 = vmul.f32 %v595, %v595
    %v653 = vmul.f32 %v596, %v596
    %v654 = vmul.f32 %v597, %v597
    %v655 = vmul.f32 %v598, %v598
    %v656 = vmul.f32 %v599, %v599
    %v657 = vmul.f32 %v600, %v600
    %v658 = vmul.f32 %v601, %v601
    %v659 = vmul.f32 %v602, %v602
    %v660 = vmul.f32 %v603, %v603
    %v661 = vmul.f32 %v604, %v604
    %v662 = vmul.f32 %v605, %v605
    %v663 = vmul.f32 %v606, %v606
    %v664 = vmul.f32 %v607, %v607
    %v665 = vmul.f32 %v608, %v608
    %v666 = vmul.f32 %v609, %v609
    %v667 = vmul.f32 %v610, %v610
    %v668 = vmul.f32 %v611, %v611
    %v669 = vmul.f32 %v612, %v612
    %v670 = vmul.f32 %v613, %v613
    %v671 = vmul.f32 %v614, %v614
    %v672 = vmul.f32 %v615, %v615
    %v673 = vmul.f32 %v616, %v616
    %v674 = vmul.f32 %v617, %v617
    %v675 = vmul.f32 %v618, %v618
    %v676 = vmul.f32 %v619, %v619
    %v677 = vmul.f32 %v620, %v620
    %v678 = vmul.f32 %v621, %v621
    %v679 = vmul.f32 %v622, %v622
    %v680 = vmul.f32 %v623, %v623
    %v681 = vmul.f32 %v624, %v624
    %v682 = vmul.f32 %v625, %v625
    %v683 = vmul.f32 %v626, %v626
    %v684 = vmul.f32 %v627, %v627
    %v685 = vmul.f32 %v628, %v628
    %v686 = vmul.f32 %v629, %v629
    %v687 = vmul.f32 %v630, %v630
    %v688 = vmul.f32 %v631, %v631
    %v689 = vmul.f32 %v632, %v632
    %v690 = vmul.f32 %v633, %v633
    %v691 = vmul.f32 %v634, %v634
    %v692 = vmul.f32 %v635, %v635
    %v693 = vmul.f32 %v636, %v636
    %v694 = vmul.f32 %v637, %v637
    %v695 = vsel %vm458, %v638, 0.0
    %v696 = vsel %vm458, %v639, 0.0
    %v697 = vadd.f32 %v695, %v696
    %v698 = vsel %vm458, %v640, 0.0
    %v699 = vadd.f32 %v697, %v698
    %v700 = vsel %vm458, %v641, 0.0
    %v701 = vadd.f32 %v699, %v700
    %v702 = vsel %vm458, %v642, 0.0
    %v703 = vadd.f32 %v701, %v702
    %v704 = vsel %vm458, %v643, 0.0
    %v705 = vadd.f32 %v703, %v704
    %v706 = vsel %vm458, %v644, 0.0
    %v707 = vadd.f32 %v705, %v706
    %v708 = vsel %vm458, %v645, 0.0
    %v709 = vadd.f32 %v707, %v708
    %v710 = vsel %vm458, %v646, 0.0
    %v711 = vadd.f32 %v709, %v710
    %v712 = vsel %vm458, %v647, 0.0
    %v713 = vadd.f32 %v711, %v712
    %v714 = vsel %vm458, %v648, 0.0
    %v715 = vadd.f32 %v713, %v714
    %v716 = vsel %vm458, %v649, 0.0
    %v717 = vadd.f32 %v715, %v716
    %v718 = vsel %vm458, %v650, 0.0
    %v719 = vadd.f32 %v717, %v718
    %v720 = vsel %vm458, %v651, 0.0
    %v721 = vadd.f32 %v719, %v720
    %v722 = vsel %vm458, %v652, 0.0
    %v723 = vadd.f32 %v721, %v722
    %v724 = vsel %vm458, %v653, 0.0
    %v725 = vadd.f32 %v723, %v724
    %v726 = vsel %vm458, %v654, 0.0
    %v727 = vadd.f32 %v725, %v726
    %v728 = vsel %vm458, %v655, 0.0
    %v729 = vadd.f32 %v727, %v728
    %v730 = vsel %vm458, %v656, 0.0
    %v731 = vadd.f32 %v729, %v730
    %v732 = vsel %vm458, %v657, 0.0
    %v733 = vadd.f32 %v731, %v732
    %v734 = vsel %vm458, %v658, 0.0
    %v735 = vadd.f32 %v733, %v734
    %v736 = vsel %vm458, %v659, 0.0
    %v737 = vadd.f32 %v735, %v736
    %v738 = vsel %vm458, %v660, 0.0
    %v739 = vadd.f32 %v737, %v738
    %v740 = vsel %vm458, %v661, 0.0
    %v741 = vadd.f32 %v739, %v740
    %v742 = vsel %vm458, %v662, 0.0
    %v743 = vadd.f32 %v741, %v742
    %v744 = vsel %vm458, %v663, 0.0
    %v745 = vadd.f32 %v743, %v744
    %v746 = vsel %vm458, %v664, 0.0
    %v747 = vadd.f32 %v745, %v746
    %v748 = vsel %vm458, %v665, 0.0
    %v749 = vadd.f32 %v747, %v748
    %v750 = vsel %vm458, %v666, 0.0
    %v751 = vadd.f32 %v749, %v750
    %v752 = vsel %vm458, %v667, 0.0
    %v753 = vadd.f32 %v751, %v752
    %v754 = vsel %vm458, %v668, 0.0
    %v755 = vadd.f32 %v753, %v754
    %v756 = vsel %vm458, %v669, 0.0
    %v757 = vadd.f32 %v755, %v756
    %v758 = vsel %vm458, %v670, 0.0
    %v759 = vadd.f32 %v757, %v758
    %v760 = vsel %vm458, %v671, 0.0
    %v761 = vadd.f32 %v759, %v760
    %v762 = vsel %vm458, %v672, 0.0
    %v763 = vadd.f32 %v761, %v762
    %v764 = vsel %vm458, %v673, 0.0
    %v765 = vadd.f32 %v763, %v764
    %v766 = vsel %vm458, %v674, 0.0
    %v767 = vadd.f32 %v765, %v766
    %v768 = vsel %vm458, %v675, 0.0
    %v769 = vadd.f32 %v767, %v768
    %v770 = vsel %vm458, %v676, 0.0
    %v771 = vadd.f32 %v769, %v770
    %v772 = vsel %vm458, %v677, 0.0
    %v773 = vadd.f32 %v771, %v772
    %v774 = vsel %vm458, %v678, 0.0
    %v775 = vadd.f32 %v773, %v774
    %v776 = vsel %vm458, %v679, 0.0
    %v777 = vadd.f32 %v775, %v776
    %v778 = vsel %vm458, %v680, 0.0
    %v779 = vadd.f32 %v777, %v778
    %v780 = vsel %vm458, %v681, 0.0
    %v781 = vadd.f32 %v779, %v780
    %v782 = vsel %vm458, %v682, 0.0
    %v783 = vadd.f32 %v781, %v782
    %v784 = vsel %vm458, %v683, 0.0
    %v785 = vadd.f32 %v783, %v784
    %v786 = vsel %vm458, %v684, 0.0
    %v787 = vadd.f32 %v785, %v786
    %v788 = vsel %vm458, %v685, 0.0
    %v789 = vadd.f32 %v787, %v788
    %v790 = vsel %vm458, %v686, 0.0
    %v791 = vadd.f32 %v789, %v790
    %v792 = vsel %vm458, %v687, 0.0
    %v793 = vadd.f32 %v791, %v792
    %v794 = vsel %vm458, %v688, 0.0
    %v795 = vadd.f32 %v793, %v794
    %v796 = vsel %vm458, %v689, 0.0
    %v797 = vadd.f32 %v795, %v796
    %v798 = vsel %vm458, %v690, 0.0
    %v799 = vadd.f32 %v797, %v798
    %v800 = vsel %vm458, %v691, 0.0
    %v801 = vadd.f32 %v799, %v800
    %v802 = vsel %vm458, %v692, 0.0
    %v803 = vadd.f32 %v801, %v802
    %v804 = vsel %vm458, %v693, 0.0
    %v805 = vadd.f32 %v803, %v804
    %v806 = vsel %vm570, %v694, 0.0
    %v807 = vadd.f32 %v805, %v806
    %v808 = vrot.slane %v807, 4
    %v809 = vadd.f32 %v807, %v808
    %v810 = vrot.slane %v809, 2
    %v811 = vadd.f32 %v809, %v810
    %v812 = vrot.slane %v811, 1
    %v813 = vadd.f32 %v811, %v812
    %v814 = vmul.f32 %v813, %v579
    %v815 = vadd.f32 %v814, 1e-05
    %v816 = vrsqrt.pop %v815
    %v817 = vmul.f32 %v581, %v816
    %v818 = vmul.f32 %v582, %v816
    %v819 = vmul.f32 %v583, %v816
    %v820 = vmul.f32 %v584, %v816
    %v821 = vmul.f32 %v585, %v816
    %v822 = vmul.f32 %v586, %v816
    %v823 = vmul.f32 %v587, %v816
    %v824 = vmul.f32 %v588, %v816
    %v825 = vmul.f32 %v589, %v816
    %v826 = vmul.f32 %v590, %v816
    %v827 = vmul.f32 %v591, %v816
    %v828 = vmul.f32 %v592, %v816
    %v829 = vmul.f32 %v593, %v816
    %v830 = vmul.f32 %v594, %v816
    %v831 = vmul.f32 %v595, %v816
    %v832 = vmul.f32 %v596, %v816
    %v833 = vmul.f32 %v597, %v816
    %v834 = vmul.f32 %v598, %v816
    %v835 = vmul.f32 %v599, %v816
    %v836 = vmul.f32 %v600, %v816
    %v837 = vmul.f32 %v601, %v816
    %v838 = vmul.f32 %v602, %v816
    %v839 = vmul.f32 %v603, %v816
    %v840 = vmul.f32 %v604, %v816
    %v841 = vmul.f32 %v605, %v816
    %v842 = vmul.f32 %v606, %v816
    %v843 = vmul.f32 %v607, %v816
    %v844 = vmul.f32 %v608, %v816
    %v845 = vmul.f32 %v609, %v816
    %v846 = vmul.f32 %v610, %v816
    %v847 = vmul.f32 %v611, %v816
    %v848 = vmul.f32 %v612, %v816
    %v849 = vmul.f32 %v613, %v816
    %v850 = vmul.f32 %v614, %v816
    %v851 = vmul.f32 %v615, %v816
    %v852 = vmul.f32 %v616, %v816
    %v853 = vmul.f32 %v617, %v816
    %v854 = vmul.f32 %v618, %v816
    %v855 = vmul.f32 %v619, %v816
    %v856 = vmul.f32 %v620, %v816
    %v857 = vmul.f32 %v621, %v816
    %v858 = vmul.f32 %v622, %v816
    %v859 = vmul.f32 %v623, %v816
    %v860 = vmul.f32 %v624, %v816
    %v861 = vmul.f32 %v625, %v816
    %v862 = vmul.f32 %v626, %v816
    %v863 = vmul.f32 %v627, %v816
    %v864 = vmul.f32 %v628, %v816
    %v865 = vmul.f32 %v629, %v816
    %v866 = vmul.f32 %v630, %v816
    %v867 = vmul.f32 %v631, %v816
    %v868 = vmul.f32 %v632, %v816
    %v869 = vmul.f32 %v633, %v816
    %v870 = vmul.f32 %v634, %v816
    %v871 = vmul.f32 %v635, %v816
    %v872 = vmul.f32 %v636, %v816
    %v873 = vmul.f32 %v637, %v816
    %v874 = vld [vmem:[#allocation4] sm:$0x1]
    %v876 = vlaneseq
    %v877 = vshrl.u32 %v876, 7
    %v878 = vsub.s32 0, %v877
    %v879 = vrot.slane %v874, %v878
    %v881 = vmul.f32 %v817, %v879
    %v882 = vmul.f32 %v818, %v879
    %v883 = vmul.f32 %v819, %v879
    %v884 = vmul.f32 %v820, %v879
    %v885 = vmul.f32 %v821, %v879
    %v886 = vmul.f32 %v822, %v879
    %v887 = vmul.f32 %v823, %v879
    %v888 = vmul.f32 %v824, %v879
    %v889 = vmul.f32 %v825, %v879
    %v890 = vmul.f32 %v826, %v879
    %v891 = vmul.f32 %v827, %v879
    %v892 = vmul.f32 %v828, %v879
    %v893 = vmul.f32 %v829, %v879
    %v894 = vmul.f32 %v830, %v879
    %v895 = vmul.f32 %v831, %v879
    %v896 = vmul.f32 %v832, %v879
    %v897 = vmul.f32 %v833, %v879
    %v898 = vmul.f32 %v834, %v879
    %v899 = vmul.f32 %v835, %v879
    %v900 = vmul.f32 %v836, %v879
    %v901 = vmul.f32 %v837, %v879
    %v902 = vmul.f32 %v838, %v879
    %v903 = vmul.f32 %v839, %v879
    %v904 = vmul.f32 %v840, %v879
    %v905 = vmul.f32 %v841, %v879
    %v906 = vmul.f32 %v842, %v879
    %v907 = vmul.f32 %v843, %v879
    %v908 = vmul.f32 %v844, %v879
    %v909 = vmul.f32 %v845, %v879
    %v910 = vmul.f32 %v846, %v879
    %v911 = vmul.f32 %v847, %v879
    %v912 = vmul.f32 %v848, %v879
    %v913 = vmul.f32 %v849, %v879
    %v914 = vmul.f32 %v850, %v879
    %v915 = vmul.f32 %v851, %v879
    %v916 = vmul.f32 %v852, %v879
    %v917 = vmul.f32 %v853, %v879
    %v918 = vmul.f32 %v854, %v879
    %v919 = vmul.f32 %v855, %v879
    %v920 = vmul.f32 %v856, %v879
    %v921 = vmul.f32 %v857, %v879
    %v922 = vmul.f32 %v858, %v879
    %v923 = vmul.f32 %v859, %v879
    %v924 = vmul.f32 %v860, %v879
    %v925 = vmul.f32 %v861, %v879
    %v926 = vmul.f32 %v862, %v879
    %v927 = vmul.f32 %v863, %v879
    %v928 = vmul.f32 %v864, %v879
    %v929 = vmul.f32 %v865, %v879
    %v930 = vmul.f32 %v866, %v879
    %v931 = vmul.f32 %v867, %v879
    %v932 = vmul.f32 %v868, %v879
    %v933 = vmul.f32 %v869, %v879
    %v934 = vmul.f32 %v870, %v879
    %v935 = vmul.f32 %v871, %v879
    %v936 = vmul.f32 %v872, %v879
    %v937 = vmul.f32 %v873, %v879
    %v938 = vld [vmem:[#allocation6] sm:$0x1]
    %v940 = vlaneseq
    %v941 = vshrl.u32 %v940, 7
    %v942 = vsub.s32 0, %v941
    %v943 = vrot.slane %v938, %v942
    %v945 = vadd.f32 %v881, %v943
    %v946 = vadd.f32 %v882, %v943
    %v947 = vadd.f32 %v883, %v943
    %v948 = vadd.f32 %v884, %v943
    %v949 = vadd.f32 %v885, %v943
    %v950 = vadd.f32 %v886, %v943
    %v951 = vadd.f32 %v887, %v943
    %v952 = vadd.f32 %v888, %v943
    %v953 = vadd.f32 %v889, %v943
    %v954 = vadd.f32 %v890, %v943
    %v955 = vadd.f32 %v891, %v943
    %v956 = vadd.f32 %v892, %v943
    %v957 = vadd.f32 %v893, %v943
    %v958 = vadd.f32 %v894, %v943
    %v959 = vadd.f32 %v895, %v943
    %v960 = vadd.f32 %v896, %v943
    %v961 = vadd.f32 %v897, %v943
    %v962 = vadd.f32 %v898, %v943
    %v963 = vadd.f32 %v899, %v943
    %v964 = vadd.f32 %v900, %v943
    %v965 = vadd.f32 %v901, %v943
    %v966 = vadd.f32 %v902, %v943
    %v967 = vadd.f32 %v903, %v943
    %v968 = vadd.f32 %v904, %v943
    %v969 = vadd.f32 %v905, %v943
    %v970 = vadd.f32 %v906, %v943
    %v971 = vadd.f32 %v907, %v943
    %v972 = vadd.f32 %v908, %v943
    %v973 = vadd.f32 %v909, %v943
    %v974 = vadd.f32 %v910, %v943
    %v975 = vadd.f32 %v911, %v943
    %v976 = vadd.f32 %v912, %v943
    %v977 = vadd.f32 %v913, %v943
    %v978 = vadd.f32 %v914, %v943
    %v979 = vadd.f32 %v915, %v943
    %v980 = vadd.f32 %v916, %v943
    %v981 = vadd.f32 %v917, %v943
    %v982 = vadd.f32 %v918, %v943
    %v983 = vadd.f32 %v919, %v943
    %v984 = vadd.f32 %v920, %v943
    %v985 = vadd.f32 %v921, %v943
    %v986 = vadd.f32 %v922, %v943
    %v987 = vadd.f32 %v923, %v943
    %v988 = vadd.f32 %v924, %v943
    %v989 = vadd.f32 %v925, %v943
    %v990 = vadd.f32 %v926, %v943
    %v991 = vadd.f32 %v927, %v943
    %v992 = vadd.f32 %v928, %v943
    %v993 = vadd.f32 %v929, %v943
    %v994 = vadd.f32 %v930, %v943
    %v995 = vadd.f32 %v931, %v943
    %v996 = vadd.f32 %v932, %v943
    %v997 = vadd.f32 %v933, %v943
    %v998 = vadd.f32 %v934, %v943
    %v999 = vadd.f32 %v935, %v943
    %v1000 = vadd.f32 %v936, %v943
    %v1001 = vadd.f32 %v937, %v943
    %v1002 = vmax.f32 %v945, 0.0
    %v1003 = vmax.f32 %v946, 0.0
    %v1004 = vmax.f32 %v947, 0.0
    %v1005 = vmax.f32 %v948, 0.0
    %v1006 = vmax.f32 %v949, 0.0
    %v1007 = vmax.f32 %v950, 0.0
    %v1008 = vmax.f32 %v951, 0.0
    %v1009 = vmax.f32 %v952, 0.0
    %v1010 = vmax.f32 %v953, 0.0
    %v1011 = vmax.f32 %v954, 0.0
    %v1012 = vmax.f32 %v955, 0.0
    %v1013 = vmax.f32 %v956, 0.0
    %v1014 = vmax.f32 %v957, 0.0
    %v1015 = vmax.f32 %v958, 0.0
    %v1016 = vmax.f32 %v959, 0.0
    %v1017 = vmax.f32 %v960, 0.0
    %v1018 = vmax.f32 %v961, 0.0
    %v1019 = vmax.f32 %v962, 0.0
    %v1020 = vmax.f32 %v963, 0.0
    %v1021 = vmax.f32 %v964, 0.0
    %v1022 = vmax.f32 %v965, 0.0
    %v1023 = vmax.f32 %v966, 0.0
    %v1024 = vmax.f32 %v967, 0.0
    %v1025 = vmax.f32 %v968, 0.0
    %v1026 = vmax.f32 %v969, 0.0
    %v1027 = vmax.f32 %v970, 0.0
    %v1028 = vmax.f32 %v971, 0.0
    %v1029 = vmax.f32 %v972, 0.0
    %v1030 = vmax.f32 %v973, 0.0
    %v1031 = vmax.f32 %v974, 0.0
    %v1032 = vmax.f32 %v975, 0.0
    %v1033 = vmax.f32 %v976, 0.0
    %v1034 = vmax.f32 %v977, 0.0
    %v1035 = vmax.f32 %v978, 0.0
    %v1036 = vmax.f32 %v979, 0.0
    %v1037 = vmax.f32 %v980, 0.0
    %v1038 = vmax.f32 %v981, 0.0
    %v1039 = vmax.f32 %v982, 0.0
    %v1040 = vmax.f32 %v983, 0.0
    %v1041 = vmax.f32 %v984, 0.0
    %v1042 = vmax.f32 %v985, 0.0
    %v1043 = vmax.f32 %v986, 0.0
    %v1044 = vmax.f32 %v987, 0.0
    %v1045 = vmax.f32 %v988, 0.0
    %v1046 = vmax.f32 %v989, 0.0
    %v1047 = vmax.f32 %v990, 0.0
    %v1048 = vmax.f32 %v991, 0.0
    %v1049 = vmax.f32 %v992, 0.0
    %v1050 = vmax.f32 %v993, 0.0
    %v1051 = vmax.f32 %v994, 0.0
    %v1052 = vmax.f32 %v995, 0.0
    %v1053 = vmax.f32 %v996, 0.0
    %v1054 = vmax.f32 %v997, 0.0
    %v1055 = vmax.f32 %v998, 0.0
    %v1056 = vmax.f32 %v999, 0.0
    %v1057 = vmax.f32 %v1000, 0.0
    %v1058 = vmax.f32 %v1001, 0.0
    %1059 = vst.msk [vmem:[%s4] sm:$0xff] %vm458, %v1002
    %1060 = vst.msk [vmem:[%s4 + $0x8] sm:$0xff] %vm458, %v1003
    %1061 = vst.msk [vmem:[%s4 + $0x10] sm:$0xff] %vm458, %v1004
    %1062 = vst.msk [vmem:[%s4 + $0x18] sm:$0xff] %vm458, %v1005
    %1063 = vst.msk [vmem:[%s4 + $0x20] sm:$0xff] %vm458, %v1006
    %1064 = vst.msk [vmem:[%s4 + $0x28] sm:$0xff] %vm458, %v1007
    %1065 = vst.msk [vmem:[%s4 + $0x30] sm:$0xff] %vm458, %v1008
    %1066 = vst.msk [vmem:[%s4 + $0x38] sm:$0xff] %vm458, %v1009
    %1067 = vst.msk [vmem:[%s4 + $0x40] sm:$0xff] %vm458, %v1010
    %1068 = vst.msk [vmem:[%s4 + $0x48] sm:$0xff] %vm458, %v1011
    %1069 = vst.msk [vmem:[%s4 + $0x50] sm:$0xff] %vm458, %v1012
    %1070 = vst.msk [vmem:[%s4 + $0x58] sm:$0xff] %vm458, %v1013
    %1071 = vst.msk [vmem:[%s4 + $0x60] sm:$0xff] %vm458, %v1014
    %1072 = vst.msk [vmem:[%s4 + $0x68] sm:$0xff] %vm458, %v1015
    %1073 = vst.msk [vmem:[%s4 + $0x70] sm:$0xff] %vm458, %v1016
    %1074 = vst.msk [vmem:[%s4 + $0x78] sm:$0xff] %vm458, %v1017
    %1075 = vst.msk [vmem:[%s4 + $0x80] sm:$0xff] %vm458, %v1018
    %1076 = vst.msk [vmem:[%s4 + $0x88] sm:$0xff] %vm458, %v1019
    %1077 = vst.msk [vmem:[%s4 + $0x90] sm:$0xff] %vm458, %v1020
    %1078 = vst.msk [vmem:[%s4 + $0x98] sm:$0xff] %vm458, %v1021
    %1079 = vst.msk [vmem:[%s4 + $0xa0] sm:$0xff] %vm458, %v1022
    %1080 = vst.msk [vmem:[%s4 + $0xa8] sm:$0xff] %vm458, %v1023
    %1081 = vst.msk [vmem:[%s4 + $0xb0] sm:$0xff] %vm458, %v1024
    %1082 = vst.msk [vmem:[%s4 + $0xb8] sm:$0xff] %vm458, %v1025
    %1083 = vst.msk [vmem:[%s4 + $0xc0] sm:$0xff] %vm458, %v1026
    %1084 = vst.msk [vmem:[%s4 + $0xc8] sm:$0xff] %vm458, %v1027
    %1085 = vst.msk [vmem:[%s4 + $0xd0] sm:$0xff] %vm458, %v1028
    %1086 = vst.msk [vmem:[%s4 + $0xd8] sm:$0xff] %vm458, %v1029
    %1087 = vst.msk [vmem:[%s4 + $0xe0] sm:$0xff] %vm458, %v1030
    %1088 = vst.msk [vmem:[%s4 + $0xe8] sm:$0xff] %vm458, %v1031
    %1089 = vst.msk [vmem:[%s4 + $0xf0] sm:$0xff] %vm458, %v1032
    %1090 = vst.msk [vmem:[%s4 + $0xf8] sm:$0xff] %vm458, %v1033
    %1091 = vst.msk [vmem:[%s4 + $0x100] sm:$0xff] %vm458, %v1034
    %1092 = vst.msk [vmem:[%s4 + $0x108] sm:$0xff] %vm458, %v1035
    %1093 = vst.msk [vmem:[%s4 + $0x110] sm:$0xff] %vm458, %v1036
    %1094 = vst.msk [vmem:[%s4 + $0x118] sm:$0xff] %vm458, %v1037
    %1095 = vst.msk [vmem:[%s4 + $0x120] sm:$0xff] %vm458, %v1038
    %1096 = vst.msk [vmem:[%s4 + $0x128] sm:$0xff] %vm458, %v1039
    %1097 = vst.msk [vmem:[%s4 + $0x130] sm:$0xff] %vm458, %v1040
    %1098 = vst.msk [vmem:[%s4 + $0x138] sm:$0xff] %vm458, %v1041
    %1099 = vst.msk [vmem:[%s4 + $0x140] sm:$0xff] %vm458, %v1042
    %1100 = vst.msk [vmem:[%s4 + $0x148] sm:$0xff] %vm458, %v1043
    %1101 = vst.msk [vmem:[%s4 + $0x150] sm:$0xff] %vm458, %v1044
    %1102 = vst.msk [vmem:[%s4 + $0x158] sm:$0xff] %vm458, %v1045
    %1103 = vst.msk [vmem:[%s4 + $0x160] sm:$0xff] %vm458, %v1046
    %1104 = vst.msk [vmem:[%s4 + $0x168] sm:$0xff] %vm458, %v1047
    %1105 = vst.msk [vmem:[%s4 + $0x170] sm:$0xff] %vm458, %v1048
    %1106 = vst.msk [vmem:[%s4 + $0x178] sm:$0xff] %vm458, %v1049
    %1107 = vst.msk [vmem:[%s4 + $0x180] sm:$0xff] %vm458, %v1050
    %1108 = vst.msk [vmem:[%s4 + $0x188] sm:$0xff] %vm458, %v1051
    %1109 = vst.msk [vmem:[%s4 + $0x190] sm:$0xff] %vm458, %v1052
    %1110 = vst.msk [vmem:[%s4 + $0x198] sm:$0xff] %vm458, %v1053
    %1111 = vst.msk [vmem:[%s4 + $0x1a0] sm:$0xff] %vm458, %v1054
    %1112 = vst.msk [vmem:[%s4 + $0x1a8] sm:$0xff] %vm458, %v1055
    %1113 = vst.msk [vmem:[%s4 + $0x1b0] sm:$0xff] %vm458, %v1056
    %1114 = vst.msk [vmem:[%s4 + $0x1b8] sm:$0xff] %vm458, %v1057
    %1115 = vst.msk [vmem:[%s4 + $0x1c0] sm:$0x3] %vm570, %v1058
    // Predicated region
    $region30: #{forward.7} parent=1 // pred_check
      _
    $region31: #{forward.7} parent=1 // pred_check_branch
      %1117 = sbr.rel (0) target = $region33
    $region32: #{forward.7} parent=1 // pred_region
      _
    $region33: #{forward.7} parent=1 // pred_fallthru
      _
    // Predicated region
    $region34: #{forward.7} parent=1 // pred_check
      _
    $region35: #{forward.7} parent=1 // pred_check_branch
      %1119 = sbr.rel (0) target = $region37
    $region36: #{forward.7} parent=1 // pred_region
      _
    $region37: #{forward.7} parent=1 // pred_fallthru
      _
    %1120 = vsyncpa [#allocation3], 1
    %1121 = vsyncpa [#allocation5], 1

// kernel: forward.8
$region0: #{forward.8}
  #allocation0 [shape = 'u32[]', space=smem, size = 0x4, offset = 0x4, fixed_abs, tag = 'smem constant byte address 0x4 - core index']
  #allocation1 [shape = 'u32[144,128]{1,0:T(1,128)}', space=vmem, size = 0x12000, scoped, tag = 'internal scratch']
  %s0 = inlined_call_operand.vmem [shape: f32[128,144], index: 0, kind: input, shape index: {}]
  %s1 = inlined_call_operand.vmem [shape: f32[144,32], index: 1, kind: input, shape index: {}]
  %s2 = inlined_call_operand.vmem [shape: f32[1,32], index: 2, kind: input, shape index: {}]
  %s3 = inlined_call_operand.vmem [shape: f32[1,32], index: 3, kind: input, shape index: {}]
  %s4 = inlined_call_operand.vmem [shape: f32[128,32], index: 4, kind: output, shape index: {}]
  %s5 = sld [smem:[#allocation0]]
  $region26: #{forward.8} parent=0
    _
  %s7 = ssub.s32 1, %s5
  %s8 = scalar_select 0, %s7, %s5
  // Predicated region
  $region2: #{forward.8} parent=0 // pred_check
    _
  $region3: #{forward.8} parent=0 // pred_check_branch
    %10 = sbr.rel (0) target = $region5
  $region4: #{forward.8} parent=0 // pred_region
    _
  $region5: #{forward.8} parent=0 // pred_fallthru
    _
  // Predicated region
  $region6: #{forward.8} parent=0 // pred_check
    _
  $region7: #{forward.8} parent=0 // pred_check_branch
    %12 = sbr.rel (0) target = $region9
  $region8: #{forward.8} parent=0 // pred_region
    _
  $region9: #{forward.8} parent=0 // pred_fallthru
    _
  // Predicated region
  $region10: #{forward.8} parent=0 // pred_check
    _
  $region11: #{forward.8} parent=0 // pred_check_branch
    %14 = sbr.rel (0) target = $region13
  $region12: #{forward.8} parent=0 // pred_region
    _
  $region13: #{forward.8} parent=0 // pred_fallthru
    _
  // Predicated region
  $region14: #{forward.8} parent=0 // pred_check
    _
  $region15: #{forward.8} parent=0 // pred_check_branch
    %16 = sbr.rel (0) target = $region17
  $region16: #{forward.8} parent=0 // pred_region
    _
  $region17: #{forward.8} parent=0 // pred_fallthru
    _
  %v17 = vld [vmem:[%s0] sm:$0xff]
  %v18 = vld [vmem:[%s0 + $0x8] sm:$0xff]
  %v19 = vld [vmem:[%s0 + $0x10] sm:$0xff]
  %v20 = vld [vmem:[%s0 + $0x18] sm:$0xff]
  %v21 = vld [vmem:[%s0 + $0x20] sm:$0xff]
  %v22 = vld [vmem:[%s0 + $0x28] sm:$0xff]
  %v23 = vld [vmem:[%s0 + $0x30] sm:$0xff]
  %v24 = vld [vmem:[%s0 + $0x38] sm:$0xff]
  %v25 = vld [vmem:[%s0 + $0x40] sm:$0xff]
  %v26 = vld [vmem:[%s0 + $0x48] sm:$0xff]
  %v27 = vld [vmem:[%s0 + $0x50] sm:$0xff]
  %v28 = vld [vmem:[%s0 + $0x58] sm:$0xff]
  %v29 = vld [vmem:[%s0 + $0x60] sm:$0xff]
  %v30 = vld [vmem:[%s0 + $0x68] sm:$0xff]
  %v31 = vld [vmem:[%s0 + $0x70] sm:$0xff]
  %v32 = vld [vmem:[%s0 + $0x78] sm:$0xff]
  %v33 = vld [vmem:[%s0 + $0x80] sm:$0xff]
  %v34 = vld [vmem:[%s0 + $0x88] sm:$0xff]
  %v35 = vld [vmem:[%s0 + $0x90] sm:$0xff]
  %v36 = vld [vmem:[%s0 + $0x98] sm:$0xff]
  %v37 = vld [vmem:[%s0 + $0xa0] sm:$0xff]
  %v38 = vld [vmem:[%s0 + $0xa8] sm:$0xff]
  %v39 = vld [vmem:[%s0 + $0xb0] sm:$0xff]
  %v40 = vld [vmem:[%s0 + $0xb8] sm:$0xff]
  %v41 = vld [vmem:[%s0 + $0xc0] sm:$0xff]
  %v42 = vld [vmem:[%s0 + $0xc8] sm:$0xff]
  %v43 = vld [vmem:[%s0 + $0xd0] sm:$0xff]
  %v44 = vld [vmem:[%s0 + $0xd8] sm:$0xff]
  %v45 = vld [vmem:[%s0 + $0xe0] sm:$0xff]
  %v46 = vld [vmem:[%s0 + $0xe8] sm:$0xff]
  %v47 = vld [vmem:[%s0 + $0xf0] sm:$0xff]
  %v48 = vld [vmem:[%s0 + $0xf8] sm:$0xff]
  %v49 = vld [vmem:[%s1] sm:$0xff]
  %v50 = vld [vmem:[%s1 + $0x8] sm:$0xff]
  %v51 = vld [vmem:[%s1 + $0x10] sm:$0xff]
  %v52 = vld [vmem:[%s1 + $0x18] sm:$0xff]
  %v53 = vld [vmem:[%s1 + $0x20] sm:$0xff]
  %v54 = vld [vmem:[%s1 + $0x28] sm:$0xff]
  %v55 = vld [vmem:[%s1 + $0x30] sm:$0xff]
  %v56 = vld [vmem:[%s1 + $0x38] sm:$0xff]
  %v57 = vld [vmem:[%s1 + $0x40] sm:$0xff]
  %v58 = vld [vmem:[%s1 + $0x48] sm:$0xff]
  %v59 = vld [vmem:[%s1 + $0x50] sm:$0xff]
  %v60 = vld [vmem:[%s1 + $0x58] sm:$0xff]
  %v61 = vld [vmem:[%s1 + $0x60] sm:$0xff]
  %v62 = vld [vmem:[%s1 + $0x68] sm:$0xff]
  %v63 = vld [vmem:[%s1 + $0x70] sm:$0xff]
  %v64 = vld [vmem:[%s1 + $0x78] sm:$0xff]
  %v65 = vld [vmem:[%s1 + $0x80] sm:$0xff]
  %v66 = vld [vmem:[%s1 + $0x88] sm:$0xff]
  %vm67 = vcmask 130048
  %v69 = vsel %vm67, %v18, 0
  %v72 = vsel %vm67, %v20, 0
  %v75 = vsel %vm67, %v22, 0
  %v78 = vsel %vm67, %v24, 0
  %v81 = vsel %vm67, %v26, 0
  %v84 = vsel %vm67, %v28, 0
  %v87 = vsel %vm67, %v30, 0
  %v90 = vsel %vm67, %v32, 0
  %v93 = vsel %vm67, %v34, 0
  %v96 = vsel %vm67, %v36, 0
  %v99 = vsel %vm67, %v38, 0
  %v102 = vsel %vm67, %v40, 0
  %v105 = vsel %vm67, %v42, 0
  %v108 = vsel %vm67, %v44, 0
  %v111 = vsel %vm67, %v46, 0
  %v114 = vsel %vm67, %v48, 0
  %116 = vmatprep.subr.mxu0 0.0
  %117 = vmatpush1.msra.mxu0 %v49
  %118 = vmatprep.subr.mxu0 0.0
  %119 = vmatpush1.msra.mxu0 %v50
  %120 = vmatprep.subr.mxu0 0.0
  %121 = vmatpush1.msra.mxu0 %v51
  %122 = vmatprep.subr.mxu0 0.0
  %123 = vmatpush1.msra.mxu0 %v52
  %124 = vmatprep.subr.mxu0 0.0
  %125 = vmatpush1.msra.mxu0 %v53
  %126 = vmatprep.subr.mxu0 0.0
  %127 = vmatpush1.msra.mxu0 %v54
  %128 = vmatprep.subr.mxu0 0.0
  %129 = vmatpush1.msra.mxu0 %v55
  %130 = vmatprep.subr.mxu0 0.0
  %131 = vmatpush1.msra.mxu0 %v56
  %132 = vmatprep.subr.mxu0 0.0
  %133 = vmatpush1.msra.mxu0 %v57
  %134 = vmatprep.subr.mxu0 0.0
  %135 = vmatpush1.msra.mxu0 %v58
  %136 = vmatprep.subr.mxu0 0.0
  %137 = vmatpush1.msra.mxu0 %v59
  %138 = vmatprep.subr.mxu0 0.0
  %139 = vmatpush1.msra.mxu0 %v60
  %140 = vmatprep.subr.mxu0 0.0
  %141 = vmatpush1.msra.mxu0 %v61
  %142 = vmatprep.subr.mxu0 0.0
  %143 = vmatpush1.msra.mxu0 %v62
  %144 = vmatprep.subr.mxu0 0.0
  %145 = vmatpush1.msra.mxu0 %v63
  %146 = vmatprep.subr.mxu0 0.0
  %147 = vmatpush1.msra.mxu0 %v64
  %148 = vmatprep.subr.mxu0 0.0
  %149 = vmatpush1.msra.mxu0 %v65
  %150 = vmatprep.subr.mxu0 0.0
  %151 = vmatpush1.msra.mxu0 %v66
  %152 = vmatprep.subr.mxu0 0.0
  %153 = vmatpush1.msra.mxu0 0.0
  %154 = vmatprep.subr.mxu0 0.0
  %155 = vmatpush1.msra.mxu0 0.0
  %156 = vmatprep.subr.mxu0 0.0
  %157 = vmatpush1.msra.mxu0 0.0
  %158 = vmatprep.subr.mxu0 0.0
  %159 = vmatpush1.msra.mxu0 0.0
  %160 = vmatprep.subr.mxu0 0.0
  %161 = vmatpush1.msra.mxu0 0.0
  %162 = vmatprep.subr.mxu0 0.0
  %163 = vmatpush1.msra.mxu0 0.0
  %164 = vmatprep.subr.mxu0 0.0
  %165 = vmatpush1.msra.mxu0 0.0
  %166 = vmatprep.subr.mxu0 0.0
  %167 = vmatpush1.msra.mxu0 0.0
  %168 = vmatprep.subr.mxu0 0.0
  %169 = vmatpush1.msra.mxu0 0.0
  %170 = vmatprep.subr.mxu0 0.0
  %171 = vmatpush1.msra.mxu0 0.0
  %172 = vmatprep.subr.mxu0 0.0
  %173 = vmatpush1.msra.mxu0 0.0
  %174 = vmatprep.subr.mxu0 0.0
  %175 = vmatpush1.msra.mxu0 0.0
  %176 = vmatprep.subr.mxu0 0.0
  %177 = vmatpush1.msra.mxu0 0.0
  %178 = vmatprep.subr.mxu0 0.0
  %179 = vmatpush1.msra.mxu0 0.0
  %180 = vmatprep.mubr.f32.mxu0 %v69
  %181 = vmatmul.mubr.f32.gmra.mrb[0].mxu0 %v17
  %v182 = vpop.f32.mrb[0].mxu0
  %v183 = vadd.f32 0.0, %v182
  %v184 = vpop.f32.mrb[0].mxu0
  %185 = vmatprep.mubr.f32.mxu0 %v72
  %186 = vmatmul.mubr.f32.gmra.mrb[0].mxu0 %v19
  %v187 = vpop.f32.mrb[0].mxu0
  %v188 = vadd.f32 0.0, %v187
  %v189 = vpop.f32.mrb[0].mxu0
  %190 = vmatprep.mubr.f32.mxu0 %v75
  %191 = vmatmul.mubr.f32.gmra.mrb[0].mxu0 %v21
  %v192 = vpop.f32.mrb[0].mxu0
  %v193 = vadd.f32 0.0, %v192
  %v194 = vpop.f32.mrb[0].mxu0
  %195 = vmatprep.mubr.f32.mxu0 %v78
  %196 = vmatmul.mubr.f32.gmra.mrb[0].mxu0 %v23
  %v197 = vpop.f32.mrb[0].mxu0
  %v198 = vadd.f32 0.0, %v197
  %v199 = vpop.f32.mrb[0].mxu0
  %200 = vmatprep.mubr.f32.mxu0 %v81
  %201 = vmatmul.mubr.f32.gmra.mrb[0].mxu0 %v25
  %v202 = vpop.f32.mrb[0].mxu0
  %v203 = vadd.f32 0.0, %v202
  %v204 = vpop.f32.mrb[0].mxu0
  %205 = vmatprep.mubr.f32.mxu0 %v84
  %206 = vmatmul.mubr.f32.gmra.mrb[0].mxu0 %v27
  %v207 = vpop.f32.mrb[0].mxu0
  %v208 = vadd.f32 0.0, %v207
  %v209 = vpop.f32.mrb[0].mxu0
  %210 = vmatprep.mubr.f32.mxu0 %v87
  %211 = vmatmul.mubr.f32.gmra.mrb[0].mxu0 %v29
  %v212 = vpop.f32.mrb[0].mxu0
  %v213 = vadd.f32 0.0, %v212
  %v214 = vpop.f32.mrb[0].mxu0
  %215 = vmatprep.mubr.f32.mxu0 %v90
  %216 = vmatmul.mubr.f32.gmra.mrb[0].mxu0 %v31
  %v217 = vpop.f32.mrb[0].mxu0
  %v218 = vadd.f32 0.0, %v217
  %v219 = vpop.f32.mrb[0].mxu0
  %220 = vmatprep.mubr.f32.mxu0 %v93
  %221 = vmatmul.mubr.f32.gmra.mrb[0].mxu0 %v33
  %v222 = vpop.f32.mrb[0].mxu0
  %v223 = vadd.f32 0.0, %v222
  %v224 = vpop.f32.mrb[0].mxu0
  %225 = vmatprep.mubr.f32.mxu0 %v96
  %226 = vmatmul.mubr.f32.gmra.mrb[0].mxu0 %v35
  %v227 = vpop.f32.mrb[0].mxu0
  %v228 = vadd.f32 0.0, %v227
  %v229 = vpop.f32.mrb[0].mxu0
  %230 = vmatprep.mubr.f32.mxu0 %v99
  %231 = vmatmul.mubr.f32.gmra.mrb[0].mxu0 %v37
  %v232 = vpop.f32.mrb[0].mxu0
  %v233 = vadd.f32 0.0, %v232
  %v234 = vpop.f32.mrb[0].mxu0
  %235 = vmatprep.mubr.f32.mxu0 %v102
  %236 = vmatmul.mubr.f32.gmra.mrb[0].mxu0 %v39
  %v237 = vpop.f32.mrb[0].mxu0
  %v238 = vadd.f32 0.0, %v237
  %v239 = vpop.f32.mrb[0].mxu0
  %240 = vmatprep.mubr.f32.mxu0 %v105
  %241 = vmatmul.mubr.f32.gmra.mrb[0].mxu0 %v41
  %v242 = vpop.f32.mrb[0].mxu0
  %v243 = vadd.f32 0.0, %v242
  %v244 = vpop.f32.mrb[0].mxu0
  %245 = vmatprep.mubr.f32.mxu0 %v108
  %246 = vmatmul.mubr.f32.gmra.mrb[0].mxu0 %v43
  %v247 = vpop.f32.mrb[0].mxu0
  %v248 = vadd.f32 0.0, %v247
  %v249 = vpop.f32.mrb[0].mxu0
  %250 = vmatprep.mubr.f32.mxu0 %v111
  %251 = vmatmul.mubr.f32.gmra.mrb[0].mxu0 %v45
  %v252 = vpop.f32.mrb[0].mxu0
  %v253 = vadd.f32 0.0, %v252
  %v254 = vpop.f32.mrb[0].mxu0
  %255 = vmatprep.mubr.f32.mxu0 %v114
  %256 = vmatmul.mubr.f32.gmra.mrb[0].mxu0 %v47
  %v257 = vpop.f32.mrb[0].mxu0
  %v258 = vadd.f32 0.0, %v257
  %v259 = vpop.f32.mrb[0].mxu0
  %260 = vdwg.mxu0
  %vm261 = vcmask 261120
  %v262 = vsel %vm261, %v183, 0.0
  %v263 = vsel %vm261, %v188, 0.0
  %v264 = vadd.f32 %v262, %v263
  %v265 = vsel %vm261, %v193, 0.0
  %v266 = vadd.f32 %v264, %v265
  %v267 = vsel %vm261, %v198, 0.0
  %v268 = vadd.f32 %v266, %v267
  %v269 = vsel %vm261, %v203, 0.0
  %v270 = vadd.f32 %v268, %v269
  %v271 = vsel %vm261, %v208, 0.0
  %v272 = vadd.f32 %v270, %v271
  %v273 = vsel %vm261, %v213, 0.0
  %v274 = vadd.f32 %v272, %v273
  %v275 = vsel %vm261, %v218, 0.0
  %v276 = vadd.f32 %v274, %v275
  %v277 = vsel %vm261, %v223, 0.0
  %v278 = vadd.f32 %v276, %v277
  %v279 = vsel %vm261, %v228, 0.0
  %v280 = vadd.f32 %v278, %v279
  %v281 = vsel %vm261, %v233, 0.0
  %v282 = vadd.f32 %v280, %v281
  %v283 = vsel %vm261, %v238, 0.0
  %v284 = vadd.f32 %v282, %v283
  %v285 = vsel %vm261, %v243, 0.0
  %v286 = vadd.f32 %v284, %v285
  %v287 = vsel %vm261, %v248, 0.0
  %v288 = vadd.f32 %v286, %v287
  %v289 = vsel %vm261, %v253, 0.0
  %v290 = vadd.f32 %v288, %v289
  %v291 = vsel %vm261, %v258, 0.0
  %v292 = vadd.f32 %v290, %v291
  %v293 = vrot.slane %v292, 4
  %v294 = vadd.f32 %v292, %v293
  %v295 = vrot.slane %v294, 2
  %v296 = vadd.f32 %v294, %v295
  %v297 = vrot.slane %v296, 1
  %v298 = vadd.f32 %v296, %v297
  %v299 = vrcp.pop 128.0
  %v300 = vmul.f32 %v298, %v299
  %v301 = vsub.f32 %v183, %v300
  %v302 = vsub.f32 %v188, %v300
  %v303 = vsub.f32 %v193, %v300
  %v304 = vsub.f32 %v198, %v300
  %v305 = vsub.f32 %v203, %v300
  %v306 = vsub.f32 %v208, %v300
  %v307 = vsub.f32 %v213, %v300
  %v308 = vsub.f32 %v218, %v300
  %v309 = vsub.f32 %v223, %v300
  %v310 = vsub.f32 %v228, %v300
  %v311 = vsub.f32 %v233, %v300
  %v312 = vsub.f32 %v238, %v300
  %v313 = vsub.f32 %v243, %v300
  %v314 = vsub.f32 %v248, %v300
  %v315 = vsub.f32 %v253, %v300
  %v316 = vsub.f32 %v258, %v300
  %v317 = vmul.f32 %v301, %v301
  %v318 = vmul.f32 %v302, %v302
  %v319 = vmul.f32 %v303, %v303
  %v320 = vmul.f32 %v304, %v304
  %v321 = vmul.f32 %v305, %v305
  %v322 = vmul.f32 %v306, %v306
  %v323 = vmul.f32 %v307, %v307
  %v324 = vmul.f32 %v308, %v308
  %v325 = vmul.f32 %v309, %v309
  %v326 = vmul.f32 %v310, %v310
  %v327 = vmul.f32 %v311, %v311
  %v328 = vmul.f32 %v312, %v312
  %v329 = vmul.f32 %v313, %v313
  %v330 = vmul.f32 %v314, %v314
  %v331 = vmul.f32 %v315, %v315
  %v332 = vmul.f32 %v316, %v316
  %v333 = vsel %vm261, %v317, 0.0
  %v334 = vsel %vm261, %v318, 0.0
  %v335 = vadd.f32 %v333, %v334
  %v336 = vsel %vm261, %v319, 0.0
  %v337 = vadd.f32 %v335, %v336
  %v338 = vsel %vm261, %v320, 0.0
  %v339 = vadd.f32 %v337, %v338
  %v340 = vsel %vm261, %v321, 0.0
  %v341 = vadd.f32 %v339, %v340
  %v342 = vsel %vm261, %v322, 0.0
  %v343 = vadd.f32 %v341, %v342
  %v344 = vsel %vm261, %v323, 0.0
  %v345 = vadd.f32 %v343, %v344
  %v346 = vsel %vm261, %v324, 0.0
  %v347 = vadd.f32 %v345, %v346
  %v348 = vsel %vm261, %v325, 0.0
  %v349 = vadd.f32 %v347, %v348
  %v350 = vsel %vm261, %v326, 0.0
  %v351 = vadd.f32 %v349, %v350
  %v352 = vsel %vm261, %v327, 0.0
  %v353 = vadd.f32 %v351, %v352
  %v354 = vsel %vm261, %v328, 0.0
  %v355 = vadd.f32 %v353, %v354
  %v356 = vsel %vm261, %v329, 0.0
  %v357 = vadd.f32 %v355, %v356
  %v358 = vsel %vm261, %v330, 0.0
  %v359 = vadd.f32 %v357, %v358
  %v360 = vsel %vm261, %v331, 0.0
  %v361 = vadd.f32 %v359, %v360
  %v362 = vsel %vm261, %v332, 0.0
  %v363 = vadd.f32 %v361, %v362
  %v364 = vrot.slane %v363, 4
  %v365 = vadd.f32 %v363, %v364
  %v366 = vrot.slane %v365, 2
  %v367 = vadd.f32 %v365, %v366
  %v368 = vrot.slane %v367, 1
  %v369 = vadd.f32 %v367, %v368
  %v370 = vmul.f32 %v369, %v299
  %v371 = vadd.f32 %v370, 1e-05
  %v372 = vrsqrt.pop %v371
  %v373 = vmul.f32 %v301, %v372
  %v374 = vmul.f32 %v302, %v372
  %v375 = vmul.f32 %v303, %v372
  %v376 = vmul.f32 %v304, %v372
  %v377 = vmul.f32 %v305, %v372
  %v378 = vmul.f32 %v306, %v372
  %v379 = vmul.f32 %v307, %v372
  %v380 = vmul.f32 %v308, %v372
  %v381 = vmul.f32 %v309, %v372
  %v382 = vmul.f32 %v310, %v372
  %v383 = vmul.f32 %v311, %v372
  %v384 = vmul.f32 %v312, %v372
  %v385 = vmul.f32 %v313, %v372
  %v386 = vmul.f32 %v314, %v372
  %v387 = vmul.f32 %v315, %v372
  %v388 = vmul.f32 %v316, %v372
  %v389 = vld [vmem:[%s2] sm:$0x1]
  %v391 = vlaneseq
  %v392 = vshrl.u32 %v391, 7
  %v393 = vsub.s32 0, %v392
  %v394 = vrot.slane %v389, %v393
  %v396 = vmul.f32 %v373, %v394
  %v397 = vmul.f32 %v374, %v394
  %v398 = vmul.f32 %v375, %v394
  %v399 = vmul.f32 %v376, %v394
  %v400 = vmul.f32 %v377, %v394
  %v401 = vmul.f32 %v378, %v394
  %v402 = vmul.f32 %v379, %v394
  %v403 = vmul.f32 %v380, %v394
  %v404 = vmul.f32 %v381, %v394
  %v405 = vmul.f32 %v382, %v394
  %v406 = vmul.f32 %v383, %v394
  %v407 = vmul.f32 %v384, %v394
  %v408 = vmul.f32 %v385, %v394
  %v409 = vmul.f32 %v386, %v394
  %v410 = vmul.f32 %v387, %v394
  %v411 = vmul.f32 %v388, %v394
  %v412 = vld [vmem:[%s3] sm:$0x1]
  %v414 = vlaneseq
  %v415 = vshrl.u32 %v414, 7
  %v416 = vsub.s32 0, %v415
  %v417 = vrot.slane %v412, %v416
  %v419 = vadd.f32 %v396, %v417
  %v420 = vadd.f32 %v397, %v417
  %v421 = vadd.f32 %v398, %v417
  %v422 = vadd.f32 %v399, %v417
  %v423 = vadd.f32 %v400, %v417
  %v424 = vadd.f32 %v401, %v417
  %v425 = vadd.f32 %v402, %v417
  %v426 = vadd.f32 %v403, %v417
  %v427 = vadd.f32 %v404, %v417
  %v428 = vadd.f32 %v405, %v417
  %v429 = vadd.f32 %v406, %v417
  %v430 = vadd.f32 %v407, %v417
  %v431 = vadd.f32 %v408, %v417
  %v432 = vadd.f32 %v409, %v417
  %v433 = vadd.f32 %v410, %v417
  %v434 = vadd.f32 %v411, %v417
  %v435 = vmax.f32 %v419, 0.0
  %v436 = vmax.f32 %v420, 0.0
  %v437 = vmax.f32 %v421, 0.0
  %v438 = vmax.f32 %v422, 0.0
  %v439 = vmax.f32 %v423, 0.0
  %v440 = vmax.f32 %v424, 0.0
  %v441 = vmax.f32 %v425, 0.0
  %v442 = vmax.f32 %v426, 0.0
  %v443 = vmax.f32 %v427, 0.0
  %v444 = vmax.f32 %v428, 0.0
  %v445 = vmax.f32 %v429, 0.0
  %v446 = vmax.f32 %v430, 0.0
  %v447 = vmax.f32 %v431, 0.0
  %v448 = vmax.f32 %v432, 0.0
  %v449 = vmax.f32 %v433, 0.0
  %v450 = vmax.f32 %v434, 0.0
  %451 = vst.msk [vmem:[%s4] sm:$0xff] %vm261, %v435
  %452 = vst.msk [vmem:[%s4 + $0x8] sm:$0xff] %vm261, %v436
  %453 = vst.msk [vmem:[%s4 + $0x10] sm:$0xff] %vm261, %v437
  %454 = vst.msk [vmem:[%s4 + $0x18] sm:$0xff] %vm261, %v438
  %455 = vst.msk [vmem:[%s4 + $0x20] sm:$0xff] %vm261, %v439
  %456 = vst.msk [vmem:[%s4 + $0x28] sm:$0xff] %vm261, %v440
  %457 = vst.msk [vmem:[%s4 + $0x30] sm:$0xff] %vm261, %v441
  %458 = vst.msk [vmem:[%s4 + $0x38] sm:$0xff] %vm261, %v442
  %459 = vst.msk [vmem:[%s4 + $0x40] sm:$0xff] %vm261, %v443
  %460 = vst.msk [vmem:[%s4 + $0x48] sm:$0xff] %vm261, %v444
  %461 = vst.msk [vmem:[%s4 + $0x50] sm:$0xff] %vm261, %v445
  %462 = vst.msk [vmem:[%s4 + $0x58] sm:$0xff] %vm261, %v446
  %463 = vst.msk [vmem:[%s4 + $0x60] sm:$0xff] %vm261, %v447
  %464 = vst.msk [vmem:[%s4 + $0x68] sm:$0xff] %vm261, %v448
  %465 = vst.msk [vmem:[%s4 + $0x70] sm:$0xff] %vm261, %v449
  %466 = vst.msk [vmem:[%s4 + $0x78] sm:$0xff] %vm261, %v450
  // Predicated region
  $region18: #{forward.8} parent=0 // pred_check
    _
  $region19: #{forward.8} parent=0 // pred_check_branch
    %468 = sbr.rel (0) target = $region21
  $region20: #{forward.8} parent=0 // pred_region
    _
  $region21: #{forward.8} parent=0 // pred_fallthru
    _
  // Predicated region
  $region22: #{forward.8} parent=0 // pred_check
    _
  $region23: #{forward.8} parent=0 // pred_check_branch
    %470 = sbr.rel (0) target = $region25
  $region24: #{forward.8} parent=0 // pred_region
    _
  $region25: #{forward.8} parent=0 // pred_fallthru
    _

// kernel: forward.9
$region0: #{forward.9}
  #allocation0 [shape = 'u32[]', space=smem, size = 0x4, offset = 0x4, fixed_abs, tag = 'smem constant byte address 0x4 - core index']
  #allocation1 [shape = 'u32[144,128]{1,0:T(1,128)}', space=vmem, size = 0x12000, scoped, tag = 'internal scratch']
  %s0 = inlined_call_operand.vmem [shape: f32[32,288], index: 0, kind: input, shape index: {}]
  %s1 = inlined_call_operand.vmem [shape: f32[288,64], index: 1, kind: input, shape index: {}]
  %s2 = inlined_call_operand.vmem [shape: f32[1,64], index: 2, kind: input, shape index: {}]
  %s3 = inlined_call_operand.vmem [shape: f32[1,64], index: 3, kind: input, shape index: {}]
  %s4 = inlined_call_operand.vmem [shape: f32[32,64], index: 4, kind: output, shape index: {}]
  %s5 = sld [smem:[#allocation0]]
  $region26: #{forward.9} parent=0
    _
  %s7 = ssub.s32 1, %s5
  %s8 = scalar_select 0, %s7, %s5
  // Predicated region
  $region2: #{forward.9} parent=0 // pred_check
    _
  $region3: #{forward.9} parent=0 // pred_check_branch
    %10 = sbr.rel (0) target = $region5
  $region4: #{forward.9} parent=0 // pred_region
    _
  $region5: #{forward.9} parent=0 // pred_fallthru
    _
  // Predicated region
  $region6: #{forward.9} parent=0 // pred_check
    _
  $region7: #{forward.9} parent=0 // pred_check_branch
    %12 = sbr.rel (0) target = $region9
  $region8: #{forward.9} parent=0 // pred_region
    _
  $region9: #{forward.9} parent=0 // pred_fallthru
    _
  // Predicated region
  $region10: #{forward.9} parent=0 // pred_check
    _
  $region11: #{forward.9} parent=0 // pred_check_branch
    %14 = sbr.rel (0) target = $region13
  $region12: #{forward.9} parent=0 // pred_region
    _
  $region13: #{forward.9} parent=0 // pred_fallthru
    _
  // Predicated region
  $region14: #{forward.9} parent=0 // pred_check
    _
  $region15: #{forward.9} parent=0 // pred_check_branch
    %16 = sbr.rel (0) target = $region17
  $region16: #{forward.9} parent=0 // pred_region
    _
  $region17: #{forward.9} parent=0 // pred_fallthru
    _
  %v17 = vld [vmem:[%s0] sm:$0xff]
  %v18 = vld [vmem:[%s0 + $0x8] sm:$0xff]
  %v19 = vld [vmem:[%s0 + $0x10] sm:$0xff]
  %v20 = vld [vmem:[%s0 + $0x18] sm:$0xff]
  %v21 = vld [vmem:[%s0 + $0x20] sm:$0xff]
  %v22 = vld [vmem:[%s0 + $0x28] sm:$0xff]
  %v23 = vld [vmem:[%s0 + $0x30] sm:$0xff]
  %v24 = vld [vmem:[%s0 + $0x38] sm:$0xff]
  %v25 = vld [vmem:[%s0 + $0x40] sm:$0xff]
  %v26 = vld [vmem:[%s0 + $0x48] sm:$0xff]
  %v27 = vld [vmem:[%s0 + $0x50] sm:$0xff]
  %v28 = vld [vmem:[%s0 + $0x58] sm:$0xff]
  %v29 = vld [vmem:[%s1] sm:$0xff]
  %v30 = vld [vmem:[%s1 + $0x8] sm:$0xff]
  %v31 = vld [vmem:[%s1 + $0x10] sm:$0xff]
  %v32 = vld [vmem:[%s1 + $0x18] sm:$0xff]
  %v33 = vld [vmem:[%s1 + $0x20] sm:$0xff]
  %v34 = vld [vmem:[%s1 + $0x28] sm:$0xff]
  %v35 = vld [vmem:[%s1 + $0x30] sm:$0xff]
  %v36 = vld [vmem:[%s1 + $0x38] sm:$0xff]
  %v37 = vld [vmem:[%s1 + $0x40] sm:$0xff]
  %v38 = vld [vmem:[%s1 + $0x48] sm:$0xff]
  %v39 = vld [vmem:[%s1 + $0x50] sm:$0xff]
  %v40 = vld [vmem:[%s1 + $0x58] sm:$0xff]
  %v41 = vld [vmem:[%s1 + $0x60] sm:$0xff]
  %v42 = vld [vmem:[%s1 + $0x68] sm:$0xff]
  %v43 = vld [vmem:[%s1 + $0x70] sm:$0xff]
  %v44 = vld [vmem:[%s1 + $0x78] sm:$0xff]
  %v45 = vld [vmem:[%s1 + $0x80] sm:$0xff]
  %v46 = vld [vmem:[%s1 + $0x88] sm:$0xff]
  %v47 = vld [vmem:[%s1 + $0x90] sm:$0xff]
  %v48 = vld [vmem:[%s1 + $0x98] sm:$0xff]
  %v49 = vld [vmem:[%s1 + $0xa0] sm:$0xff]
  %v50 = vld [vmem:[%s1 + $0xa8] sm:$0xff]
  %v51 = vld [vmem:[%s1 + $0xb0] sm:$0xff]
  %v52 = vld [vmem:[%s1 + $0xb8] sm:$0xff]
  %v53 = vld [vmem:[%s1 + $0xc0] sm:$0xff]
  %v54 = vld [vmem:[%s1 + $0xc8] sm:$0xff]
  %v55 = vld [vmem:[%s1 + $0xd0] sm:$0xff]
  %v56 = vld [vmem:[%s1 + $0xd8] sm:$0xff]
  %v57 = vld [vmem:[%s1 + $0xe0] sm:$0xff]
  %v58 = vld [vmem:[%s1 + $0xe8] sm:$0xff]
  %v59 = vld [vmem:[%s1 + $0xf0] sm:$0xff]
  %v60 = vld [vmem:[%s1 + $0xf8] sm:$0xff]
  %v61 = vld [vmem:[%s1 + $0x100] sm:$0xff]
  %v62 = vld [vmem:[%s1 + $0x108] sm:$0xff]
  %v63 = vld [vmem:[%s1 + $0x110] sm:$0xff]
  %v64 = vld [vmem:[%s1 + $0x118] sm:$0xff]
  %vm65 = vcmask 261120
  %v67 = vsel %vm65, %v19, 0
  %v70 = vsel %vm65, %v22, 0
  %v73 = vsel %vm65, %v25, 0
  %v76 = vsel %vm65, %v28, 0
  %78 = vmatprep.subr.mxu0 0.0
  %79 = vmatpush1.msra.mxu0 %v29
  %80 = vmatprep.subr.mxu0 0.0
  %81 = vmatpush1.msra.mxu0 %v30
  %82 = vmatprep.subr.mxu0 0.0
  %83 = vmatpush1.msra.mxu0 %v31
  %84 = vmatprep.subr.mxu0 0.0
  %85 = vmatpush1.msra.mxu0 %v32
  %86 = vmatprep.subr.mxu0 0.0
  %87 = vmatpush1.msra.mxu0 %v33
  %88 = vmatprep.subr.mxu0 0.0
  %89 = vmatpush1.msra.mxu0 %v34
  %90 = vmatprep.subr.mxu0 0.0
  %91 = vmatpush1.msra.mxu0 %v35
  %92 = vmatprep.subr.mxu0 0.0
  %93 = vmatpush1.msra.mxu0 %v36
  %94 = vmatprep.subr.mxu0 0.0
  %95 = vmatpush1.msra.mxu0 %v37
  %96 = vmatprep.subr.mxu0 0.0
  %97 = vmatpush1.msra.mxu0 %v38
  %98 = vmatprep.subr.mxu0 0.0
  %99 = vmatpush1.msra.mxu0 %v39
  %100 = vmatprep.subr.mxu0 0.0
  %101 = vmatpush1.msra.mxu0 %v40
  %102 = vmatprep.subr.mxu0 0.0
  %103 = vmatpush1.msra.mxu0 %v41
  %104 = vmatprep.subr.mxu0 0.0
  %105 = vmatpush1.msra.mxu0 %v42
  %106 = vmatprep.subr.mxu0 0.0
  %107 = vmatpush1.msra.mxu0 %v43
  %108 = vmatprep.subr.mxu0 0.0
  %109 = vmatpush1.msra.mxu0 %v44
  %110 = vmatprep.subr.mxu0 0.0
  %111 = vmatpush1.msra.mxu0 %v45
  %112 = vmatprep.subr.mxu0 0.0
  %113 = vmatpush1.msra.mxu0 %v46
  %114 = vmatprep.subr.mxu0 0.0
  %115 = vmatpush1.msra.mxu0 %v47
  %116 = vmatprep.subr.mxu0 0.0
  %117 = vmatpush1.msra.mxu0 %v48
  %118 = vmatprep.subr.mxu0 0.0
  %119 = vmatpush1.msra.mxu0 %v49
  %120 = vmatprep.subr.mxu0 0.0
  %121 = vmatpush1.msra.mxu0 %v50
  %122 = vmatprep.subr.mxu0 0.0
  %123 = vmatpush1.msra.mxu0 %v51
  %124 = vmatprep.subr.mxu0 0.0
  %125 = vmatpush1.msra.mxu0 %v52
  %126 = vmatprep.subr.mxu0 0.0
  %127 = vmatpush1.msra.mxu0 %v53
  %128 = vmatprep.subr.mxu0 0.0
  %129 = vmatpush1.msra.mxu0 %v54
  %130 = vmatprep.subr.mxu0 0.0
  %131 = vmatpush1.msra.mxu0 %v55
  %132 = vmatprep.subr.mxu0 0.0
  %133 = vmatpush1.msra.mxu0 %v56
  %134 = vmatprep.subr.mxu0 0.0
  %135 = vmatpush1.msra.mxu0 %v57
  %136 = vmatprep.subr.mxu0 0.0
  %137 = vmatpush1.msra.mxu0 %v58
  %138 = vmatprep.subr.mxu0 0.0
  %139 = vmatpush1.msra.mxu0 %v59
  %140 = vmatprep.subr.mxu0 0.0
  %141 = vmatpush1.msra.mxu0 %v60
  %142 = vmatprep.mubr.f32.mxu0 %v18
  %143 = vmatmul.mubr.f32.gmra.mrb[0].mxu0 %v17
  %v144 = vpop.f32.mrb[0].mxu0
  %v145 = vadd.f32 0.0, %v144
  %v146 = vpop.f32.mrb[0].mxu0
  %147 = vmatprep.mubr.f32.mxu0 %v21
  %148 = vmatmul.mubr.f32.gmra.mrb[0].mxu0 %v20
  %v149 = vpop.f32.mrb[0].mxu0
  %v150 = vadd.f32 0.0, %v149
  %v151 = vpop.f32.mrb[0].mxu0
  %152 = vmatprep.mubr.f32.mxu0 %v24
  %153 = vmatmul.mubr.f32.gmra.mrb[0].mxu0 %v23
  %v154 = vpop.f32.mrb[0].mxu0
  %v155 = vadd.f32 0.0, %v154
  %v156 = vpop.f32.mrb[0].mxu0
  %157 = vmatprep.mubr.f32.mxu0 %v27
  %158 = vmatmul.mubr.f32.gmra.mrb[0].mxu0 %v26
  %v159 = vpop.f32.mrb[0].mxu0
  %v160 = vadd.f32 0.0, %v159
  %v161 = vpop.f32.mrb[0].mxu0
  %162 = vdwg.mxu0
  %163 = vmatprep.subr.mxu0 0.0
  %164 = vmatpush1.msra.mxu0 %v61
  %165 = vmatprep.subr.mxu0 0.0
  %166 = vmatpush1.msra.mxu0 %v62
  %167 = vmatprep.subr.mxu0 0.0
  %168 = vmatpush1.msra.mxu0 %v63
  %169 = vmatprep.subr.mxu0 0.0
  %170 = vmatpush1.msra.mxu0 %v64
  %171 = vmatprep.subr.mxu0 0.0
  %172 = vmatpush1.msra.mxu0 0.0
  %173 = vmatprep.subr.mxu0 0.0
  %174 = vmatpush1.msra.mxu0 0.0
  %175 = vmatprep.subr.mxu0 0.0
  %176 = vmatpush1.msra.mxu0 0.0
  %177 = vmatprep.subr.mxu0 0.0
  %178 = vmatpush1.msra.mxu0 0.0
  %179 = vmatprep.subr.mxu0 0.0
  %180 = vmatpush1.msra.mxu0 0.0
  %181 = vmatprep.subr.mxu0 0.0
  %182 = vmatpush1.msra.mxu0 0.0
  %183 = vmatprep.subr.mxu0 0.0
  %184 = vmatpush1.msra.mxu0 0.0
  %185 = vmatprep.subr.mxu0 0.0
  %186 = vmatpush1.msra.mxu0 0.0
  %187 = vmatprep.subr.mxu0 0.0
  %188 = vmatpush1.msra.mxu0 0.0
  %189 = vmatprep.subr.mxu0 0.0
  %190 = vmatpush1.msra.mxu0 0.0
  %191 = vmatprep.subr.mxu0 0.0
  %192 = vmatpush1.msra.mxu0 0.0
  %193 = vmatprep.subr.mxu0 0.0
  %194 = vmatpush1.msra.mxu0 0.0
  %195 = vmatprep.subr.mxu0 0.0
  %196 = vmatpush1.msra.mxu0 0.0
  %197 = vmatprep.subr.mxu0 0.0
  %198 = vmatpush1.msra.mxu0 0.0
  %199 = vmatprep.subr.mxu0 0.0
  %200 = vmatpush1.msra.mxu0 0.0
  %201 = vmatprep.subr.mxu0 0.0
  %202 = vmatpush1.msra.mxu0 0.0
  %203 = vmatprep.subr.mxu0 0.0
  %204 = vmatpush1.msra.mxu0 0.0
  %205 = vmatprep.subr.mxu0 0.0
  %206 = vmatpush1.msra.mxu0 0.0
  %207 = vmatprep.subr.mxu0 0.0
  %208 = vmatpush1.msra.mxu0 0.0
  %209 = vmatprep.subr.mxu0 0.0
  %210 = vmatpush1.msra.mxu0 0.0
  %211 = vmatprep.subr.mxu0 0.0
  %212 = vmatpush1.msra.mxu0 0.0
  %213 = vmatprep.subr.mxu0 0.0
  %214 = vmatpush1.msra.mxu0 0.0
  %215 = vmatprep.subr.mxu0 0.0
  %216 = vmatpush1.msra.mxu0 0.0
  %217 = vmatprep.subr.mxu0 0.0
  %218 = vmatpush1.msra.mxu0 0.0
  %219 = vmatprep.subr.mxu0 0.0
  %220 = vmatpush1.msra.mxu0 0.0
  %221 = vmatprep.subr.mxu0 0.0
  %222 = vmatpush1.msra.mxu0 0.0
  %223 = vmatprep.subr.mxu0 0.0
  %224 = vmatpush1.msra.mxu0 0.0
  %225 = vmatprep.subr.mxu0 0.0
  %226 = vmatpush1.msra.mxu0 0.0
  %227 = vmatprep.mubr.f32.mxu0 0.0
  %228 = vmatmul.mubr.f32.gmra.mrb[0].mxu0 %v67
  %v229 = vpop.f32.mrb[0].mxu0
  %v230 = vadd.f32 %v145, %v229
  %v231 = vpop.f32.mrb[0].mxu0
  %232 = vmatprep.mubr.f32.mxu0 0.0
  %233 = vmatmul.mubr.f32.gmra.mrb[0].mxu0 %v70
  %v234 = vpop.f32.mrb[0].mxu0
  %v235 = vadd.f32 %v150, %v234
  %v236 = vpop.f32.mrb[0].mxu0
  %237 = vmatprep.mubr.f32.mxu0 0.0
  %238 = vmatmul.mubr.f32.gmra.mrb[0].mxu0 %v73
  %v239 = vpop.f32.mrb[0].mxu0
  %v240 = vadd.f32 %v155, %v239
  %v241 = vpop.f32.mrb[0].mxu0
  %242 = vmatprep.mubr.f32.mxu0 0.0
  %243 = vmatmul.mubr.f32.gmra.mrb[0].mxu0 %v76
  %v244 = vpop.f32.mrb[0].mxu0
  %v245 = vadd.f32 %v160, %v244
  %v246 = vpop.f32.mrb[0].mxu0
  %247 = vdwg.mxu0
  %vm248 = vcmask 523264
  %v249 = vsel %vm248, %v230, 0.0
  %v250 = vsel %vm248, %v235, 0.0
  %v251 = vadd.f32 %v249, %v250
  %v252 = vsel %vm248, %v240, 0.0
  %v253 = vadd.f32 %v251, %v252
  %v254 = vsel %vm248, %v245, 0.0
  %v255 = vadd.f32 %v253, %v254
  %v256 = vrot.slane %v255, 4
  %v257 = vadd.f32 %v255, %v256
  %v258 = vrot.slane %v257, 2
  %v259 = vadd.f32 %v257, %v258
  %v260 = vrot.slane %v259, 1
  %v261 = vadd.f32 %v259, %v260
  %v262 = vrcp.pop 32.0
  %v263 = vmul.f32 %v261, %v262
  %v264 = vsub.f32 %v230, %v263
  %v265 = vsub.f32 %v235, %v263
  %v266 = vsub.f32 %v240, %v263
  %v267 = vsub.f32 %v245, %v263
  %v268 = vmul.f32 %v264, %v264
  %v269 = vmul.f32 %v265, %v265
  %v270 = vmul.f32 %v266, %v266
  %v271 = vmul.f32 %v267, %v267
  %v272 = vsel %vm248, %v268, 0.0
  %v273 = vsel %vm248, %v269, 0.0
  %v274 = vadd.f32 %v272, %v273
  %v275 = vsel %vm248, %v270, 0.0
  %v276 = vadd.f32 %v274, %v275
  %v277 = vsel %vm248, %v271, 0.0
  %v278 = vadd.f32 %v276, %v277
  %v279 = vrot.slane %v278, 4
  %v280 = vadd.f32 %v278, %v279
  %v281 = vrot.slane %v280, 2
  %v282 = vadd.f32 %v280, %v281
  %v283 = vrot.slane %v282, 1
  %v284 = vadd.f32 %v282, %v283
  %v285 = vmul.f32 %v284, %v262
  %v286 = vadd.f32 %v285, 1e-05
  %v287 = vrsqrt.pop %v286
  %v288 = vmul.f32 %v264, %v287
  %v289 = vmul.f32 %v265, %v287
  %v290 = vmul.f32 %v266, %v287
  %v291 = vmul.f32 %v267, %v287
  %v292 = vld [vmem:[%s2] sm:$0x1]
  %v294 = vlaneseq
  %v295 = vshrl.u32 %v294, 7
  %v296 = vsub.s32 0, %v295
  %v297 = vrot.slane %v292, %v296
  %v299 = vmul.f32 %v288, %v297
  %v300 = vmul.f32 %v289, %v297
  %v301 = vmul.f32 %v290, %v297
  %v302 = vmul.f32 %v291, %v297
  %v303 = vld [vmem:[%s3] sm:$0x1]
  %v305 = vlaneseq
  %v306 = vshrl.u32 %v305, 7
  %v307 = vsub.s32 0, %v306
  %v308 = vrot.slane %v303, %v307
  %v310 = vadd.f32 %v299, %v308
  %v311 = vadd.f32 %v300, %v308
  %v312 = vadd.f32 %v301, %v308
  %v313 = vadd.f32 %v302, %v308
  %v314 = vmax.f32 %v310, 0.0
  %v315 = vmax.f32 %v311, 0.0
  %v316 = vmax.f32 %v312, 0.0
  %v317 = vmax.f32 %v313, 0.0
  %318 = vst.msk [vmem:[%s4] sm:$0xff] %vm248, %v314
  %319 = vst.msk [vmem:[%s4 + $0x8] sm:$0xff] %vm248, %v315
  %320 = vst.msk [vmem:[%s4 + $0x10] sm:$0xff] %vm248, %v316
  %321 = vst.msk [vmem:[%s4 + $0x18] sm:$0xff] %vm248, %v317
  // Predicated region
  $region18: #{forward.9} parent=0 // pred_check
    _
  $region19: #{forward.9} parent=0 // pred_check_branch
    %323 = sbr.rel (0) target = $region21
  $region20: #{forward.9} parent=0 // pred_region
    _
  $region21: #{forward.9} parent=0 // pred_fallthru
    _
  // Predicated region
  $region22: #{forward.9} parent=0 // pred_check
    _
  $region23: #{forward.9} parent=0 // pred_check_branch
    %325 = sbr.rel (0) target = $region25
  $region24: #{forward.9} parent=0 // pred_region
    _
  $region25: #{forward.9} parent=0 // pred_fallthru
    _

// kernel: forward.10
$region0: #{forward.10}
  #allocation0 [shape = 'u32[]', space=smem, size = 0x4, offset = 0x4, fixed_abs, tag = 'smem constant byte address 0x4 - core index']
  #allocation1 [shape = 'u32[144,128]{1,0:T(1,128)}', space=vmem, size = 0x12000, scoped, tag = 'internal scratch']
  %s0 = inlined_call_operand.vmem [shape: f32[2,1024], index: 0, kind: input, shape index: {}]
  %s1 = inlined_call_operand.vmem [shape: f32[64,1024], index: 1, kind: input, shape index: {}]
  %s2 = inlined_call_operand.hbm [shape: f32[2,64], index: 2, kind: output, shape index: {0}]
  %s3 = inlined_call_operand.vmem [shape: f32[2,1024], index: 3, kind: output, shape index: {1}]
  %4 = xla_tuple %s2, %s3
  %s5 = sld [smem:[#allocation0]]
  $region26: #{forward.10} parent=0
    _
  %s7 = ssub.s32 1, %s5
  %s8 = scalar_select 0, %s7, %s5
  $region1: #{forward.10} parent=0
    #allocation2 [shape = 'u8[1024]{0}', space=vmem, size = 0x400, scoped, tag = 'output window, operand 0, single buffered']
    #allocation3 [shape = 's32[1]{0}', space=sflag, size = 0x4, scoped, tag = 'scoped memory for forward.10']
    %9 = vsyncpa [#allocation3], 0
    // Predicated region
    $region2: #{forward.10} parent=1 // pred_check
      _
    $region3: #{forward.10} parent=1 // pred_check_branch
      %11 = sbr.rel (0) target = $region5
    $region4: #{forward.10} parent=1 // pred_region
      _
    $region5: #{forward.10} parent=1 // pred_fallthru
      _
    // Predicated region
    $region6: #{forward.10} parent=1 // pred_check
      _
    $region7: #{forward.10} parent=1 // pred_check_branch
      %13 = sbr.rel (0) target = $region9
    $region8: #{forward.10} parent=1 // pred_region
      _
    $region9: #{forward.10} parent=1 // pred_fallthru
      _
    %v14 = vld [vmem:[%s0] sm:$0xff]
    %v15 = vld [vmem:[%s0 + $0x8] sm:$0xff]
    %v16 = vld [vmem:[%s1] sm:$0xff]
    %v17 = vld [vmem:[%s1 + $0x8] sm:$0xff]
    %v18 = vld [vmem:[%s1 + $0x10] sm:$0xff]
    %v19 = vld [vmem:[%s1 + $0x18] sm:$0xff]
    %v20 = vld [vmem:[%s1 + $0x20] sm:$0xff]
    %v21 = vld [vmem:[%s1 + $0x28] sm:$0xff]
    %v22 = vld [vmem:[%s1 + $0x30] sm:$0xff]
    %v23 = vld [vmem:[%s1 + $0x38] sm:$0xff]
    %v24 = vld [vmem:[%s1 + $0x40] sm:$0xff]
    %v25 = vld [vmem:[%s1 + $0x48] sm:$0xff]
    %v26 = vld [vmem:[%s1 + $0x50] sm:$0xff]
    %v27 = vld [vmem:[%s1 + $0x58] sm:$0xff]
    %v28 = vld [vmem:[%s1 + $0x60] sm:$0xff]
    %v29 = vld [vmem:[%s1 + $0x68] sm:$0xff]
    %v30 = vld [vmem:[%s1 + $0x70] sm:$0xff]
    %v31 = vld [vmem:[%s1 + $0x78] sm:$0xff]
    %v32 = vld [vmem:[%s1 + $0x80] sm:$0xff]
    %v33 = vld [vmem:[%s1 + $0x88] sm:$0xff]
    %v34 = vld [vmem:[%s1 + $0x90] sm:$0xff]
    %v35 = vld [vmem:[%s1 + $0x98] sm:$0xff]
    %v36 = vld [vmem:[%s1 + $0xa0] sm:$0xff]
    %v37 = vld [vmem:[%s1 + $0xa8] sm:$0xff]
    %v38 = vld [vmem:[%s1 + $0xb0] sm:$0xff]
    %v39 = vld [vmem:[%s1 + $0xb8] sm:$0xff]
    %v40 = vld [vmem:[%s1 + $0xc0] sm:$0xff]
    %v41 = vld [vmem:[%s1 + $0xc8] sm:$0xff]
    %v42 = vld [vmem:[%s1 + $0xd0] sm:$0xff]
    %v43 = vld [vmem:[%s1 + $0xd8] sm:$0xff]
    %v44 = vld [vmem:[%s1 + $0xe0] sm:$0xff]
    %v45 = vld [vmem:[%s1 + $0xe8] sm:$0xff]
    %v46 = vld [vmem:[%s1 + $0xf0] sm:$0xff]
    %v47 = vld [vmem:[%s1 + $0xf8] sm:$0xff]
    %v48 = vld [vmem:[%s1 + $0x100] sm:$0xff]
    %v49 = vld [vmem:[%s1 + $0x108] sm:$0xff]
    %v50 = vld [vmem:[%s1 + $0x110] sm:$0xff]
    %v51 = vld [vmem:[%s1 + $0x118] sm:$0xff]
    %v52 = vld [vmem:[%s1 + $0x120] sm:$0xff]
    %v53 = vld [vmem:[%s1 + $0x128] sm:$0xff]
    %v54 = vld [vmem:[%s1 + $0x130] sm:$0xff]
    %v55 = vld [vmem:[%s1 + $0x138] sm:$0xff]
    %v56 = vld [vmem:[%s1 + $0x140] sm:$0xff]
    %v57 = vld [vmem:[%s1 + $0x148] sm:$0xff]
    %v58 = vld [vmem:[%s1 + $0x150] sm:$0xff]
    %v59 = vld [vmem:[%s1 + $0x158] sm:$0xff]
    %v60 = vld [vmem:[%s1 + $0x160] sm:$0xff]
    %v61 = vld [vmem:[%s1 + $0x168] sm:$0xff]
    %v62 = vld [vmem:[%s1 + $0x170] sm:$0xff]
    %v63 = vld [vmem:[%s1 + $0x178] sm:$0xff]
    %v64 = vld [vmem:[%s1 + $0x180] sm:$0xff]
    %v65 = vld [vmem:[%s1 + $0x188] sm:$0xff]
    %v66 = vld [vmem:[%s1 + $0x190] sm:$0xff]
    %v67 = vld [vmem:[%s1 + $0x198] sm:$0xff]
    %v68 = vld [vmem:[%s1 + $0x1a0] sm:$0xff]
    %v69 = vld [vmem:[%s1 + $0x1a8] sm:$0xff]
    %v70 = vld [vmem:[%s1 + $0x1b0] sm:$0xff]
    %v71 = vld [vmem:[%s1 + $0x1b8] sm:$0xff]
    %v72 = vld [vmem:[%s1 + $0x1c0] sm:$0xff]
    %v73 = vld [vmem:[%s1 + $0x1c8] sm:$0xff]
    %v74 = vld [vmem:[%s1 + $0x1d0] sm:$0xff]
    %v75 = vld [vmem:[%s1 + $0x1d8] sm:$0xff]
    %v76 = vld [vmem:[%s1 + $0x1e0] sm:$0xff]
    %v77 = vld [vmem:[%s1 + $0x1e8] sm:$0xff]
    %v78 = vld [vmem:[%s1 + $0x1f0] sm:$0xff]
    %v79 = vld [vmem:[%s1 + $0x1f8] sm:$0xff]
    %v80 = vmul.f32 %v14, %v14
    %v81 = vmul.f32 %v15, %v15
    %v84 = vcombine.high %v80, %v80
    %v86 = vunpack.c.l.s4 1983009808
    %v87 = vunpack.c.0.s8 %v86
    %v88 = vlaneseq
    %v89 = vshrl.u32 %v88, 7
    %v90 = vsub.s32 %v87, %v89
    %v91 = vrot.slane %v80, %v90
    %v93 = vunpack.c.l.s4 1983009808
    %v94 = vunpack.c.0.s8 %v93
    %v95 = vlaneseq
    %v96 = vshrl.u32 %v95, 7
    %v97 = vsub.s32 %v94, %v96
    %v98 = vrot.slane %v84, %v97
    %v99 = vcombine.high %v91, %v91
    %v100 = vcombine.high %v98, %v98
    %v101 = vcombine.high %v81, %v81
    %v103 = vunpack.c.l.s4 1983009808
    %v104 = vunpack.c.0.s8 %v103
    %v105 = vlaneseq
    %v106 = vshrl.u32 %v105, 7
    %v107 = vsub.s32 %v104, %v106
    %v108 = vrot.slane %v81, %v107
    %v110 = vunpack.c.l.s4 1983009808
    %v111 = vunpack.c.0.s8 %v110
    %v112 = vlaneseq
    %v113 = vshrl.u32 %v112, 7
    %v114 = vsub.s32 %v111, %v113
    %v115 = vrot.slane %v101, %v114
    %v116 = vcombine.high %v108, %v108
    %v117 = vcombine.high %v115, %v115
    %vm126 = vcmask 1041408
    %v127 = vsel %vm126, %v91, 0.0
    %v128 = vsel %vm126, %v99, 0.0
    %v129 = vadd.f32 %v127, %v128
    %v130 = vsel %vm126, %v98, 0.0
    %v131 = vadd.f32 %v129, %v130
    %v132 = vsel %vm126, %v100, 0.0
    %v133 = vadd.f32 %v131, %v132
    %v134 = vsel %vm126, %v108, 0.0
    %v135 = vadd.f32 %v133, %v134
    %v136 = vsel %vm126, %v116, 0.0
    %v137 = vadd.f32 %v135, %v136
    %v138 = vsel %vm126, %v115, 0.0
    %v139 = vadd.f32 %v137, %v138
    %v140 = vsel %vm126, %v117, 0.0
    %v141 = vadd.f32 %v139, %v140
    %142 = vadd.xlane.f32.xlu0 %v141
    %v143 = vpop.xlane.xlu0 %142
    %v144 = vrsqrt.pop %v143
    %v145 = vmul.f32 %v143, %v144
    %vm146 = vcmp.eq.f32.partialorder %v143, inf
    %v147 = vsel %vm146, %v143, %v145
    %vm148 = vcmp.eq.f32.partialorder %v143, 0.0
    %v149 = vand.u32 %v143, 2147483648
    %v150 = vsel %vm148, %v149, %v147
    %v151 = vmul.f32 %v16, %v16
    %v152 = vmul.f32 %v17, %v17
    %v153 = vmul.f32 %v18, %v18
    %v154 = vmul.f32 %v19, %v19
    %v155 = vmul.f32 %v20, %v20
    %v156 = vmul.f32 %v21, %v21
    %v157 = vmul.f32 %v22, %v22
    %v158 = vmul.f32 %v23, %v23
    %v159 = vmul.f32 %v24, %v24
    %v160 = vmul.f32 %v25, %v25
    %v161 = vmul.f32 %v26, %v26
    %v162 = vmul.f32 %v27, %v27
    %v163 = vmul.f32 %v28, %v28
    %v164 = vmul.f32 %v29, %v29
    %v165 = vmul.f32 %v30, %v30
    %v166 = vmul.f32 %v31, %v31
    %v167 = vmul.f32 %v32, %v32
    %v168 = vmul.f32 %v33, %v33
    %v169 = vmul.f32 %v34, %v34
    %v170 = vmul.f32 %v35, %v35
    %v171 = vmul.f32 %v36, %v36
    %v172 = vmul.f32 %v37, %v37
    %v173 = vmul.f32 %v38, %v38
    %v174 = vmul.f32 %v39, %v39
    %v175 = vmul.f32 %v40, %v40
    %v176 = vmul.f32 %v41, %v41
    %v177 = vmul.f32 %v42, %v42
    %v178 = vmul.f32 %v43, %v43
    %v179 = vmul.f32 %v44, %v44
    %v180 = vmul.f32 %v45, %v45
    %v181 = vmul.f32 %v46, %v46
    %v182 = vmul.f32 %v47, %v47
    %v183 = vmul.f32 %v48, %v48
    %v184 = vmul.f32 %v49, %v49
    %v185 = vmul.f32 %v50, %v50
    %v186 = vmul.f32 %v51, %v51
    %v187 = vmul.f32 %v52, %v52
    %v188 = vmul.f32 %v53, %v53
    %v189 = vmul.f32 %v54, %v54
    %v190 = vmul.f32 %v55, %v55
    %v191 = vmul.f32 %v56, %v56
    %v192 = vmul.f32 %v57, %v57
    %v193 = vmul.f32 %v58, %v58
    %v194 = vmul.f32 %v59, %v59
    %v195 = vmul.f32 %v60, %v60
    %v196 = vmul.f32 %v61, %v61
    %v197 = vmul.f32 %v62, %v62
    %v198 = vmul.f32 %v63, %v63
    %v199 = vmul.f32 %v64, %v64
    %v200 = vmul.f32 %v65, %v65
    %v201 = vmul.f32 %v66, %v66
    %v202 = vmul.f32 %v67, %v67
    %v203 = vmul.f32 %v68, %v68
    %v204 = vmul.f32 %v69, %v69
    %v205 = vmul.f32 %v70, %v70
    %v206 = vmul.f32 %v71, %v71
    %v207 = vmul.f32 %v72, %v72
    %v208 = vmul.f32 %v73, %v73
    %v209 = vmul.f32 %v74, %v74
    %v210 = vmul.f32 %v75, %v75
    %v211 = vmul.f32 %v76, %v76
    %v212 = vmul.f32 %v77, %v77
    %v213 = vmul.f32 %v78, %v78
    %v214 = vmul.f32 %v79, %v79
    %v215 = vadd.f32 %v151, %v152
    %v216 = vadd.f32 %v215, %v153
    %v217 = vadd.f32 %v216, %v154
    %v218 = vadd.f32 %v217, %v155
    %v219 = vadd.f32 %v218, %v156
    %v220 = vadd.f32 %v219, %v157
    %v221 = vadd.f32 %v220, %v158
    %222 = vadd.xlane.f32.xlu0 %v221
    %v223 = vpop.xlane.xlu0 %222
    %v224 = vadd.f32 %v159, %v160
    %v225 = vadd.f32 %v224, %v161
    %v226 = vadd.f32 %v225, %v162
    %v227 = vadd.f32 %v226, %v163
    %v228 = vadd.f32 %v227, %v164
    %v229 = vadd.f32 %v228, %v165
    %v230 = vadd.f32 %v229, %v166
    %231 = vadd.xlane.f32.xlu0 %v230
    %v232 = vpop.xlane.xlu0 %231
    %v233 = vadd.f32 %v167, %v168
    %v234 = vadd.f32 %v233, %v169
    %v235 = vadd.f32 %v234, %v170
    %v236 = vadd.f32 %v235, %v171
    %v237 = vadd.f32 %v236, %v172
    %v238 = vadd.f32 %v237, %v173
    %v239 = vadd.f32 %v238, %v174
    %240 = vadd.xlane.f32.xlu0 %v239
    %v241 = vpop.xlane.xlu0 %240
    %v242 = vadd.f32 %v175, %v176
    %v243 = vadd.f32 %v242, %v177
    %v244 = vadd.f32 %v243, %v178
    %v245 = vadd.f32 %v244, %v179
    %v246 = vadd.f32 %v245, %v180
    %v247 = vadd.f32 %v246, %v181
    %v248 = vadd.f32 %v247, %v182
    %249 = vadd.xlane.f32.xlu0 %v248
    %v250 = vpop.xlane.xlu0 %249
    %v251 = vadd.f32 %v183, %v184
    %v252 = vadd.f32 %v251, %v185
    %v253 = vadd.f32 %v252, %v186
    %v254 = vadd.f32 %v253, %v187
    %v255 = vadd.f32 %v254, %v188
    %v256 = vadd.f32 %v255, %v189
    %v257 = vadd.f32 %v256, %v190
    %258 = vadd.xlane.f32.xlu0 %v257
    %v259 = vpop.xlane.xlu0 %258
    %v260 = vadd.f32 %v191, %v192
    %v261 = vadd.f32 %v260, %v193
    %v262 = vadd.f32 %v261, %v194
    %v263 = vadd.f32 %v262, %v195
    %v264 = vadd.f32 %v263, %v196
    %v265 = vadd.f32 %v264, %v197
    %v266 = vadd.f32 %v265, %v198
    %267 = vadd.xlane.f32.xlu0 %v266
    %v268 = vpop.xlane.xlu0 %267
    %v269 = vadd.f32 %v199, %v200
    %v270 = vadd.f32 %v269, %v201
    %v271 = vadd.f32 %v270, %v202
    %v272 = vadd.f32 %v271, %v203
    %v273 = vadd.f32 %v272, %v204
    %v274 = vadd.f32 %v273, %v205
    %v275 = vadd.f32 %v274, %v206
    %276 = vadd.xlane.f32.xlu0 %v275
    %v277 = vpop.xlane.xlu0 %276
    %v278 = vadd.f32 %v207, %v208
    %v279 = vadd.f32 %v278, %v209
    %v280 = vadd.f32 %v279, %v210
    %v281 = vadd.f32 %v280, %v211
    %v282 = vadd.f32 %v281, %v212
    %v283 = vadd.f32 %v282, %v213
    %v284 = vadd.f32 %v283, %v214
    %285 = vadd.xlane.f32.xlu0 %v284
    %v286 = vpop.xlane.xlu0 %285
    %v287 = vrsqrt.pop %v223
    %v288 = vmul.f32 %v223, %v287
    %vm289 = vcmp.eq.f32.partialorder %v223, inf
    %v290 = vsel %vm289, %v223, %v288
    %vm291 = vcmp.eq.f32.partialorder %v223, 0.0
    %v292 = vand.u32 %v223, 2147483648
    %v293 = vsel %vm291, %v292, %v290
    %v294 = vrsqrt.pop %v232
    %v295 = vmul.f32 %v232, %v294
    %vm296 = vcmp.eq.f32.partialorder %v232, inf
    %v297 = vsel %vm296, %v232, %v295
    %vm298 = vcmp.eq.f32.partialorder %v232, 0.0
    %v299 = vand.u32 %v232, 2147483648
    %v300 = vsel %vm298, %v299, %v297
    %v301 = vrsqrt.pop %v241
    %v302 = vmul.f32 %v241, %v301
    %vm303 = vcmp.eq.f32.partialorder %v241, inf
    %v304 = vsel %vm303, %v241, %v302
    %vm305 = vcmp.eq.f32.partialorder %v241, 0.0
    %v306 = vand.u32 %v241, 2147483648
    %v307 = vsel %vm305, %v306, %v304
    %v308 = vrsqrt.pop %v250
    %v309 = vmul.f32 %v250, %v308
    %vm310 = vcmp.eq.f32.partialorder %v250, inf
    %v311 = vsel %vm310, %v250, %v309
    %vm312 = vcmp.eq.f32.partialorder %v250, 0.0
    %v313 = vand.u32 %v250, 2147483648
    %v314 = vsel %vm312, %v313, %v311
    %v315 = vrsqrt.pop %v259
    %v316 = vmul.f32 %v259, %v315
    %vm317 = vcmp.eq.f32.partialorder %v259, inf
    %v318 = vsel %vm317, %v259, %v316
    %vm319 = vcmp.eq.f32.partialorder %v259, 0.0
    %v320 = vand.u32 %v259, 2147483648
    %v321 = vsel %vm319, %v320, %v318
    %v322 = vrsqrt.pop %v268
    %v323 = vmul.f32 %v268, %v322
    %vm324 = vcmp.eq.f32.partialorder %v268, inf
    %v325 = vsel %vm324, %v268, %v323
    %vm326 = vcmp.eq.f32.partialorder %v268, 0.0
    %v327 = vand.u32 %v268, 2147483648
    %v328 = vsel %vm326, %v327, %v325
    %v329 = vrsqrt.pop %v277
    %v330 = vmul.f32 %v277, %v329
    %vm331 = vcmp.eq.f32.partialorder %v277, inf
    %v332 = vsel %vm331, %v277, %v330
    %vm333 = vcmp.eq.f32.partialorder %v277, 0.0
    %v334 = vand.u32 %v277, 2147483648
    %v335 = vsel %vm333, %v334, %v332
    %v336 = vrsqrt.pop %v286
    %v337 = vmul.f32 %v286, %v336
    %vm338 = vcmp.eq.f32.partialorder %v286, inf
    %v339 = vsel %vm338, %v286, %v337
    %vm340 = vcmp.eq.f32.partialorder %v286, 0.0
    %v341 = vand.u32 %v286, 2147483648
    %v342 = vsel %vm340, %v341, %v339
    %v345 = vcombine.high %v14, %v14
    %v347 = vunpack.c.l.s4 1983009808
    %v348 = vunpack.c.0.s8 %v347
    %v349 = vlaneseq
    %v350 = vshrl.u32 %v349, 7
    %v351 = vsub.s32 %v348, %v350
    %v352 = vrot.slane %v14, %v351
    %v354 = vunpack.c.l.s4 1983009808
    %v355 = vunpack.c.0.s8 %v354
    %v356 = vlaneseq
    %v357 = vshrl.u32 %v356, 7
    %v358 = vsub.s32 %v355, %v357
    %v359 = vrot.slane %v345, %v358
    %v360 = vcombine.high %v352, %v352
    %v361 = vcombine.high %v359, %v359
    %v362 = vcombine.high %v15, %v15
    %v364 = vunpack.c.l.s4 1983009808
    %v365 = vunpack.c.0.s8 %v364
    %v366 = vlaneseq
    %v367 = vshrl.u32 %v366, 7
    %v368 = vsub.s32 %v365, %v367
    %v369 = vrot.slane %v15, %v368
    %v371 = vunpack.c.l.s4 1983009808
    %v372 = vunpack.c.0.s8 %v371
    %v373 = vlaneseq
    %v374 = vshrl.u32 %v373, 7
    %v375 = vsub.s32 %v372, %v374
    %v376 = vrot.slane %v362, %v375
    %v377 = vcombine.high %v369, %v369
    %v378 = vcombine.high %v376, %v376
    %387 = vmatprep.subr.mxu0 %v17
    %388 = vmatpush1.xpose.msra.mxu0 %v16
    %389 = vmatprep.subr.mxu0 %v25
    %390 = vmatpush1.xpose.msra.mxu0 %v24
    %391 = vmatprep.subr.mxu0 %v33
    %392 = vmatpush1.xpose.msra.mxu0 %v32
    %393 = vmatprep.subr.mxu0 %v41
    %394 = vmatpush1.xpose.msra.mxu0 %v40
    %395 = vmatprep.subr.mxu0 %v49
    %396 = vmatpush1.xpose.msra.mxu0 %v48
    %397 = vmatprep.subr.mxu0 %v57
    %398 = vmatpush1.xpose.msra.mxu0 %v56
    %399 = vmatprep.subr.mxu0 %v65
    %400 = vmatpush1.xpose.msra.mxu0 %v64
    %401 = vmatprep.subr.mxu0 %v73
    %402 = vmatpush1.xpose.msra.mxu0 %v72
    %403 = vmatprep.subr.mxu0 0.0
    %404 = vmatpush1.xpose.msra.mxu0 0.0
    %405 = vmatprep.subr.mxu0 0.0
    %406 = vmatpush1.xpose.msra.mxu0 0.0
    %407 = vmatprep.subr.mxu0 0.0
    %408 = vmatpush1.xpose.msra.mxu0 0.0
    %409 = vmatprep.subr.mxu0 0.0
    %410 = vmatpush1.xpose.msra.mxu0 0.0
    %411 = vmatprep.subr.mxu0 0.0
    %412 = vmatpush1.xpose.msra.mxu0 0.0
    %413 = vmatprep.subr.mxu0 0.0
    %414 = vmatpush1.xpose.msra.mxu0 0.0
    %415 = vmatprep.subr.mxu0 0.0
    %416 = vmatpush1.xpose.msra.mxu0 0.0
    %417 = vmatprep.subr.mxu0 0.0
    %418 = vmatpush1.xpose.msra.mxu0 0.0
    %419 = vmatprep.subr.mxu0 0.0
    %420 = vmatpush1.xpose.msra.mxu0 0.0
    %421 = vmatprep.subr.mxu0 0.0
    %422 = vmatpush1.xpose.msra.mxu0 0.0
    %423 = vmatprep.subr.mxu0 0.0
    %424 = vmatpush1.xpose.msra.mxu0 0.0
    %425 = vmatprep.subr.mxu0 0.0
    %426 = vmatpush1.xpose.msra.mxu0 0.0
    %427 = vmatprep.subr.mxu0 0.0
    %428 = vmatpush1.xpose.msra.mxu0 0.0
    %429 = vmatprep.subr.mxu0 0.0
    %430 = vmatpush1.xpose.msra.mxu0 0.0
    %431 = vmatprep.subr.mxu0 0.0
    %432 = vmatpush1.xpose.msra.mxu0 0.0
    %433 = vmatprep.subr.mxu0 0.0
    %434 = vmatpush1.xpose.msra.mxu0 0.0
    %435 = vmatprep.subr.mxu0 0.0
    %436 = vmatpush1.xpose.msra.mxu0 0.0
    %437 = vmatprep.subr.mxu0 0.0
    %438 = vmatpush1.xpose.msra.mxu0 0.0
    %439 = vmatprep.subr.mxu0 0.0
    %440 = vmatpush1.xpose.msra.mxu0 0.0
    %441 = vmatprep.subr.mxu0 0.0
    %442 = vmatpush1.xpose.msra.mxu0 0.0
    %443 = vmatprep.subr.mxu0 0.0
    %444 = vmatpush1.xpose.msra.mxu0 0.0
    %445 = vmatprep.subr.mxu0 0.0
    %446 = vmatpush1.xpose.msra.mxu0 0.0
    %447 = vmatprep.subr.mxu0 0.0
    %448 = vmatpush1.xpose.msra.mxu0 0.0
    %449 = vmatprep.subr.mxu0 0.0
    %450 = vmatpush1.xpose.msra.mxu0 0.0
    %451 = vmatprep.mubr.f32.mxu0 %v360
    %452 = vmatmul.mubr.f32.gmra.mrb[0].mxu0 %v352
    %v453 = vpop.f32.mrb[0].mxu0
    %v454 = vadd.f32 0.0, %v453
    %v455 = vpop.f32.mrb[0].mxu0
    %456 = vdwg.mxu0
    %457 = vmatprep.subr.mxu0 %v19
    %458 = vmatpush1.xpose.msra.mxu0 %v18
    %459 = vmatprep.subr.mxu0 %v27
    %460 = vmatpush1.xpose.msra.mxu0 %v26
    %461 = vmatprep.subr.mxu0 %v35
    %462 = vmatpush1.xpose.msra.mxu0 %v34
    %463 = vmatprep.subr.mxu0 %v43
    %464 = vmatpush1.xpose.msra.mxu0 %v42
    %465 = vmatprep.subr.mxu0 %v51
    %466 = vmatpush1.xpose.msra.mxu0 %v50
    %467 = vmatprep.subr.mxu0 %v59
    %468 = vmatpush1.xpose.msra.mxu0 %v58
    %469 = vmatprep.subr.mxu0 %v67
    %470 = vmatpush1.xpose.msra.mxu0 %v66
    %471 = vmatprep.subr.mxu0 %v75
    %472 = vmatpush1.xpose.msra.mxu0 %v74
    %473 = vmatprep.subr.mxu0 0.0
    %474 = vmatpush1.xpose.msra.mxu0 0.0
    %475 = vmatprep.subr.mxu0 0.0
    %476 = vmatpush1.xpose.msra.mxu0 0.0
    %477 = vmatprep.subr.mxu0 0.0
    %478 = vmatpush1.xpose.msra.mxu0 0.0
    %479 = vmatprep.subr.mxu0 0.0
    %480 = vmatpush1.xpose.msra.mxu0 0.0
    %481 = vmatprep.subr.mxu0 0.0
    %482 = vmatpush1.xpose.msra.mxu0 0.0
    %483 = vmatprep.subr.mxu0 0.0
    %484 = vmatpush1.xpose.msra.mxu0 0.0
    %485 = vmatprep.subr.mxu0 0.0
    %486 = vmatpush1.xpose.msra.mxu0 0.0
    %487 = vmatprep.subr.mxu0 0.0
    %488 = vmatpush1.xpose.msra.mxu0 0.0
    %489 = vmatprep.subr.mxu0 0.0
    %490 = vmatpush1.xpose.msra.mxu0 0.0
    %491 = vmatprep.subr.mxu0 0.0
    %492 = vmatpush1.xpose.msra.mxu0 0.0
    %493 = vmatprep.subr.mxu0 0.0
    %494 = vmatpush1.xpose.msra.mxu0 0.0
    %495 = vmatprep.subr.mxu0 0.0
    %496 = vmatpush1.xpose.msra.mxu0 0.0
    %497 = vmatprep.subr.mxu0 0.0
    %498 = vmatpush1.xpose.msra.mxu0 0.0
    %499 = vmatprep.subr.mxu0 0.0
    %500 = vmatpush1.xpose.msra.mxu0 0.0
    %501 = vmatprep.subr.mxu0 0.0
    %502 = vmatpush1.xpose.msra.mxu0 0.0
    %503 = vmatprep.subr.mxu0 0.0
    %504 = vmatpush1.xpose.msra.mxu0 0.0
    %505 = vmatprep.subr.mxu0 0.0
    %506 = vmatpush1.xpose.msra.mxu0 0.0
    %507 = vmatprep.subr.mxu0 0.0
    %508 = vmatpush1.xpose.msra.mxu0 0.0
    %509 = vmatprep.subr.mxu0 0.0
    %510 = vmatpush1.xpose.msra.mxu0 0.0
    %511 = vmatprep.subr.mxu0 0.0
    %512 = vmatpush1.xpose.msra.mxu0 0.0
    %513 = vmatprep.subr.mxu0 0.0
    %514 = vmatpush1.xpose.msra.mxu0 0.0
    %515 = vmatprep.subr.mxu0 0.0
    %516 = vmatpush1.xpose.msra.mxu0 0.0
    %517 = vmatprep.subr.mxu0 0.0
    %518 = vmatpush1.xpose.msra.mxu0 0.0
    %519 = vmatprep.subr.mxu0 0.0
    %520 = vmatpush1.xpose.msra.mxu0 0.0
    %521 = vmatprep.mubr.f32.mxu0 %v361
    %522 = vmatmul.mubr.f32.gmra.mrb[0].mxu0 %v359
    %v523 = vpop.f32.mrb[0].mxu0
    %v524 = vadd.f32 %v454, %v523
    %v525 = vpop.f32.mrb[0].mxu0
    %526 = vdwg.mxu0
    %527 = vmatprep.subr.mxu0 %v21
    %528 = vmatpush1.xpose.msra.mxu0 %v20
    %529 = vmatprep.subr.mxu0 %v29
    %530 = vmatpush1.xpose.msra.mxu0 %v28
    %531 = vmatprep.subr.mxu0 %v37
    %532 = vmatpush1.xpose.msra.mxu0 %v36
    %533 = vmatprep.subr.mxu0 %v45
    %534 = vmatpush1.xpose.msra.mxu0 %v44
    %535 = vmatprep.subr.mxu0 %v53
    %536 = vmatpush1.xpose.msra.mxu0 %v52
    %537 = vmatprep.subr.mxu0 %v61
    %538 = vmatpush1.xpose.msra.mxu0 %v60
    %539 = vmatprep.subr.mxu0 %v69
    %540 = vmatpush1.xpose.msra.mxu0 %v68
    %541 = vmatprep.subr.mxu0 %v77
    %542 = vmatpush1.xpose.msra.mxu0 %v76
    %543 = vmatprep.subr.mxu0 0.0
    %544 = vmatpush1.xpose.msra.mxu0 0.0
    %545 = vmatprep.subr.mxu0 0.0
    %546 = vmatpush1.xpose.msra.mxu0 0.0
    %547 = vmatprep.subr.mxu0 0.0
    %548 = vmatpush1.xpose.msra.mxu0 0.0
    %549 = vmatprep.subr.mxu0 0.0
    %550 = vmatpush1.xpose.msra.mxu0 0.0
    %551 = vmatprep.subr.mxu0 0.0
    %552 = vmatpush1.xpose.msra.mxu0 0.0
    %553 = vmatprep.subr.mxu0 0.0
    %554 = vmatpush1.xpose.msra.mxu0 0.0
    %555 = vmatprep.subr.mxu0 0.0
    %556 = vmatpush1.xpose.msra.mxu0 0.0
    %557 = vmatprep.subr.mxu0 0.0
    %558 = vmatpush1.xpose.msra.mxu0 0.0
    %559 = vmatprep.subr.mxu0 0.0
    %560 = vmatpush1.xpose.msra.mxu0 0.0
    %561 = vmatprep.subr.mxu0 0.0
    %562 = vmatpush1.xpose.msra.mxu0 0.0
    %563 = vmatprep.subr.mxu0 0.0
    %564 = vmatpush1.xpose.msra.mxu0 0.0
    %565 = vmatprep.subr.mxu0 0.0
    %566 = vmatpush1.xpose.msra.mxu0 0.0
    %567 = vmatprep.subr.mxu0 0.0
    %568 = vmatpush1.xpose.msra.mxu0 0.0
    %569 = vmatprep.subr.mxu0 0.0
    %570 = vmatpush1.xpose.msra.mxu0 0.0
    %571 = vmatprep.subr.mxu0 0.0
    %572 = vmatpush1.xpose.msra.mxu0 0.0
    %573 = vmatprep.subr.mxu0 0.0
    %574 = vmatpush1.xpose.msra.mxu0 0.0
    %575 = vmatprep.subr.mxu0 0.0
    %576 = vmatpush1.xpose.msra.mxu0 0.0
    %577 = vmatprep.subr.mxu0 0.0
    %578 = vmatpush1.xpose.msra.mxu0 0.0
    %579 = vmatprep.subr.mxu0 0.0
    %580 = vmatpush1.xpose.msra.mxu0 0.0
    %581 = vmatprep.subr.mxu0 0.0
    %582 = vmatpush1.xpose.msra.mxu0 0.0
    %583 = vmatprep.subr.mxu0 0.0
    %584 = vmatpush1.xpose.msra.mxu0 0.0
    %585 = vmatprep.subr.mxu0 0.0
    %586 = vmatpush1.xpose.msra.mxu0 0.0
    %587 = vmatprep.subr.mxu0 0.0
    %588 = vmatpush1.xpose.msra.mxu0 0.0
    %589 = vmatprep.subr.mxu0 0.0
    %590 = vmatpush1.xpose.msra.mxu0 0.0
    %591 = vmatprep.mubr.f32.mxu0 %v377
    %592 = vmatmul.mubr.f32.gmra.mrb[0].mxu0 %v369
    %v593 = vpop.f32.mrb[0].mxu0
    %v594 = vadd.f32 %v524, %v593
    %v595 = vpop.f32.mrb[0].mxu0
    %596 = vdwg.mxu0
    %597 = vmatprep.subr.mxu0 %v23
    %598 = vmatpush1.xpose.msra.mxu0 %v22
    %599 = vmatprep.subr.mxu0 %v31
    %600 = vmatpush1.xpose.msra.mxu0 %v30
    %601 = vmatprep.subr.mxu0 %v39
    %602 = vmatpush1.xpose.msra.mxu0 %v38
    %603 = vmatprep.subr.mxu0 %v47
    %604 = vmatpush1.xpose.msra.mxu0 %v46
    %605 = vmatprep.subr.mxu0 %v55
    %606 = vmatpush1.xpose.msra.mxu0 %v54
    %607 = vmatprep.subr.mxu0 %v63
    %608 = vmatpush1.xpose.msra.mxu0 %v62
    %609 = vmatprep.subr.mxu0 %v71
    %610 = vmatpush1.xpose.msra.mxu0 %v70
    %611 = vmatprep.subr.mxu0 %v79
    %612 = vmatpush1.xpose.msra.mxu0 %v78
    %613 = vmatprep.subr.mxu0 0.0
    %614 = vmatpush1.xpose.msra.mxu0 0.0
    %615 = vmatprep.subr.mxu0 0.0
    %616 = vmatpush1.xpose.msra.mxu0 0.0
    %617 = vmatprep.subr.mxu0 0.0
    %618 = vmatpush1.xpose.msra.mxu0 0.0
    %619 = vmatprep.subr.mxu0 0.0
    %620 = vmatpush1.xpose.msra.mxu0 0.0
    %621 = vmatprep.subr.mxu0 0.0
    %622 = vmatpush1.xpose.msra.mxu0 0.0
    %623 = vmatprep.subr.mxu0 0.0
    %624 = vmatpush1.xpose.msra.mxu0 0.0
    %625 = vmatprep.subr.mxu0 0.0
    %626 = vmatpush1.xpose.msra.mxu0 0.0
    %627 = vmatprep.subr.mxu0 0.0
    %628 = vmatpush1.xpose.msra.mxu0 0.0
    %629 = vmatprep.subr.mxu0 0.0
    %630 = vmatpush1.xpose.msra.mxu0 0.0
    %631 = vmatprep.subr.mxu0 0.0
    %632 = vmatpush1.xpose.msra.mxu0 0.0
    %633 = vmatprep.subr.mxu0 0.0
    %634 = vmatpush1.xpose.msra.mxu0 0.0
    %635 = vmatprep.subr.mxu0 0.0
    %636 = vmatpush1.xpose.msra.mxu0 0.0
    %637 = vmatprep.subr.mxu0 0.0
    %638 = vmatpush1.xpose.msra.mxu0 0.0
    %639 = vmatprep.subr.mxu0 0.0
    %640 = vmatpush1.xpose.msra.mxu0 0.0
    %641 = vmatprep.subr.mxu0 0.0
    %642 = vmatpush1.xpose.msra.mxu0 0.0
    %643 = vmatprep.subr.mxu0 0.0
    %644 = vmatpush1.xpose.msra.mxu0 0.0
    %645 = vmatprep.subr.mxu0 0.0
    %646 = vmatpush1.xpose.msra.mxu0 0.0
    %647 = vmatprep.subr.mxu0 0.0
    %648 = vmatpush1.xpose.msra.mxu0 0.0
    %649 = vmatprep.subr.mxu0 0.0
    %650 = vmatpush1.xpose.msra.mxu0 0.0
    %651 = vmatprep.subr.mxu0 0.0
    %652 = vmatpush1.xpose.msra.mxu0 0.0
    %653 = vmatprep.subr.mxu0 0.0
    %654 = vmatpush1.xpose.msra.mxu0 0.0
    %655 = vmatprep.subr.mxu0 0.0
    %656 = vmatpush1.xpose.msra.mxu0 0.0
    %657 = vmatprep.subr.mxu0 0.0
    %658 = vmatpush1.xpose.msra.mxu0 0.0
    %659 = vmatprep.subr.mxu0 0.0
    %660 = vmatpush1.xpose.msra.mxu0 0.0
    %661 = vmatprep.mubr.f32.mxu0 %v378
    %662 = vmatmul.mubr.f32.gmra.mrb[0].mxu0 %v376
    %v663 = vpop.f32.mrb[0].mxu0
    %v664 = vadd.f32 %v594, %v663
    %v665 = vpop.f32.mrb[0].mxu0
    %666 = vdwg.mxu0
    %v667 = vmax.f32 %v150, 1e-08
    %v668 = vmax.f32 %v293, 1e-08
    %v669 = vmax.f32 %v300, 1e-08
    %v670 = vmax.f32 %v307, 1e-08
    %v671 = vmax.f32 %v314, 1e-08
    %v672 = vmax.f32 %v321, 1e-08
    %v673 = vmax.f32 %v328, 1e-08
    %v674 = vmax.f32 %v335, 1e-08
    %v675 = vmax.f32 %v342, 1e-08
    %v684 = vlaneseq
    %v685 = vand.u32 %v684, 127
    %v686 = vlaneseq
    %v687 = vshrl.u32 %v686, 7
    %v688 = vsub.s32 %v685, %v687
    %v689 = vrot.slane %v668, %v688
    %v690 = vadd.s32 %v685, 4294967288
    %v691 = vlaneseq
    %v692 = vshrl.u32 %v691, 7
    %v693 = vsub.s32 %v690, %v692
    %v694 = vrot.slane %v669, %v693
    %vm695 = vcmask 130112
    %v696 = vsel %vm695, %v694, %v689
    %v697 = vadd.s32 %v685, 4294967280
    %v698 = vlaneseq
    %v699 = vshrl.u32 %v698, 7
    %v700 = vsub.s32 %v697, %v699
    %v701 = vrot.slane %v670, %v700
    %vm702 = vcmask 195712
    %v703 = vsel %vm702, %v701, %v696
    %v704 = vadd.s32 %v685, 4294967272
    %v705 = vlaneseq
    %v706 = vshrl.u32 %v705, 7
    %v707 = vsub.s32 %v704, %v706
    %v708 = vrot.slane %v671, %v707
    %vm709 = vcmask 261312
    %v710 = vsel %vm709, %v708, %v703
    %v711 = vadd.s32 %v685, 4294967264
    %v712 = vlaneseq
    %v713 = vshrl.u32 %v712, 7
    %v714 = vsub.s32 %v711, %v713
    %v715 = vrot.slane %v672, %v714
    %vm716 = vcmask 326912
    %v717 = vsel %vm716, %v715, %v710
    %v718 = vadd.s32 %v685, 4294967256
    %v719 = vlaneseq
    %v720 = vshrl.u32 %v719, 7
    %v721 = vsub.s32 %v718, %v720
    %v722 = vrot.slane %v673, %v721
    %vm723 = vcmask 392512
    %v724 = vsel %vm723, %v722, %v717
    %v725 = vadd.s32 %v685, 4294967248
    %v726 = vlaneseq
    %v727 = vshrl.u32 %v726, 7
    %v728 = vsub.s32 %v725, %v727
    %v729 = vrot.slane %v674, %v728
    %vm730 = vcmask 458112
    %v731 = vsel %vm730, %v729, %v724
    %v732 = vadd.s32 %v685, 4294967240
    %v733 = vlaneseq
    %v734 = vshrl.u32 %v733, 7
    %v735 = vsub.s32 %v732, %v734
    %v736 = vrot.slane %v675, %v735
    %vm737 = vcmask 523712
    %v738 = vsel %vm737, %v736, %v731
    %v740 = vmul.f32 %v667, %v738
    %v741 = vrcp.pop %v740
    %v742 = vmul.f32 %v664, %v741
    %vm743 = vcmask 517120
    %v744 = vsel %vm743, %v742, -inf
    %745 = vmax.xlane.f32.xlu0 %v744
    %v746 = vpop.xlane.xlu0 %745
    %v747 = vsub.f32 %v742, %v746
    %v748 = vmul.f32 %v747, 1.442695
    %v749 = vpow.pop %v748
    %v750 = vsel %vm743, %v749, 0.0
    %751 = vadd.xlane.f32.xlu0 %v750
    %v752 = vpop.xlane.xlu0 %751
    %v753 = vrcp.pop %v752
    %v754 = vmul.f32 %v749, %v753
    %755 = vst.msk [vmem:[#allocation2] sm:$0x3] %vm743, %v754
    %vm756 = vcmask 523264
    %v758 = vsel %vm756, %v754, 0
    %760 = vmatprep.subr.mxu0 %v17
    %761 = vmatpush1.msra.mxu0 %v16
    %762 = vmatprep.subr.mxu0 %v25
    %763 = vmatpush1.msra.mxu0 %v24
    %764 = vmatprep.subr.mxu0 %v33
    %765 = vmatpush1.msra.mxu0 %v32
    %766 = vmatprep.subr.mxu0 %v41
    %767 = vmatpush1.msra.mxu0 %v40
    %768 = vmatprep.subr.mxu0 %v49
    %769 = vmatpush1.msra.mxu0 %v48
    %770 = vmatprep.subr.mxu0 %v57
    %771 = vmatpush1.msra.mxu0 %v56
    %772 = vmatprep.subr.mxu0 %v65
    %773 = vmatpush1.msra.mxu0 %v64
    %774 = vmatprep.subr.mxu0 %v73
    %775 = vmatpush1.msra.mxu0 %v72
    %776 = vmatprep.subr.mxu0 0.0
    %777 = vmatpush1.msra.mxu0 0.0
    %778 = vmatprep.subr.mxu0 0.0
    %779 = vmatpush1.msra.mxu0 0.0
    %780 = vmatprep.subr.mxu0 0.0
    %781 = vmatpush1.msra.mxu0 0.0
    %782 = vmatprep.subr.mxu0 0.0
    %783 = vmatpush1.msra.mxu0 0.0
    %784 = vmatprep.subr.mxu0 0.0
    %785 = vmatpush1.msra.mxu0 0.0
    %786 = vmatprep.subr.mxu0 0.0
    %787 = vmatpush1.msra.mxu0 0.0
    %788 = vmatprep.subr.mxu0 0.0
    %789 = vmatpush1.msra.mxu0 0.0
    %790 = vmatprep.subr.mxu0 0.0
    %791 = vmatpush1.msra.mxu0 0.0
    %792 = vmatprep.subr.mxu0 0.0
    %793 = vmatpush1.msra.mxu0 0.0
    %794 = vmatprep.subr.mxu0 0.0
    %795 = vmatpush1.msra.mxu0 0.0
    %796 = vmatprep.subr.mxu0 0.0
    %797 = vmatpush1.msra.mxu0 0.0
    %798 = vmatprep.subr.mxu0 0.0
    %799 = vmatpush1.msra.mxu0 0.0
    %800 = vmatprep.subr.mxu0 0.0
    %801 = vmatpush1.msra.mxu0 0.0
    %802 = vmatprep.subr.mxu0 0.0
    %803 = vmatpush1.msra.mxu0 0.0
    %804 = vmatprep.subr.mxu0 0.0
    %805 = vmatpush1.msra.mxu0 0.0
    %806 = vmatprep.subr.mxu0 0.0
    %807 = vmatpush1.msra.mxu0 0.0
    %808 = vmatprep.subr.mxu0 0.0
    %809 = vmatpush1.msra.mxu0 0.0
    %810 = vmatprep.subr.mxu0 0.0
    %811 = vmatpush1.msra.mxu0 0.0
    %812 = vmatprep.subr.mxu0 0.0
    %813 = vmatpush1.msra.mxu0 0.0
    %814 = vmatprep.subr.mxu0 0.0
    %815 = vmatpush1.msra.mxu0 0.0
    %816 = vmatprep.subr.mxu0 0.0
    %817 = vmatpush1.msra.mxu0 0.0
    %818 = vmatprep.subr.mxu0 0.0
    %819 = vmatpush1.msra.mxu0 0.0
    %820 = vmatprep.subr.mxu0 0.0
    %821 = vmatpush1.msra.mxu0 0.0
    %822 = vmatprep.subr.mxu0 0.0
    %823 = vmatpush1.msra.mxu0 0.0
    %824 = vmatprep.mubr.f32.mxu0 0.0
    %825 = vmatmul.mubr.f32.gmra.mrb[0].mxu0 %v758
    %v826 = vpop.f32.mrb[0].mxu0
    %v827 = vadd.f32 0.0, %v826
    %v828 = vpop.f32.mrb[0].mxu0
    %v829 = vadd.f32 0.0, %v828
    %830 = vdwg.mxu0
    %831 = vmatprep.subr.mxu0 %v19
    %832 = vmatpush1.msra.mxu0 %v18
    %833 = vmatprep.subr.mxu0 %v27
    %834 = vmatpush1.msra.mxu0 %v26
    %835 = vmatprep.subr.mxu0 %v35
    %836 = vmatpush1.msra.mxu0 %v34
    %837 = vmatprep.subr.mxu0 %v43
    %838 = vmatpush1.msra.mxu0 %v42
    %839 = vmatprep.subr.mxu0 %v51
    %840 = vmatpush1.msra.mxu0 %v50
    %841 = vmatprep.subr.mxu0 %v59
    %842 = vmatpush1.msra.mxu0 %v58
    %843 = vmatprep.subr.mxu0 %v67
    %844 = vmatpush1.msra.mxu0 %v66
    %845 = vmatprep.subr.mxu0 %v75
    %846 = vmatpush1.msra.mxu0 %v74
    %847 = vmatprep.subr.mxu0 0.0
    %848 = vmatpush1.msra.mxu0 0.0
    %849 = vmatprep.subr.mxu0 0.0
    %850 = vmatpush1.msra.mxu0 0.0
    %851 = vmatprep.subr.mxu0 0.0
    %852 = vmatpush1.msra.mxu0 0.0
    %853 = vmatprep.subr.mxu0 0.0
    %854 = vmatpush1.msra.mxu0 0.0
    %855 = vmatprep.subr.mxu0 0.0
    %856 = vmatpush1.msra.mxu0 0.0
    %857 = vmatprep.subr.mxu0 0.0
    %858 = vmatpush1.msra.mxu0 0.0
    %859 = vmatprep.subr.mxu0 0.0
    %860 = vmatpush1.msra.mxu0 0.0
    %861 = vmatprep.subr.mxu0 0.0
    %862 = vmatpush1.msra.mxu0 0.0
    %863 = vmatprep.subr.mxu0 0.0
    %864 = vmatpush1.msra.mxu0 0.0
    %865 = vmatprep.subr.mxu0 0.0
    %866 = vmatpush1.msra.mxu0 0.0
    %867 = vmatprep.subr.mxu0 0.0
    %868 = vmatpush1.msra.mxu0 0.0
    %869 = vmatprep.subr.mxu0 0.0
    %870 = vmatpush1.msra.mxu0 0.0
    %871 = vmatprep.subr.mxu0 0.0
    %872 = vmatpush1.msra.mxu0 0.0
    %873 = vmatprep.subr.mxu0 0.0
    %874 = vmatpush1.msra.mxu0 0.0
    %875 = vmatprep.subr.mxu0 0.0
    %876 = vmatpush1.msra.mxu0 0.0
    %877 = vmatprep.subr.mxu0 0.0
    %878 = vmatpush1.msra.mxu0 0.0
    %879 = vmatprep.subr.mxu0 0.0
    %880 = vmatpush1.msra.mxu0 0.0
    %881 = vmatprep.subr.mxu0 0.0
    %882 = vmatpush1.msra.mxu0 0.0
    %883 = vmatprep.subr.mxu0 0.0
    %884 = vmatpush1.msra.mxu0 0.0
    %885 = vmatprep.subr.mxu0 0.0
    %886 = vmatpush1.msra.mxu0 0.0
    %887 = vmatprep.subr.mxu0 0.0
    %888 = vmatpush1.msra.mxu0 0.0
    %889 = vmatprep.subr.mxu0 0.0
    %890 = vmatpush1.msra.mxu0 0.0
    %891 = vmatprep.subr.mxu0 0.0
    %892 = vmatpush1.msra.mxu0 0.0
    %893 = vmatprep.subr.mxu0 0.0
    %894 = vmatpush1.msra.mxu0 0.0
    %895 = vmatprep.mubr.f32.mxu0 0.0
    %896 = vmatmul.mubr.f32.gmra.mrb[0].mxu0 %v758
    %v897 = vpop.f32.mrb[0].mxu0
    %v898 = vadd.f32 0.0, %v897
    %v899 = vpop.f32.mrb[0].mxu0
    %v900 = vadd.f32 0.0, %v899
    %901 = vdwg.mxu0
    %902 = vmatprep.subr.mxu0 %v21
    %903 = vmatpush1.msra.mxu0 %v20
    %904 = vmatprep.subr.mxu0 %v29
    %905 = vmatpush1.msra.mxu0 %v28
    %906 = vmatprep.subr.mxu0 %v37
    %907 = vmatpush1.msra.mxu0 %v36
    %908 = vmatprep.subr.mxu0 %v45
    %909 = vmatpush1.msra.mxu0 %v44
    %910 = vmatprep.subr.mxu0 %v53
    %911 = vmatpush1.msra.mxu0 %v52
    %912 = vmatprep.subr.mxu0 %v61
    %913 = vmatpush1.msra.mxu0 %v60
    %914 = vmatprep.subr.mxu0 %v69
    %915 = vmatpush1.msra.mxu0 %v68
    %916 = vmatprep.subr.mxu0 %v77
    %917 = vmatpush1.msra.mxu0 %v76
    %918 = vmatprep.subr.mxu0 0.0
    %919 = vmatpush1.msra.mxu0 0.0
    %920 = vmatprep.subr.mxu0 0.0
    %921 = vmatpush1.msra.mxu0 0.0
    %922 = vmatprep.subr.mxu0 0.0
    %923 = vmatpush1.msra.mxu0 0.0
    %924 = vmatprep.subr.mxu0 0.0
    %925 = vmatpush1.msra.mxu0 0.0
    %926 = vmatprep.subr.mxu0 0.0
    %927 = vmatpush1.msra.mxu0 0.0
    %928 = vmatprep.subr.mxu0 0.0
    %929 = vmatpush1.msra.mxu0 0.0
    %930 = vmatprep.subr.mxu0 0.0
    %931 = vmatpush1.msra.mxu0 0.0
    %932 = vmatprep.subr.mxu0 0.0
    %933 = vmatpush1.msra.mxu0 0.0
    %934 = vmatprep.subr.mxu0 0.0
    %935 = vmatpush1.msra.mxu0 0.0
    %936 = vmatprep.subr.mxu0 0.0
    %937 = vmatpush1.msra.mxu0 0.0
    %938 = vmatprep.subr.mxu0 0.0
    %939 = vmatpush1.msra.mxu0 0.0
    %940 = vmatprep.subr.mxu0 0.0
    %941 = vmatpush1.msra.mxu0 0.0
    %942 = vmatprep.subr.mxu0 0.0
    %943 = vmatpush1.msra.mxu0 0.0
    %944 = vmatprep.subr.mxu0 0.0
    %945 = vmatpush1.msra.mxu0 0.0
    %946 = vmatprep.subr.mxu0 0.0
    %947 = vmatpush1.msra.mxu0 0.0
    %948 = vmatprep.subr.mxu0 0.0
    %949 = vmatpush1.msra.mxu0 0.0
    %950 = vmatprep.subr.mxu0 0.0
    %951 = vmatpush1.msra.mxu0 0.0
    %952 = vmatprep.subr.mxu0 0.0
    %953 = vmatpush1.msra.mxu0 0.0
    %954 = vmatprep.subr.mxu0 0.0
    %955 = vmatpush1.msra.mxu0 0.0
    %956 = vmatprep.subr.mxu0 0.0
    %957 = vmatpush1.msra.mxu0 0.0
    %958 = vmatprep.subr.mxu0 0.0
    %959 = vmatpush1.msra.mxu0 0.0
    %960 = vmatprep.subr.mxu0 0.0
    %961 = vmatpush1.msra.mxu0 0.0
    %962 = vmatprep.subr.mxu0 0.0
    %963 = vmatpush1.msra.mxu0 0.0
    %964 = vmatprep.subr.mxu0 0.0
    %965 = vmatpush1.msra.mxu0 0.0
    %966 = vmatprep.mubr.f32.mxu0 0.0
    %967 = vmatmul.mubr.f32.gmra.mrb[0].mxu0 %v758
    %v968 = vpop.f32.mrb[0].mxu0
    %v969 = vadd.f32 0.0, %v968
    %v970 = vpop.f32.mrb[0].mxu0
    %v971 = vadd.f32 0.0, %v970
    %972 = vdwg.mxu0
    %973 = vmatprep.subr.mxu0 %v23
    %974 = vmatpush1.msra.mxu0 %v22
    %975 = vmatprep.subr.mxu0 %v31
    %976 = vmatpush1.msra.mxu0 %v30
    %977 = vmatprep.subr.mxu0 %v39
    %978 = vmatpush1.msra.mxu0 %v38
    %979 = vmatprep.subr.mxu0 %v47
    %980 = vmatpush1.msra.mxu0 %v46
    %981 = vmatprep.subr.mxu0 %v55
    %982 = vmatpush1.msra.mxu0 %v54
    %983 = vmatprep.subr.mxu0 %v63
    %984 = vmatpush1.msra.mxu0 %v62
    %985 = vmatprep.subr.mxu0 %v71
    %986 = vmatpush1.msra.mxu0 %v70
    %987 = vmatprep.subr.mxu0 %v79
    %988 = vmatpush1.msra.mxu0 %v78
    %989 = vmatprep.subr.mxu0 0.0
    %990 = vmatpush1.msra.mxu0 0.0
    %991 = vmatprep.subr.mxu0 0.0
    %992 = vmatpush1.msra.mxu0 0.0
    %993 = vmatprep.subr.mxu0 0.0
    %994 = vmatpush1.msra.mxu0 0.0
    %995 = vmatprep.subr.mxu0 0.0
    %996 = vmatpush1.msra.mxu0 0.0
    %997 = vmatprep.subr.mxu0 0.0
    %998 = vmatpush1.msra.mxu0 0.0
    %999 = vmatprep.subr.mxu0 0.0
    %1000 = vmatpush1.msra.mxu0 0.0
    %1001 = vmatprep.subr.mxu0 0.0
    %1002 = vmatpush1.msra.mxu0 0.0
    %1003 = vmatprep.subr.mxu0 0.0
    %1004 = vmatpush1.msra.mxu0 0.0
    %1005 = vmatprep.subr.mxu0 0.0
    %1006 = vmatpush1.msra.mxu0 0.0
    %1007 = vmatprep.subr.mxu0 0.0
    %1008 = vmatpush1.msra.mxu0 0.0
    %1009 = vmatprep.subr.mxu0 0.0
    %1010 = vmatpush1.msra.mxu0 0.0
    %1011 = vmatprep.subr.mxu0 0.0
    %1012 = vmatpush1.msra.mxu0 0.0
    %1013 = vmatprep.subr.mxu0 0.0
    %1014 = vmatpush1.msra.mxu0 0.0
    %1015 = vmatprep.subr.mxu0 0.0
    %1016 = vmatpush1.msra.mxu0 0.0
    %1017 = vmatprep.subr.mxu0 0.0
    %1018 = vmatpush1.msra.mxu0 0.0
    %1019 = vmatprep.subr.mxu0 0.0
    %1020 = vmatpush1.msra.mxu0 0.0
    %1021 = vmatprep.subr.mxu0 0.0
    %1022 = vmatpush1.msra.mxu0 0.0
    %1023 = vmatprep.subr.mxu0 0.0
    %1024 = vmatpush1.msra.mxu0 0.0
    %1025 = vmatprep.subr.mxu0 0.0
    %1026 = vmatpush1.msra.mxu0 0.0
    %1027 = vmatprep.subr.mxu0 0.0
    %1028 = vmatpush1.msra.mxu0 0.0
    %1029 = vmatprep.subr.mxu0 0.0
    %1030 = vmatpush1.msra.mxu0 0.0
    %1031 = vmatprep.subr.mxu0 0.0
    %1032 = vmatpush1.msra.mxu0 0.0
    %1033 = vmatprep.subr.mxu0 0.0
    %1034 = vmatpush1.msra.mxu0 0.0
    %1035 = vmatprep.subr.mxu0 0.0
    %1036 = vmatpush1.msra.mxu0 0.0
    %1037 = vmatprep.mubr.f32.mxu0 0.0
    %1038 = vmatmul.mubr.f32.gmra.mrb[0].mxu0 %v758
    %v1039 = vpop.f32.mrb[0].mxu0
    %v1040 = vadd.f32 0.0, %v1039
    %v1041 = vpop.f32.mrb[0].mxu0
    %v1042 = vadd.f32 0.0, %v1041
    %1043 = vdwg.mxu0
    %v1052 = vcombine.low %v827, %v829
    %v1053 = vcombine.low %v898, %v900
    %v1055 = vunpack.c.l.s4 1983009808
    %v1056 = vunpack.c.0.s8 %v1055
    %v1057 = vlaneseq
    %v1058 = vshrl.u32 %v1057, 7
    %v1059 = vsub.s32 %v1056, %v1058
    %v1060 = vrot.slane %v1052, %v1059
    %v1062 = vunpack.c.l.s4 1983009808
    %v1063 = vunpack.c.0.s8 %v1062
    %v1064 = vlaneseq
    %v1065 = vshrl.u32 %v1064, 7
    %v1066 = vsub.s32 %v1063, %v1065
    %v1067 = vrot.slane %v1053, %v1066
    %v1068 = vcombine.low %v1060, %v1067
    %v1069 = vcombine.low %v969, %v971
    %v1070 = vcombine.low %v1040, %v1042
    %v1072 = vunpack.c.l.s4 1983009808
    %v1073 = vunpack.c.0.s8 %v1072
    %v1074 = vlaneseq
    %v1075 = vshrl.u32 %v1074, 7
    %v1076 = vsub.s32 %v1073, %v1075
    %v1077 = vrot.slane %v1069, %v1076
    %v1079 = vunpack.c.l.s4 1983009808
    %v1080 = vunpack.c.0.s8 %v1079
    %v1081 = vlaneseq
    %v1082 = vshrl.u32 %v1081, 7
    %v1083 = vsub.s32 %v1080, %v1082
    %v1084 = vrot.slane %v1070, %v1083
    %v1085 = vcombine.low %v1077, %v1084
    %1088 = vst [vmem:[%s3] sm:$0xff] %v1068
    %1089 = vst [vmem:[%s3 + $0x8] sm:$0xff] %v1085
    // Predicated region
    $region10: #{forward.10} parent=1 // pred_check
      _
    $region11: #{forward.10} parent=1 // pred_check_branch
      %1091 = sbr.rel (0) target = $region13
    $region12: #{forward.10} parent=1 // pred_region
      %s1093 = ssub.s32 32, 32
      %1094 = vsyncadd [#allocation3], %s1093
      %s1096 = sshll.u32 [#allocation2], 4
      %s1097 = int_to_ptr.vmem [resolvable:$true] %s1096
      %1099 = dma.vmem_to_hbm [thread:$0]  %s1097, 32, %s2, [#allocation3]
    $region13: #{forward.10} parent=1 // pred_fallthru
      _
    // Predicated region
    $region14: #{forward.10} parent=1 // pred_check
      _
    $region15: #{forward.10} parent=1 // pred_check_branch
      %1101 = sbr.rel (0) target = $region17
    $region16: #{forward.10} parent=1 // pred_region
      _
    $region17: #{forward.10} parent=1 // pred_fallthru
      _
    // Predicated region
    $region18: #{forward.10} parent=1 // pred_check
      _
    $region19: #{forward.10} parent=1 // pred_check_branch
      %1103 = sbr.rel (0) target = $region21
    $region20: #{forward.10} parent=1 // pred_region
      %1104 = dma.done [#allocation3], 32
    $region21: #{forward.10} parent=1 // pred_fallthru
      _
    // Predicated region
    $region22: #{forward.10} parent=1 // pred_check
      _
    $region23: #{forward.10} parent=1 // pred_check_branch
      %1106 = sbr.rel (0) target = $region25
    $region24: #{forward.10} parent=1 // pred_region
      _
    $region25: #{forward.10} parent=1 // pred_fallthru
      _
    %1107 = vsyncpa [#allocation3], 1

// kernel: forward.11
$region0: #{forward.11}
  #allocation0 [shape = 'u32[]', space=smem, size = 0x4, offset = 0x4, fixed_abs, tag = 'smem constant byte address 0x4 - core index']
  #allocation1 [shape = 'u32[144,128]{1,0:T(1,128)}', space=vmem, size = 0x12000, scoped, tag = 'internal scratch']
  %s0 = inlined_call_operand.vmem [shape: f32[128,576], index: 0, kind: input, shape index: {}]
  %s1 = inlined_call_operand.vmem [shape: f32[576,32], index: 1, kind: input, shape index: {}]
  %s2 = inlined_call_operand.vmem [shape: f32[1,32], index: 2, kind: input, shape index: {}]
  %s3 = inlined_call_operand.vmem [shape: f32[1,32], index: 3, kind: input, shape index: {}]
  %s4 = inlined_call_operand.vmem [shape: f32[128,32], index: 4, kind: output, shape index: {}]
  %s5 = sld [smem:[#allocation0]]
  $region26: #{forward.11} parent=0
    _
  %s7 = ssub.s32 1, %s5
  %s8 = scalar_select 0, %s7, %s5
  // Predicated region
  $region2: #{forward.11} parent=0 // pred_check
    _
  $region3: #{forward.11} parent=0 // pred_check_branch
    %10 = sbr.rel (0) target = $region5
  $region4: #{forward.11} parent=0 // pred_region
    _
  $region5: #{forward.11} parent=0 // pred_fallthru
    _
  // Predicated region
  $region6: #{forward.11} parent=0 // pred_check
    _
  $region7: #{forward.11} parent=0 // pred_check_branch
    %12 = sbr.rel (0) target = $region9
  $region8: #{forward.11} parent=0 // pred_region
    _
  $region9: #{forward.11} parent=0 // pred_fallthru
    _
  // Predicated region
  $region10: #{forward.11} parent=0 // pred_check
    _
  $region11: #{forward.11} parent=0 // pred_check_branch
    %14 = sbr.rel (0) target = $region13
  $region12: #{forward.11} parent=0 // pred_region
    _
  $region13: #{forward.11} parent=0 // pred_fallthru
    _
  // Predicated region
  $region14: #{forward.11} parent=0 // pred_check
    _
  $region15: #{forward.11} parent=0 // pred_check_branch
    %16 = sbr.rel (0) target = $region17
  $region16: #{forward.11} parent=0 // pred_region
    _
  $region17: #{forward.11} parent=0 // pred_fallthru
    _
  %v17 = vld [vmem:[%s0] sm:$0xff]
  %v18 = vld [vmem:[%s0 + $0x8] sm:$0xff]
  %v19 = vld [vmem:[%s0 + $0x10] sm:$0xff]
  %v20 = vld [vmem:[%s0 + $0x18] sm:$0xff]
  %v21 = vld [vmem:[%s0 + $0x20] sm:$0xff]
  %v22 = vld [vmem:[%s0 + $0x28] sm:$0xff]
  %v23 = vld [vmem:[%s0 + $0x30] sm:$0xff]
  %v24 = vld [vmem:[%s0 + $0x38] sm:$0xff]
  %v25 = vld [vmem:[%s0 + $0x40] sm:$0xff]
  %v26 = vld [vmem:[%s0 + $0x48] sm:$0xff]
  %v27 = vld [vmem:[%s0 + $0x50] sm:$0xff]
  %v28 = vld [vmem:[%s0 + $0x58] sm:$0xff]
  %v29 = vld [vmem:[%s0 + $0x60] sm:$0xff]
  %v30 = vld [vmem:[%s0 + $0x68] sm:$0xff]
  %v31 = vld [vmem:[%s0 + $0x70] sm:$0xff]
  %v32 = vld [vmem:[%s0 + $0x78] sm:$0xff]
  %v33 = vld [vmem:[%s0 + $0x80] sm:$0xff]
  %v34 = vld [vmem:[%s0 + $0x88] sm:$0xff]
  %v35 = vld [vmem:[%s0 + $0x90] sm:$0xff]
  %v36 = vld [vmem:[%s0 + $0x98] sm:$0xff]
  %v37 = vld [vmem:[%s0 + $0xa0] sm:$0xff]
  %v38 = vld [vmem:[%s0 + $0xa8] sm:$0xff]
  %v39 = vld [vmem:[%s0 + $0xb0] sm:$0xff]
  %v40 = vld [vmem:[%s0 + $0xb8] sm:$0xff]
  %v41 = vld [vmem:[%s0 + $0xc0] sm:$0xff]
  %v42 = vld [vmem:[%s0 + $0xc8] sm:$0xff]
  %v43 = vld [vmem:[%s0 + $0xd0] sm:$0xff]
  %v44 = vld [vmem:[%s0 + $0xd8] sm:$0xff]
  %v45 = vld [vmem:[%s0 + $0xe0] sm:$0xff]
  %v46 = vld [vmem:[%s0 + $0xe8] sm:$0xff]
  %v47 = vld [vmem:[%s0 + $0xf0] sm:$0xff]
  %v48 = vld [vmem:[%s0 + $0xf8] sm:$0xff]
  %v49 = vld [vmem:[%s0 + $0x100] sm:$0xff]
  %v50 = vld [vmem:[%s0 + $0x108] sm:$0xff]
  %v51 = vld [vmem:[%s0 + $0x110] sm:$0xff]
  %v52 = vld [vmem:[%s0 + $0x118] sm:$0xff]
  %v53 = vld [vmem:[%s0 + $0x120] sm:$0xff]
  %v54 = vld [vmem:[%s0 + $0x128] sm:$0xff]
  %v55 = vld [vmem:[%s0 + $0x130] sm:$0xff]
  %v56 = vld [vmem:[%s0 + $0x138] sm:$0xff]
  %v57 = vld [vmem:[%s0 + $0x140] sm:$0xff]
  %v58 = vld [vmem:[%s0 + $0x148] sm:$0xff]
  %v59 = vld [vmem:[%s0 + $0x150] sm:$0xff]
  %v60 = vld [vmem:[%s0 + $0x158] sm:$0xff]
  %v61 = vld [vmem:[%s0 + $0x160] sm:$0xff]
  %v62 = vld [vmem:[%s0 + $0x168] sm:$0xff]
  %v63 = vld [vmem:[%s0 + $0x170] sm:$0xff]
  %v64 = vld [vmem:[%s0 + $0x178] sm:$0xff]
  %v65 = vld [vmem:[%s0 + $0x180] sm:$0xff]
  %v66 = vld [vmem:[%s0 + $0x188] sm:$0xff]
  %v67 = vld [vmem:[%s0 + $0x190] sm:$0xff]
  %v68 = vld [vmem:[%s0 + $0x198] sm:$0xff]
  %v69 = vld [vmem:[%s0 + $0x1a0] sm:$0xff]
  %v70 = vld [vmem:[%s0 + $0x1a8] sm:$0xff]
  %v71 = vld [vmem:[%s0 + $0x1b0] sm:$0xff]
  %v72 = vld [vmem:[%s0 + $0x1b8] sm:$0xff]
  %v73 = vld [vmem:[%s0 + $0x1c0] sm:$0xff]
  %v74 = vld [vmem:[%s0 + $0x1c8] sm:$0xff]
  %v75 = vld [vmem:[%s0 + $0x1d0] sm:$0xff]
  %v76 = vld [vmem:[%s0 + $0x1d8] sm:$0xff]
  %v77 = vld [vmem:[%s0 + $0x1e0] sm:$0xff]
  %v78 = vld [vmem:[%s0 + $0x1e8] sm:$0xff]
  %v79 = vld [vmem:[%s0 + $0x1f0] sm:$0xff]
  %v80 = vld [vmem:[%s0 + $0x1f8] sm:$0xff]
  %v81 = vld [vmem:[%s0 + $0x200] sm:$0xff]
  %v82 = vld [vmem:[%s0 + $0x208] sm:$0xff]
  %v83 = vld [vmem:[%s0 + $0x210] sm:$0xff]
  %v84 = vld [vmem:[%s0 + $0x218] sm:$0xff]
  %v85 = vld [vmem:[%s0 + $0x220] sm:$0xff]
  %v86 = vld [vmem:[%s0 + $0x228] sm:$0xff]
  %v87 = vld [vmem:[%s0 + $0x230] sm:$0xff]
  %v88 = vld [vmem:[%s0 + $0x238] sm:$0xff]
  %v89 = vld [vmem:[%s0 + $0x240] sm:$0xff]
  %v90 = vld [vmem:[%s0 + $0x248] sm:$0xff]
  %v91 = vld [vmem:[%s0 + $0x250] sm:$0xff]
  %v92 = vld [vmem:[%s0 + $0x258] sm:$0xff]
  %v93 = vld [vmem:[%s0 + $0x260] sm:$0xff]
  %v94 = vld [vmem:[%s0 + $0x268] sm:$0xff]
  %v95 = vld [vmem:[%s0 + $0x270] sm:$0xff]
  %v96 = vld [vmem:[%s0 + $0x278] sm:$0xff]
  %v97 = vld [vmem:[%s1] sm:$0xff]
  %v98 = vld [vmem:[%s1 + $0x8] sm:$0xff]
  %v99 = vld [vmem:[%s1 + $0x10] sm:$0xff]
  %v100 = vld [vmem:[%s1 + $0x18] sm:$0xff]
  %v101 = vld [vmem:[%s1 + $0x20] sm:$0xff]
  %v102 = vld [vmem:[%s1 + $0x28] sm:$0xff]
  %v103 = vld [vmem:[%s1 + $0x30] sm:$0xff]
  %v104 = vld [vmem:[%s1 + $0x38] sm:$0xff]
  %v105 = vld [vmem:[%s1 + $0x40] sm:$0xff]
  %v106 = vld [vmem:[%s1 + $0x48] sm:$0xff]
  %v107 = vld [vmem:[%s1 + $0x50] sm:$0xff]
  %v108 = vld [vmem:[%s1 + $0x58] sm:$0xff]
  %v109 = vld [vmem:[%s1 + $0x60] sm:$0xff]
  %v110 = vld [vmem:[%s1 + $0x68] sm:$0xff]
  %v111 = vld [vmem:[%s1 + $0x70] sm:$0xff]
  %v112 = vld [vmem:[%s1 + $0x78] sm:$0xff]
  %v113 = vld [vmem:[%s1 + $0x80] sm:$0xff]
  %v114 = vld [vmem:[%s1 + $0x88] sm:$0xff]
  %v115 = vld [vmem:[%s1 + $0x90] sm:$0xff]
  %v116 = vld [vmem:[%s1 + $0x98] sm:$0xff]
  %v117 = vld [vmem:[%s1 + $0xa0] sm:$0xff]
  %v118 = vld [vmem:[%s1 + $0xa8] sm:$0xff]
  %v119 = vld [vmem:[%s1 + $0xb0] sm:$0xff]
  %v120 = vld [vmem:[%s1 + $0xb8] sm:$0xff]
  %v121 = vld [vmem:[%s1 + $0xc0] sm:$0xff]
  %v122 = vld [vmem:[%s1 + $0xc8] sm:$0xff]
  %v123 = vld [vmem:[%s1 + $0xd0] sm:$0xff]
  %v124 = vld [vmem:[%s1 + $0xd8] sm:$0xff]
  %v125 = vld [vmem:[%s1 + $0xe0] sm:$0xff]
  %v126 = vld [vmem:[%s1 + $0xe8] sm:$0xff]
  %v127 = vld [vmem:[%s1 + $0xf0] sm:$0xff]
  %v128 = vld [vmem:[%s1 + $0xf8] sm:$0xff]
  %v129 = vld [vmem:[%s1 + $0x100] sm:$0xff]
  %v130 = vld [vmem:[%s1 + $0x108] sm:$0xff]
  %v131 = vld [vmem:[%s1 + $0x110] sm:$0xff]
  %v132 = vld [vmem:[%s1 + $0x118] sm:$0xff]
  %v133 = vld [vmem:[%s1 + $0x120] sm:$0xff]
  %v134 = vld [vmem:[%s1 + $0x128] sm:$0xff]
  %v135 = vld [vmem:[%s1 + $0x130] sm:$0xff]
  %v136 = vld [vmem:[%s1 + $0x138] sm:$0xff]
  %v137 = vld [vmem:[%s1 + $0x140] sm:$0xff]
  %v138 = vld [vmem:[%s1 + $0x148] sm:$0xff]
  %v139 = vld [vmem:[%s1 + $0x150] sm:$0xff]
  %v140 = vld [vmem:[%s1 + $0x158] sm:$0xff]
  %v141 = vld [vmem:[%s1 + $0x160] sm:$0xff]
  %v142 = vld [vmem:[%s1 + $0x168] sm:$0xff]
  %v143 = vld [vmem:[%s1 + $0x170] sm:$0xff]
  %v144 = vld [vmem:[%s1 + $0x178] sm:$0xff]
  %v145 = vld [vmem:[%s1 + $0x180] sm:$0xff]
  %v146 = vld [vmem:[%s1 + $0x188] sm:$0xff]
  %v147 = vld [vmem:[%s1 + $0x190] sm:$0xff]
  %v148 = vld [vmem:[%s1 + $0x198] sm:$0xff]
  %v149 = vld [vmem:[%s1 + $0x1a0] sm:$0xff]
  %v150 = vld [vmem:[%s1 + $0x1a8] sm:$0xff]
  %v151 = vld [vmem:[%s1 + $0x1b0] sm:$0xff]
  %v152 = vld [vmem:[%s1 + $0x1b8] sm:$0xff]
  %v153 = vld [vmem:[%s1 + $0x1c0] sm:$0xff]
  %v154 = vld [vmem:[%s1 + $0x1c8] sm:$0xff]
  %v155 = vld [vmem:[%s1 + $0x1d0] sm:$0xff]
  %v156 = vld [vmem:[%s1 + $0x1d8] sm:$0xff]
  %v157 = vld [vmem:[%s1 + $0x1e0] sm:$0xff]
  %v158 = vld [vmem:[%s1 + $0x1e8] sm:$0xff]
  %v159 = vld [vmem:[%s1 + $0x1f0] sm:$0xff]
  %v160 = vld [vmem:[%s1 + $0x1f8] sm:$0xff]
  %v161 = vld [vmem:[%s1 + $0x200] sm:$0xff]
  %v162 = vld [vmem:[%s1 + $0x208] sm:$0xff]
  %v163 = vld [vmem:[%s1 + $0x210] sm:$0xff]
  %v164 = vld [vmem:[%s1 + $0x218] sm:$0xff]
  %v165 = vld [vmem:[%s1 + $0x220] sm:$0xff]
  %v166 = vld [vmem:[%s1 + $0x228] sm:$0xff]
  %v167 = vld [vmem:[%s1 + $0x230] sm:$0xff]
  %v168 = vld [vmem:[%s1 + $0x238] sm:$0xff]
  %vm169 = vcmask 523264
  %v171 = vsel %vm169, %v21, 0
  %v174 = vsel %vm169, %v26, 0
  %v177 = vsel %vm169, %v31, 0
  %v180 = vsel %vm169, %v36, 0
  %v183 = vsel %vm169, %v41, 0
  %v186 = vsel %vm169, %v46, 0
  %v189 = vsel %vm169, %v51, 0
  %v192 = vsel %vm169, %v56, 0
  %v195 = vsel %vm169, %v61, 0
  %v198 = vsel %vm169, %v66, 0
  %v201 = vsel %vm169, %v71, 0
  %v204 = vsel %vm169, %v76, 0
  %v207 = vsel %vm169, %v81, 0
  %v210 = vsel %vm169, %v86, 0
  %v213 = vsel %vm169, %v91, 0
  %v216 = vsel %vm169, %v96, 0
  %218 = vmatprep.subr.mxu0 0.0
  %219 = vmatpush1.msra.mxu0 %v97
  %220 = vmatprep.subr.mxu0 0.0
  %221 = vmatpush1.msra.mxu0 %v98
  %222 = vmatprep.subr.mxu0 0.0
  %223 = vmatpush1.msra.mxu0 %v99
  %224 = vmatprep.subr.mxu0 0.0
  %225 = vmatpush1.msra.mxu0 %v100
  %226 = vmatprep.subr.mxu0 0.0
  %227 = vmatpush1.msra.mxu0 %v101
  %228 = vmatprep.subr.mxu0 0.0
  %229 = vmatpush1.msra.mxu0 %v102
  %230 = vmatprep.subr.mxu0 0.0
  %231 = vmatpush1.msra.mxu0 %v103
  %232 = vmatprep.subr.mxu0 0.0
  %233 = vmatpush1.msra.mxu0 %v104
  %234 = vmatprep.subr.mxu0 0.0
  %235 = vmatpush1.msra.mxu0 %v105
  %236 = vmatprep.subr.mxu0 0.0
  %237 = vmatpush1.msra.mxu0 %v106
  %238 = vmatprep.subr.mxu0 0.0
  %239 = vmatpush1.msra.mxu0 %v107
  %240 = vmatprep.subr.mxu0 0.0
  %241 = vmatpush1.msra.mxu0 %v108
  %242 = vmatprep.subr.mxu0 0.0
  %243 = vmatpush1.msra.mxu0 %v109
  %244 = vmatprep.subr.mxu0 0.0
  %245 = vmatpush1.msra.mxu0 %v110
  %246 = vmatprep.subr.mxu0 0.0
  %247 = vmatpush1.msra.mxu0 %v111
  %248 = vmatprep.subr.mxu0 0.0
  %249 = vmatpush1.msra.mxu0 %v112
  %250 = vmatprep.subr.mxu0 0.0
  %251 = vmatpush1.msra.mxu0 %v113
  %252 = vmatprep.subr.mxu0 0.0
  %253 = vmatpush1.msra.mxu0 %v114
  %254 = vmatprep.subr.mxu0 0.0
  %255 = vmatpush1.msra.mxu0 %v115
  %256 = vmatprep.subr.mxu0 0.0
  %257 = vmatpush1.msra.mxu0 %v116
  %258 = vmatprep.subr.mxu0 0.0
  %259 = vmatpush1.msra.mxu0 %v117
  %260 = vmatprep.subr.mxu0 0.0
  %261 = vmatpush1.msra.mxu0 %v118
  %262 = vmatprep.subr.mxu0 0.0
  %263 = vmatpush1.msra.mxu0 %v119
  %264 = vmatprep.subr.mxu0 0.0
  %265 = vmatpush1.msra.mxu0 %v120
  %266 = vmatprep.subr.mxu0 0.0
  %267 = vmatpush1.msra.mxu0 %v121
  %268 = vmatprep.subr.mxu0 0.0
  %269 = vmatpush1.msra.mxu0 %v122
  %270 = vmatprep.subr.mxu0 0.0
  %271 = vmatpush1.msra.mxu0 %v123
  %272 = vmatprep.subr.mxu0 0.0
  %273 = vmatpush1.msra.mxu0 %v124
  %274 = vmatprep.subr.mxu0 0.0
  %275 = vmatpush1.msra.mxu0 %v125
  %276 = vmatprep.subr.mxu0 0.0
  %277 = vmatpush1.msra.mxu0 %v126
  %278 = vmatprep.subr.mxu0 0.0
  %279 = vmatpush1.msra.mxu0 %v127
  %280 = vmatprep.subr.mxu0 0.0
  %281 = vmatpush1.msra.mxu0 %v128
  %282 = vmatprep.mubr.f32.mxu0 %v18
  %283 = vmatmul.mubr.f32.gmra.mrb[0].mxu0 %v17
  %v284 = vpop.f32.mrb[0].mxu0
  %v285 = vadd.f32 0.0, %v284
  %v286 = vpop.f32.mrb[0].mxu0
  %287 = vmatprep.mubr.f32.mxu0 %v23
  %288 = vmatmul.mubr.f32.gmra.mrb[0].mxu0 %v22
  %v289 = vpop.f32.mrb[0].mxu0
  %v290 = vadd.f32 0.0, %v289
  %v291 = vpop.f32.mrb[0].mxu0
  %292 = vmatprep.mubr.f32.mxu0 %v28
  %293 = vmatmul.mubr.f32.gmra.mrb[0].mxu0 %v27
  %v294 = vpop.f32.mrb[0].mxu0
  %v295 = vadd.f32 0.0, %v294
  %v296 = vpop.f32.mrb[0].mxu0
  %297 = vmatprep.mubr.f32.mxu0 %v33
  %298 = vmatmul.mubr.f32.gmra.mrb[0].mxu0 %v32
  %v299 = vpop.f32.mrb[0].mxu0
  %v300 = vadd.f32 0.0, %v299
  %v301 = vpop.f32.mrb[0].mxu0
  %302 = vmatprep.mubr.f32.mxu0 %v38
  %303 = vmatmul.mubr.f32.gmra.mrb[0].mxu0 %v37
  %v304 = vpop.f32.mrb[0].mxu0
  %v305 = vadd.f32 0.0, %v304
  %v306 = vpop.f32.mrb[0].mxu0
  %307 = vmatprep.mubr.f32.mxu0 %v43
  %308 = vmatmul.mubr.f32.gmra.mrb[0].mxu0 %v42
  %v309 = vpop.f32.mrb[0].mxu0
  %v310 = vadd.f32 0.0, %v309
  %v311 = vpop.f32.mrb[0].mxu0
  %312 = vmatprep.mubr.f32.mxu0 %v48
  %313 = vmatmul.mubr.f32.gmra.mrb[0].mxu0 %v47
  %v314 = vpop.f32.mrb[0].mxu0
  %v315 = vadd.f32 0.0, %v314
  %v316 = vpop.f32.mrb[0].mxu0
  %317 = vmatprep.mubr.f32.mxu0 %v53
  %318 = vmatmul.mubr.f32.gmra.mrb[0].mxu0 %v52
  %v319 = vpop.f32.mrb[0].mxu0
  %v320 = vadd.f32 0.0, %v319
  %v321 = vpop.f32.mrb[0].mxu0
  %322 = vmatprep.mubr.f32.mxu0 %v58
  %323 = vmatmul.mubr.f32.gmra.mrb[0].mxu0 %v57
  %v324 = vpop.f32.mrb[0].mxu0
  %v325 = vadd.f32 0.0, %v324
  %v326 = vpop.f32.mrb[0].mxu0
  %327 = vmatprep.mubr.f32.mxu0 %v63
  %328 = vmatmul.mubr.f32.gmra.mrb[0].mxu0 %v62
  %v329 = vpop.f32.mrb[0].mxu0
  %v330 = vadd.f32 0.0, %v329
  %v331 = vpop.f32.mrb[0].mxu0
  %332 = vmatprep.mubr.f32.mxu0 %v68
  %333 = vmatmul.mubr.f32.gmra.mrb[0].mxu0 %v67
  %v334 = vpop.f32.mrb[0].mxu0
  %v335 = vadd.f32 0.0, %v334
  %v336 = vpop.f32.mrb[0].mxu0
  %337 = vmatprep.mubr.f32.mxu0 %v73
  %338 = vmatmul.mubr.f32.gmra.mrb[0].mxu0 %v72
  %v339 = vpop.f32.mrb[0].mxu0
  %v340 = vadd.f32 0.0, %v339
  %v341 = vpop.f32.mrb[0].mxu0
  %342 = vmatprep.mubr.f32.mxu0 %v78
  %343 = vmatmul.mubr.f32.gmra.mrb[0].mxu0 %v77
  %v344 = vpop.f32.mrb[0].mxu0
  %v345 = vadd.f32 0.0, %v344
  %v346 = vpop.f32.mrb[0].mxu0
  %347 = vmatprep.mubr.f32.mxu0 %v83
  %348 = vmatmul.mubr.f32.gmra.mrb[0].mxu0 %v82
  %v349 = vpop.f32.mrb[0].mxu0
  %v350 = vadd.f32 0.0, %v349
  %v351 = vpop.f32.mrb[0].mxu0
  %352 = vmatprep.mubr.f32.mxu0 %v88
  %353 = vmatmul.mubr.f32.gmra.mrb[0].mxu0 %v87
  %v354 = vpop.f32.mrb[0].mxu0
  %v355 = vadd.f32 0.0, %v354
  %v356 = vpop.f32.mrb[0].mxu0
  %357 = vmatprep.mubr.f32.mxu0 %v93
  %358 = vmatmul.mubr.f32.gmra.mrb[0].mxu0 %v92
  %v359 = vpop.f32.mrb[0].mxu0
  %v360 = vadd.f32 0.0, %v359
  %v361 = vpop.f32.mrb[0].mxu0
  %362 = vdwg.mxu0
  %363 = vmatprep.subr.mxu0 0.0
  %364 = vmatpush1.msra.mxu0 %v129
  %365 = vmatprep.subr.mxu0 0.0
  %366 = vmatpush1.msra.mxu0 %v130
  %367 = vmatprep.subr.mxu0 0.0
  %368 = vmatpush1.msra.mxu0 %v131
  %369 = vmatprep.subr.mxu0 0.0
  %370 = vmatpush1.msra.mxu0 %v132
  %371 = vmatprep.subr.mxu0 0.0
  %372 = vmatpush1.msra.mxu0 %v133
  %373 = vmatprep.subr.mxu0 0.0
  %374 = vmatpush1.msra.mxu0 %v134
  %375 = vmatprep.subr.mxu0 0.0
  %376 = vmatpush1.msra.mxu0 %v135
  %377 = vmatprep.subr.mxu0 0.0
  %378 = vmatpush1.msra.mxu0 %v136
  %379 = vmatprep.subr.mxu0 0.0
  %380 = vmatpush1.msra.mxu0 %v137
  %381 = vmatprep.subr.mxu0 0.0
  %382 = vmatpush1.msra.mxu0 %v138
  %383 = vmatprep.subr.mxu0 0.0
  %384 = vmatpush1.msra.mxu0 %v139
  %385 = vmatprep.subr.mxu0 0.0
  %386 = vmatpush1.msra.mxu0 %v140
  %387 = vmatprep.subr.mxu0 0.0
  %388 = vmatpush1.msra.mxu0 %v141
  %389 = vmatprep.subr.mxu0 0.0
  %390 = vmatpush1.msra.mxu0 %v142
  %391 = vmatprep.subr.mxu0 0.0
  %392 = vmatpush1.msra.mxu0 %v143
  %393 = vmatprep.subr.mxu0 0.0
  %394 = vmatpush1.msra.mxu0 %v144
  %395 = vmatprep.subr.mxu0 0.0
  %396 = vmatpush1.msra.mxu0 %v145
  %397 = vmatprep.subr.mxu0 0.0
  %398 = vmatpush1.msra.mxu0 %v146
  %399 = vmatprep.subr.mxu0 0.0
  %400 = vmatpush1.msra.mxu0 %v147
  %401 = vmatprep.subr.mxu0 0.0
  %402 = vmatpush1.msra.mxu0 %v148
  %403 = vmatprep.subr.mxu0 0.0
  %404 = vmatpush1.msra.mxu0 %v149
  %405 = vmatprep.subr.mxu0 0.0
  %406 = vmatpush1.msra.mxu0 %v150
  %407 = vmatprep.subr.mxu0 0.0
  %408 = vmatpush1.msra.mxu0 %v151
  %409 = vmatprep.subr.mxu0 0.0
  %410 = vmatpush1.msra.mxu0 %v152
  %411 = vmatprep.subr.mxu0 0.0
  %412 = vmatpush1.msra.mxu0 %v153
  %413 = vmatprep.subr.mxu0 0.0
  %414 = vmatpush1.msra.mxu0 %v154
  %415 = vmatprep.subr.mxu0 0.0
  %416 = vmatpush1.msra.mxu0 %v155
  %417 = vmatprep.subr.mxu0 0.0
  %418 = vmatpush1.msra.mxu0 %v156
  %419 = vmatprep.subr.mxu0 0.0
  %420 = vmatpush1.msra.mxu0 %v157
  %421 = vmatprep.subr.mxu0 0.0
  %422 = vmatpush1.msra.mxu0 %v158
  %423 = vmatprep.subr.mxu0 0.0
  %424 = vmatpush1.msra.mxu0 %v159
  %425 = vmatprep.subr.mxu0 0.0
  %426 = vmatpush1.msra.mxu0 %v160
  %427 = vmatprep.mubr.f32.mxu0 %v20
  %428 = vmatmul.mubr.f32.gmra.mrb[0].mxu0 %v19
  %v429 = vpop.f32.mrb[0].mxu0
  %v430 = vadd.f32 %v285, %v429
  %v431 = vpop.f32.mrb[0].mxu0
  %432 = vmatprep.mubr.f32.mxu0 %v25
  %433 = vmatmul.mubr.f32.gmra.mrb[0].mxu0 %v24
  %v434 = vpop.f32.mrb[0].mxu0
  %v435 = vadd.f32 %v290, %v434
  %v436 = vpop.f32.mrb[0].mxu0
  %437 = vmatprep.mubr.f32.mxu0 %v30
  %438 = vmatmul.mubr.f32.gmra.mrb[0].mxu0 %v29
  %v439 = vpop.f32.mrb[0].mxu0
  %v440 = vadd.f32 %v295, %v439
  %v441 = vpop.f32.mrb[0].mxu0
  %442 = vmatprep.mubr.f32.mxu0 %v35
  %443 = vmatmul.mubr.f32.gmra.mrb[0].mxu0 %v34
  %v444 = vpop.f32.mrb[0].mxu0
  %v445 = vadd.f32 %v300, %v444
  %v446 = vpop.f32.mrb[0].mxu0
  %447 = vmatprep.mubr.f32.mxu0 %v40
  %448 = vmatmul.mubr.f32.gmra.mrb[0].mxu0 %v39
  %v449 = vpop.f32.mrb[0].mxu0
  %v450 = vadd.f32 %v305, %v449
  %v451 = vpop.f32.mrb[0].mxu0
  %452 = vmatprep.mubr.f32.mxu0 %v45
  %453 = vmatmul.mubr.f32.gmra.mrb[0].mxu0 %v44
  %v454 = vpop.f32.mrb[0].mxu0
  %v455 = vadd.f32 %v310, %v454
  %v456 = vpop.f32.mrb[0].mxu0
  %457 = vmatprep.mubr.f32.mxu0 %v50
  %458 = vmatmul.mubr.f32.gmra.mrb[0].mxu0 %v49
  %v459 = vpop.f32.mrb[0].mxu0
  %v460 = vadd.f32 %v315, %v459
  %v461 = vpop.f32.mrb[0].mxu0
  %462 = vmatprep.mubr.f32.mxu0 %v55
  %463 = vmatmul.mubr.f32.gmra.mrb[0].mxu0 %v54
  %v464 = vpop.f32.mrb[0].mxu0
  %v465 = vadd.f32 %v320, %v464
  %v466 = vpop.f32.mrb[0].mxu0
  %467 = vmatprep.mubr.f32.mxu0 %v60
  %468 = vmatmul.mubr.f32.gmra.mrb[0].mxu0 %v59
  %v469 = vpop.f32.mrb[0].mxu0
  %v470 = vadd.f32 %v325, %v469
  %v471 = vpop.f32.mrb[0].mxu0
  %472 = vmatprep.mubr.f32.mxu0 %v65
  %473 = vmatmul.mubr.f32.gmra.mrb[0].mxu0 %v64
  %v474 = vpop.f32.mrb[0].mxu0
  %v475 = vadd.f32 %v330, %v474
  %v476 = vpop.f32.mrb[0].mxu0
  %477 = vmatprep.mubr.f32.mxu0 %v70
  %478 = vmatmul.mubr.f32.gmra.mrb[0].mxu0 %v69
  %v479 = vpop.f32.mrb[0].mxu0
  %v480 = vadd.f32 %v335, %v479
  %v481 = vpop.f32.mrb[0].mxu0
  %482 = vmatprep.mubr.f32.mxu0 %v75
  %483 = vmatmul.mubr.f32.gmra.mrb[0].mxu0 %v74
  %v484 = vpop.f32.mrb[0].mxu0
  %v485 = vadd.f32 %v340, %v484
  %v486 = vpop.f32.mrb[0].mxu0
  %487 = vmatprep.mubr.f32.mxu0 %v80
  %488 = vmatmul.mubr.f32.gmra.mrb[0].mxu0 %v79
  %v489 = vpop.f32.mrb[0].mxu0
  %v490 = vadd.f32 %v345, %v489
  %v491 = vpop.f32.mrb[0].mxu0
  %492 = vmatprep.mubr.f32.mxu0 %v85
  %493 = vmatmul.mubr.f32.gmra.mrb[0].mxu0 %v84
  %v494 = vpop.f32.mrb[0].mxu0
  %v495 = vadd.f32 %v350, %v494
  %v496 = vpop.f32.mrb[0].mxu0
  %497 = vmatprep.mubr.f32.mxu0 %v90
  %498 = vmatmul.mubr.f32.gmra.mrb[0].mxu0 %v89
  %v499 = vpop.f32.mrb[0].mxu0
  %v500 = vadd.f32 %v355, %v499
  %v501 = vpop.f32.mrb[0].mxu0
  %502 = vmatprep.mubr.f32.mxu0 %v95
  %503 = vmatmul.mubr.f32.gmra.mrb[0].mxu0 %v94
  %v504 = vpop.f32.mrb[0].mxu0
  %v505 = vadd.f32 %v360, %v504
  %v506 = vpop.f32.mrb[0].mxu0
  %507 = vdwg.mxu0
  %508 = vmatprep.subr.mxu0 0.0
  %509 = vmatpush1.msra.mxu0 %v161
  %510 = vmatprep.subr.mxu0 0.0
  %511 = vmatpush1.msra.mxu0 %v162
  %512 = vmatprep.subr.mxu0 0.0
  %513 = vmatpush1.msra.mxu0 %v163
  %514 = vmatprep.subr.mxu0 0.0
  %515 = vmatpush1.msra.mxu0 %v164
  %516 = vmatprep.subr.mxu0 0.0
  %517 = vmatpush1.msra.mxu0 %v165
  %518 = vmatprep.subr.mxu0 0.0
  %519 = vmatpush1.msra.mxu0 %v166
  %520 = vmatprep.subr.mxu0 0.0
  %521 = vmatpush1.msra.mxu0 %v167
  %522 = vmatprep.subr.mxu0 0.0
  %523 = vmatpush1.msra.mxu0 %v168
  %524 = vmatprep.subr.mxu0 0.0
  %525 = vmatpush1.msra.mxu0 0.0
  %526 = vmatprep.subr.mxu0 0.0
  %527 = vmatpush1.msra.mxu0 0.0
  %528 = vmatprep.subr.mxu0 0.0
  %529 = vmatpush1.msra.mxu0 0.0
  %530 = vmatprep.subr.mxu0 0.0
  %531 = vmatpush1.msra.mxu0 0.0
  %532 = vmatprep.subr.mxu0 0.0
  %533 = vmatpush1.msra.mxu0 0.0
  %534 = vmatprep.subr.mxu0 0.0
  %535 = vmatpush1.msra.mxu0 0.0
  %536 = vmatprep.subr.mxu0 0.0
  %537 = vmatpush1.msra.mxu0 0.0
  %538 = vmatprep.subr.mxu0 0.0
  %539 = vmatpush1.msra.mxu0 0.0
  %540 = vmatprep.subr.mxu0 0.0
  %541 = vmatpush1.msra.mxu0 0.0
  %542 = vmatprep.subr.mxu0 0.0
  %543 = vmatpush1.msra.mxu0 0.0
  %544 = vmatprep.subr.mxu0 0.0
  %545 = vmatpush1.msra.mxu0 0.0
  %546 = vmatprep.subr.mxu0 0.0
  %547 = vmatpush1.msra.mxu0 0.0
  %548 = vmatprep.subr.mxu0 0.0
  %549 = vmatpush1.msra.mxu0 0.0
  %550 = vmatprep.subr.mxu0 0.0
  %551 = vmatpush1.msra.mxu0 0.0
  %552 = vmatprep.subr.mxu0 0.0
  %553 = vmatpush1.msra.mxu0 0.0
  %554 = vmatprep.subr.mxu0 0.0
  %555 = vmatpush1.msra.mxu0 0.0
  %556 = vmatprep.subr.mxu0 0.0
  %557 = vmatpush1.msra.mxu0 0.0
  %558 = vmatprep.subr.mxu0 0.0
  %559 = vmatpush1.msra.mxu0 0.0
  %560 = vmatprep.subr.mxu0 0.0
  %561 = vmatpush1.msra.mxu0 0.0
  %562 = vmatprep.subr.mxu0 0.0
  %563 = vmatpush1.msra.mxu0 0.0
  %564 = vmatprep.subr.mxu0 0.0
  %565 = vmatpush1.msra.mxu0 0.0
  %566 = vmatprep.subr.mxu0 0.0
  %567 = vmatpush1.msra.mxu0 0.0
  %568 = vmatprep.subr.mxu0 0.0
  %569 = vmatpush1.msra.mxu0 0.0
  %570 = vmatprep.subr.mxu0 0.0
  %571 = vmatpush1.msra.mxu0 0.0
  %572 = vmatprep.mubr.f32.mxu0 0.0
  %573 = vmatmul.mubr.f32.gmra.mrb[0].mxu0 %v171
  %v574 = vpop.f32.mrb[0].mxu0
  %v575 = vadd.f32 %v430, %v574
  %v576 = vpop.f32.mrb[0].mxu0
  %577 = vmatprep.mubr.f32.mxu0 0.0
  %578 = vmatmul.mubr.f32.gmra.mrb[0].mxu0 %v174
  %v579 = vpop.f32.mrb[0].mxu0
  %v580 = vadd.f32 %v435, %v579
  %v581 = vpop.f32.mrb[0].mxu0
  %582 = vmatprep.mubr.f32.mxu0 0.0
  %583 = vmatmul.mubr.f32.gmra.mrb[0].mxu0 %v177
  %v584 = vpop.f32.mrb[0].mxu0
  %v585 = vadd.f32 %v440, %v584
  %v586 = vpop.f32.mrb[0].mxu0
  %587 = vmatprep.mubr.f32.mxu0 0.0
  %588 = vmatmul.mubr.f32.gmra.mrb[0].mxu0 %v180
  %v589 = vpop.f32.mrb[0].mxu0
  %v590 = vadd.f32 %v445, %v589
  %v591 = vpop.f32.mrb[0].mxu0
  %592 = vmatprep.mubr.f32.mxu0 0.0
  %593 = vmatmul.mubr.f32.gmra.mrb[0].mxu0 %v183
  %v594 = vpop.f32.mrb[0].mxu0
  %v595 = vadd.f32 %v450, %v594
  %v596 = vpop.f32.mrb[0].mxu0
  %597 = vmatprep.mubr.f32.mxu0 0.0
  %598 = vmatmul.mubr.f32.gmra.mrb[0].mxu0 %v186
  %v599 = vpop.f32.mrb[0].mxu0
  %v600 = vadd.f32 %v455, %v599
  %v601 = vpop.f32.mrb[0].mxu0
  %602 = vmatprep.mubr.f32.mxu0 0.0
  %603 = vmatmul.mubr.f32.gmra.mrb[0].mxu0 %v189
  %v604 = vpop.f32.mrb[0].mxu0
  %v605 = vadd.f32 %v460, %v604
  %v606 = vpop.f32.mrb[0].mxu0
  %607 = vmatprep.mubr.f32.mxu0 0.0
  %608 = vmatmul.mubr.f32.gmra.mrb[0].mxu0 %v192
  %v609 = vpop.f32.mrb[0].mxu0
  %v610 = vadd.f32 %v465, %v609
  %v611 = vpop.f32.mrb[0].mxu0
  %612 = vmatprep.mubr.f32.mxu0 0.0
  %613 = vmatmul.mubr.f32.gmra.mrb[0].mxu0 %v195
  %v614 = vpop.f32.mrb[0].mxu0
  %v615 = vadd.f32 %v470, %v614
  %v616 = vpop.f32.mrb[0].mxu0
  %617 = vmatprep.mubr.f32.mxu0 0.0
  %618 = vmatmul.mubr.f32.gmra.mrb[0].mxu0 %v198
  %v619 = vpop.f32.mrb[0].mxu0
  %v620 = vadd.f32 %v475, %v619
  %v621 = vpop.f32.mrb[0].mxu0
  %622 = vmatprep.mubr.f32.mxu0 0.0
  %623 = vmatmul.mubr.f32.gmra.mrb[0].mxu0 %v201
  %v624 = vpop.f32.mrb[0].mxu0
  %v625 = vadd.f32 %v480, %v624
  %v626 = vpop.f32.mrb[0].mxu0
  %627 = vmatprep.mubr.f32.mxu0 0.0
  %628 = vmatmul.mubr.f32.gmra.mrb[0].mxu0 %v204
  %v629 = vpop.f32.mrb[0].mxu0
  %v630 = vadd.f32 %v485, %v629
  %v631 = vpop.f32.mrb[0].mxu0
  %632 = vmatprep.mubr.f32.mxu0 0.0
  %633 = vmatmul.mubr.f32.gmra.mrb[0].mxu0 %v207
  %v634 = vpop.f32.mrb[0].mxu0
  %v635 = vadd.f32 %v490, %v634
  %v636 = vpop.f32.mrb[0].mxu0
  %637 = vmatprep.mubr.f32.mxu0 0.0
  %638 = vmatmul.mubr.f32.gmra.mrb[0].mxu0 %v210
  %v639 = vpop.f32.mrb[0].mxu0
  %v640 = vadd.f32 %v495, %v639
  %v641 = vpop.f32.mrb[0].mxu0
  %642 = vmatprep.mubr.f32.mxu0 0.0
  %643 = vmatmul.mubr.f32.gmra.mrb[0].mxu0 %v213
  %v644 = vpop.f32.mrb[0].mxu0
  %v645 = vadd.f32 %v500, %v644
  %v646 = vpop.f32.mrb[0].mxu0
  %647 = vmatprep.mubr.f32.mxu0 0.0
  %648 = vmatmul.mubr.f32.gmra.mrb[0].mxu0 %v216
  %v649 = vpop.f32.mrb[0].mxu0
  %v650 = vadd.f32 %v505, %v649
  %v651 = vpop.f32.mrb[0].mxu0
  %652 = vdwg.mxu0
  %vm653 = vcmask 261120
  %v654 = vsel %vm653, %v575, 0.0
  %v655 = vsel %vm653, %v580, 0.0
  %v656 = vadd.f32 %v654, %v655
  %v657 = vsel %vm653, %v585, 0.0
  %v658 = vadd.f32 %v656, %v657
  %v659 = vsel %vm653, %v590, 0.0
  %v660 = vadd.f32 %v658, %v659
  %v661 = vsel %vm653, %v595, 0.0
  %v662 = vadd.f32 %v660, %v661
  %v663 = vsel %vm653, %v600, 0.0
  %v664 = vadd.f32 %v662, %v663
  %v665 = vsel %vm653, %v605, 0.0
  %v666 = vadd.f32 %v664, %v665
  %v667 = vsel %vm653, %v610, 0.0
  %v668 = vadd.f32 %v666, %v667
  %v669 = vsel %vm653, %v615, 0.0
  %v670 = vadd.f32 %v668, %v669
  %v671 = vsel %vm653, %v620, 0.0
  %v672 = vadd.f32 %v670, %v671
  %v673 = vsel %vm653, %v625, 0.0
  %v674 = vadd.f32 %v672, %v673
  %v675 = vsel %vm653, %v630, 0.0
  %v676 = vadd.f32 %v674, %v675
  %v677 = vsel %vm653, %v635, 0.0
  %v678 = vadd.f32 %v676, %v677
  %v679 = vsel %vm653, %v640, 0.0
  %v680 = vadd.f32 %v678, %v679
  %v681 = vsel %vm653, %v645, 0.0
  %v682 = vadd.f32 %v680, %v681
  %v683 = vsel %vm653, %v650, 0.0
  %v684 = vadd.f32 %v682, %v683
  %v685 = vrot.slane %v684, 4
  %v686 = vadd.f32 %v684, %v685
  %v687 = vrot.slane %v686, 2
  %v688 = vadd.f32 %v686, %v687
  %v689 = vrot.slane %v688, 1
  %v690 = vadd.f32 %v688, %v689
  %v691 = vrcp.pop 128.0
  %v692 = vmul.f32 %v690, %v691
  %v693 = vsub.f32 %v575, %v692
  %v694 = vsub.f32 %v580, %v692
  %v695 = vsub.f32 %v585, %v692
  %v696 = vsub.f32 %v590, %v692
  %v697 = vsub.f32 %v595, %v692
  %v698 = vsub.f32 %v600, %v692
  %v699 = vsub.f32 %v605, %v692
  %v700 = vsub.f32 %v610, %v692
  %v701 = vsub.f32 %v615, %v692
  %v702 = vsub.f32 %v620, %v692
  %v703 = vsub.f32 %v625, %v692
  %v704 = vsub.f32 %v630, %v692
  %v705 = vsub.f32 %v635, %v692
  %v706 = vsub.f32 %v640, %v692
  %v707 = vsub.f32 %v645, %v692
  %v708 = vsub.f32 %v650, %v692
  %v709 = vmul.f32 %v693, %v693
  %v710 = vmul.f32 %v694, %v694
  %v711 = vmul.f32 %v695, %v695
  %v712 = vmul.f32 %v696, %v696
  %v713 = vmul.f32 %v697, %v697
  %v714 = vmul.f32 %v698, %v698
  %v715 = vmul.f32 %v699, %v699
  %v716 = vmul.f32 %v700, %v700
  %v717 = vmul.f32 %v701, %v701
  %v718 = vmul.f32 %v702, %v702
  %v719 = vmul.f32 %v703, %v703
  %v720 = vmul.f32 %v704, %v704
  %v721 = vmul.f32 %v705, %v705
  %v722 = vmul.f32 %v706, %v706
  %v723 = vmul.f32 %v707, %v707
  %v724 = vmul.f32 %v708, %v708
  %v725 = vsel %vm653, %v709, 0.0
  %v726 = vsel %vm653, %v710, 0.0
  %v727 = vadd.f32 %v725, %v726
  %v728 = vsel %vm653, %v711, 0.0
  %v729 = vadd.f32 %v727, %v728
  %v730 = vsel %vm653, %v712, 0.0
  %v731 = vadd.f32 %v729, %v730
  %v732 = vsel %vm653, %v713, 0.0
  %v733 = vadd.f32 %v731, %v732
  %v734 = vsel %vm653, %v714, 0.0
  %v735 = vadd.f32 %v733, %v734
  %v736 = vsel %vm653, %v715, 0.0
  %v737 = vadd.f32 %v735, %v736
  %v738 = vsel %vm653, %v716, 0.0
  %v739 = vadd.f32 %v737, %v738
  %v740 = vsel %vm653, %v717, 0.0
  %v741 = vadd.f32 %v739, %v740
  %v742 = vsel %vm653, %v718, 0.0
  %v743 = vadd.f32 %v741, %v742
  %v744 = vsel %vm653, %v719, 0.0
  %v745 = vadd.f32 %v743, %v744
  %v746 = vsel %vm653, %v720, 0.0
  %v747 = vadd.f32 %v745, %v746
  %v748 = vsel %vm653, %v721, 0.0
  %v749 = vadd.f32 %v747, %v748
  %v750 = vsel %vm653, %v722, 0.0
  %v751 = vadd.f32 %v749, %v750
  %v752 = vsel %vm653, %v723, 0.0
  %v753 = vadd.f32 %v751, %v752
  %v754 = vsel %vm653, %v724, 0.0
  %v755 = vadd.f32 %v753, %v754
  %v756 = vrot.slane %v755, 4
  %v757 = vadd.f32 %v755, %v756
  %v758 = vrot.slane %v757, 2
  %v759 = vadd.f32 %v757, %v758
  %v760 = vrot.slane %v759, 1
  %v761 = vadd.f32 %v759, %v760
  %v762 = vmul.f32 %v761, %v691
  %v763 = vadd.f32 %v762, 1e-05
  %v764 = vrsqrt.pop %v763
  %v765 = vmul.f32 %v693, %v764
  %v766 = vmul.f32 %v694, %v764
  %v767 = vmul.f32 %v695, %v764
  %v768 = vmul.f32 %v696, %v764
  %v769 = vmul.f32 %v697, %v764
  %v770 = vmul.f32 %v698, %v764
  %v771 = vmul.f32 %v699, %v764
  %v772 = vmul.f32 %v700, %v764
  %v773 = vmul.f32 %v701, %v764
  %v774 = vmul.f32 %v702, %v764
  %v775 = vmul.f32 %v703, %v764
  %v776 = vmul.f32 %v704, %v764
  %v777 = vmul.f32 %v705, %v764
  %v778 = vmul.f32 %v706, %v764
  %v779 = vmul.f32 %v707, %v764
  %v780 = vmul.f32 %v708, %v764
  %v781 = vld [vmem:[%s2] sm:$0x1]
  %v783 = vlaneseq
  %v784 = vshrl.u32 %v783, 7
  %v785 = vsub.s32 0, %v784
  %v786 = vrot.slane %v781, %v785
  %v788 = vmul.f32 %v765, %v786
  %v789 = vmul.f32 %v766, %v786
  %v790 = vmul.f32 %v767, %v786
  %v791 = vmul.f32 %v768, %v786
  %v792 = vmul.f32 %v769, %v786
  %v793 = vmul.f32 %v770, %v786
  %v794 = vmul.f32 %v771, %v786
  %v795 = vmul.f32 %v772, %v786
  %v796 = vmul.f32 %v773, %v786
  %v797 = vmul.f32 %v774, %v786
  %v798 = vmul.f32 %v775, %v786
  %v799 = vmul.f32 %v776, %v786
  %v800 = vmul.f32 %v777, %v786
  %v801 = vmul.f32 %v778, %v786
  %v802 = vmul.f32 %v779, %v786
  %v803 = vmul.f32 %v780, %v786
  %v804 = vld [vmem:[%s3] sm:$0x1]
  %v806 = vlaneseq
  %v807 = vshrl.u32 %v806, 7
  %v808 = vsub.s32 0, %v807
  %v809 = vrot.slane %v804, %v808
  %v811 = vadd.f32 %v788, %v809
  %v812 = vadd.f32 %v789, %v809
  %v813 = vadd.f32 %v790, %v809
  %v814 = vadd.f32 %v791, %v809
  %v815 = vadd.f32 %v792, %v809
  %v816 = vadd.f32 %v793, %v809
  %v817 = vadd.f32 %v794, %v809
  %v818 = vadd.f32 %v795, %v809
  %v819 = vadd.f32 %v796, %v809
  %v820 = vadd.f32 %v797, %v809
  %v821 = vadd.f32 %v798, %v809
  %v822 = vadd.f32 %v799, %v809
  %v823 = vadd.f32 %v800, %v809
  %v824 = vadd.f32 %v801, %v809
  %v825 = vadd.f32 %v802, %v809
  %v826 = vadd.f32 %v803, %v809
  %v827 = vmax.f32 %v811, 0.0
  %v828 = vmax.f32 %v812, 0.0
  %v829 = vmax.f32 %v813, 0.0
  %v830 = vmax.f32 %v814, 0.0
  %v831 = vmax.f32 %v815, 0.0
  %v832 = vmax.f32 %v816, 0.0
  %v833 = vmax.f32 %v817, 0.0
  %v834 = vmax.f32 %v818, 0.0
  %v835 = vmax.f32 %v819, 0.0
  %v836 = vmax.f32 %v820, 0.0
  %v837 = vmax.f32 %v821, 0.0
  %v838 = vmax.f32 %v822, 0.0
  %v839 = vmax.f32 %v823, 0.0
  %v840 = vmax.f32 %v824, 0.0
  %v841 = vmax.f32 %v825, 0.0
  %v842 = vmax.f32 %v826, 0.0
  %843 = vst.msk [vmem:[%s4] sm:$0xff] %vm653, %v827
  %844 = vst.msk [vmem:[%s4 + $0x8] sm:$0xff] %vm653, %v828
  %845 = vst.msk [vmem:[%s4 + $0x10] sm:$0xff] %vm653, %v829
  %846 = vst.msk [vmem:[%s4 + $0x18] sm:$0xff] %vm653, %v830
  %847 = vst.msk [vmem:[%s4 + $0x20] sm:$0xff] %vm653, %v831
  %848 = vst.msk [vmem:[%s4 + $0x28] sm:$0xff] %vm653, %v832
  %849 = vst.msk [vmem:[%s4 + $0x30] sm:$0xff] %vm653, %v833
  %850 = vst.msk [vmem:[%s4 + $0x38] sm:$0xff] %vm653, %v834
  %851 = vst.msk [vmem:[%s4 + $0x40] sm:$0xff] %vm653, %v835
  %852 = vst.msk [vmem:[%s4 + $0x48] sm:$0xff] %vm653, %v836
  %853 = vst.msk [vmem:[%s4 + $0x50] sm:$0xff] %vm653, %v837
  %854 = vst.msk [vmem:[%s4 + $0x58] sm:$0xff] %vm653, %v838
  %855 = vst.msk [vmem:[%s4 + $0x60] sm:$0xff] %vm653, %v839
  %856 = vst.msk [vmem:[%s4 + $0x68] sm:$0xff] %vm653, %v840
  %857 = vst.msk [vmem:[%s4 + $0x70] sm:$0xff] %vm653, %v841
  %858 = vst.msk [vmem:[%s4 + $0x78] sm:$0xff] %vm653, %v842
  // Predicated region
  $region18: #{forward.11} parent=0 // pred_check
    _
  $region19: #{forward.11} parent=0 // pred_check_branch
    %860 = sbr.rel (0) target = $region21
  $region20: #{forward.11} parent=0 // pred_region
    _
  $region21: #{forward.11} parent=0 // pred_fallthru
    _
  // Predicated region
  $region22: #{forward.11} parent=0 // pred_check
    _
  $region23: #{forward.11} parent=0 // pred_check_branch
    %862 = sbr.rel (0) target = $region25
  $region24: #{forward.11} parent=0 // pred_region
    _
  $region25: #{forward.11} parent=0 // pred_fallthru
    _

// kernel: forward.12
$region0: #{forward.12}
  #allocation0 [shape = 'u32[]', space=smem, size = 0x4, offset = 0x4, fixed_abs, tag = 'smem constant byte address 0x4 - core index']
  #allocation1 [shape = 'u32[144,128]{1,0:T(1,128)}', space=vmem, size = 0x12000, scoped, tag = 'internal scratch']
  %s0 = inlined_call_operand.vmem [shape: f32[450,128], index: 0, kind: input, shape index: {}]
  %s1 = inlined_call_operand.vmem [shape: f32[128,16], index: 1, kind: input, shape index: {}]
  %s2 = inlined_call_operand.vmem [shape: f32[1,16], index: 2, kind: input, shape index: {}]
  %s3 = inlined_call_operand.vmem [shape: f32[1,16], index: 3, kind: input, shape index: {}]
  %s4 = inlined_call_operand.vmem [shape: f32[450,16], index: 4, kind: output, shape index: {}]
  %s5 = sld [smem:[#allocation0]]
  $region26: #{forward.12} parent=0
    _
  %s7 = ssub.s32 1, %s5
  %s8 = scalar_select 0, %s7, %s5
  // Predicated region
  $region2: #{forward.12} parent=0 // pred_check
    _
  $region3: #{forward.12} parent=0 // pred_check_branch
    %10 = sbr.rel (0) target = $region5
  $region4: #{forward.12} parent=0 // pred_region
    _
  $region5: #{forward.12} parent=0 // pred_fallthru
    _
  // Predicated region
  $region6: #{forward.12} parent=0 // pred_check
    _
  $region7: #{forward.12} parent=0 // pred_check_branch
    %12 = sbr.rel (0) target = $region9
  $region8: #{forward.12} parent=0 // pred_region
    _
  $region9: #{forward.12} parent=0 // pred_fallthru
    _
  // Predicated region
  $region10: #{forward.12} parent=0 // pred_check
    _
  $region11: #{forward.12} parent=0 // pred_check_branch
    %14 = sbr.rel (0) target = $region13
  $region12: #{forward.12} parent=0 // pred_region
    _
  $region13: #{forward.12} parent=0 // pred_fallthru
    _
  // Predicated region
  $region14: #{forward.12} parent=0 // pred_check
    _
  $region15: #{forward.12} parent=0 // pred_check_branch
    %16 = sbr.rel (0) target = $region17
  $region16: #{forward.12} parent=0 // pred_region
    _
  $region17: #{forward.12} parent=0 // pred_fallthru
    _
  %v17 = vld [vmem:[%s0] sm:$0xff]
  %v18 = vld [vmem:[%s0 + $0x8] sm:$0xff]
  %v19 = vld [vmem:[%s0 + $0x10] sm:$0xff]
  %v20 = vld [vmem:[%s0 + $0x18] sm:$0xff]
  %v21 = vld [vmem:[%s0 + $0x20] sm:$0xff]
  %v22 = vld [vmem:[%s0 + $0x28] sm:$0xff]
  %v23 = vld [vmem:[%s0 + $0x30] sm:$0xff]
  %v24 = vld [vmem:[%s0 + $0x38] sm:$0xff]
  %v25 = vld [vmem:[%s0 + $0x40] sm:$0xff]
  %v26 = vld [vmem:[%s0 + $0x48] sm:$0xff]
  %v27 = vld [vmem:[%s0 + $0x50] sm:$0xff]
  %v28 = vld [vmem:[%s0 + $0x58] sm:$0xff]
  %v29 = vld [vmem:[%s0 + $0x60] sm:$0xff]
  %v30 = vld [vmem:[%s0 + $0x68] sm:$0xff]
  %v31 = vld [vmem:[%s0 + $0x70] sm:$0xff]
  %v32 = vld [vmem:[%s0 + $0x78] sm:$0xff]
  %v33 = vld [vmem:[%s0 + $0x80] sm:$0xff]
  %v34 = vld [vmem:[%s0 + $0x88] sm:$0xff]
  %v35 = vld [vmem:[%s0 + $0x90] sm:$0xff]
  %v36 = vld [vmem:[%s0 + $0x98] sm:$0xff]
  %v37 = vld [vmem:[%s0 + $0xa0] sm:$0xff]
  %v38 = vld [vmem:[%s0 + $0xa8] sm:$0xff]
  %v39 = vld [vmem:[%s0 + $0xb0] sm:$0xff]
  %v40 = vld [vmem:[%s0 + $0xb8] sm:$0xff]
  %v41 = vld [vmem:[%s0 + $0xc0] sm:$0xff]
  %v42 = vld [vmem:[%s0 + $0xc8] sm:$0xff]
  %v43 = vld [vmem:[%s0 + $0xd0] sm:$0xff]
  %v44 = vld [vmem:[%s0 + $0xd8] sm:$0xff]
  %v45 = vld [vmem:[%s0 + $0xe0] sm:$0xff]
  %v46 = vld [vmem:[%s0 + $0xe8] sm:$0xff]
  %v47 = vld [vmem:[%s0 + $0xf0] sm:$0xff]
  %v48 = vld [vmem:[%s0 + $0xf8] sm:$0xff]
  %v49 = vld [vmem:[%s0 + $0x100] sm:$0xff]
  %v50 = vld [vmem:[%s0 + $0x108] sm:$0xff]
  %v51 = vld [vmem:[%s0 + $0x110] sm:$0xff]
  %v52 = vld [vmem:[%s0 + $0x118] sm:$0xff]
  %v53 = vld [vmem:[%s0 + $0x120] sm:$0xff]
  %v54 = vld [vmem:[%s0 + $0x128] sm:$0xff]
  %v55 = vld [vmem:[%s0 + $0x130] sm:$0xff]
  %v56 = vld [vmem:[%s0 + $0x138] sm:$0xff]
  %v57 = vld [vmem:[%s0 + $0x140] sm:$0xff]
  %v58 = vld [vmem:[%s0 + $0x148] sm:$0xff]
  %v59 = vld [vmem:[%s0 + $0x150] sm:$0xff]
  %v60 = vld [vmem:[%s0 + $0x158] sm:$0xff]
  %v61 = vld [vmem:[%s0 + $0x160] sm:$0xff]
  %v62 = vld [vmem:[%s0 + $0x168] sm:$0xff]
  %v63 = vld [vmem:[%s0 + $0x170] sm:$0xff]
  %v64 = vld [vmem:[%s0 + $0x178] sm:$0xff]
  %v65 = vld [vmem:[%s0 + $0x180] sm:$0xff]
  %v66 = vld [vmem:[%s0 + $0x188] sm:$0xff]
  %v67 = vld [vmem:[%s0 + $0x190] sm:$0xff]
  %v68 = vld [vmem:[%s0 + $0x198] sm:$0xff]
  %v69 = vld [vmem:[%s0 + $0x1a0] sm:$0xff]
  %v70 = vld [vmem:[%s0 + $0x1a8] sm:$0xff]
  %v71 = vld [vmem:[%s0 + $0x1b0] sm:$0xff]
  %v72 = vld [vmem:[%s0 + $0x1b8] sm:$0xff]
  %v73 = vld [vmem:[%s0 + $0x1c0] sm:$0x3]
  %v74 = vld [vmem:[%s1] sm:$0xff]
  %v75 = vld [vmem:[%s1 + $0x8] sm:$0xff]
  %v76 = vld [vmem:[%s1 + $0x10] sm:$0xff]
  %v77 = vld [vmem:[%s1 + $0x18] sm:$0xff]
  %v78 = vld [vmem:[%s1 + $0x20] sm:$0xff]
  %v79 = vld [vmem:[%s1 + $0x28] sm:$0xff]
  %v80 = vld [vmem:[%s1 + $0x30] sm:$0xff]
  %v81 = vld [vmem:[%s1 + $0x38] sm:$0xff]
  %v82 = vld [vmem:[%s1 + $0x40] sm:$0xff]
  %v83 = vld [vmem:[%s1 + $0x48] sm:$0xff]
  %v84 = vld [vmem:[%s1 + $0x50] sm:$0xff]
  %v85 = vld [vmem:[%s1 + $0x58] sm:$0xff]
  %v86 = vld [vmem:[%s1 + $0x60] sm:$0xff]
  %v87 = vld [vmem:[%s1 + $0x68] sm:$0xff]
  %v88 = vld [vmem:[%s1 + $0x70] sm:$0xff]
  %v89 = vld [vmem:[%s1 + $0x78] sm:$0xff]
  %90 = vmatprep.subr.mxu0 0.0
  %91 = vmatpush1.msra.mxu0 %v74
  %92 = vmatprep.subr.mxu0 0.0
  %93 = vmatpush1.msra.mxu0 %v75
  %94 = vmatprep.subr.mxu0 0.0
  %95 = vmatpush1.msra.mxu0 %v76
  %96 = vmatprep.subr.mxu0 0.0
  %97 = vmatpush1.msra.mxu0 %v77
  %98 = vmatprep.subr.mxu0 0.0
  %99 = vmatpush1.msra.mxu0 %v78
  %100 = vmatprep.subr.mxu0 0.0
  %101 = vmatpush1.msra.mxu0 %v79
  %102 = vmatprep.subr.mxu0 0.0
  %103 = vmatpush1.msra.mxu0 %v80
  %104 = vmatprep.subr.mxu0 0.0
  %105 = vmatpush1.msra.mxu0 %v81
  %106 = vmatprep.subr.mxu0 0.0
  %107 = vmatpush1.msra.mxu0 %v82
  %108 = vmatprep.subr.mxu0 0.0
  %109 = vmatpush1.msra.mxu0 %v83
  %110 = vmatprep.subr.mxu0 0.0
  %111 = vmatpush1.msra.mxu0 %v84
  %112 = vmatprep.subr.mxu0 0.0
  %113 = vmatpush1.msra.mxu0 %v85
  %114 = vmatprep.subr.mxu0 0.0
  %115 = vmatpush1.msra.mxu0 %v86
  %116 = vmatprep.subr.mxu0 0.0
  %117 = vmatpush1.msra.mxu0 %v87
  %118 = vmatprep.subr.mxu0 0.0
  %119 = vmatpush1.msra.mxu0 %v88
  %120 = vmatprep.subr.mxu0 0.0
  %121 = vmatpush1.msra.mxu0 %v89
  %122 = vmatprep.subr.mxu0 0.0
  %123 = vmatpush1.msra.mxu0 0.0
  %124 = vmatprep.subr.mxu0 0.0
  %125 = vmatpush1.msra.mxu0 0.0
  %126 = vmatprep.subr.mxu0 0.0
  %127 = vmatpush1.msra.mxu0 0.0
  %128 = vmatprep.subr.mxu0 0.0
  %129 = vmatpush1.msra.mxu0 0.0
  %130 = vmatprep.subr.mxu0 0.0
  %131 = vmatpush1.msra.mxu0 0.0
  %132 = vmatprep.subr.mxu0 0.0
  %133 = vmatpush1.msra.mxu0 0.0
  %134 = vmatprep.subr.mxu0 0.0
  %135 = vmatpush1.msra.mxu0 0.0
  %136 = vmatprep.subr.mxu0 0.0
  %137 = vmatpush1.msra.mxu0 0.0
  %138 = vmatprep.subr.mxu0 0.0
  %139 = vmatpush1.msra.mxu0 0.0
  %140 = vmatprep.subr.mxu0 0.0
  %141 = vmatpush1.msra.mxu0 0.0
  %142 = vmatprep.subr.mxu0 0.0
  %143 = vmatpush1.msra.mxu0 0.0
  %144 = vmatprep.subr.mxu0 0.0
  %145 = vmatpush1.msra.mxu0 0.0
  %146 = vmatprep.subr.mxu0 0.0
  %147 = vmatpush1.msra.mxu0 0.0
  %148 = vmatprep.subr.mxu0 0.0
  %149 = vmatpush1.msra.mxu0 0.0
  %150 = vmatprep.subr.mxu0 0.0
  %151 = vmatpush1.msra.mxu0 0.0
  %152 = vmatprep.subr.mxu0 0.0
  %153 = vmatpush1.msra.mxu0 0.0
  %154 = vmatprep.mubr.f32.mxu0 0.0
  %155 = vmatmul.mubr.f32.gmra.mrb[0].mxu0 %v17
  %v156 = vpop.f32.mrb[0].mxu0
  %v157 = vadd.f32 0.0, %v156
  %v158 = vpop.f32.mrb[0].mxu0
  %159 = vmatprep.mubr.f32.mxu0 0.0
  %160 = vmatmul.mubr.f32.gmra.mrb[0].mxu0 %v18
  %v161 = vpop.f32.mrb[0].mxu0
  %v162 = vadd.f32 0.0, %v161
  %v163 = vpop.f32.mrb[0].mxu0
  %164 = vmatprep.mubr.f32.mxu0 0.0
  %165 = vmatmul.mubr.f32.gmra.mrb[0].mxu0 %v19
  %v166 = vpop.f32.mrb[0].mxu0
  %v167 = vadd.f32 0.0, %v166
  %v168 = vpop.f32.mrb[0].mxu0
  %169 = vmatprep.mubr.f32.mxu0 0.0
  %170 = vmatmul.mubr.f32.gmra.mrb[0].mxu0 %v20
  %v171 = vpop.f32.mrb[0].mxu0
  %v172 = vadd.f32 0.0, %v171
  %v173 = vpop.f32.mrb[0].mxu0
  %174 = vmatprep.mubr.f32.mxu0 0.0
  %175 = vmatmul.mubr.f32.gmra.mrb[0].mxu0 %v21
  %v176 = vpop.f32.mrb[0].mxu0
  %v177 = vadd.f32 0.0, %v176
  %v178 = vpop.f32.mrb[0].mxu0
  %179 = vmatprep.mubr.f32.mxu0 0.0
  %180 = vmatmul.mubr.f32.gmra.mrb[0].mxu0 %v22
  %v181 = vpop.f32.mrb[0].mxu0
  %v182 = vadd.f32 0.0, %v181
  %v183 = vpop.f32.mrb[0].mxu0
  %184 = vmatprep.mubr.f32.mxu0 0.0
  %185 = vmatmul.mubr.f32.gmra.mrb[0].mxu0 %v23
  %v186 = vpop.f32.mrb[0].mxu0
  %v187 = vadd.f32 0.0, %v186
  %v188 = vpop.f32.mrb[0].mxu0
  %189 = vmatprep.mubr.f32.mxu0 0.0
  %190 = vmatmul.mubr.f32.gmra.mrb[0].mxu0 %v24
  %v191 = vpop.f32.mrb[0].mxu0
  %v192 = vadd.f32 0.0, %v191
  %v193 = vpop.f32.mrb[0].mxu0
  %194 = vmatprep.mubr.f32.mxu0 0.0
  %195 = vmatmul.mubr.f32.gmra.mrb[0].mxu0 %v25
  %v196 = vpop.f32.mrb[0].mxu0
  %v197 = vadd.f32 0.0, %v196
  %v198 = vpop.f32.mrb[0].mxu0
  %199 = vmatprep.mubr.f32.mxu0 0.0
  %200 = vmatmul.mubr.f32.gmra.mrb[0].mxu0 %v26
  %v201 = vpop.f32.mrb[0].mxu0
  %v202 = vadd.f32 0.0, %v201
  %v203 = vpop.f32.mrb[0].mxu0
  %204 = vmatprep.mubr.f32.mxu0 0.0
  %205 = vmatmul.mubr.f32.gmra.mrb[0].mxu0 %v27
  %v206 = vpop.f32.mrb[0].mxu0
  %v207 = vadd.f32 0.0, %v206
  %v208 = vpop.f32.mrb[0].mxu0
  %209 = vmatprep.mubr.f32.mxu0 0.0
  %210 = vmatmul.mubr.f32.gmra.mrb[0].mxu0 %v28
  %v211 = vpop.f32.mrb[0].mxu0
  %v212 = vadd.f32 0.0, %v211
  %v213 = vpop.f32.mrb[0].mxu0
  %214 = vmatprep.mubr.f32.mxu0 0.0
  %215 = vmatmul.mubr.f32.gmra.mrb[0].mxu0 %v29
  %v216 = vpop.f32.mrb[0].mxu0
  %v217 = vadd.f32 0.0, %v216
  %v218 = vpop.f32.mrb[0].mxu0
  %219 = vmatprep.mubr.f32.mxu0 0.0
  %220 = vmatmul.mubr.f32.gmra.mrb[0].mxu0 %v30
  %v221 = vpop.f32.mrb[0].mxu0
  %v222 = vadd.f32 0.0, %v221
  %v223 = vpop.f32.mrb[0].mxu0
  %224 = vmatprep.mubr.f32.mxu0 0.0
  %225 = vmatmul.mubr.f32.gmra.mrb[0].mxu0 %v31
  %v226 = vpop.f32.mrb[0].mxu0
  %v227 = vadd.f32 0.0, %v226
  %v228 = vpop.f32.mrb[0].mxu0
  %229 = vmatprep.mubr.f32.mxu0 0.0
  %230 = vmatmul.mubr.f32.gmra.mrb[0].mxu0 %v32
  %v231 = vpop.f32.mrb[0].mxu0
  %v232 = vadd.f32 0.0, %v231
  %v233 = vpop.f32.mrb[0].mxu0
  %234 = vmatprep.mubr.f32.mxu0 0.0
  %235 = vmatmul.mubr.f32.gmra.mrb[0].mxu0 %v33
  %v236 = vpop.f32.mrb[0].mxu0
  %v237 = vadd.f32 0.0, %v236
  %v238 = vpop.f32.mrb[0].mxu0
  %239 = vmatprep.mubr.f32.mxu0 0.0
  %240 = vmatmul.mubr.f32.gmra.mrb[0].mxu0 %v34
  %v241 = vpop.f32.mrb[0].mxu0
  %v242 = vadd.f32 0.0, %v241
  %v243 = vpop.f32.mrb[0].mxu0
  %244 = vmatprep.mubr.f32.mxu0 0.0
  %245 = vmatmul.mubr.f32.gmra.mrb[0].mxu0 %v35
  %v246 = vpop.f32.mrb[0].mxu0
  %v247 = vadd.f32 0.0, %v246
  %v248 = vpop.f32.mrb[0].mxu0
  %249 = vmatprep.mubr.f32.mxu0 0.0
  %250 = vmatmul.mubr.f32.gmra.mrb[0].mxu0 %v36
  %v251 = vpop.f32.mrb[0].mxu0
  %v252 = vadd.f32 0.0, %v251
  %v253 = vpop.f32.mrb[0].mxu0
  %254 = vmatprep.mubr.f32.mxu0 0.0
  %255 = vmatmul.mubr.f32.gmra.mrb[0].mxu0 %v37
  %v256 = vpop.f32.mrb[0].mxu0
  %v257 = vadd.f32 0.0, %v256
  %v258 = vpop.f32.mrb[0].mxu0
  %259 = vmatprep.mubr.f32.mxu0 0.0
  %260 = vmatmul.mubr.f32.gmra.mrb[0].mxu0 %v38
  %v261 = vpop.f32.mrb[0].mxu0
  %v262 = vadd.f32 0.0, %v261
  %v263 = vpop.f32.mrb[0].mxu0
  %264 = vmatprep.mubr.f32.mxu0 0.0
  %265 = vmatmul.mubr.f32.gmra.mrb[0].mxu0 %v39
  %v266 = vpop.f32.mrb[0].mxu0
  %v267 = vadd.f32 0.0, %v266
  %v268 = vpop.f32.mrb[0].mxu0
  %269 = vmatprep.mubr.f32.mxu0 0.0
  %270 = vmatmul.mubr.f32.gmra.mrb[0].mxu0 %v40
  %v271 = vpop.f32.mrb[0].mxu0
  %v272 = vadd.f32 0.0, %v271
  %v273 = vpop.f32.mrb[0].mxu0
  %274 = vmatprep.mubr.f32.mxu0 0.0
  %275 = vmatmul.mubr.f32.gmra.mrb[0].mxu0 %v41
  %v276 = vpop.f32.mrb[0].mxu0
  %v277 = vadd.f32 0.0, %v276
  %v278 = vpop.f32.mrb[0].mxu0
  %279 = vmatprep.mubr.f32.mxu0 0.0
  %280 = vmatmul.mubr.f32.gmra.mrb[0].mxu0 %v42
  %v281 = vpop.f32.mrb[0].mxu0
  %v282 = vadd.f32 0.0, %v281
  %v283 = vpop.f32.mrb[0].mxu0
  %284 = vmatprep.mubr.f32.mxu0 0.0
  %285 = vmatmul.mubr.f32.gmra.mrb[0].mxu0 %v43
  %v286 = vpop.f32.mrb[0].mxu0
  %v287 = vadd.f32 0.0, %v286
  %v288 = vpop.f32.mrb[0].mxu0
  %289 = vmatprep.mubr.f32.mxu0 0.0
  %290 = vmatmul.mubr.f32.gmra.mrb[0].mxu0 %v44
  %v291 = vpop.f32.mrb[0].mxu0
  %v292 = vadd.f32 0.0, %v291
  %v293 = vpop.f32.mrb[0].mxu0
  %294 = vmatprep.mubr.f32.mxu0 0.0
  %295 = vmatmul.mubr.f32.gmra.mrb[0].mxu0 %v45
  %v296 = vpop.f32.mrb[0].mxu0
  %v297 = vadd.f32 0.0, %v296
  %v298 = vpop.f32.mrb[0].mxu0
  %299 = vmatprep.mubr.f32.mxu0 0.0
  %300 = vmatmul.mubr.f32.gmra.mrb[0].mxu0 %v46
  %v301 = vpop.f32.mrb[0].mxu0
  %v302 = vadd.f32 0.0, %v301
  %v303 = vpop.f32.mrb[0].mxu0
  %304 = vmatprep.mubr.f32.mxu0 0.0
  %305 = vmatmul.mubr.f32.gmra.mrb[0].mxu0 %v47
  %v306 = vpop.f32.mrb[0].mxu0
  %v307 = vadd.f32 0.0, %v306
  %v308 = vpop.f32.mrb[0].mxu0
  %309 = vmatprep.mubr.f32.mxu0 0.0
  %310 = vmatmul.mubr.f32.gmra.mrb[0].mxu0 %v48
  %v311 = vpop.f32.mrb[0].mxu0
  %v312 = vadd.f32 0.0, %v311
  %v313 = vpop.f32.mrb[0].mxu0
  %314 = vmatprep.mubr.f32.mxu0 0.0
  %315 = vmatmul.mubr.f32.gmra.mrb[0].mxu0 %v49
  %v316 = vpop.f32.mrb[0].mxu0
  %v317 = vadd.f32 0.0, %v316
  %v318 = vpop.f32.mrb[0].mxu0
  %319 = vmatprep.mubr.f32.mxu0 0.0
  %320 = vmatmul.mubr.f32.gmra.mrb[0].mxu0 %v50
  %v321 = vpop.f32.mrb[0].mxu0
  %v322 = vadd.f32 0.0, %v321
  %v323 = vpop.f32.mrb[0].mxu0
  %324 = vmatprep.mubr.f32.mxu0 0.0
  %325 = vmatmul.mubr.f32.gmra.mrb[0].mxu0 %v51
  %v326 = vpop.f32.mrb[0].mxu0
  %v327 = vadd.f32 0.0, %v326
  %v328 = vpop.f32.mrb[0].mxu0
  %329 = vmatprep.mubr.f32.mxu0 0.0
  %330 = vmatmul.mubr.f32.gmra.mrb[0].mxu0 %v52
  %v331 = vpop.f32.mrb[0].mxu0
  %v332 = vadd.f32 0.0, %v331
  %v333 = vpop.f32.mrb[0].mxu0
  %334 = vmatprep.mubr.f32.mxu0 0.0
  %335 = vmatmul.mubr.f32.gmra.mrb[0].mxu0 %v53
  %v336 = vpop.f32.mrb[0].mxu0
  %v337 = vadd.f32 0.0, %v336
  %v338 = vpop.f32.mrb[0].mxu0
  %339 = vmatprep.mubr.f32.mxu0 0.0
  %340 = vmatmul.mubr.f32.gmra.mrb[0].mxu0 %v54
  %v341 = vpop.f32.mrb[0].mxu0
  %v342 = vadd.f32 0.0, %v341
  %v343 = vpop.f32.mrb[0].mxu0
  %344 = vmatprep.mubr.f32.mxu0 0.0
  %345 = vmatmul.mubr.f32.gmra.mrb[0].mxu0 %v55
  %v346 = vpop.f32.mrb[0].mxu0
  %v347 = vadd.f32 0.0, %v346
  %v348 = vpop.f32.mrb[0].mxu0
  %349 = vmatprep.mubr.f32.mxu0 0.0
  %350 = vmatmul.mubr.f32.gmra.mrb[0].mxu0 %v56
  %v351 = vpop.f32.mrb[0].mxu0
  %v352 = vadd.f32 0.0, %v351
  %v353 = vpop.f32.mrb[0].mxu0
  %354 = vmatprep.mubr.f32.mxu0 0.0
  %355 = vmatmul.mubr.f32.gmra.mrb[0].mxu0 %v57
  %v356 = vpop.f32.mrb[0].mxu0
  %v357 = vadd.f32 0.0, %v356
  %v358 = vpop.f32.mrb[0].mxu0
  %359 = vmatprep.mubr.f32.mxu0 0.0
  %360 = vmatmul.mubr.f32.gmra.mrb[0].mxu0 %v58
  %v361 = vpop.f32.mrb[0].mxu0
  %v362 = vadd.f32 0.0, %v361
  %v363 = vpop.f32.mrb[0].mxu0
  %364 = vmatprep.mubr.f32.mxu0 0.0
  %365 = vmatmul.mubr.f32.gmra.mrb[0].mxu0 %v59
  %v366 = vpop.f32.mrb[0].mxu0
  %v367 = vadd.f32 0.0, %v366
  %v368 = vpop.f32.mrb[0].mxu0
  %369 = vmatprep.mubr.f32.mxu0 0.0
  %370 = vmatmul.mubr.f32.gmra.mrb[0].mxu0 %v60
  %v371 = vpop.f32.mrb[0].mxu0
  %v372 = vadd.f32 0.0, %v371
  %v373 = vpop.f32.mrb[0].mxu0
  %374 = vmatprep.mubr.f32.mxu0 0.0
  %375 = vmatmul.mubr.f32.gmra.mrb[0].mxu0 %v61
  %v376 = vpop.f32.mrb[0].mxu0
  %v377 = vadd.f32 0.0, %v376
  %v378 = vpop.f32.mrb[0].mxu0
  %379 = vmatprep.mubr.f32.mxu0 0.0
  %380 = vmatmul.mubr.f32.gmra.mrb[0].mxu0 %v62
  %v381 = vpop.f32.mrb[0].mxu0
  %v382 = vadd.f32 0.0, %v381
  %v383 = vpop.f32.mrb[0].mxu0
  %384 = vmatprep.mubr.f32.mxu0 0.0
  %385 = vmatmul.mubr.f32.gmra.mrb[0].mxu0 %v63
  %v386 = vpop.f32.mrb[0].mxu0
  %v387 = vadd.f32 0.0, %v386
  %v388 = vpop.f32.mrb[0].mxu0
  %389 = vmatprep.mubr.f32.mxu0 0.0
  %390 = vmatmul.mubr.f32.gmra.mrb[0].mxu0 %v64
  %v391 = vpop.f32.mrb[0].mxu0
  %v392 = vadd.f32 0.0, %v391
  %v393 = vpop.f32.mrb[0].mxu0
  %394 = vmatprep.mubr.f32.mxu0 0.0
  %395 = vmatmul.mubr.f32.gmra.mrb[0].mxu0 %v65
  %v396 = vpop.f32.mrb[0].mxu0
  %v397 = vadd.f32 0.0, %v396
  %v398 = vpop.f32.mrb[0].mxu0
  %399 = vmatprep.mubr.f32.mxu0 0.0
  %400 = vmatmul.mubr.f32.gmra.mrb[0].mxu0 %v66
  %v401 = vpop.f32.mrb[0].mxu0
  %v402 = vadd.f32 0.0, %v401
  %v403 = vpop.f32.mrb[0].mxu0
  %404 = vmatprep.mubr.f32.mxu0 0.0
  %405 = vmatmul.mubr.f32.gmra.mrb[0].mxu0 %v67
  %v406 = vpop.f32.mrb[0].mxu0
  %v407 = vadd.f32 0.0, %v406
  %v408 = vpop.f32.mrb[0].mxu0
  %409 = vmatprep.mubr.f32.mxu0 0.0
  %410 = vmatmul.mubr.f32.gmra.mrb[0].mxu0 %v68
  %v411 = vpop.f32.mrb[0].mxu0
  %v412 = vadd.f32 0.0, %v411
  %v413 = vpop.f32.mrb[0].mxu0
  %414 = vmatprep.mubr.f32.mxu0 0.0
  %415 = vmatmul.mubr.f32.gmra.mrb[0].mxu0 %v69
  %v416 = vpop.f32.mrb[0].mxu0
  %v417 = vadd.f32 0.0, %v416
  %v418 = vpop.f32.mrb[0].mxu0
  %419 = vmatprep.mubr.f32.mxu0 0.0
  %420 = vmatmul.mubr.f32.gmra.mrb[0].mxu0 %v70
  %v421 = vpop.f32.mrb[0].mxu0
  %v422 = vadd.f32 0.0, %v421
  %v423 = vpop.f32.mrb[0].mxu0
  %424 = vmatprep.mubr.f32.mxu0 0.0
  %425 = vmatmul.mubr.f32.gmra.mrb[0].mxu0 %v71
  %v426 = vpop.f32.mrb[0].mxu0
  %v427 = vadd.f32 0.0, %v426
  %v428 = vpop.f32.mrb[0].mxu0
  %429 = vmatprep.mubr.f32.mxu0 0.0
  %430 = vmatmul.mubr.f32.gmra.mrb[0].mxu0 %v72
  %v431 = vpop.f32.mrb[0].mxu0
  %v432 = vadd.f32 0.0, %v431
  %v433 = vpop.f32.mrb[0].mxu0
  %434 = vmatprep.mubr.f32.mxu0 0.0
  %435 = vmatmul.mubr.f32.gmra.mrb[0].mxu0 %v73
  %v436 = vpop.f32.mrb[0].mxu0
  %v437 = vadd.f32 0.0, %v436
  %v438 = vpop.f32.mrb[0].mxu0
  %439 = vdwg.mxu0
  %vm440 = vcmask 130048
  %v441 = vsel %vm440, %v157, 0.0
  %v442 = vsel %vm440, %v162, 0.0
  %v443 = vadd.f32 %v441, %v442
  %v444 = vsel %vm440, %v167, 0.0
  %v445 = vadd.f32 %v443, %v444
  %v446 = vsel %vm440, %v172, 0.0
  %v447 = vadd.f32 %v445, %v446
  %v448 = vsel %vm440, %v177, 0.0
  %v449 = vadd.f32 %v447, %v448
  %v450 = vsel %vm440, %v182, 0.0
  %v451 = vadd.f32 %v449, %v450
  %v452 = vsel %vm440, %v187, 0.0
  %v453 = vadd.f32 %v451, %v452
  %v454 = vsel %vm440, %v192, 0.0
  %v455 = vadd.f32 %v453, %v454
  %v456 = vsel %vm440, %v197, 0.0
  %v457 = vadd.f32 %v455, %v456
  %v458 = vsel %vm440, %v202, 0.0
  %v459 = vadd.f32 %v457, %v458
  %v460 = vsel %vm440, %v207, 0.0
  %v461 = vadd.f32 %v459, %v460
  %v462 = vsel %vm440, %v212, 0.0
  %v463 = vadd.f32 %v461, %v462
  %v464 = vsel %vm440, %v217, 0.0
  %v465 = vadd.f32 %v463, %v464
  %v466 = vsel %vm440, %v222, 0.0
  %v467 = vadd.f32 %v465, %v466
  %v468 = vsel %vm440, %v227, 0.0
  %v469 = vadd.f32 %v467, %v468
  %v470 = vsel %vm440, %v232, 0.0
  %v471 = vadd.f32 %v469, %v470
  %v472 = vsel %vm440, %v237, 0.0
  %v473 = vadd.f32 %v471, %v472
  %v474 = vsel %vm440, %v242, 0.0
  %v475 = vadd.f32 %v473, %v474
  %v476 = vsel %vm440, %v247, 0.0
  %v477 = vadd.f32 %v475, %v476
  %v478 = vsel %vm440, %v252, 0.0
  %v479 = vadd.f32 %v477, %v478
  %v480 = vsel %vm440, %v257, 0.0
  %v481 = vadd.f32 %v479, %v480
  %v482 = vsel %vm440, %v262, 0.0
  %v483 = vadd.f32 %v481, %v482
  %v484 = vsel %vm440, %v267, 0.0
  %v485 = vadd.f32 %v483, %v484
  %v486 = vsel %vm440, %v272, 0.0
  %v487 = vadd.f32 %v485, %v486
  %v488 = vsel %vm440, %v277, 0.0
  %v489 = vadd.f32 %v487, %v488
  %v490 = vsel %vm440, %v282, 0.0
  %v491 = vadd.f32 %v489, %v490
  %v492 = vsel %vm440, %v287, 0.0
  %v493 = vadd.f32 %v491, %v492
  %v494 = vsel %vm440, %v292, 0.0
  %v495 = vadd.f32 %v493, %v494
  %v496 = vsel %vm440, %v297, 0.0
  %v497 = vadd.f32 %v495, %v496
  %v498 = vsel %vm440, %v302, 0.0
  %v499 = vadd.f32 %v497, %v498
  %v500 = vsel %vm440, %v307, 0.0
  %v501 = vadd.f32 %v499, %v500
  %v502 = vsel %vm440, %v312, 0.0
  %v503 = vadd.f32 %v501, %v502
  %v504 = vsel %vm440, %v317, 0.0
  %v505 = vadd.f32 %v503, %v504
  %v506 = vsel %vm440, %v322, 0.0
  %v507 = vadd.f32 %v505, %v506
  %v508 = vsel %vm440, %v327, 0.0
  %v509 = vadd.f32 %v507, %v508
  %v510 = vsel %vm440, %v332, 0.0
  %v511 = vadd.f32 %v509, %v510
  %v512 = vsel %vm440, %v337, 0.0
  %v513 = vadd.f32 %v511, %v512
  %v514 = vsel %vm440, %v342, 0.0
  %v515 = vadd.f32 %v513, %v514
  %v516 = vsel %vm440, %v347, 0.0
  %v517 = vadd.f32 %v515, %v516
  %v518 = vsel %vm440, %v352, 0.0
  %v519 = vadd.f32 %v517, %v518
  %v520 = vsel %vm440, %v357, 0.0
  %v521 = vadd.f32 %v519, %v520
  %v522 = vsel %vm440, %v362, 0.0
  %v523 = vadd.f32 %v521, %v522
  %v524 = vsel %vm440, %v367, 0.0
  %v525 = vadd.f32 %v523, %v524
  %v526 = vsel %vm440, %v372, 0.0
  %v527 = vadd.f32 %v525, %v526
  %v528 = vsel %vm440, %v377, 0.0
  %v529 = vadd.f32 %v527, %v528
  %v530 = vsel %vm440, %v382, 0.0
  %v531 = vadd.f32 %v529, %v530
  %v532 = vsel %vm440, %v387, 0.0
  %v533 = vadd.f32 %v531, %v532
  %v534 = vsel %vm440, %v392, 0.0
  %v535 = vadd.f32 %v533, %v534
  %v536 = vsel %vm440, %v397, 0.0
  %v537 = vadd.f32 %v535, %v536
  %v538 = vsel %vm440, %v402, 0.0
  %v539 = vadd.f32 %v537, %v538
  %v540 = vsel %vm440, %v407, 0.0
  %v541 = vadd.f32 %v539, %v540
  %v542 = vsel %vm440, %v412, 0.0
  %v543 = vadd.f32 %v541, %v542
  %v544 = vsel %vm440, %v417, 0.0
  %v545 = vadd.f32 %v543, %v544
  %v546 = vsel %vm440, %v422, 0.0
  %v547 = vadd.f32 %v545, %v546
  %v548 = vsel %vm440, %v427, 0.0
  %v549 = vadd.f32 %v547, %v548
  %v550 = vsel %vm440, %v432, 0.0
  %v551 = vadd.f32 %v549, %v550
  %vm552 = vcmask 123904
  %v553 = vsel %vm552, %v437, 0.0
  %v554 = vadd.f32 %v551, %v553
  %v555 = vrot.slane %v554, 4
  %v556 = vadd.f32 %v554, %v555
  %v557 = vrot.slane %v556, 2
  %v558 = vadd.f32 %v556, %v557
  %v559 = vrot.slane %v558, 1
  %v560 = vadd.f32 %v558, %v559
  %v561 = vrcp.pop 450.0
  %v562 = vmul.f32 %v560, %v561
  %v563 = vsub.f32 %v157, %v562
  %v564 = vsub.f32 %v162, %v562
  %v565 = vsub.f32 %v167, %v562
  %v566 = vsub.f32 %v172, %v562
  %v567 = vsub.f32 %v177, %v562
  %v568 = vsub.f32 %v182, %v562
  %v569 = vsub.f32 %v187, %v562
  %v570 = vsub.f32 %v192, %v562
  %v571 = vsub.f32 %v197, %v562
  %v572 = vsub.f32 %v202, %v562
  %v573 = vsub.f32 %v207, %v562
  %v574 = vsub.f32 %v212, %v562
  %v575 = vsub.f32 %v217, %v562
  %v576 = vsub.f32 %v222, %v562
  %v577 = vsub.f32 %v227, %v562
  %v578 = vsub.f32 %v232, %v562
  %v579 = vsub.f32 %v237, %v562
  %v580 = vsub.f32 %v242, %v562
  %v581 = vsub.f32 %v247, %v562
  %v582 = vsub.f32 %v252, %v562
  %v583 = vsub.f32 %v257, %v562
  %v584 = vsub.f32 %v262, %v562
  %v585 = vsub.f32 %v267, %v562
  %v586 = vsub.f32 %v272, %v562
  %v587 = vsub.f32 %v277, %v562
  %v588 = vsub.f32 %v282, %v562
  %v589 = vsub.f32 %v287, %v562
  %v590 = vsub.f32 %v292, %v562
  %v591 = vsub.f32 %v297, %v562
  %v592 = vsub.f32 %v302, %v562
  %v593 = vsub.f32 %v307, %v562
  %v594 = vsub.f32 %v312, %v562
  %v595 = vsub.f32 %v317, %v562
  %v596 = vsub.f32 %v322, %v562
  %v597 = vsub.f32 %v327, %v562
  %v598 = vsub.f32 %v332, %v562
  %v599 = vsub.f32 %v337, %v562
  %v600 = vsub.f32 %v342, %v562
  %v601 = vsub.f32 %v347, %v562
  %v602 = vsub.f32 %v352, %v562
  %v603 = vsub.f32 %v357, %v562
  %v604 = vsub.f32 %v362, %v562
  %v605 = vsub.f32 %v367, %v562
  %v606 = vsub.f32 %v372, %v562
  %v607 = vsub.f32 %v377, %v562
  %v608 = vsub.f32 %v382, %v562
  %v609 = vsub.f32 %v387, %v562
  %v610 = vsub.f32 %v392, %v562
  %v611 = vsub.f32 %v397, %v562
  %v612 = vsub.f32 %v402, %v562
  %v613 = vsub.f32 %v407, %v562
  %v614 = vsub.f32 %v412, %v562
  %v615 = vsub.f32 %v417, %v562
  %v616 = vsub.f32 %v422, %v562
  %v617 = vsub.f32 %v427, %v562
  %v618 = vsub.f32 %v432, %v562
  %v619 = vsub.f32 %v437, %v562
  %v620 = vmul.f32 %v563, %v563
  %v621 = vmul.f32 %v564, %v564
  %v622 = vmul.f32 %v565, %v565
  %v623 = vmul.f32 %v566, %v566
  %v624 = vmul.f32 %v567, %v567
  %v625 = vmul.f32 %v568, %v568
  %v626 = vmul.f32 %v569, %v569
  %v627 = vmul.f32 %v570, %v570
  %v628 = vmul.f32 %v571, %v571
  %v629 = vmul.f32 %v572, %v572
  %v630 = vmul.f32 %v573, %v573
  %v631 = vmul.f32 %v574, %v574
  %v632 = vmul.f32 %v575, %v575
  %v633 = vmul.f32 %v576, %v576
  %v634 = vmul.f32 %v577, %v577
  %v635 = vmul.f32 %v578, %v578
  %v636 = vmul.f32 %v579, %v579
  %v637 = vmul.f32 %v580, %v580
  %v638 = vmul.f32 %v581, %v581
  %v639 = vmul.f32 %v582, %v582
  %v640 = vmul.f32 %v583, %v583
  %v641 = vmul.f32 %v584, %v584
  %v642 = vmul.f32 %v585, %v585
  %v643 = vmul.f32 %v586, %v586
  %v644 = vmul.f32 %v587, %v587
  %v645 = vmul.f32 %v588, %v588
  %v646 = vmul.f32 %v589, %v589
  %v647 = vmul.f32 %v590, %v590
  %v648 = vmul.f32 %v591, %v591
  %v649 = vmul.f32 %v592, %v592
  %v650 = vmul.f32 %v593, %v593
  %v651 = vmul.f32 %v594, %v594
  %v652 = vmul.f32 %v595, %v595
  %v653 = vmul.f32 %v596, %v596
  %v654 = vmul.f32 %v597, %v597
  %v655 = vmul.f32 %v598, %v598
  %v656 = vmul.f32 %v599, %v599
  %v657 = vmul.f32 %v600, %v600
  %v658 = vmul.f32 %v601, %v601
  %v659 = vmul.f32 %v602, %v602
  %v660 = vmul.f32 %v603, %v603
  %v661 = vmul.f32 %v604, %v604
  %v662 = vmul.f32 %v605, %v605
  %v663 = vmul.f32 %v606, %v606
  %v664 = vmul.f32 %v607, %v607
  %v665 = vmul.f32 %v608, %v608
  %v666 = vmul.f32 %v609, %v609
  %v667 = vmul.f32 %v610, %v610
  %v668 = vmul.f32 %v611, %v611
  %v669 = vmul.f32 %v612, %v612
  %v670 = vmul.f32 %v613, %v613
  %v671 = vmul.f32 %v614, %v614
  %v672 = vmul.f32 %v615, %v615
  %v673 = vmul.f32 %v616, %v616
  %v674 = vmul.f32 %v617, %v617
  %v675 = vmul.f32 %v618, %v618
  %v676 = vmul.f32 %v619, %v619
  %v677 = vsel %vm440, %v620, 0.0
  %v678 = vsel %vm440, %v621, 0.0
  %v679 = vadd.f32 %v677, %v678
  %v680 = vsel %vm440, %v622, 0.0
  %v681 = vadd.f32 %v679, %v680
  %v682 = vsel %vm440, %v623, 0.0
  %v683 = vadd.f32 %v681, %v682
  %v684 = vsel %vm440, %v624, 0.0
  %v685 = vadd.f32 %v683, %v684
  %v686 = vsel %vm440, %v625, 0.0
  %v687 = vadd.f32 %v685, %v686
  %v688 = vsel %vm440, %v626, 0.0
  %v689 = vadd.f32 %v687, %v688
  %v690 = vsel %vm440, %v627, 0.0
  %v691 = vadd.f32 %v689, %v690
  %v692 = vsel %vm440, %v628, 0.0
  %v693 = vadd.f32 %v691, %v692
  %v694 = vsel %vm440, %v629, 0.0
  %v695 = vadd.f32 %v693, %v694
  %v696 = vsel %vm440, %v630, 0.0
  %v697 = vadd.f32 %v695, %v696
  %v698 = vsel %vm440, %v631, 0.0
  %v699 = vadd.f32 %v697, %v698
  %v700 = vsel %vm440, %v632, 0.0
  %v701 = vadd.f32 %v699, %v700
  %v702 = vsel %vm440, %v633, 0.0
  %v703 = vadd.f32 %v701, %v702
  %v704 = vsel %vm440, %v634, 0.0
  %v705 = vadd.f32 %v703, %v704
  %v706 = vsel %vm440, %v635, 0.0
  %v707 = vadd.f32 %v705, %v706
  %v708 = vsel %vm440, %v636, 0.0
  %v709 = vadd.f32 %v707, %v708
  %v710 = vsel %vm440, %v637, 0.0
  %v711 = vadd.f32 %v709, %v710
  %v712 = vsel %vm440, %v638, 0.0
  %v713 = vadd.f32 %v711, %v712
  %v714 = vsel %vm440, %v639, 0.0
  %v715 = vadd.f32 %v713, %v714
  %v716 = vsel %vm440, %v640, 0.0
  %v717 = vadd.f32 %v715, %v716
  %v718 = vsel %vm440, %v641, 0.0
  %v719 = vadd.f32 %v717, %v718
  %v720 = vsel %vm440, %v642, 0.0
  %v721 = vadd.f32 %v719, %v720
  %v722 = vsel %vm440, %v643, 0.0
  %v723 = vadd.f32 %v721, %v722
  %v724 = vsel %vm440, %v644, 0.0
  %v725 = vadd.f32 %v723, %v724
  %v726 = vsel %vm440, %v645, 0.0
  %v727 = vadd.f32 %v725, %v726
  %v728 = vsel %vm440, %v646, 0.0
  %v729 = vadd.f32 %v727, %v728
  %v730 = vsel %vm440, %v647, 0.0
  %v731 = vadd.f32 %v729, %v730
  %v732 = vsel %vm440, %v648, 0.0
  %v733 = vadd.f32 %v731, %v732
  %v734 = vsel %vm440, %v649, 0.0
  %v735 = vadd.f32 %v733, %v734
  %v736 = vsel %vm440, %v650, 0.0
  %v737 = vadd.f32 %v735, %v736
  %v738 = vsel %vm440, %v651, 0.0
  %v739 = vadd.f32 %v737, %v738
  %v740 = vsel %vm440, %v652, 0.0
  %v741 = vadd.f32 %v739, %v740
  %v742 = vsel %vm440, %v653, 0.0
  %v743 = vadd.f32 %v741, %v742
  %v744 = vsel %vm440, %v654, 0.0
  %v745 = vadd.f32 %v743, %v744
  %v746 = vsel %vm440, %v655, 0.0
  %v747 = vadd.f32 %v745, %v746
  %v748 = vsel %vm440, %v656, 0.0
  %v749 = vadd.f32 %v747, %v748
  %v750 = vsel %vm440, %v657, 0.0
  %v751 = vadd.f32 %v749, %v750
  %v752 = vsel %vm440, %v658, 0.0
  %v753 = vadd.f32 %v751, %v752
  %v754 = vsel %vm440, %v659, 0.0
  %v755 = vadd.f32 %v753, %v754
  %v756 = vsel %vm440, %v660, 0.0
  %v757 = vadd.f32 %v755, %v756
  %v758 = vsel %vm440, %v661, 0.0
  %v759 = vadd.f32 %v757, %v758
  %v760 = vsel %vm440, %v662, 0.0
  %v761 = vadd.f32 %v759, %v760
  %v762 = vsel %vm440, %v663, 0.0
  %v763 = vadd.f32 %v761, %v762
  %v764 = vsel %vm440, %v664, 0.0
  %v765 = vadd.f32 %v763, %v764
  %v766 = vsel %vm440, %v665, 0.0
  %v767 = vadd.f32 %v765, %v766
  %v768 = vsel %vm440, %v666, 0.0
  %v769 = vadd.f32 %v767, %v768
  %v770 = vsel %vm440, %v667, 0.0
  %v771 = vadd.f32 %v769, %v770
  %v772 = vsel %vm440, %v668, 0.0
  %v773 = vadd.f32 %v771, %v772
  %v774 = vsel %vm440, %v669, 0.0
  %v775 = vadd.f32 %v773, %v774
  %v776 = vsel %vm440, %v670, 0.0
  %v777 = vadd.f32 %v775, %v776
  %v778 = vsel %vm440, %v671, 0.0
  %v779 = vadd.f32 %v777, %v778
  %v780 = vsel %vm440, %v672, 0.0
  %v781 = vadd.f32 %v779, %v780
  %v782 = vsel %vm440, %v673, 0.0
  %v783 = vadd.f32 %v781, %v782
  %v784 = vsel %vm440, %v674, 0.0
  %v785 = vadd.f32 %v783, %v784
  %v786 = vsel %vm440, %v675, 0.0
  %v787 = vadd.f32 %v785, %v786
  %v788 = vsel %vm552, %v676, 0.0
  %v789 = vadd.f32 %v787, %v788
  %v790 = vrot.slane %v789, 4
  %v791 = vadd.f32 %v789, %v790
  %v792 = vrot.slane %v791, 2
  %v793 = vadd.f32 %v791, %v792
  %v794 = vrot.slane %v793, 1
  %v795 = vadd.f32 %v793, %v794
  %v796 = vmul.f32 %v795, %v561
  %v797 = vadd.f32 %v796, 1e-05
  %v798 = vrsqrt.pop %v797
  %v799 = vmul.f32 %v563, %v798
  %v800 = vmul.f32 %v564, %v798
  %v801 = vmul.f32 %v565, %v798
  %v802 = vmul.f32 %v566, %v798
  %v803 = vmul.f32 %v567, %v798
  %v804 = vmul.f32 %v568, %v798
  %v805 = vmul.f32 %v569, %v798
  %v806 = vmul.f32 %v570, %v798
  %v807 = vmul.f32 %v571, %v798
  %v808 = vmul.f32 %v572, %v798
  %v809 = vmul.f32 %v573, %v798
  %v810 = vmul.f32 %v574, %v798
  %v811 = vmul.f32 %v575, %v798
  %v812 = vmul.f32 %v576, %v798
  %v813 = vmul.f32 %v577, %v798
  %v814 = vmul.f32 %v578, %v798
  %v815 = vmul.f32 %v579, %v798
  %v816 = vmul.f32 %v580, %v798
  %v817 = vmul.f32 %v581, %v798
  %v818 = vmul.f32 %v582, %v798
  %v819 = vmul.f32 %v583, %v798
  %v820 = vmul.f32 %v584, %v798
  %v821 = vmul.f32 %v585, %v798
  %v822 = vmul.f32 %v586, %v798
  %v823 = vmul.f32 %v587, %v798
  %v824 = vmul.f32 %v588, %v798
  %v825 = vmul.f32 %v589, %v798
  %v826 = vmul.f32 %v590, %v798
  %v827 = vmul.f32 %v591, %v798
  %v828 = vmul.f32 %v592, %v798
  %v829 = vmul.f32 %v593, %v798
  %v830 = vmul.f32 %v594, %v798
  %v831 = vmul.f32 %v595, %v798
  %v832 = vmul.f32 %v596, %v798
  %v833 = vmul.f32 %v597, %v798
  %v834 = vmul.f32 %v598, %v798
  %v835 = vmul.f32 %v599, %v798
  %v836 = vmul.f32 %v600, %v798
  %v837 = vmul.f32 %v601, %v798
  %v838 = vmul.f32 %v602, %v798
  %v839 = vmul.f32 %v603, %v798
  %v840 = vmul.f32 %v604, %v798
  %v841 = vmul.f32 %v605, %v798
  %v842 = vmul.f32 %v606, %v798
  %v843 = vmul.f32 %v607, %v798
  %v844 = vmul.f32 %v608, %v798
  %v845 = vmul.f32 %v609, %v798
  %v846 = vmul.f32 %v610, %v798
  %v847 = vmul.f32 %v611, %v798
  %v848 = vmul.f32 %v612, %v798
  %v849 = vmul.f32 %v613, %v798
  %v850 = vmul.f32 %v614, %v798
  %v851 = vmul.f32 %v615, %v798
  %v852 = vmul.f32 %v616, %v798
  %v853 = vmul.f32 %v617, %v798
  %v854 = vmul.f32 %v618, %v798
  %v855 = vmul.f32 %v619, %v798
  %v856 = vld [vmem:[%s2] sm:$0x1]
  %v858 = vlaneseq
  %v859 = vshrl.u32 %v858, 7
  %v860 = vsub.s32 0, %v859
  %v861 = vrot.slane %v856, %v860
  %v863 = vmul.f32 %v799, %v861
  %v864 = vmul.f32 %v800, %v861
  %v865 = vmul.f32 %v801, %v861
  %v866 = vmul.f32 %v802, %v861
  %v867 = vmul.f32 %v803, %v861
  %v868 = vmul.f32 %v804, %v861
  %v869 = vmul.f32 %v805, %v861
  %v870 = vmul.f32 %v806, %v861
  %v871 = vmul.f32 %v807, %v861
  %v872 = vmul.f32 %v808, %v861
  %v873 = vmul.f32 %v809, %v861
  %v874 = vmul.f32 %v810, %v861
  %v875 = vmul.f32 %v811, %v861
  %v876 = vmul.f32 %v812, %v861
  %v877 = vmul.f32 %v813, %v861
  %v878 = vmul.f32 %v814, %v861
  %v879 = vmul.f32 %v815, %v861
  %v880 = vmul.f32 %v816, %v861
  %v881 = vmul.f32 %v817, %v861
  %v882 = vmul.f32 %v818, %v861
  %v883 = vmul.f32 %v819, %v861
  %v884 = vmul.f32 %v820, %v861
  %v885 = vmul.f32 %v821, %v861
  %v886 = vmul.f32 %v822, %v861
  %v887 = vmul.f32 %v823, %v861
  %v888 = vmul.f32 %v824, %v861
  %v889 = vmul.f32 %v825, %v861
  %v890 = vmul.f32 %v826, %v861
  %v891 = vmul.f32 %v827, %v861
  %v892 = vmul.f32 %v828, %v861
  %v893 = vmul.f32 %v829, %v861
  %v894 = vmul.f32 %v830, %v861
  %v895 = vmul.f32 %v831, %v861
  %v896 = vmul.f32 %v832, %v861
  %v897 = vmul.f32 %v833, %v861
  %v898 = vmul.f32 %v834, %v861
  %v899 = vmul.f32 %v835, %v861
  %v900 = vmul.f32 %v836, %v861
  %v901 = vmul.f32 %v837, %v861
  %v902 = vmul.f32 %v838, %v861
  %v903 = vmul.f32 %v839, %v861
  %v904 = vmul.f32 %v840, %v861
  %v905 = vmul.f32 %v841, %v861
  %v906 = vmul.f32 %v842, %v861
  %v907 = vmul.f32 %v843, %v861
  %v908 = vmul.f32 %v844, %v861
  %v909 = vmul.f32 %v845, %v861
  %v910 = vmul.f32 %v846, %v861
  %v911 = vmul.f32 %v847, %v861
  %v912 = vmul.f32 %v848, %v861
  %v913 = vmul.f32 %v849, %v861
  %v914 = vmul.f32 %v850, %v861
  %v915 = vmul.f32 %v851, %v861
  %v916 = vmul.f32 %v852, %v861
  %v917 = vmul.f32 %v853, %v861
  %v918 = vmul.f32 %v854, %v861
  %v919 = vmul.f32 %v855, %v861
  %v920 = vld [vmem:[%s3] sm:$0x1]
  %v922 = vlaneseq
  %v923 = vshrl.u32 %v922, 7
  %v924 = vsub.s32 0, %v923
  %v925 = vrot.slane %v920, %v924
  %v927 = vadd.f32 %v863, %v925
  %v928 = vadd.f32 %v864, %v925
  %v929 = vadd.f32 %v865, %v925
  %v930 = vadd.f32 %v866, %v925
  %v931 = vadd.f32 %v867, %v925
  %v932 = vadd.f32 %v868, %v925
  %v933 = vadd.f32 %v869, %v925
  %v934 = vadd.f32 %v870, %v925
  %v935 = vadd.f32 %v871, %v925
  %v936 = vadd.f32 %v872, %v925
  %v937 = vadd.f32 %v873, %v925
  %v938 = vadd.f32 %v874, %v925
  %v939 = vadd.f32 %v875, %v925
  %v940 = vadd.f32 %v876, %v925
  %v941 = vadd.f32 %v877, %v925
  %v942 = vadd.f32 %v878, %v925
  %v943 = vadd.f32 %v879, %v925
  %v944 = vadd.f32 %v880, %v925
  %v945 = vadd.f32 %v881, %v925
  %v946 = vadd.f32 %v882, %v925
  %v947 = vadd.f32 %v883, %v925
  %v948 = vadd.f32 %v884, %v925
  %v949 = vadd.f32 %v885, %v925
  %v950 = vadd.f32 %v886, %v925
  %v951 = vadd.f32 %v887, %v925
  %v952 = vadd.f32 %v888, %v925
  %v953 = vadd.f32 %v889, %v925
  %v954 = vadd.f32 %v890, %v925
  %v955 = vadd.f32 %v891, %v925
  %v956 = vadd.f32 %v892, %v925
  %v957 = vadd.f32 %v893, %v925
  %v958 = vadd.f32 %v894, %v925
  %v959 = vadd.f32 %v895, %v925
  %v960 = vadd.f32 %v896, %v925
  %v961 = vadd.f32 %v897, %v925
  %v962 = vadd.f32 %v898, %v925
  %v963 = vadd.f32 %v899, %v925
  %v964 = vadd.f32 %v900, %v925
  %v965 = vadd.f32 %v901, %v925
  %v966 = vadd.f32 %v902, %v925
  %v967 = vadd.f32 %v903, %v925
  %v968 = vadd.f32 %v904, %v925
  %v969 = vadd.f32 %v905, %v925
  %v970 = vadd.f32 %v906, %v925
  %v971 = vadd.f32 %v907, %v925
  %v972 = vadd.f32 %v908, %v925
  %v973 = vadd.f32 %v909, %v925
  %v974 = vadd.f32 %v910, %v925
  %v975 = vadd.f32 %v911, %v925
  %v976 = vadd.f32 %v912, %v925
  %v977 = vadd.f32 %v913, %v925
  %v978 = vadd.f32 %v914, %v925
  %v979 = vadd.f32 %v915, %v925
  %v980 = vadd.f32 %v916, %v925
  %v981 = vadd.f32 %v917, %v925
  %v982 = vadd.f32 %v918, %v925
  %v983 = vadd.f32 %v919, %v925
  %v984 = vmax.f32 %v927, 0.0
  %v985 = vmax.f32 %v928, 0.0
  %v986 = vmax.f32 %v929, 0.0
  %v987 = vmax.f32 %v930, 0.0
  %v988 = vmax.f32 %v931, 0.0
  %v989 = vmax.f32 %v932, 0.0
  %v990 = vmax.f32 %v933, 0.0
  %v991 = vmax.f32 %v934, 0.0
  %v992 = vmax.f32 %v935, 0.0
  %v993 = vmax.f32 %v936, 0.0
  %v994 = vmax.f32 %v937, 0.0
  %v995 = vmax.f32 %v938, 0.0
  %v996 = vmax.f32 %v939, 0.0
  %v997 = vmax.f32 %v940, 0.0
  %v998 = vmax.f32 %v941, 0.0
  %v999 = vmax.f32 %v942, 0.0
  %v1000 = vmax.f32 %v943, 0.0
  %v1001 = vmax.f32 %v944, 0.0
  %v1002 = vmax.f32 %v945, 0.0
  %v1003 = vmax.f32 %v946, 0.0
  %v1004 = vmax.f32 %v947, 0.0
  %v1005 = vmax.f32 %v948, 0.0
  %v1006 = vmax.f32 %v949, 0.0
  %v1007 = vmax.f32 %v950, 0.0
  %v1008 = vmax.f32 %v951, 0.0
  %v1009 = vmax.f32 %v952, 0.0
  %v1010 = vmax.f32 %v953, 0.0
  %v1011 = vmax.f32 %v954, 0.0
  %v1012 = vmax.f32 %v955, 0.0
  %v1013 = vmax.f32 %v956, 0.0
  %v1014 = vmax.f32 %v957, 0.0
  %v1015 = vmax.f32 %v958, 0.0
  %v1016 = vmax.f32 %v959, 0.0
  %v1017 = vmax.f32 %v960, 0.0
  %v1018 = vmax.f32 %v961, 0.0
  %v1019 = vmax.f32 %v962, 0.0
  %v1020 = vmax.f32 %v963, 0.0
  %v1021 = vmax.f32 %v964, 0.0
  %v1022 = vmax.f32 %v965, 0.0
  %v1023 = vmax.f32 %v966, 0.0
  %v1024 = vmax.f32 %v967, 0.0
  %v1025 = vmax.f32 %v968, 0.0
  %v1026 = vmax.f32 %v969, 0.0
  %v1027 = vmax.f32 %v970, 0.0
  %v1028 = vmax.f32 %v971, 0.0
  %v1029 = vmax.f32 %v972, 0.0
  %v1030 = vmax.f32 %v973, 0.0
  %v1031 = vmax.f32 %v974, 0.0
  %v1032 = vmax.f32 %v975, 0.0
  %v1033 = vmax.f32 %v976, 0.0
  %v1034 = vmax.f32 %v977, 0.0
  %v1035 = vmax.f32 %v978, 0.0
  %v1036 = vmax.f32 %v979, 0.0
  %v1037 = vmax.f32 %v980, 0.0
  %v1038 = vmax.f32 %v981, 0.0
  %v1039 = vmax.f32 %v982, 0.0
  %v1040 = vmax.f32 %v983, 0.0
  %1041 = vst.msk [vmem:[%s4] sm:$0xff] %vm440, %v984
  %1042 = vst.msk [vmem:[%s4 + $0x8] sm:$0xff] %vm440, %v985
  %1043 = vst.msk [vmem:[%s4 + $0x10] sm:$0xff] %vm440, %v986
  %1044 = vst.msk [vmem:[%s4 + $0x18] sm:$0xff] %vm440, %v987
  %1045 = vst.msk [vmem:[%s4 + $0x20] sm:$0xff] %vm440, %v988
  %1046 = vst.msk [vmem:[%s4 + $0x28] sm:$0xff] %vm440, %v989
  %1047 = vst.msk [vmem:[%s4 + $0x30] sm:$0xff] %vm440, %v990
  %1048 = vst.msk [vmem:[%s4 + $0x38] sm:$0xff] %vm440, %v991
  %1049 = vst.msk [vmem:[%s4 + $0x40] sm:$0xff] %vm440, %v992
  %1050 = vst.msk [vmem:[%s4 + $0x48] sm:$0xff] %vm440, %v993
  %1051 = vst.msk [vmem:[%s4 + $0x50] sm:$0xff] %vm440, %v994
  %1052 = vst.msk [vmem:[%s4 + $0x58] sm:$0xff] %vm440, %v995
  %1053 = vst.msk [vmem:[%s4 + $0x60] sm:$0xff] %vm440, %v996
  %1054 = vst.msk [vmem:[%s4 + $0x68] sm:$0xff] %vm440, %v997
  %1055 = vst.msk [vmem:[%s4 + $0x70] sm:$0xff] %vm440, %v998
  %1056 = vst.msk [vmem:[%s4 + $0x78] sm:$0xff] %vm440, %v999
  %1057 = vst.msk [vmem:[%s4 + $0x80] sm:$0xff] %vm440, %v1000
  %1058 = vst.msk [vmem:[%s4 + $0x88] sm:$0xff] %vm440, %v1001
  %1059 = vst.msk [vmem:[%s4 + $0x90] sm:$0xff] %vm440, %v1002
  %1060 = vst.msk [vmem:[%s4 + $0x98] sm:$0xff] %vm440, %v1003
  %1061 = vst.msk [vmem:[%s4 + $0xa0] sm:$0xff] %vm440, %v1004
  %1062 = vst.msk [vmem:[%s4 + $0xa8] sm:$0xff] %vm440, %v1005
  %1063 = vst.msk [vmem:[%s4 + $0xb0] sm:$0xff] %vm440, %v1006
  %1064 = vst.msk [vmem:[%s4 + $0xb8] sm:$0xff] %vm440, %v1007
  %1065 = vst.msk [vmem:[%s4 + $0xc0] sm:$0xff] %vm440, %v1008
  %1066 = vst.msk [vmem:[%s4 + $0xc8] sm:$0xff] %vm440, %v1009
  %1067 = vst.msk [vmem:[%s4 + $0xd0] sm:$0xff] %vm440, %v1010
  %1068 = vst.msk [vmem:[%s4 + $0xd8] sm:$0xff] %vm440, %v1011
  %1069 = vst.msk [vmem:[%s4 + $0xe0] sm:$0xff] %vm440, %v1012
  %1070 = vst.msk [vmem:[%s4 + $0xe8] sm:$0xff] %vm440, %v1013
  %1071 = vst.msk [vmem:[%s4 + $0xf0] sm:$0xff] %vm440, %v1014
  %1072 = vst.msk [vmem:[%s4 + $0xf8] sm:$0xff] %vm440, %v1015
  %1073 = vst.msk [vmem:[%s4 + $0x100] sm:$0xff] %vm440, %v1016
  %1074 = vst.msk [vmem:[%s4 + $0x108] sm:$0xff] %vm440, %v1017
  %1075 = vst.msk [vmem:[%s4 + $0x110] sm:$0xff] %vm440, %v1018
  %1076 = vst.msk [vmem:[%s4 + $0x118] sm:$0xff] %vm440, %v1019
  %1077 = vst.msk [vmem:[%s4 + $0x120] sm:$0xff] %vm440, %v1020
  %1078 = vst.msk [vmem:[%s4 + $0x128] sm:$0xff] %vm440, %v1021
  %1079 = vst.msk [vmem:[%s4 + $0x130] sm:$0xff] %vm440, %v1022
  %1080 = vst.msk [vmem:[%s4 + $0x138] sm:$0xff] %vm440, %v1023
  %1081 = vst.msk [vmem:[%s4 + $0x140] sm:$0xff] %vm440, %v1024
  %1082 = vst.msk [vmem:[%s4 + $0x148] sm:$0xff] %vm440, %v1025
  %1083 = vst.msk [vmem:[%s4 + $0x150] sm:$0xff] %vm440, %v1026
  %1084 = vst.msk [vmem:[%s4 + $0x158] sm:$0xff] %vm440, %v1027
  %1085 = vst.msk [vmem:[%s4 + $0x160] sm:$0xff] %vm440, %v1028
  %1086 = vst.msk [vmem:[%s4 + $0x168] sm:$0xff] %vm440, %v1029
  %1087 = vst.msk [vmem:[%s4 + $0x170] sm:$0xff] %vm440, %v1030
  %1088 = vst.msk [vmem:[%s4 + $0x178] sm:$0xff] %vm440, %v1031
  %1089 = vst.msk [vmem:[%s4 + $0x180] sm:$0xff] %vm440, %v1032
  %1090 = vst.msk [vmem:[%s4 + $0x188] sm:$0xff] %vm440, %v1033
  %1091 = vst.msk [vmem:[%s4 + $0x190] sm:$0xff] %vm440, %v1034
  %1092 = vst.msk [vmem:[%s4 + $0x198] sm:$0xff] %vm440, %v1035
  %1093 = vst.msk [vmem:[%s4 + $0x1a0] sm:$0xff] %vm440, %v1036
  %1094 = vst.msk [vmem:[%s4 + $0x1a8] sm:$0xff] %vm440, %v1037
  %1095 = vst.msk [vmem:[%s4 + $0x1b0] sm:$0xff] %vm440, %v1038
  %1096 = vst.msk [vmem:[%s4 + $0x1b8] sm:$0xff] %vm440, %v1039
  %1097 = vst.msk [vmem:[%s4 + $0x1c0] sm:$0x3] %vm552, %v1040
  // Predicated region
  $region18: #{forward.12} parent=0 // pred_check
    _
  $region19: #{forward.12} parent=0 // pred_check_branch
    %1099 = sbr.rel (0) target = $region21
  $region20: #{forward.12} parent=0 // pred_region
    _
  $region21: #{forward.12} parent=0 // pred_fallthru
    _
  // Predicated region
  $region22: #{forward.12} parent=0 // pred_check
    _
  $region23: #{forward.12} parent=0 // pred_check_branch
    %1101 = sbr.rel (0) target = $region25
  $region24: #{forward.12} parent=0 // pred_region
    _
  $region25: #{forward.12} parent=0 // pred_fallthru
    _

// kernel: forward.13
$region0: #{forward.13}
  #allocation0 [shape = 'u32[]', space=smem, size = 0x4, offset = 0x4, fixed_abs, tag = 'smem constant byte address 0x4 - core index']
  #allocation1 [shape = 'u32[144,128]{1,0:T(1,128)}', space=vmem, size = 0x12000, scoped, tag = 'internal scratch']
  #allocation2 [shape = 'f32[1,1]{1,0:T(1,128)S(1)}', space=vmem, size = 0x200, scoped, tag = 'scoped memory for forward.13']
  %s0 = inlined_call_operand.vmem [shape: f32[1568,64], index: 0, kind: input, shape index: {}]
  %s1 = inlined_call_operand.vmem [shape: f32[1,64], index: 1, kind: input, shape index: {}]
  %s2 = inlined_call_operand.<no memory space> [shape: f32[1,1], index: 2, kind: input, shape index: {}]
  %s3 = inlined_call_operand.vmem [shape: f32[1,1568], index: 3, kind: output, shape index: {}]
  %s4 = sld [smem:[#allocation0]]
  $region22: #{forward.13} parent=0
    _
  %s6 = ssub.s32 1, %s4
  %s7 = scalar_select 0, %s6, %s4
  %v8 = vstv %s2
  %9 = vst [vmem:[#allocation2] sm:$0x1] %v8
  // Predicated region
  $region2: #{forward.13} parent=0 // pred_check
    _
  $region3: #{forward.13} parent=0 // pred_check_branch
    %11 = sbr.rel (0) target = $region5
  $region4: #{forward.13} parent=0 // pred_region
    _
  $region5: #{forward.13} parent=0 // pred_fallthru
    _
  // Predicated region
  $region6: #{forward.13} parent=0 // pred_check
    _
  $region7: #{forward.13} parent=0 // pred_check_branch
    %13 = sbr.rel (0) target = $region9
  $region8: #{forward.13} parent=0 // pred_region
    _
  $region9: #{forward.13} parent=0 // pred_fallthru
    _
  // Predicated region
  $region10: #{forward.13} parent=0 // pred_check
    _
  $region11: #{forward.13} parent=0 // pred_check_branch
    %15 = sbr.rel (0) target = $region13
  $region12: #{forward.13} parent=0 // pred_region
    _
  $region13: #{forward.13} parent=0 // pred_fallthru
    _
  %v16 = vld [vmem:[%s1] sm:$0x1]
  %v17 = vld [vmem:[%s0] sm:$0xff]
  %v18 = vld [vmem:[%s0 + $0x8] sm:$0xff]
  %v19 = vld [vmem:[%s0 + $0x10] sm:$0xff]
  %v20 = vld [vmem:[%s0 + $0x18] sm:$0xff]
  %v21 = vld [vmem:[%s0 + $0x20] sm:$0xff]
  %v22 = vld [vmem:[%s0 + $0x28] sm:$0xff]
  %v23 = vld [vmem:[%s0 + $0x30] sm:$0xff]
  %v24 = vld [vmem:[%s0 + $0x38] sm:$0xff]
  %v25 = vld [vmem:[%s0 + $0x40] sm:$0xff]
  %v26 = vld [vmem:[%s0 + $0x48] sm:$0xff]
  %v27 = vld [vmem:[%s0 + $0x50] sm:$0xff]
  %v28 = vld [vmem:[%s0 + $0x58] sm:$0xff]
  %v29 = vld [vmem:[%s0 + $0x60] sm:$0xff]
  %v30 = vld [vmem:[%s0 + $0x68] sm:$0xff]
  %v31 = vld [vmem:[%s0 + $0x70] sm:$0xff]
  %v32 = vld [vmem:[%s0 + $0x78] sm:$0xff]
  %v33 = vld [vmem:[%s0 + $0x80] sm:$0xff]
  %v34 = vld [vmem:[%s0 + $0x88] sm:$0xff]
  %v35 = vld [vmem:[%s0 + $0x90] sm:$0xff]
  %v36 = vld [vmem:[%s0 + $0x98] sm:$0xff]
  %v37 = vld [vmem:[%s0 + $0xa0] sm:$0xff]
  %v38 = vld [vmem:[%s0 + $0xa8] sm:$0xff]
  %v39 = vld [vmem:[%s0 + $0xb0] sm:$0xff]
  %v40 = vld [vmem:[%s0 + $0xb8] sm:$0xff]
  %v41 = vld [vmem:[%s0 + $0xc0] sm:$0xff]
  %v42 = vld [vmem:[%s0 + $0xc8] sm:$0xff]
  %v43 = vld [vmem:[%s0 + $0xd0] sm:$0xff]
  %v44 = vld [vmem:[%s0 + $0xd8] sm:$0xff]
  %v45 = vld [vmem:[%s0 + $0xe0] sm:$0xff]
  %v46 = vld [vmem:[%s0 + $0xe8] sm:$0xff]
  %v47 = vld [vmem:[%s0 + $0xf0] sm:$0xff]
  %v48 = vld [vmem:[%s0 + $0xf8] sm:$0xff]
  %v49 = vld [vmem:[%s0 + $0x100] sm:$0xff]
  %v50 = vld [vmem:[%s0 + $0x108] sm:$0xff]
  %v51 = vld [vmem:[%s0 + $0x110] sm:$0xff]
  %v52 = vld [vmem:[%s0 + $0x118] sm:$0xff]
  %v53 = vld [vmem:[%s0 + $0x120] sm:$0xff]
  %v54 = vld [vmem:[%s0 + $0x128] sm:$0xff]
  %v55 = vld [vmem:[%s0 + $0x130] sm:$0xff]
  %v56 = vld [vmem:[%s0 + $0x138] sm:$0xff]
  %v57 = vld [vmem:[%s0 + $0x140] sm:$0xff]
  %v58 = vld [vmem:[%s0 + $0x148] sm:$0xff]
  %v59 = vld [vmem:[%s0 + $0x150] sm:$0xff]
  %v60 = vld [vmem:[%s0 + $0x158] sm:$0xff]
  %v61 = vld [vmem:[%s0 + $0x160] sm:$0xff]
  %v62 = vld [vmem:[%s0 + $0x168] sm:$0xff]
  %v63 = vld [vmem:[%s0 + $0x170] sm:$0xff]
  %v64 = vld [vmem:[%s0 + $0x178] sm:$0xff]
  %v65 = vld [vmem:[%s0 + $0x180] sm:$0xff]
  %v66 = vld [vmem:[%s0 + $0x188] sm:$0xff]
  %v67 = vld [vmem:[%s0 + $0x190] sm:$0xff]
  %v68 = vld [vmem:[%s0 + $0x198] sm:$0xff]
  %v69 = vld [vmem:[%s0 + $0x1a0] sm:$0xff]
  %v70 = vld [vmem:[%s0 + $0x1a8] sm:$0xff]
  %v71 = vld [vmem:[%s0 + $0x1b0] sm:$0xff]
  %v72 = vld [vmem:[%s0 + $0x1b8] sm:$0xff]
  %v73 = vld [vmem:[%s0 + $0x1c0] sm:$0xff]
  %v74 = vld [vmem:[%s0 + $0x1c8] sm:$0xff]
  %v75 = vld [vmem:[%s0 + $0x1d0] sm:$0xff]
  %v76 = vld [vmem:[%s0 + $0x1d8] sm:$0xff]
  %v77 = vld [vmem:[%s0 + $0x1e0] sm:$0xff]
  %v78 = vld [vmem:[%s0 + $0x1e8] sm:$0xff]
  %v79 = vld [vmem:[%s0 + $0x1f0] sm:$0xff]
  %v80 = vld [vmem:[%s0 + $0x1f8] sm:$0xff]
  %v81 = vld [vmem:[%s0 + $0x200] sm:$0xff]
  %v82 = vld [vmem:[%s0 + $0x208] sm:$0xff]
  %v83 = vld [vmem:[%s0 + $0x210] sm:$0xff]
  %v84 = vld [vmem:[%s0 + $0x218] sm:$0xff]
  %v85 = vld [vmem:[%s0 + $0x220] sm:$0xff]
  %v86 = vld [vmem:[%s0 + $0x228] sm:$0xff]
  %v87 = vld [vmem:[%s0 + $0x230] sm:$0xff]
  %v88 = vld [vmem:[%s0 + $0x238] sm:$0xff]
  %v89 = vld [vmem:[%s0 + $0x240] sm:$0xff]
  %v90 = vld [vmem:[%s0 + $0x248] sm:$0xff]
  %v91 = vld [vmem:[%s0 + $0x250] sm:$0xff]
  %v92 = vld [vmem:[%s0 + $0x258] sm:$0xff]
  %v93 = vld [vmem:[%s0 + $0x260] sm:$0xff]
  %v94 = vld [vmem:[%s0 + $0x268] sm:$0xff]
  %v95 = vld [vmem:[%s0 + $0x270] sm:$0xff]
  %v96 = vld [vmem:[%s0 + $0x278] sm:$0xff]
  %v97 = vld [vmem:[%s0 + $0x280] sm:$0xff]
  %v98 = vld [vmem:[%s0 + $0x288] sm:$0xff]
  %v99 = vld [vmem:[%s0 + $0x290] sm:$0xff]
  %v100 = vld [vmem:[%s0 + $0x298] sm:$0xff]
  %v101 = vld [vmem:[%s0 + $0x2a0] sm:$0xff]
  %v102 = vld [vmem:[%s0 + $0x2a8] sm:$0xff]
  %v103 = vld [vmem:[%s0 + $0x2b0] sm:$0xff]
  %v104 = vld [vmem:[%s0 + $0x2b8] sm:$0xff]
  %v105 = vld [vmem:[%s0 + $0x2c0] sm:$0xff]
  %v106 = vld [vmem:[%s0 + $0x2c8] sm:$0xff]
  %v107 = vld [vmem:[%s0 + $0x2d0] sm:$0xff]
  %v108 = vld [vmem:[%s0 + $0x2d8] sm:$0xff]
  %v109 = vld [vmem:[%s0 + $0x2e0] sm:$0xff]
  %v110 = vld [vmem:[%s0 + $0x2e8] sm:$0xff]
  %v111 = vld [vmem:[%s0 + $0x2f0] sm:$0xff]
  %v112 = vld [vmem:[%s0 + $0x2f8] sm:$0xff]
  %v113 = vld [vmem:[%s0 + $0x300] sm:$0xff]
  %v114 = vld [vmem:[%s0 + $0x308] sm:$0xff]
  %v115 = vld [vmem:[%s0 + $0x310] sm:$0xff]
  %v116 = vld [vmem:[%s0 + $0x318] sm:$0xff]
  %v117 = vld [vmem:[%s0 + $0x320] sm:$0xff]
  %v118 = vld [vmem:[%s0 + $0x328] sm:$0xff]
  %v119 = vld [vmem:[%s0 + $0x330] sm:$0xff]
  %v120 = vld [vmem:[%s0 + $0x338] sm:$0xff]
  %v121 = vld [vmem:[%s0 + $0x340] sm:$0xff]
  %v122 = vld [vmem:[%s0 + $0x348] sm:$0xff]
  %v123 = vld [vmem:[%s0 + $0x350] sm:$0xff]
  %v124 = vld [vmem:[%s0 + $0x358] sm:$0xff]
  %v125 = vld [vmem:[%s0 + $0x360] sm:$0xff]
  %v126 = vld [vmem:[%s0 + $0x368] sm:$0xff]
  %v127 = vld [vmem:[%s0 + $0x370] sm:$0xff]
  %v128 = vld [vmem:[%s0 + $0x378] sm:$0xff]
  %v129 = vld [vmem:[%s0 + $0x380] sm:$0xff]
  %v130 = vld [vmem:[%s0 + $0x388] sm:$0xff]
  %v131 = vld [vmem:[%s0 + $0x390] sm:$0xff]
  %v132 = vld [vmem:[%s0 + $0x398] sm:$0xff]
  %v133 = vld [vmem:[%s0 + $0x3a0] sm:$0xff]
  %v134 = vld [vmem:[%s0 + $0x3a8] sm:$0xff]
  %v135 = vld [vmem:[%s0 + $0x3b0] sm:$0xff]
  %v136 = vld [vmem:[%s0 + $0x3b8] sm:$0xff]
  %v137 = vld [vmem:[%s0 + $0x3c0] sm:$0xff]
  %v138 = vld [vmem:[%s0 + $0x3c8] sm:$0xff]
  %v139 = vld [vmem:[%s0 + $0x3d0] sm:$0xff]
  %v140 = vld [vmem:[%s0 + $0x3d8] sm:$0xff]
  %v141 = vld [vmem:[%s0 + $0x3e0] sm:$0xff]
  %v142 = vld [vmem:[%s0 + $0x3e8] sm:$0xff]
  %v143 = vld [vmem:[%s0 + $0x3f0] sm:$0xff]
  %v144 = vld [vmem:[%s0 + $0x3f8] sm:$0xff]
  %v145 = vld [vmem:[%s0 + $0x400] sm:$0xff]
  %v146 = vld [vmem:[%s0 + $0x408] sm:$0xff]
  %v147 = vld [vmem:[%s0 + $0x410] sm:$0xff]
  %v148 = vld [vmem:[%s0 + $0x418] sm:$0xff]
  %v149 = vld [vmem:[%s0 + $0x420] sm:$0xff]
  %v150 = vld [vmem:[%s0 + $0x428] sm:$0xff]
  %v151 = vld [vmem:[%s0 + $0x430] sm:$0xff]
  %v152 = vld [vmem:[%s0 + $0x438] sm:$0xff]
  %v153 = vld [vmem:[%s0 + $0x440] sm:$0xff]
  %v154 = vld [vmem:[%s0 + $0x448] sm:$0xff]
  %v155 = vld [vmem:[%s0 + $0x450] sm:$0xff]
  %v156 = vld [vmem:[%s0 + $0x458] sm:$0xff]
  %v157 = vld [vmem:[%s0 + $0x460] sm:$0xff]
  %v158 = vld [vmem:[%s0 + $0x468] sm:$0xff]
  %v159 = vld [vmem:[%s0 + $0x470] sm:$0xff]
  %v160 = vld [vmem:[%s0 + $0x478] sm:$0xff]
  %v161 = vld [vmem:[%s0 + $0x480] sm:$0xff]
  %v162 = vld [vmem:[%s0 + $0x488] sm:$0xff]
  %v163 = vld [vmem:[%s0 + $0x490] sm:$0xff]
  %v164 = vld [vmem:[%s0 + $0x498] sm:$0xff]
  %v165 = vld [vmem:[%s0 + $0x4a0] sm:$0xff]
  %v166 = vld [vmem:[%s0 + $0x4a8] sm:$0xff]
  %v167 = vld [vmem:[%s0 + $0x4b0] sm:$0xff]
  %v168 = vld [vmem:[%s0 + $0x4b8] sm:$0xff]
  %v169 = vld [vmem:[%s0 + $0x4c0] sm:$0xff]
  %v170 = vld [vmem:[%s0 + $0x4c8] sm:$0xff]
  %v171 = vld [vmem:[%s0 + $0x4d0] sm:$0xff]
  %v172 = vld [vmem:[%s0 + $0x4d8] sm:$0xff]
  %v173 = vld [vmem:[%s0 + $0x4e0] sm:$0xff]
  %v174 = vld [vmem:[%s0 + $0x4e8] sm:$0xff]
  %v175 = vld [vmem:[%s0 + $0x4f0] sm:$0xff]
  %v176 = vld [vmem:[%s0 + $0x4f8] sm:$0xff]
  %v177 = vld [vmem:[%s0 + $0x500] sm:$0xff]
  %v178 = vld [vmem:[%s0 + $0x508] sm:$0xff]
  %v179 = vld [vmem:[%s0 + $0x510] sm:$0xff]
  %v180 = vld [vmem:[%s0 + $0x518] sm:$0xff]
  %v181 = vld [vmem:[%s0 + $0x520] sm:$0xff]
  %v182 = vld [vmem:[%s0 + $0x528] sm:$0xff]
  %v183 = vld [vmem:[%s0 + $0x530] sm:$0xff]
  %v184 = vld [vmem:[%s0 + $0x538] sm:$0xff]
  %v185 = vld [vmem:[%s0 + $0x540] sm:$0xff]
  %v186 = vld [vmem:[%s0 + $0x548] sm:$0xff]
  %v187 = vld [vmem:[%s0 + $0x550] sm:$0xff]
  %v188 = vld [vmem:[%s0 + $0x558] sm:$0xff]
  %v189 = vld [vmem:[%s0 + $0x560] sm:$0xff]
  %v190 = vld [vmem:[%s0 + $0x568] sm:$0xff]
  %v191 = vld [vmem:[%s0 + $0x570] sm:$0xff]
  %v192 = vld [vmem:[%s0 + $0x578] sm:$0xff]
  %v193 = vld [vmem:[%s0 + $0x580] sm:$0xff]
  %v194 = vld [vmem:[%s0 + $0x588] sm:$0xff]
  %v195 = vld [vmem:[%s0 + $0x590] sm:$0xff]
  %v196 = vld [vmem:[%s0 + $0x598] sm:$0xff]
  %v197 = vld [vmem:[%s0 + $0x5a0] sm:$0xff]
  %v198 = vld [vmem:[%s0 + $0x5a8] sm:$0xff]
  %v199 = vld [vmem:[%s0 + $0x5b0] sm:$0xff]
  %v200 = vld [vmem:[%s0 + $0x5b8] sm:$0xff]
  %v201 = vld [vmem:[%s0 + $0x5c0] sm:$0xff]
  %v202 = vld [vmem:[%s0 + $0x5c8] sm:$0xff]
  %v203 = vld [vmem:[%s0 + $0x5d0] sm:$0xff]
  %v204 = vld [vmem:[%s0 + $0x5d8] sm:$0xff]
  %v205 = vld [vmem:[%s0 + $0x5e0] sm:$0xff]
  %v206 = vld [vmem:[%s0 + $0x5e8] sm:$0xff]
  %v207 = vld [vmem:[%s0 + $0x5f0] sm:$0xff]
  %v208 = vld [vmem:[%s0 + $0x5f8] sm:$0xff]
  %v209 = vld [vmem:[%s0 + $0x600] sm:$0xff]
  %v210 = vld [vmem:[%s0 + $0x608] sm:$0xff]
  %v211 = vld [vmem:[%s0 + $0x610] sm:$0xff]
  %v212 = vld [vmem:[%s0 + $0x618] sm:$0xff]
  %v213 = vld [vmem:[#allocation2] sm:$0x1]
  %215 = vset.pattern.permute.xlu0 0
  %216 = vperm.xlu0 %215, %v213
  %v217 = vpop.permute.xlu0 %216
  %v219 = vlaneseq
  %v220 = vshrl.u32 %v219, 7
  %v221 = vsub.s32 0, %v220
  %v222 = vrot.slane %v217, %v221
  %vm223 = vcmask 523264
  %v225 = vsel %vm223, %v16, 0
  %v228 = vsel %vm223, %v17, 0
  %v231 = vsel %vm223, %v18, 0
  %v234 = vsel %vm223, %v19, 0
  %v237 = vsel %vm223, %v20, 0
  %v240 = vsel %vm223, %v21, 0
  %v243 = vsel %vm223, %v22, 0
  %v246 = vsel %vm223, %v23, 0
  %v249 = vsel %vm223, %v24, 0
  %v252 = vsel %vm223, %v25, 0
  %v255 = vsel %vm223, %v26, 0
  %v258 = vsel %vm223, %v27, 0
  %v261 = vsel %vm223, %v28, 0
  %v264 = vsel %vm223, %v29, 0
  %v267 = vsel %vm223, %v30, 0
  %v270 = vsel %vm223, %v31, 0
  %v273 = vsel %vm223, %v32, 0
  %v276 = vsel %vm223, %v33, 0
  %v279 = vsel %vm223, %v34, 0
  %v282 = vsel %vm223, %v35, 0
  %v285 = vsel %vm223, %v36, 0
  %v288 = vsel %vm223, %v37, 0
  %v291 = vsel %vm223, %v38, 0
  %v294 = vsel %vm223, %v39, 0
  %v297 = vsel %vm223, %v40, 0
  %v300 = vsel %vm223, %v41, 0
  %v303 = vsel %vm223, %v42, 0
  %v306 = vsel %vm223, %v43, 0
  %v309 = vsel %vm223, %v44, 0
  %v312 = vsel %vm223, %v45, 0
  %v315 = vsel %vm223, %v46, 0
  %v318 = vsel %vm223, %v47, 0
  %v321 = vsel %vm223, %v48, 0
  %v324 = vsel %vm223, %v49, 0
  %v327 = vsel %vm223, %v50, 0
  %v330 = vsel %vm223, %v51, 0
  %v333 = vsel %vm223, %v52, 0
  %v336 = vsel %vm223, %v53, 0
  %v339 = vsel %vm223, %v54, 0
  %v342 = vsel %vm223, %v55, 0
  %v345 = vsel %vm223, %v56, 0
  %v348 = vsel %vm223, %v57, 0
  %v351 = vsel %vm223, %v58, 0
  %v354 = vsel %vm223, %v59, 0
  %v357 = vsel %vm223, %v60, 0
  %v360 = vsel %vm223, %v61, 0
  %v363 = vsel %vm223, %v62, 0
  %v366 = vsel %vm223, %v63, 0
  %v369 = vsel %vm223, %v64, 0
  %v372 = vsel %vm223, %v65, 0
  %v375 = vsel %vm223, %v66, 0
  %v378 = vsel %vm223, %v67, 0
  %v381 = vsel %vm223, %v68, 0
  %v384 = vsel %vm223, %v69, 0
  %v387 = vsel %vm223, %v70, 0
  %v390 = vsel %vm223, %v71, 0
  %v393 = vsel %vm223, %v72, 0
  %v396 = vsel %vm223, %v73, 0
  %v399 = vsel %vm223, %v74, 0
  %v402 = vsel %vm223, %v75, 0
  %v405 = vsel %vm223, %v76, 0
  %v408 = vsel %vm223, %v77, 0
  %v411 = vsel %vm223, %v78, 0
  %v414 = vsel %vm223, %v79, 0
  %v417 = vsel %vm223, %v80, 0
  %v420 = vsel %vm223, %v81, 0
  %v423 = vsel %vm223, %v82, 0
  %v426 = vsel %vm223, %v83, 0
  %v429 = vsel %vm223, %v84, 0
  %v432 = vsel %vm223, %v85, 0
  %v435 = vsel %vm223, %v86, 0
  %v438 = vsel %vm223, %v87, 0
  %v441 = vsel %vm223, %v88, 0
  %v444 = vsel %vm223, %v89, 0
  %v447 = vsel %vm223, %v90, 0
  %v450 = vsel %vm223, %v91, 0
  %v453 = vsel %vm223, %v92, 0
  %v456 = vsel %vm223, %v93, 0
  %v459 = vsel %vm223, %v94, 0
  %v462 = vsel %vm223, %v95, 0
  %v465 = vsel %vm223, %v96, 0
  %v468 = vsel %vm223, %v97, 0
  %v471 = vsel %vm223, %v98, 0
  %v474 = vsel %vm223, %v99, 0
  %v477 = vsel %vm223, %v100, 0
  %v480 = vsel %vm223, %v101, 0
  %v483 = vsel %vm223, %v102, 0
  %v486 = vsel %vm223, %v103, 0
  %v489 = vsel %vm223, %v104, 0
  %v492 = vsel %vm223, %v105, 0
  %v495 = vsel %vm223, %v106, 0
  %v498 = vsel %vm223, %v107, 0
  %v501 = vsel %vm223, %v108, 0
  %v504 = vsel %vm223, %v109, 0
  %v507 = vsel %vm223, %v110, 0
  %v510 = vsel %vm223, %v111, 0
  %v513 = vsel %vm223, %v112, 0
  %v516 = vsel %vm223, %v113, 0
  %v519 = vsel %vm223, %v114, 0
  %v522 = vsel %vm223, %v115, 0
  %v525 = vsel %vm223, %v116, 0
  %v528 = vsel %vm223, %v117, 0
  %v531 = vsel %vm223, %v118, 0
  %v534 = vsel %vm223, %v119, 0
  %v537 = vsel %vm223, %v120, 0
  %v540 = vsel %vm223, %v121, 0
  %v543 = vsel %vm223, %v122, 0
  %v546 = vsel %vm223, %v123, 0
  %v549 = vsel %vm223, %v124, 0
  %v552 = vsel %vm223, %v125, 0
  %v555 = vsel %vm223, %v126, 0
  %v558 = vsel %vm223, %v127, 0
  %v561 = vsel %vm223, %v128, 0
  %v564 = vsel %vm223, %v129, 0
  %v567 = vsel %vm223, %v130, 0
  %v570 = vsel %vm223, %v131, 0
  %v573 = vsel %vm223, %v132, 0
  %v576 = vsel %vm223, %v133, 0
  %v579 = vsel %vm223, %v134, 0
  %v582 = vsel %vm223, %v135, 0
  %v585 = vsel %vm223, %v136, 0
  %v588 = vsel %vm223, %v137, 0
  %v591 = vsel %vm223, %v138, 0
  %v594 = vsel %vm223, %v139, 0
  %v597 = vsel %vm223, %v140, 0
  %v600 = vsel %vm223, %v141, 0
  %v603 = vsel %vm223, %v142, 0
  %v606 = vsel %vm223, %v143, 0
  %v609 = vsel %vm223, %v144, 0
  %v612 = vsel %vm223, %v145, 0
  %v615 = vsel %vm223, %v146, 0
  %v618 = vsel %vm223, %v147, 0
  %v621 = vsel %vm223, %v148, 0
  %v624 = vsel %vm223, %v149, 0
  %v627 = vsel %vm223, %v150, 0
  %v630 = vsel %vm223, %v151, 0
  %v633 = vsel %vm223, %v152, 0
  %v636 = vsel %vm223, %v153, 0
  %v639 = vsel %vm223, %v154, 0
  %v642 = vsel %vm223, %v155, 0
  %v645 = vsel %vm223, %v156, 0
  %v648 = vsel %vm223, %v157, 0
  %v651 = vsel %vm223, %v158, 0
  %v654 = vsel %vm223, %v159, 0
  %v657 = vsel %vm223, %v160, 0
  %v660 = vsel %vm223, %v161, 0
  %v663 = vsel %vm223, %v162, 0
  %v666 = vsel %vm223, %v163, 0
  %v669 = vsel %vm223, %v164, 0
  %v672 = vsel %vm223, %v165, 0
  %v675 = vsel %vm223, %v166, 0
  %v678 = vsel %vm223, %v167, 0
  %v681 = vsel %vm223, %v168, 0
  %v684 = vsel %vm223, %v169, 0
  %v687 = vsel %vm223, %v170, 0
  %v690 = vsel %vm223, %v171, 0
  %v693 = vsel %vm223, %v172, 0
  %v696 = vsel %vm223, %v173, 0
  %v699 = vsel %vm223, %v174, 0
  %v702 = vsel %vm223, %v175, 0
  %v705 = vsel %vm223, %v176, 0
  %v708 = vsel %vm223, %v177, 0
  %v711 = vsel %vm223, %v178, 0
  %v714 = vsel %vm223, %v179, 0
  %v717 = vsel %vm223, %v180, 0
  %v720 = vsel %vm223, %v181, 0
  %v723 = vsel %vm223, %v182, 0
  %v726 = vsel %vm223, %v183, 0
  %v729 = vsel %vm223, %v184, 0
  %v732 = vsel %vm223, %v185, 0
  %v735 = vsel %vm223, %v186, 0
  %v738 = vsel %vm223, %v187, 0
  %v741 = vsel %vm223, %v188, 0
  %v744 = vsel %vm223, %v189, 0
  %v747 = vsel %vm223, %v190, 0
  %v750 = vsel %vm223, %v191, 0
  %v753 = vsel %vm223, %v192, 0
  %v756 = vsel %vm223, %v193, 0
  %v759 = vsel %vm223, %v194, 0
  %v762 = vsel %vm223, %v195, 0
  %v765 = vsel %vm223, %v196, 0
  %v768 = vsel %vm223, %v197, 0
  %v771 = vsel %vm223, %v198, 0
  %v774 = vsel %vm223, %v199, 0
  %v777 = vsel %vm223, %v200, 0
  %v780 = vsel %vm223, %v201, 0
  %v783 = vsel %vm223, %v202, 0
  %v786 = vsel %vm223, %v203, 0
  %v789 = vsel %vm223, %v204, 0
  %v792 = vsel %vm223, %v205, 0
  %v795 = vsel %vm223, %v206, 0
  %v798 = vsel %vm223, %v207, 0
  %v801 = vsel %vm223, %v208, 0
  %v804 = vsel %vm223, %v209, 0
  %v807 = vsel %vm223, %v210, 0
  %v810 = vsel %vm223, %v211, 0
  %v813 = vsel %vm223, %v212, 0
  %815 = vmatprep.subr.mxu0 0.0
  %816 = vmatpush1.xpose.msra.mxu0 %v228
  %817 = vmatprep.subr.mxu0 0.0
  %818 = vmatpush1.xpose.msra.mxu0 %v231
  %819 = vmatprep.subr.mxu0 0.0
  %820 = vmatpush1.xpose.msra.mxu0 %v234
  %821 = vmatprep.subr.mxu0 0.0
  %822 = vmatpush1.xpose.msra.mxu0 %v237
  %823 = vmatprep.subr.mxu0 0.0
  %824 = vmatpush1.xpose.msra.mxu0 %v240
  %825 = vmatprep.subr.mxu0 0.0
  %826 = vmatpush1.xpose.msra.mxu0 %v243
  %827 = vmatprep.subr.mxu0 0.0
  %828 = vmatpush1.xpose.msra.mxu0 %v246
  %829 = vmatprep.subr.mxu0 0.0
  %830 = vmatpush1.xpose.msra.mxu0 %v249
  %831 = vmatprep.subr.mxu0 0.0
  %832 = vmatpush1.xpose.msra.mxu0 %v252
  %833 = vmatprep.subr.mxu0 0.0
  %834 = vmatpush1.xpose.msra.mxu0 %v255
  %835 = vmatprep.subr.mxu0 0.0
  %836 = vmatpush1.xpose.msra.mxu0 %v258
  %837 = vmatprep.subr.mxu0 0.0
  %838 = vmatpush1.xpose.msra.mxu0 %v261
  %839 = vmatprep.subr.mxu0 0.0
  %840 = vmatpush1.xpose.msra.mxu0 %v264
  %841 = vmatprep.subr.mxu0 0.0
  %842 = vmatpush1.xpose.msra.mxu0 %v267
  %843 = vmatprep.subr.mxu0 0.0
  %844 = vmatpush1.xpose.msra.mxu0 %v270
  %845 = vmatprep.subr.mxu0 0.0
  %846 = vmatpush1.xpose.msra.mxu0 %v273
  %847 = vmatprep.subr.mxu0 0.0
  %848 = vmatpush1.xpose.msra.mxu0 %v276
  %849 = vmatprep.subr.mxu0 0.0
  %850 = vmatpush1.xpose.msra.mxu0 %v279
  %851 = vmatprep.subr.mxu0 0.0
  %852 = vmatpush1.xpose.msra.mxu0 %v282
  %853 = vmatprep.subr.mxu0 0.0
  %854 = vmatpush1.xpose.msra.mxu0 %v285
  %855 = vmatprep.subr.mxu0 0.0
  %856 = vmatpush1.xpose.msra.mxu0 %v288
  %857 = vmatprep.subr.mxu0 0.0
  %858 = vmatpush1.xpose.msra.mxu0 %v291
  %859 = vmatprep.subr.mxu0 0.0
  %860 = vmatpush1.xpose.msra.mxu0 %v294
  %861 = vmatprep.subr.mxu0 0.0
  %862 = vmatpush1.xpose.msra.mxu0 %v297
  %863 = vmatprep.subr.mxu0 0.0
  %864 = vmatpush1.xpose.msra.mxu0 %v300
  %865 = vmatprep.subr.mxu0 0.0
  %866 = vmatpush1.xpose.msra.mxu0 %v303
  %867 = vmatprep.subr.mxu0 0.0
  %868 = vmatpush1.xpose.msra.mxu0 %v306
  %869 = vmatprep.subr.mxu0 0.0
  %870 = vmatpush1.xpose.msra.mxu0 %v309
  %871 = vmatprep.subr.mxu0 0.0
  %872 = vmatpush1.xpose.msra.mxu0 %v312
  %873 = vmatprep.subr.mxu0 0.0
  %874 = vmatpush1.xpose.msra.mxu0 %v315
  %875 = vmatprep.subr.mxu0 0.0
  %876 = vmatpush1.xpose.msra.mxu0 %v318
  %877 = vmatprep.subr.mxu0 0.0
  %878 = vmatpush1.xpose.msra.mxu0 %v321
  %879 = vmatprep.mubr.f32.mxu0 0.0
  %880 = vmatmul.mubr.f32.gmra.mrb[0].mxu0 %v225
  %v881 = vpop.f32.mrb[0].mxu0
  %v882 = vadd.f32 %v222, %v881
  %v883 = vpop.f32.mrb[0].mxu0
  %v884 = vadd.f32 %v222, %v883
  %885 = vdwg.mxu0
  %886 = vmatprep.subr.mxu0 0.0
  %887 = vmatpush1.xpose.msra.mxu0 %v324
  %888 = vmatprep.subr.mxu0 0.0
  %889 = vmatpush1.xpose.msra.mxu0 %v327
  %890 = vmatprep.subr.mxu0 0.0
  %891 = vmatpush1.xpose.msra.mxu0 %v330
  %892 = vmatprep.subr.mxu0 0.0
  %893 = vmatpush1.xpose.msra.mxu0 %v333
  %894 = vmatprep.subr.mxu0 0.0
  %895 = vmatpush1.xpose.msra.mxu0 %v336
  %896 = vmatprep.subr.mxu0 0.0
  %897 = vmatpush1.xpose.msra.mxu0 %v339
  %898 = vmatprep.subr.mxu0 0.0
  %899 = vmatpush1.xpose.msra.mxu0 %v342
  %900 = vmatprep.subr.mxu0 0.0
  %901 = vmatpush1.xpose.msra.mxu0 %v345
  %902 = vmatprep.subr.mxu0 0.0
  %903 = vmatpush1.xpose.msra.mxu0 %v348
  %904 = vmatprep.subr.mxu0 0.0
  %905 = vmatpush1.xpose.msra.mxu0 %v351
  %906 = vmatprep.subr.mxu0 0.0
  %907 = vmatpush1.xpose.msra.mxu0 %v354
  %908 = vmatprep.subr.mxu0 0.0
  %909 = vmatpush1.xpose.msra.mxu0 %v357
  %910 = vmatprep.subr.mxu0 0.0
  %911 = vmatpush1.xpose.msra.mxu0 %v360
  %912 = vmatprep.subr.mxu0 0.0
  %913 = vmatpush1.xpose.msra.mxu0 %v363
  %914 = vmatprep.subr.mxu0 0.0
  %915 = vmatpush1.xpose.msra.mxu0 %v366
  %916 = vmatprep.subr.mxu0 0.0
  %917 = vmatpush1.xpose.msra.mxu0 %v369
  %918 = vmatprep.subr.mxu0 0.0
  %919 = vmatpush1.xpose.msra.mxu0 %v372
  %920 = vmatprep.subr.mxu0 0.0
  %921 = vmatpush1.xpose.msra.mxu0 %v375
  %922 = vmatprep.subr.mxu0 0.0
  %923 = vmatpush1.xpose.msra.mxu0 %v378
  %924 = vmatprep.subr.mxu0 0.0
  %925 = vmatpush1.xpose.msra.mxu0 %v381
  %926 = vmatprep.subr.mxu0 0.0
  %927 = vmatpush1.xpose.msra.mxu0 %v384
  %928 = vmatprep.subr.mxu0 0.0
  %929 = vmatpush1.xpose.msra.mxu0 %v387
  %930 = vmatprep.subr.mxu0 0.0
  %931 = vmatpush1.xpose.msra.mxu0 %v390
  %932 = vmatprep.subr.mxu0 0.0
  %933 = vmatpush1.xpose.msra.mxu0 %v393
  %934 = vmatprep.subr.mxu0 0.0
  %935 = vmatpush1.xpose.msra.mxu0 %v396
  %936 = vmatprep.subr.mxu0 0.0
  %937 = vmatpush1.xpose.msra.mxu0 %v399
  %938 = vmatprep.subr.mxu0 0.0
  %939 = vmatpush1.xpose.msra.mxu0 %v402
  %940 = vmatprep.subr.mxu0 0.0
  %941 = vmatpush1.xpose.msra.mxu0 %v405
  %942 = vmatprep.subr.mxu0 0.0
  %943 = vmatpush1.xpose.msra.mxu0 %v408
  %944 = vmatprep.subr.mxu0 0.0
  %945 = vmatpush1.xpose.msra.mxu0 %v411
  %946 = vmatprep.subr.mxu0 0.0
  %947 = vmatpush1.xpose.msra.mxu0 %v414
  %948 = vmatprep.subr.mxu0 0.0
  %949 = vmatpush1.xpose.msra.mxu0 %v417
  %950 = vmatprep.mubr.f32.mxu0 0.0
  %951 = vmatmul.mubr.f32.gmra.mrb[0].mxu0 %v225
  %v952 = vpop.f32.mrb[0].mxu0
  %v953 = vadd.f32 %v222, %v952
  %v954 = vpop.f32.mrb[0].mxu0
  %v955 = vadd.f32 %v222, %v954
  %956 = vdwg.mxu0
  %957 = vmatprep.subr.mxu0 0.0
  %958 = vmatpush1.xpose.msra.mxu0 %v420
  %959 = vmatprep.subr.mxu0 0.0
  %960 = vmatpush1.xpose.msra.mxu0 %v423
  %961 = vmatprep.subr.mxu0 0.0
  %962 = vmatpush1.xpose.msra.mxu0 %v426
  %963 = vmatprep.subr.mxu0 0.0
  %964 = vmatpush1.xpose.msra.mxu0 %v429
  %965 = vmatprep.subr.mxu0 0.0
  %966 = vmatpush1.xpose.msra.mxu0 %v432
  %967 = vmatprep.subr.mxu0 0.0
  %968 = vmatpush1.xpose.msra.mxu0 %v435
  %969 = vmatprep.subr.mxu0 0.0
  %970 = vmatpush1.xpose.msra.mxu0 %v438
  %971 = vmatprep.subr.mxu0 0.0
  %972 = vmatpush1.xpose.msra.mxu0 %v441
  %973 = vmatprep.subr.mxu0 0.0
  %974 = vmatpush1.xpose.msra.mxu0 %v444
  %975 = vmatprep.subr.mxu0 0.0
  %976 = vmatpush1.xpose.msra.mxu0 %v447
  %977 = vmatprep.subr.mxu0 0.0
  %978 = vmatpush1.xpose.msra.mxu0 %v450
  %979 = vmatprep.subr.mxu0 0.0
  %980 = vmatpush1.xpose.msra.mxu0 %v453
  %981 = vmatprep.subr.mxu0 0.0
  %982 = vmatpush1.xpose.msra.mxu0 %v456
  %983 = vmatprep.subr.mxu0 0.0
  %984 = vmatpush1.xpose.msra.mxu0 %v459
  %985 = vmatprep.subr.mxu0 0.0
  %986 = vmatpush1.xpose.msra.mxu0 %v462
  %987 = vmatprep.subr.mxu0 0.0
  %988 = vmatpush1.xpose.msra.mxu0 %v465
  %989 = vmatprep.subr.mxu0 0.0
  %990 = vmatpush1.xpose.msra.mxu0 %v468
  %991 = vmatprep.subr.mxu0 0.0
  %992 = vmatpush1.xpose.msra.mxu0 %v471
  %993 = vmatprep.subr.mxu0 0.0
  %994 = vmatpush1.xpose.msra.mxu0 %v474
  %995 = vmatprep.subr.mxu0 0.0
  %996 = vmatpush1.xpose.msra.mxu0 %v477
  %997 = vmatprep.subr.mxu0 0.0
  %998 = vmatpush1.xpose.msra.mxu0 %v480
  %999 = vmatprep.subr.mxu0 0.0
  %1000 = vmatpush1.xpose.msra.mxu0 %v483
  %1001 = vmatprep.subr.mxu0 0.0
  %1002 = vmatpush1.xpose.msra.mxu0 %v486
  %1003 = vmatprep.subr.mxu0 0.0
  %1004 = vmatpush1.xpose.msra.mxu0 %v489
  %1005 = vmatprep.subr.mxu0 0.0
  %1006 = vmatpush1.xpose.msra.mxu0 %v492
  %1007 = vmatprep.subr.mxu0 0.0
  %1008 = vmatpush1.xpose.msra.mxu0 %v495
  %1009 = vmatprep.subr.mxu0 0.0
  %1010 = vmatpush1.xpose.msra.mxu0 %v498
  %1011 = vmatprep.subr.mxu0 0.0
  %1012 = vmatpush1.xpose.msra.mxu0 %v501
  %1013 = vmatprep.subr.mxu0 0.0
  %1014 = vmatpush1.xpose.msra.mxu0 %v504
  %1015 = vmatprep.subr.mxu0 0.0
  %1016 = vmatpush1.xpose.msra.mxu0 %v507
  %1017 = vmatprep.subr.mxu0 0.0
  %1018 = vmatpush1.xpose.msra.mxu0 %v510
  %1019 = vmatprep.subr.mxu0 0.0
  %1020 = vmatpush1.xpose.msra.mxu0 %v513
  %1021 = vmatprep.mubr.f32.mxu0 0.0
  %1022 = vmatmul.mubr.f32.gmra.mrb[0].mxu0 %v225
  %v1023 = vpop.f32.mrb[0].mxu0
  %v1024 = vadd.f32 %v222, %v1023
  %v1025 = vpop.f32.mrb[0].mxu0
  %v1026 = vadd.f32 %v222, %v1025
  %1027 = vdwg.mxu0
  %1028 = vmatprep.subr.mxu0 0.0
  %1029 = vmatpush1.xpose.msra.mxu0 %v516
  %1030 = vmatprep.subr.mxu0 0.0
  %1031 = vmatpush1.xpose.msra.mxu0 %v519
  %1032 = vmatprep.subr.mxu0 0.0
  %1033 = vmatpush1.xpose.msra.mxu0 %v522
  %1034 = vmatprep.subr.mxu0 0.0
  %1035 = vmatpush1.xpose.msra.mxu0 %v525
  %1036 = vmatprep.subr.mxu0 0.0
  %1037 = vmatpush1.xpose.msra.mxu0 %v528
  %1038 = vmatprep.subr.mxu0 0.0
  %1039 = vmatpush1.xpose.msra.mxu0 %v531
  %1040 = vmatprep.subr.mxu0 0.0
  %1041 = vmatpush1.xpose.msra.mxu0 %v534
  %1042 = vmatprep.subr.mxu0 0.0
  %1043 = vmatpush1.xpose.msra.mxu0 %v537
  %1044 = vmatprep.subr.mxu0 0.0
  %1045 = vmatpush1.xpose.msra.mxu0 %v540
  %1046 = vmatprep.subr.mxu0 0.0
  %1047 = vmatpush1.xpose.msra.mxu0 %v543
  %1048 = vmatprep.subr.mxu0 0.0
  %1049 = vmatpush1.xpose.msra.mxu0 %v546
  %1050 = vmatprep.subr.mxu0 0.0
  %1051 = vmatpush1.xpose.msra.mxu0 %v549
  %1052 = vmatprep.subr.mxu0 0.0
  %1053 = vmatpush1.xpose.msra.mxu0 %v552
  %1054 = vmatprep.subr.mxu0 0.0
  %1055 = vmatpush1.xpose.msra.mxu0 %v555
  %1056 = vmatprep.subr.mxu0 0.0
  %1057 = vmatpush1.xpose.msra.mxu0 %v558
  %1058 = vmatprep.subr.mxu0 0.0
  %1059 = vmatpush1.xpose.msra.mxu0 %v561
  %1060 = vmatprep.subr.mxu0 0.0
  %1061 = vmatpush1.xpose.msra.mxu0 %v564
  %1062 = vmatprep.subr.mxu0 0.0
  %1063 = vmatpush1.xpose.msra.mxu0 %v567
  %1064 = vmatprep.subr.mxu0 0.0
  %1065 = vmatpush1.xpose.msra.mxu0 %v570
  %1066 = vmatprep.subr.mxu0 0.0
  %1067 = vmatpush1.xpose.msra.mxu0 %v573
  %1068 = vmatprep.subr.mxu0 0.0
  %1069 = vmatpush1.xpose.msra.mxu0 %v576
  %1070 = vmatprep.subr.mxu0 0.0
  %1071 = vmatpush1.xpose.msra.mxu0 %v579
  %1072 = vmatprep.subr.mxu0 0.0
  %1073 = vmatpush1.xpose.msra.mxu0 %v582
  %1074 = vmatprep.subr.mxu0 0.0
  %1075 = vmatpush1.xpose.msra.mxu0 %v585
  %1076 = vmatprep.subr.mxu0 0.0
  %1077 = vmatpush1.xpose.msra.mxu0 %v588
  %1078 = vmatprep.subr.mxu0 0.0
  %1079 = vmatpush1.xpose.msra.mxu0 %v591
  %1080 = vmatprep.subr.mxu0 0.0
  %1081 = vmatpush1.xpose.msra.mxu0 %v594
  %1082 = vmatprep.subr.mxu0 0.0
  %1083 = vmatpush1.xpose.msra.mxu0 %v597
  %1084 = vmatprep.subr.mxu0 0.0
  %1085 = vmatpush1.xpose.msra.mxu0 %v600
  %1086 = vmatprep.subr.mxu0 0.0
  %1087 = vmatpush1.xpose.msra.mxu0 %v603
  %1088 = vmatprep.subr.mxu0 0.0
  %1089 = vmatpush1.xpose.msra.mxu0 %v606
  %1090 = vmatprep.subr.mxu0 0.0
  %1091 = vmatpush1.xpose.msra.mxu0 %v609
  %1092 = vmatprep.mubr.f32.mxu0 0.0
  %1093 = vmatmul.mubr.f32.gmra.mrb[0].mxu0 %v225
  %v1094 = vpop.f32.mrb[0].mxu0
  %v1095 = vadd.f32 %v222, %v1094
  %v1096 = vpop.f32.mrb[0].mxu0
  %v1097 = vadd.f32 %v222, %v1096
  %1098 = vdwg.mxu0
  %1099 = vmatprep.subr.mxu0 0.0
  %1100 = vmatpush1.xpose.msra.mxu0 %v612
  %1101 = vmatprep.subr.mxu0 0.0
  %1102 = vmatpush1.xpose.msra.mxu0 %v615
  %1103 = vmatprep.subr.mxu0 0.0
  %1104 = vmatpush1.xpose.msra.mxu0 %v618
  %1105 = vmatprep.subr.mxu0 0.0
  %1106 = vmatpush1.xpose.msra.mxu0 %v621
  %1107 = vmatprep.subr.mxu0 0.0
  %1108 = vmatpush1.xpose.msra.mxu0 %v624
  %1109 = vmatprep.subr.mxu0 0.0
  %1110 = vmatpush1.xpose.msra.mxu0 %v627
  %1111 = vmatprep.subr.mxu0 0.0
  %1112 = vmatpush1.xpose.msra.mxu0 %v630
  %1113 = vmatprep.subr.mxu0 0.0
  %1114 = vmatpush1.xpose.msra.mxu0 %v633
  %1115 = vmatprep.subr.mxu0 0.0
  %1116 = vmatpush1.xpose.msra.mxu0 %v636
  %1117 = vmatprep.subr.mxu0 0.0
  %1118 = vmatpush1.xpose.msra.mxu0 %v639
  %1119 = vmatprep.subr.mxu0 0.0
  %1120 = vmatpush1.xpose.msra.mxu0 %v642
  %1121 = vmatprep.subr.mxu0 0.0
  %1122 = vmatpush1.xpose.msra.mxu0 %v645
  %1123 = vmatprep.subr.mxu0 0.0
  %1124 = vmatpush1.xpose.msra.mxu0 %v648
  %1125 = vmatprep.subr.mxu0 0.0
  %1126 = vmatpush1.xpose.msra.mxu0 %v651
  %1127 = vmatprep.subr.mxu0 0.0
  %1128 = vmatpush1.xpose.msra.mxu0 %v654
  %1129 = vmatprep.subr.mxu0 0.0
  %1130 = vmatpush1.xpose.msra.mxu0 %v657
  %1131 = vmatprep.subr.mxu0 0.0
  %1132 = vmatpush1.xpose.msra.mxu0 %v660
  %1133 = vmatprep.subr.mxu0 0.0
  %1134 = vmatpush1.xpose.msra.mxu0 %v663
  %1135 = vmatprep.subr.mxu0 0.0
  %1136 = vmatpush1.xpose.msra.mxu0 %v666
  %1137 = vmatprep.subr.mxu0 0.0
  %1138 = vmatpush1.xpose.msra.mxu0 %v669
  %1139 = vmatprep.subr.mxu0 0.0
  %1140 = vmatpush1.xpose.msra.mxu0 %v672
  %1141 = vmatprep.subr.mxu0 0.0
  %1142 = vmatpush1.xpose.msra.mxu0 %v675
  %1143 = vmatprep.subr.mxu0 0.0
  %1144 = vmatpush1.xpose.msra.mxu0 %v678
  %1145 = vmatprep.subr.mxu0 0.0
  %1146 = vmatpush1.xpose.msra.mxu0 %v681
  %1147 = vmatprep.subr.mxu0 0.0
  %1148 = vmatpush1.xpose.msra.mxu0 %v684
  %1149 = vmatprep.subr.mxu0 0.0
  %1150 = vmatpush1.xpose.msra.mxu0 %v687
  %1151 = vmatprep.subr.mxu0 0.0
  %1152 = vmatpush1.xpose.msra.mxu0 %v690
  %1153 = vmatprep.subr.mxu0 0.0
  %1154 = vmatpush1.xpose.msra.mxu0 %v693
  %1155 = vmatprep.subr.mxu0 0.0
  %1156 = vmatpush1.xpose.msra.mxu0 %v696
  %1157 = vmatprep.subr.mxu0 0.0
  %1158 = vmatpush1.xpose.msra.mxu0 %v699
  %1159 = vmatprep.subr.mxu0 0.0
  %1160 = vmatpush1.xpose.msra.mxu0 %v702
  %1161 = vmatprep.subr.mxu0 0.0
  %1162 = vmatpush1.xpose.msra.mxu0 %v705
  %1163 = vmatprep.mubr.f32.mxu0 0.0
  %1164 = vmatmul.mubr.f32.gmra.mrb[0].mxu0 %v225
  %v1165 = vpop.f32.mrb[0].mxu0
  %v1166 = vadd.f32 %v222, %v1165
  %v1167 = vpop.f32.mrb[0].mxu0
  %v1168 = vadd.f32 %v222, %v1167
  %1169 = vdwg.mxu0
  %1170 = vmatprep.subr.mxu0 0.0
  %1171 = vmatpush1.xpose.msra.mxu0 %v708
  %1172 = vmatprep.subr.mxu0 0.0
  %1173 = vmatpush1.xpose.msra.mxu0 %v711
  %1174 = vmatprep.subr.mxu0 0.0
  %1175 = vmatpush1.xpose.msra.mxu0 %v714
  %1176 = vmatprep.subr.mxu0 0.0
  %1177 = vmatpush1.xpose.msra.mxu0 %v717
  %1178 = vmatprep.subr.mxu0 0.0
  %1179 = vmatpush1.xpose.msra.mxu0 %v720
  %1180 = vmatprep.subr.mxu0 0.0
  %1181 = vmatpush1.xpose.msra.mxu0 %v723
  %1182 = vmatprep.subr.mxu0 0.0
  %1183 = vmatpush1.xpose.msra.mxu0 %v726
  %1184 = vmatprep.subr.mxu0 0.0
  %1185 = vmatpush1.xpose.msra.mxu0 %v729
  %1186 = vmatprep.subr.mxu0 0.0
  %1187 = vmatpush1.xpose.msra.mxu0 %v732
  %1188 = vmatprep.subr.mxu0 0.0
  %1189 = vmatpush1.xpose.msra.mxu0 %v735
  %1190 = vmatprep.subr.mxu0 0.0
  %1191 = vmatpush1.xpose.msra.mxu0 %v738
  %1192 = vmatprep.subr.mxu0 0.0
  %1193 = vmatpush1.xpose.msra.mxu0 %v741
  %1194 = vmatprep.subr.mxu0 0.0
  %1195 = vmatpush1.xpose.msra.mxu0 %v744
  %1196 = vmatprep.subr.mxu0 0.0
  %1197 = vmatpush1.xpose.msra.mxu0 %v747
  %1198 = vmatprep.subr.mxu0 0.0
  %1199 = vmatpush1.xpose.msra.mxu0 %v750
  %1200 = vmatprep.subr.mxu0 0.0
  %1201 = vmatpush1.xpose.msra.mxu0 %v753
  %1202 = vmatprep.subr.mxu0 0.0
  %1203 = vmatpush1.xpose.msra.mxu0 %v756
  %1204 = vmatprep.subr.mxu0 0.0
  %1205 = vmatpush1.xpose.msra.mxu0 %v759
  %1206 = vmatprep.subr.mxu0 0.0
  %1207 = vmatpush1.xpose.msra.mxu0 %v762
  %1208 = vmatprep.subr.mxu0 0.0
  %1209 = vmatpush1.xpose.msra.mxu0 %v765
  %1210 = vmatprep.subr.mxu0 0.0
  %1211 = vmatpush1.xpose.msra.mxu0 %v768
  %1212 = vmatprep.subr.mxu0 0.0
  %1213 = vmatpush1.xpose.msra.mxu0 %v771
  %1214 = vmatprep.subr.mxu0 0.0
  %1215 = vmatpush1.xpose.msra.mxu0 %v774
  %1216 = vmatprep.subr.mxu0 0.0
  %1217 = vmatpush1.xpose.msra.mxu0 %v777
  %1218 = vmatprep.subr.mxu0 0.0
  %1219 = vmatpush1.xpose.msra.mxu0 %v780
  %1220 = vmatprep.subr.mxu0 0.0
  %1221 = vmatpush1.xpose.msra.mxu0 %v783
  %1222 = vmatprep.subr.mxu0 0.0
  %1223 = vmatpush1.xpose.msra.mxu0 %v786
  %1224 = vmatprep.subr.mxu0 0.0
  %1225 = vmatpush1.xpose.msra.mxu0 %v789
  %1226 = vmatprep.subr.mxu0 0.0
  %1227 = vmatpush1.xpose.msra.mxu0 %v792
  %1228 = vmatprep.subr.mxu0 0.0
  %1229 = vmatpush1.xpose.msra.mxu0 %v795
  %1230 = vmatprep.subr.mxu0 0.0
  %1231 = vmatpush1.xpose.msra.mxu0 %v798
  %1232 = vmatprep.subr.mxu0 0.0
  %1233 = vmatpush1.xpose.msra.mxu0 %v801
  %1234 = vmatprep.mubr.f32.mxu0 0.0
  %1235 = vmatmul.mubr.f32.gmra.mrb[0].mxu0 %v225
  %v1236 = vpop.f32.mrb[0].mxu0
  %v1237 = vadd.f32 %v222, %v1236
  %v1238 = vpop.f32.mrb[0].mxu0
  %v1239 = vadd.f32 %v222, %v1238
  %1240 = vdwg.mxu0
  %1241 = vmatprep.subr.mxu0 0.0
  %1242 = vmatpush1.xpose.msra.mxu0 %v804
  %1243 = vmatprep.subr.mxu0 0.0
  %1244 = vmatpush1.xpose.msra.mxu0 %v807
  %1245 = vmatprep.subr.mxu0 0.0
  %1246 = vmatpush1.xpose.msra.mxu0 %v810
  %1247 = vmatprep.subr.mxu0 0.0
  %1248 = vmatpush1.xpose.msra.mxu0 %v813
  %1249 = vmatprep.subr.mxu0 0.0
  %1250 = vmatpush1.xpose.msra.mxu0 0.0
  %1251 = vmatprep.subr.mxu0 0.0
  %1252 = vmatpush1.xpose.msra.mxu0 0.0
  %1253 = vmatprep.subr.mxu0 0.0
  %1254 = vmatpush1.xpose.msra.mxu0 0.0
  %1255 = vmatprep.subr.mxu0 0.0
  %1256 = vmatpush1.xpose.msra.mxu0 0.0
  %1257 = vmatprep.subr.mxu0 0.0
  %1258 = vmatpush1.xpose.msra.mxu0 0.0
  %1259 = vmatprep.subr.mxu0 0.0
  %1260 = vmatpush1.xpose.msra.mxu0 0.0
  %1261 = vmatprep.subr.mxu0 0.0
  %1262 = vmatpush1.xpose.msra.mxu0 0.0
  %1263 = vmatprep.subr.mxu0 0.0
  %1264 = vmatpush1.xpose.msra.mxu0 0.0
  %1265 = vmatprep.subr.mxu0 0.0
  %1266 = vmatpush1.xpose.msra.mxu0 0.0
  %1267 = vmatprep.subr.mxu0 0.0
  %1268 = vmatpush1.xpose.msra.mxu0 0.0
  %1269 = vmatprep.subr.mxu0 0.0
  %1270 = vmatpush1.xpose.msra.mxu0 0.0
  %1271 = vmatprep.subr.mxu0 0.0
  %1272 = vmatpush1.xpose.msra.mxu0 0.0
  %1273 = vmatprep.subr.mxu0 0.0
  %1274 = vmatpush1.xpose.msra.mxu0 0.0
  %1275 = vmatprep.subr.mxu0 0.0
  %1276 = vmatpush1.xpose.msra.mxu0 0.0
  %1277 = vmatprep.subr.mxu0 0.0
  %1278 = vmatpush1.xpose.msra.mxu0 0.0
  %1279 = vmatprep.subr.mxu0 0.0
  %1280 = vmatpush1.xpose.msra.mxu0 0.0
  %1281 = vmatprep.subr.mxu0 0.0
  %1282 = vmatpush1.xpose.msra.mxu0 0.0
  %1283 = vmatprep.subr.mxu0 0.0
  %1284 = vmatpush1.xpose.msra.mxu0 0.0
  %1285 = vmatprep.subr.mxu0 0.0
  %1286 = vmatpush1.xpose.msra.mxu0 0.0
  %1287 = vmatprep.subr.mxu0 0.0
  %1288 = vmatpush1.xpose.msra.mxu0 0.0
  %1289 = vmatprep.subr.mxu0 0.0
  %1290 = vmatpush1.xpose.msra.mxu0 0.0
  %1291 = vmatprep.subr.mxu0 0.0
  %1292 = vmatpush1.xpose.msra.mxu0 0.0
  %1293 = vmatprep.subr.mxu0 0.0
  %1294 = vmatpush1.xpose.msra.mxu0 0.0
  %1295 = vmatprep.subr.mxu0 0.0
  %1296 = vmatpush1.xpose.msra.mxu0 0.0
  %1297 = vmatprep.subr.mxu0 0.0
  %1298 = vmatpush1.xpose.msra.mxu0 0.0
  %1299 = vmatprep.subr.mxu0 0.0
  %1300 = vmatpush1.xpose.msra.mxu0 0.0
  %1301 = vmatprep.subr.mxu0 0.0
  %1302 = vmatpush1.xpose.msra.mxu0 0.0
  %1303 = vmatprep.subr.mxu0 0.0
  %1304 = vmatpush1.xpose.msra.mxu0 0.0
  %1305 = vmatprep.mubr.f32.mxu0 0.0
  %1306 = vmatmul.mubr.f32.gmra.mrb[0].mxu0 %v225
  %v1307 = vpop.f32.mrb[0].mxu0
  %v1308 = vadd.f32 %v222, %v1307
  %v1309 = vpop.f32.mrb[0].mxu0
  %1310 = vdwg.mxu0
  %v1324 = vcombine.low %v882, %v884
  %v1325 = vcombine.low %v953, %v955
  %v1326 = vcombine.low %v1024, %v1026
  %v1327 = vcombine.low %v1095, %v1097
  %v1329 = vunpack.c.l.s4 1966171168
  %v1330 = vunpack.c.0.s8 %v1329
  %v1331 = vlaneseq
  %v1332 = vshrl.u32 %v1331, 7
  %v1333 = vsub.s32 %v1330, %v1332
  %v1334 = vrot.slane %v1324, %v1333
  %v1336 = vunpack.c.l.s4 1966171168
  %v1337 = vunpack.c.0.s8 %v1336
  %v1338 = vlaneseq
  %v1339 = vshrl.u32 %v1338, 7
  %v1340 = vsub.s32 %v1337, %v1339
  %v1341 = vrot.slane %v1325, %v1340
  %v1343 = vunpack.c.l.s4 1966171168
  %v1344 = vunpack.c.0.s8 %v1343
  %v1345 = vlaneseq
  %v1346 = vshrl.u32 %v1345, 7
  %v1347 = vsub.s32 %v1344, %v1346
  %v1348 = vrot.slane %v1326, %v1347
  %v1350 = vunpack.c.l.s4 1966171168
  %v1351 = vunpack.c.0.s8 %v1350
  %v1352 = vlaneseq
  %v1353 = vshrl.u32 %v1352, 7
  %v1354 = vsub.s32 %v1351, %v1353
  %v1355 = vrot.slane %v1327, %v1354
  %v1356 = vcombine.low %v1334, %v1341
  %v1357 = vcombine.low %v1348, %v1355
  %v1359 = vunpack.c.l.s4 1966171168
  %v1360 = vunpack.c.0.s8 %v1359
  %v1361 = vlaneseq
  %v1362 = vshrl.u32 %v1361, 7
  %v1363 = vsub.s32 %v1360, %v1362
  %v1364 = vrot.slane %v1356, %v1363
  %v1366 = vunpack.c.l.s4 1966171168
  %v1367 = vunpack.c.0.s8 %v1366
  %v1368 = vlaneseq
  %v1369 = vshrl.u32 %v1368, 7
  %v1370 = vsub.s32 %v1367, %v1369
  %v1371 = vrot.slane %v1357, %v1370
  %v1372 = vcombine.low %v1364, %v1371
  %v1373 = vcombine.low %v1166, %v1168
  %v1374 = vcombine.low %v1237, %v1239
  %v1376 = vunpack.c.l.s4 1966171168
  %v1377 = vunpack.c.0.s8 %v1376
  %v1378 = vlaneseq
  %v1379 = vshrl.u32 %v1378, 7
  %v1380 = vsub.s32 %v1377, %v1379
  %v1381 = vrot.slane %v1373, %v1380
  %v1383 = vunpack.c.l.s4 1966171168
  %v1384 = vunpack.c.0.s8 %v1383
  %v1385 = vlaneseq
  %v1386 = vshrl.u32 %v1385, 7
  %v1387 = vsub.s32 %v1384, %v1386
  %v1388 = vrot.slane %v1374, %v1387
  %v1390 = vunpack.c.l.s4 1966171168
  %v1391 = vunpack.c.0.s8 %v1390
  %v1392 = vlaneseq
  %v1393 = vshrl.u32 %v1392, 7
  %v1394 = vsub.s32 %v1391, %v1393
  %v1395 = vrot.slane %v1308, %v1394
  %v1396 = vcombine.low %v1381, %v1388
  %v1398 = vunpack.c.l.s4 1966171168
  %v1399 = vunpack.c.0.s8 %v1398
  %v1400 = vlaneseq
  %v1401 = vshrl.u32 %v1400, 7
  %v1402 = vsub.s32 %v1399, %v1401
  %v1403 = vrot.slane %v1396, %v1402
  %v1405 = vunpack.c.l.s4 1966171168
  %v1406 = vunpack.c.0.s8 %v1405
  %v1407 = vlaneseq
  %v1408 = vshrl.u32 %v1407, 7
  %v1409 = vsub.s32 %v1406, %v1408
  %v1410 = vrot.slane %v1395, %v1409
  %v1411 = vcombine.low %v1403, %v1410
  %1414 = vst [vmem:[%s3] sm:$0xff] %v1372
  %v1415 = vlaneseq
  %vm1416 = vcmp.ge.s32.totalorder %v1415, 0
  %vm1417 = vcmp.lt.s32.totalorder %v1415, 544
  %vm1418 = vmand %vm1416, %vm1417
  %1419 = vst.msk [vmem:[%s3 + $0x8] sm:$0x1f] %vm1418, %v1411
  // Predicated region
  $region14: #{forward.13} parent=0 // pred_check
    _
  $region15: #{forward.13} parent=0 // pred_check_branch
    %1421 = sbr.rel (0) target = $region17
  $region16: #{forward.13} parent=0 // pred_region
    _
  $region17: #{forward.13} parent=0 // pred_fallthru
    _
  // Predicated region
  $region18: #{forward.13} parent=0 // pred_check
    _
  $region19: #{forward.13} parent=0 // pred_check_branch
    %1423 = sbr.rel (0) target = $region21
  $region20: #{forward.13} parent=0 // pred_region
    _
  $region21: #{forward.13} parent=0 // pred_fallthru
    _

</llo_original>
